<compile_context>
chip_gen: v7x
topology: tpu7x:2x2x1
jax: 0.10.0
libtpu: 0.0.40
codegen_flags: <defaults>
</compile_context>

<pallas_src>
import functools

import jax
import jax.numpy as jnp
from jax.experimental import pallas as pl
from jax.experimental.pallas import tpu as pltpu

PAD = 128   # lane-padded hidden / feature dim (each gate = one 128-lane block)
BP = 8      # sublane-padded batch

_VMEM_SPEC = pl.BlockSpec(memory_space=pltpu.MemorySpace.VMEM)

# PyTorch gate order (i, f, g, o) -> packed block order (i, f, o, g)
GATE_DST = (0, 1, 3, 2)


# ----------------------------- fused Pallas kernel --------------------------

def _fused_lstm_kernel(x_ref, b_ref, bout_ref, w_hbm, wout_hbm,
                       out_ref, ht_ref,
                       w_v, wout_v, gx0_v, sem, *, S, Bp, L):
    """Fused 4-layer LSTM stack + linear head.

    x_ref:    (S*Bp, PAD)  bf16, time-major, batch/feature padded input (VMEM)
    b_ref:    (L, 1, 4*PAD) f32 combined bias b_ih + b_hh (VMEM)
    bout_ref: (1, PAD)      f32 head bias (VMEM)
    w_hbm:    (L, 2*PAD, 4*PAD) bf16 in HBM; rows [0:PAD] = Wih^T, [PAD:] = Whh^T
    wout_hbm: (PAD, PAD)    bf16 head weight in HBM
    out_ref:  (Bp, PAD)     f32 head output (valid block [:B, :O])
    ht_ref:   (Bp, PAD)     f32 final hidden of last layer (valid [:B, :E])
    w_v/wout_v: VMEM landing buffers for the weight DMAs
    gx0_v:    (S*Bp, 4*PAD) f32 scratch for layer-0 hoisted input projection
    sem:      DMA semaphores, shape (L+1,)
    Gate blocks packed in order i, f, o, g (each a 128-lane block).
    """
    Hp = PAD
    f32 = jnp.float32

    # ---- start every weight DMA up front; wait only right before first use.
    w_cp = [pltpu.make_async_copy(w_hbm.at[l], w_v.at[l], sem.at[l])
            for l in range(L)]
    wout_cp = pltpu.make_async_copy(wout_hbm, wout_v, sem.at[L])
    for cp in w_cp:
        cp.start()
    wout_cp.start()

    # ---- layer 0: hoisted input projection over all S timesteps (one matmul).
    w_cp[0].wait()
    gx0_v[...] = (jnp.dot(x_ref[...], w_v[0, 0:Hp, :],
                          preferred_element_type=f32) + b_ref[0])

    zeros_f32 = jnp.zeros((Bp, Hp), f32)
    h = [zeros_f32] * L                               # f32 hidden state
    c = [zeros_f32] * L                               # f32 cell state
    hb = [jnp.zeros((Bp, Hp), jnp.bfloat16)] * L      # bf16 copy for MXU use

    def cell(gates, c_prev):
        # gate order i, f, o, g: one contiguous sigmoid over 3*Hp lanes.
        ifo = jax.nn.sigmoid(gates[:, 0:3 * Hp])
        g_g = jnp.tanh(gates[:, 3 * Hp:4 * Hp])
        i_g = ifo[:, 0:Hp]
        f_g = ifo[:, Hp:2 * Hp]
        o_g = ifo[:, 2 * Hp:3 * Hp]
        c_new = f_g * c_prev + i_g * g_g
        h_new = o_g * jnp.tanh(c_new)
        return h_new, c_new

    # ---- wavefront over (layer, timestep): diagonal d runs step t = d - l for
    # every live layer l; each cell depends only on (l, t-1) and (l-1, t).
    for d in range(S + L - 1):
        hb_in = list(hb)                              # snapshot of diag d-1
        for l in range(L):
            t = d - l
            if t < 0 or t >= S:
                continue
            if t == 0 and l > 0:
                w_cp[l].wait()                        # weights hidden behind earlier diags
            if l == 0:
                gates = (gx0_v[t * Bp:(t + 1) * Bp, :]
                         + jnp.dot(hb_in[0], w_v[0, Hp:2 * Hp, :],
                                   preferred_element_type=f32))
            else:
                # per-step input + recurrent projections: two independent
                # K=128 matmuls (single-pass on v5e, pipeline on v6e/v7x).
                gates = (jnp.dot(hb_in[l - 1], w_v[l, 0:Hp, :],
                                 preferred_element_type=f32)
                         + jnp.dot(hb_in[l], w_v[l, Hp:2 * Hp, :],
                                   preferred_element_type=f32)
                         + b_ref[l])
            h_new, c_new = cell(gates, c[l])
            h[l] = h_new
            c[l] = c_new
            hb[l] = h_new.astype(jnp.bfloat16)

    # ---- linear head on the last layer's final hidden state.
    wout_cp.wait()
    out_ref[...] = (jnp.dot(hb[L - 1], wout_v[...],
                            preferred_element_type=f32) + bout_ref[...])
    ht_ref[...] = h[L - 1]


# ----------------------------- wrapper ---------------------------------------

def lstm_forward(x, params, *, embedding_dim=64, output_size=16):
    """Mirrors LSTM.forward / Encoder.forward.

    x: (B, S, n_features) batch-first (PyTorch batch_first=True).
    Returns (out: (B, output_size), ht: (B,)).
    """
    B, S, F = x.shape
    L = params["w"].shape[0]

    xt = jnp.transpose(x, (1, 0, 2)).astype(jnp.float32)         # (S, B, F)
    x_p = jnp.zeros((S, BP, PAD), jnp.float32).at[:, :B, :F].set(xt)
    x_p = x_p.reshape(S * BP, PAD).astype(jnp.bfloat16)

    kernel = functools.partial(_fused_lstm_kernel, S=S, Bp=BP, L=L)
    out_p, h_p = pl.pallas_call(
        kernel,
        out_shape=(jax.ShapeDtypeStruct((BP, PAD), jnp.float32),
                   jax.ShapeDtypeStruct((BP, PAD), jnp.float32)),
        in_specs=[
            _VMEM_SPEC,                               # x (tiny, auto-copied)
            _VMEM_SPEC,                               # biases (8 KiB)
            _VMEM_SPEC,                               # head bias
            pl.BlockSpec(memory_space=pl.ANY),        # LSTM weights stay in HBM
            pl.BlockSpec(memory_space=pl.ANY),        # head weight stays in HBM
        ],
        out_specs=(_VMEM_SPEC, _VMEM_SPEC),
        scratch_shapes=[
            pltpu.VMEM((L, 2 * PAD, 4 * PAD), jnp.bfloat16),   # weight landing bufs
            pltpu.VMEM((PAD, PAD), jnp.bfloat16),              # head weight buf
            pltpu.VMEM((S * BP, 4 * PAD), jnp.float32),        # layer-0 gates_x
            pltpu.SemaphoreType.DMA((L + 1,)),
        ],
    )(x_p, params["b"], params["bout"], params["w"], params["wout"])

    out = out_p[:B, :output_size]                     # Linear(x[:, -1, :])
    ht = h_p[:B, embedding_dim - 1]                   # hidden_state[-1, :, -1]
    return out, ht


# ----------------------------- parameter init --------------------------------

def _pack_lstm_layer(wih, whh, b, din, h):
    """PyTorch-layout (4h,din)/(4h,h)/(4h,) -> one padded, transposed block.

    Returns w: (2*PAD, 4*PAD) bf16 (rows [0:PAD] input->gates, rows [PAD:]
    hidden->gates) and b: (1, 4*PAD) f32, with gates reordered to i, f, o, g.
    """
    wih_t, whh_t = wih.T, whh.T                       # (din, 4h), (h, 4h)
    w = jnp.zeros((2 * PAD, 4 * PAD), jnp.float32)
    bp = jnp.zeros((4 * PAD,), jnp.float32)
    for k in range(4):                                # PyTorch order i, f, g, o
        dst = GATE_DST[k]
        w = w.at[:din, dst * PAD:dst * PAD + h].set(wih_t[:, k * h:(k + 1) * h])
        w = w.at[PAD:PAD + h, dst * PAD:dst * PAD + h].set(whh_t[:, k * h:(k + 1) * h])
        bp = bp.at[dst * PAD:dst * PAD + h].set(b[k * h:(k + 1) * h])
    return w.astype(jnp.bfloat16), bp[None, :]


def init_params(key, n_features=8, embedding_dim=64, output_size=16,
                n_layers_1=2, n_layers_2=2):
    hidden = 2 * embedding_dim
    # Stacked layers: LSTMenc (F->2E, 2E->2E), LSTM1 (2E->E, E->E).
    layer_dims = ([(n_features, hidden)] + [(hidden, hidden)] * (n_layers_1 - 1)
                  + [(hidden, embedding_dim)]
                  + [(embedding_dim, embedding_dim)] * (n_layers_2 - 1))

    w_l, b_l = [], []
    for din, h in layer_dims:
        key, k1, k2, k3, k4 = jax.random.split(key, 5)
        bound = 1.0 / float(h) ** 0.5                 # PyTorch default LSTM init range
        wih = jax.random.uniform(k1, (4 * h, din), jnp.float32, -bound, bound)
        whh = jax.random.uniform(k2, (4 * h, h), jnp.float32, -bound, bound)
        bih = jax.random.uniform(k3, (4 * h,), jnp.float32, -bound, bound)
        bhh = jax.random.uniform(k4, (4 * h,), jnp.float32, -bound, bound)
        w_p, b_p = _pack_lstm_layer(wih, whh, bih + bhh, din, h)
        w_l.append(w_p)
        b_l.append(b_p)

    key, kw = jax.random.split(key)
    # Linear head: kaiming_normal_ weight, zero bias (Encoder.weight_init).
    w_out = (jax.random.normal(kw, (output_size, embedding_dim), jnp.float32)
             * (2.0 / embedding_dim) ** 0.5)
    wout_p = (jnp.zeros((PAD, PAD), jnp.float32)
              .at[:embedding_dim, :output_size].set(w_out.T)
              .astype(jnp.bfloat16))
    bout_p = jnp.zeros((1, PAD), jnp.float32)

    return {"w": jnp.stack(w_l),                      # (L, 2*PAD, 4*PAD) bf16
            "b": jnp.stack(b_l),                      # (L, 1, 4*PAD)     f32
            "wout": wout_p,                           # (PAD, PAD)        bf16
            "bout": bout_p}                           # (1, PAD)          f32


# ----------------------------- main ------------------------------------------

if __name__ == "__main__":
    key = jax.random.PRNGKey(0)
    k_param, k_x = jax.random.split(key)

    # Module defaults: seq_in=7, n_features=8, embedding_dim=64, output_size=16.
    B, S, F = 2, 7, 8
    E, O = 64, 16
    params = init_params(k_param, n_features=F, embedding_dim=E, output_size=O)
    x = jax.random.normal(k_x, (B, S, F), jnp.float32)

    out, ht = jax.jit(lstm_forward)(x, params)
    jax.block_until_ready((out, ht))
    assert out.shape == (B, O) and ht.shape == (B,)
    print("KERNEL_OK")
</pallas_src>

<mosaic_0001>
module attributes {stable_mosaic.version = 11 : i64} {
  func.func @_fused_lstm_kernel(%arg0: memref<56x128xbf16, #tpu.memory_space<vmem>>, %arg1: memref<4x1x512xf32, #tpu.memory_space<vmem>>, %arg2: memref<1x128xf32, #tpu.memory_space<vmem>>, %arg3: memref<4x256x512xbf16, #tpu.memory_space<any>>, %arg4: memref<128x128xbf16, #tpu.memory_space<any>>, %arg5: memref<8x128xf32, #tpu.memory_space<vmem>>, %arg6: memref<8x128xf32, #tpu.memory_space<vmem>>, %arg7: memref<4x256x512xbf16, #tpu.memory_space<vmem>>, %arg8: memref<128x128xbf16, #tpu.memory_space<vmem>>, %arg9: memref<56x512xf32, #tpu.memory_space<vmem>>, %arg10: memref<5x!tpu.dma_semaphore, #tpu.memory_space<semaphore_mem>>) attributes {dimension_semantics = [], scalar_prefetch = 0 : i64, scratch_operands = 4 : i64, tpu.core_type = #tpu.core_type<tc>} {
    %c0_i32 = arith.constant 0 : i32
    %c0_i32_0 = arith.constant 0 : i32
    %c0_i32_1 = arith.constant 0 : i32
    %c0_i32_2 = arith.constant 0 : i32
    %c0_i32_3 = arith.constant 0 : i32
    %0 = tpu.memref_slice %arg3[%c0_i32, %c0_i32_2, %c0_i32_3] : memref<4x256x512xbf16, #tpu.memory_space<any>> -> memref<1x256x512xbf16, #tpu.memory_space<any>>
    %1 = tpu.memref_squeeze %0 : memref<1x256x512xbf16, #tpu.memory_space<any>> -> memref<256x512xbf16, #tpu.memory_space<any>>
    %c0_i32_4 = arith.constant 0 : i32
    %c0_i32_5 = arith.constant 0 : i32
    %2 = tpu.memref_slice %arg7[%c0_i32_0, %c0_i32_4, %c0_i32_5] : memref<4x256x512xbf16, #tpu.memory_space<vmem>> -> memref<1x256x512xbf16, #tpu.memory_space<vmem>>
    %3 = tpu.memref_squeeze %2 : memref<1x256x512xbf16, #tpu.memory_space<vmem>> -> memref<256x512xbf16, #tpu.memory_space<vmem>>
    %4 = tpu.memref_slice %arg10[%c0_i32_1] : memref<5x!tpu.dma_semaphore, #tpu.memory_space<semaphore_mem>> -> memref<1x!tpu.dma_semaphore, #tpu.memory_space<semaphore_mem>>
    %5 = tpu.memref_squeeze %4 : memref<1x!tpu.dma_semaphore, #tpu.memory_space<semaphore_mem>> -> memref<!tpu.dma_semaphore, #tpu.memory_space<semaphore_mem>>
    tpu.enqueue_dma source(%1 : memref<256x512xbf16, #tpu.memory_space<any>>) target(%3 : memref<256x512xbf16, #tpu.memory_space<vmem>>) target_semaphore(%5 : memref<!tpu.dma_semaphore, #tpu.memory_space<semaphore_mem>>)
    %c1_i32 = arith.constant 1 : i32
    %c1_i32_6 = arith.constant 1 : i32
    %c1_i32_7 = arith.constant 1 : i32
    %c0_i32_8 = arith.constant 0 : i32
    %c0_i32_9 = arith.constant 0 : i32
    %6 = tpu.memref_slice %arg3[%c1_i32, %c0_i32_8, %c0_i32_9] : memref<4x256x512xbf16, #tpu.memory_space<any>> -> memref<1x256x512xbf16, #tpu.memory_space<any>>
    %7 = tpu.memref_squeeze %6 : memref<1x256x512xbf16, #tpu.memory_space<any>> -> memref<256x512xbf16, #tpu.memory_space<any>>
    %c0_i32_10 = arith.constant 0 : i32
    %c0_i32_11 = arith.constant 0 : i32
    %8 = tpu.memref_slice %arg7[%c1_i32_6, %c0_i32_10, %c0_i32_11] : memref<4x256x512xbf16, #tpu.memory_space<vmem>> -> memref<1x256x512xbf16, #tpu.memory_space<vmem>>
    %9 = tpu.memref_squeeze %8 : memref<1x256x512xbf16, #tpu.memory_space<vmem>> -> memref<256x512xbf16, #tpu.memory_space<vmem>>
    %10 = tpu.memref_slice %arg10[%c1_i32_7] : memref<5x!tpu.dma_semaphore, #tpu.memory_space<semaphore_mem>> -> memref<1x!tpu.dma_semaphore, #tpu.memory_space<semaphore_mem>>
    %11 = tpu.memref_squeeze %10 : memref<1x!tpu.dma_semaphore, #tpu.memory_space<semaphore_mem>> -> memref<!tpu.dma_semaphore, #tpu.memory_space<semaphore_mem>>
    tpu.enqueue_dma source(%7 : memref<256x512xbf16, #tpu.memory_space<any>>) target(%9 : memref<256x512xbf16, #tpu.memory_space<vmem>>) target_semaphore(%11 : memref<!tpu.dma_semaphore, #tpu.memory_space<semaphore_mem>>)
    %c2_i32 = arith.constant 2 : i32
    %c2_i32_12 = arith.constant 2 : i32
    %c2_i32_13 = arith.constant 2 : i32
    %c0_i32_14 = arith.constant 0 : i32
    %c0_i32_15 = arith.constant 0 : i32
    %12 = tpu.memref_slice %arg3[%c2_i32, %c0_i32_14, %c0_i32_15] : memref<4x256x512xbf16, #tpu.memory_space<any>> -> memref<1x256x512xbf16, #tpu.memory_space<any>>
    %13 = tpu.memref_squeeze %12 : memref<1x256x512xbf16, #tpu.memory_space<any>> -> memref<256x512xbf16, #tpu.memory_space<any>>
    %c0_i32_16 = arith.constant 0 : i32
    %c0_i32_17 = arith.constant 0 : i32
    %14 = tpu.memref_slice %arg7[%c2_i32_12, %c0_i32_16, %c0_i32_17] : memref<4x256x512xbf16, #tpu.memory_space<vmem>> -> memref<1x256x512xbf16, #tpu.memory_space<vmem>>
    %15 = tpu.memref_squeeze %14 : memref<1x256x512xbf16, #tpu.memory_space<vmem>> -> memref<256x512xbf16, #tpu.memory_space<vmem>>
    %16 = tpu.memref_slice %arg10[%c2_i32_13] : memref<5x!tpu.dma_semaphore, #tpu.memory_space<semaphore_mem>> -> memref<1x!tpu.dma_semaphore, #tpu.memory_space<semaphore_mem>>
    %17 = tpu.memref_squeeze %16 : memref<1x!tpu.dma_semaphore, #tpu.memory_space<semaphore_mem>> -> memref<!tpu.dma_semaphore, #tpu.memory_space<semaphore_mem>>
    tpu.enqueue_dma source(%13 : memref<256x512xbf16, #tpu.memory_space<any>>) target(%15 : memref<256x512xbf16, #tpu.memory_space<vmem>>) target_semaphore(%17 : memref<!tpu.dma_semaphore, #tpu.memory_space<semaphore_mem>>)
    %c3_i32 = arith.constant 3 : i32
    %c3_i32_18 = arith.constant 3 : i32
    %c3_i32_19 = arith.constant 3 : i32
    %c0_i32_20 = arith.constant 0 : i32
    %c0_i32_21 = arith.constant 0 : i32
    %18 = tpu.memref_slice %arg3[%c3_i32, %c0_i32_20, %c0_i32_21] : memref<4x256x512xbf16, #tpu.memory_space<any>> -> memref<1x256x512xbf16, #tpu.memory_space<any>>
    %19 = tpu.memref_squeeze %18 : memref<1x256x512xbf16, #tpu.memory_space<any>> -> memref<256x512xbf16, #tpu.memory_space<any>>
    %c0_i32_22 = arith.constant 0 : i32
    %c0_i32_23 = arith.constant 0 : i32
    %20 = tpu.memref_slice %arg7[%c3_i32_18, %c0_i32_22, %c0_i32_23] : memref<4x256x512xbf16, #tpu.memory_space<vmem>> -> memref<1x256x512xbf16, #tpu.memory_space<vmem>>
    %21 = tpu.memref_squeeze %20 : memref<1x256x512xbf16, #tpu.memory_space<vmem>> -> memref<256x512xbf16, #tpu.memory_space<vmem>>
    %22 = tpu.memref_slice %arg10[%c3_i32_19] : memref<5x!tpu.dma_semaphore, #tpu.memory_space<semaphore_mem>> -> memref<1x!tpu.dma_semaphore, #tpu.memory_space<semaphore_mem>>
    %23 = tpu.memref_squeeze %22 : memref<1x!tpu.dma_semaphore, #tpu.memory_space<semaphore_mem>> -> memref<!tpu.dma_semaphore, #tpu.memory_space<semaphore_mem>>
    tpu.enqueue_dma source(%19 : memref<256x512xbf16, #tpu.memory_space<any>>) target(%21 : memref<256x512xbf16, #tpu.memory_space<vmem>>) target_semaphore(%23 : memref<!tpu.dma_semaphore, #tpu.memory_space<semaphore_mem>>)
    %c4_i32 = arith.constant 4 : i32
    %24 = tpu.memref_slice %arg10[%c4_i32] : memref<5x!tpu.dma_semaphore, #tpu.memory_space<semaphore_mem>> -> memref<1x!tpu.dma_semaphore, #tpu.memory_space<semaphore_mem>>
    %25 = tpu.memref_squeeze %24 : memref<1x!tpu.dma_semaphore, #tpu.memory_space<semaphore_mem>> -> memref<!tpu.dma_semaphore, #tpu.memory_space<semaphore_mem>>
    tpu.enqueue_dma source(%arg4 : memref<128x128xbf16, #tpu.memory_space<any>>) target(%arg8 : memref<128x128xbf16, #tpu.memory_space<vmem>>) target_semaphore(%25 : memref<!tpu.dma_semaphore, #tpu.memory_space<semaphore_mem>>)
    %c0_i32_24 = arith.constant 0 : i32
    %c0_i32_25 = arith.constant 0 : i32
    %c0_i32_26 = arith.constant 0 : i32
    %c0_i32_27 = arith.constant 0 : i32
    %c0_i32_28 = arith.constant 0 : i32
    %26 = tpu.memref_slice %arg3[%c0_i32_24, %c0_i32_27, %c0_i32_28] : memref<4x256x512xbf16, #tpu.memory_space<any>> -> memref<1x256x512xbf16, #tpu.memory_space<any>>
    %27 = tpu.memref_squeeze %26 : memref<1x256x512xbf16, #tpu.memory_space<any>> -> memref<256x512xbf16, #tpu.memory_space<any>>
    %c0_i32_29 = arith.constant 0 : i32
    %c0_i32_30 = arith.constant 0 : i32
    %28 = tpu.memref_slice %arg7[%c0_i32_25, %c0_i32_29, %c0_i32_30] : memref<4x256x512xbf16, #tpu.memory_space<vmem>> -> memref<1x256x512xbf16, #tpu.memory_space<vmem>>
    %29 = tpu.memref_squeeze %28 : memref<1x256x512xbf16, #tpu.memory_space<vmem>> -> memref<256x512xbf16, #tpu.memory_space<vmem>>
    %30 = tpu.memref_slice %arg10[%c0_i32_26] : memref<5x!tpu.dma_semaphore, #tpu.memory_space<semaphore_mem>> -> memref<1x!tpu.dma_semaphore, #tpu.memory_space<semaphore_mem>>
    %31 = tpu.memref_squeeze %30 : memref<1x!tpu.dma_semaphore, #tpu.memory_space<semaphore_mem>> -> memref<!tpu.dma_semaphore, #tpu.memory_space<semaphore_mem>>
    tpu.wait_dma2 semaphore(%31 : memref<!tpu.dma_semaphore, #tpu.memory_space<semaphore_mem>>) src(%27 : memref<256x512xbf16, #tpu.memory_space<any>>) dst(%29 : memref<256x512xbf16, #tpu.memory_space<vmem>>)
    %c0 = arith.constant 0 : index
    %c0_31 = arith.constant 0 : index
    %32 = vector.load %arg0[%c0, %c0_31] : memref<56x128xbf16, #tpu.memory_space<vmem>>, vector<56x128xbf16>
    %c0_32 = arith.constant 0 : index
    %c0_33 = arith.constant 0 : index
    %c0_34 = arith.constant 0 : index
    %33 = vector.load %arg7[%c0_32, %c0_33, %c0_34] : memref<4x256x512xbf16, #tpu.memory_space<vmem>>, vector<1x128x512xbf16>
    %34 = vector.shape_cast %33 : vector<1x128x512xbf16> to vector<128x512xbf16>
    %cst = arith.constant dense<0.000000e+00> : vector<56x512xf32>
    %35 = tpu.matmul %32, %34, %cst {dimension_numbers = #tpu.dot_dimension_numbers<[1], [0], [0], [1], [0, 0, 1, 1], [], []>} : vector<56x128xbf16>, vector<128x512xbf16>, vector<56x512xf32> -> vector<56x512xf32>
    %c0_35 = arith.constant 0 : index
    %c0_36 = arith.constant 0 : index
    %c0_37 = arith.constant 0 : index
    %36 = vector.load %arg1[%c0_35, %c0_36, %c0_37] : memref<4x1x512xf32, #tpu.memory_space<vmem>>, vector<1x1x512xf32>
    %37 = vector.shape_cast %36 : vector<1x1x512xf32> to vector<1x512xf32>
    %38 = vector.broadcast %37 : vector<1x512xf32> to vector<56x512xf32>
    %39 = arith.addf %35, %38 : vector<56x512xf32>
    %c0_38 = arith.constant 0 : index
    %c0_39 = arith.constant 0 : index
    %40 = vector.load %arg9[%c0_38, %c0_39] : memref<56x512xf32, #tpu.memory_space<vmem>>, vector<56x512xf32>
    tpu.vector_store %arg9[%c0_38, %c0_39], %39 {strides = array<i32>} : memref<56x512xf32, #tpu.memory_space<vmem>>, vector<56x512xf32>,
    %cst_40 = arith.constant 0.000000e+00 : f32
    %41 = vector.broadcast %cst_40 : f32 to vector<8x128xf32>
    %cst_41 = arith.constant 0.000000e+00 : bf16
    %42 = vector.broadcast %cst_41 : bf16 to vector<8x128xbf16>
    %c0_42 = arith.constant 0 : index
    %c0_43 = arith.constant 0 : index
    %43 = vector.load %arg9[%c0_42, %c0_43] : memref<56x512xf32, #tpu.memory_space<vmem>>, vector<8x512xf32>
    %c0_44 = arith.constant 0 : index
    %c128 = arith.constant 128 : index
    %c0_45 = arith.constant 0 : index
    %44 = vector.load %arg7[%c0_44, %c128, %c0_45] : memref<4x256x512xbf16, #tpu.memory_space<vmem>>, vector<1x128x512xbf16>
    %45 = vector.shape_cast %44 : vector<1x128x512xbf16> to vector<128x512xbf16>
    %cst_46 = arith.constant dense<0.000000e+00> : vector<8x512xf32>
    %46 = tpu.matmul %42, %45, %cst_46 {dimension_numbers = #tpu.dot_dimension_numbers<[1], [0], [0], [1], [0, 0, 1, 1], [], []>} : vector<8x128xbf16>, vector<128x512xbf16>, vector<8x512xf32> -> vector<8x512xf32>
    %47 = arith.addf %43, %46 : vector<8x512xf32>
    %48 = vector.extract_strided_slice %47 {offsets = [0, 0], sizes = [8, 384], strides = [1, 1]} : vector<8x512xf32> to vector<8x384xf32>
    %49 = arith.negf %48 : vector<8x384xf32>
    %50 = math.exp %49 : vector<8x384xf32>
    %cst_47 = arith.constant 1.000000e+00 : f32
    %51 = vector.broadcast %cst_47 : f32 to vector<8x384xf32>
    %52 = arith.addf %51, %50 : vector<8x384xf32>
    %53 = arith.divf %51, %52 : vector<8x384xf32>
    %54 = vector.extract_strided_slice %47 {offsets = [0, 384], sizes = [8, 128], strides = [1, 1]} : vector<8x512xf32> to vector<8x128xf32>
    %55 = math.tanh %54 : vector<8x128xf32>
    %56 = vector.extract_strided_slice %53 {offsets = [0, 0], sizes = [8, 128], strides = [1, 1]} : vector<8x384xf32> to vector<8x128xf32>
    %57 = vector.extract_strided_slice %53 {offsets = [0, 128], sizes = [8, 128], strides = [1, 1]} : vector<8x384xf32> to vector<8x128xf32>
    %58 = vector.extract_strided_slice %53 {offsets = [0, 256], sizes = [8, 128], strides = [1, 1]} : vector<8x384xf32> to vector<8x128xf32>
    %59 = arith.mulf %57, %41 : vector<8x128xf32>
    %60 = arith.mulf %56, %55 : vector<8x128xf32>
    %61 = arith.addf %59, %60 : vector<8x128xf32>
    %62 = math.tanh %61 : vector<8x128xf32>
    %63 = arith.mulf %58, %62 : vector<8x128xf32>
    %64 = arith.truncf %63 : vector<8x128xf32> to vector<8x128xbf16>
    %c8 = arith.constant 8 : index
    %c0_48 = arith.constant 0 : index
    %65 = vector.load %arg9[%c8, %c0_48] : memref<56x512xf32, #tpu.memory_space<vmem>>, vector<8x512xf32>
    %c0_49 = arith.constant 0 : index
    %c128_50 = arith.constant 128 : index
    %c0_51 = arith.constant 0 : index
    %66 = vector.load %arg7[%c0_49, %c128_50, %c0_51] : memref<4x256x512xbf16, #tpu.memory_space<vmem>>, vector<1x128x512xbf16>
    %67 = vector.shape_cast %66 : vector<1x128x512xbf16> to vector<128x512xbf16>
    %cst_52 = arith.constant dense<0.000000e+00> : vector<8x512xf32>
    %68 = tpu.matmul %64, %67, %cst_52 {dimension_numbers = #tpu.dot_dimension_numbers<[1], [0], [0], [1], [0, 0, 1, 1], [], []>} : vector<8x128xbf16>, vector<128x512xbf16>, vector<8x512xf32> -> vector<8x512xf32>
    %69 = arith.addf %65, %68 : vector<8x512xf32>
    %70 = vector.extract_strided_slice %69 {offsets = [0, 0], sizes = [8, 384], strides = [1, 1]} : vector<8x512xf32> to vector<8x384xf32>
    %71 = arith.negf %70 : vector<8x384xf32>
    %72 = math.exp %71 : vector<8x384xf32>
    %cst_53 = arith.constant 1.000000e+00 : f32
    %73 = vector.broadcast %cst_53 : f32 to vector<8x384xf32>
    %74 = arith.addf %73, %72 : vector<8x384xf32>
    %75 = arith.divf %73, %74 : vector<8x384xf32>
    %76 = vector.extract_strided_slice %69 {offsets = [0, 384], sizes = [8, 128], strides = [1, 1]} : vector<8x512xf32> to vector<8x128xf32>
    %77 = math.tanh %76 : vector<8x128xf32>
    %78 = vector.extract_strided_slice %75 {offsets = [0, 0], sizes = [8, 128], strides = [1, 1]} : vector<8x384xf32> to vector<8x128xf32>
    %79 = vector.extract_strided_slice %75 {offsets = [0, 128], sizes = [8, 128], strides = [1, 1]} : vector<8x384xf32> to vector<8x128xf32>
    %80 = vector.extract_strided_slice %75 {offsets = [0, 256], sizes = [8, 128], strides = [1, 1]} : vector<8x384xf32> to vector<8x128xf32>
    %81 = arith.mulf %79, %61 : vector<8x128xf32>
    %82 = arith.mulf %78, %77 : vector<8x128xf32>
    %83 = arith.addf %81, %82 : vector<8x128xf32>
    %84 = math.tanh %83 : vector<8x128xf32>
    %85 = arith.mulf %80, %84 : vector<8x128xf32>
    %86 = arith.truncf %85 : vector<8x128xf32> to vector<8x128xbf16>
    %c1_i32_54 = arith.constant 1 : i32
    %c1_i32_55 = arith.constant 1 : i32
    %c1_i32_56 = arith.constant 1 : i32
    %c0_i32_57 = arith.constant 0 : i32
    %c0_i32_58 = arith.constant 0 : i32
    %87 = tpu.memref_slice %arg3[%c1_i32_54, %c0_i32_57, %c0_i32_58] : memref<4x256x512xbf16, #tpu.memory_space<any>> -> memref<1x256x512xbf16, #tpu.memory_space<any>>
    %88 = tpu.memref_squeeze %87 : memref<1x256x512xbf16, #tpu.memory_space<any>> -> memref<256x512xbf16, #tpu.memory_space<any>>
    %c0_i32_59 = arith.constant 0 : i32
    %c0_i32_60 = arith.constant 0 : i32
    %89 = tpu.memref_slice %arg7[%c1_i32_55, %c0_i32_59, %c0_i32_60] : memref<4x256x512xbf16, #tpu.memory_space<vmem>> -> memref<1x256x512xbf16, #tpu.memory_space<vmem>>
    %90 = tpu.memref_squeeze %89 : memref<1x256x512xbf16, #tpu.memory_space<vmem>> -> memref<256x512xbf16, #tpu.memory_space<vmem>>
    %91 = tpu.memref_slice %arg10[%c1_i32_56] : memref<5x!tpu.dma_semaphore, #tpu.memory_space<semaphore_mem>> -> memref<1x!tpu.dma_semaphore, #tpu.memory_space<semaphore_mem>>
    %92 = tpu.memref_squeeze %91 : memref<1x!tpu.dma_semaphore, #tpu.memory_space<semaphore_mem>> -> memref<!tpu.dma_semaphore, #tpu.memory_space<semaphore_mem>>
    tpu.wait_dma2 semaphore(%92 : memref<!tpu.dma_semaphore, #tpu.memory_space<semaphore_mem>>) src(%88 : memref<256x512xbf16, #tpu.memory_space<any>>) dst(%90 : memref<256x512xbf16, #tpu.memory_space<vmem>>)
    %c1 = arith.constant 1 : index
    %c0_61 = arith.constant 0 : index
    %c0_62 = arith.constant 0 : index
    %93 = vector.load %arg7[%c1, %c0_61, %c0_62] : memref<4x256x512xbf16, #tpu.memory_space<vmem>>, vector<1x128x512xbf16>
    %94 = vector.shape_cast %93 : vector<1x128x512xbf16> to vector<128x512xbf16>
    %cst_63 = arith.constant dense<0.000000e+00> : vector<8x512xf32>
    %95 = tpu.matmul %64, %94, %cst_63 {dimension_numbers = #tpu.dot_dimension_numbers<[1], [0], [0], [1], [0, 0, 1, 1], [], []>} : vector<8x128xbf16>, vector<128x512xbf16>, vector<8x512xf32> -> vector<8x512xf32>
    %c1_64 = arith.constant 1 : index
    %c128_65 = arith.constant 128 : index
    %c0_66 = arith.constant 0 : index
    %96 = vector.load %arg7[%c1_64, %c128_65, %c0_66] : memref<4x256x512xbf16, #tpu.memory_space<vmem>>, vector<1x128x512xbf16>
    %97 = vector.shape_cast %96 : vector<1x128x512xbf16> to vector<128x512xbf16>
    %cst_67 = arith.constant dense<0.000000e+00> : vector<8x512xf32>
    %98 = tpu.matmul %42, %97, %cst_67 {dimension_numbers = #tpu.dot_dimension_numbers<[1], [0], [0], [1], [0, 0, 1, 1], [], []>} : vector<8x128xbf16>, vector<128x512xbf16>, vector<8x512xf32> -> vector<8x512xf32>
    %99 = arith.addf %95, %98 : vector<8x512xf32>
    %c1_68 = arith.constant 1 : index
    %c0_69 = arith.constant 0 : index
    %c0_70 = arith.constant 0 : index
    %100 = vector.load %arg1[%c1_68, %c0_69, %c0_70] : memref<4x1x512xf32, #tpu.memory_space<vmem>>, vector<1x1x512xf32>
    %101 = vector.shape_cast %100 : vector<1x1x512xf32> to vector<1x512xf32>
    %102 = vector.broadcast %101 : vector<1x512xf32> to vector<8x512xf32>
    %103 = arith.addf %99, %102 : vector<8x512xf32>
    %104 = vector.extract_strided_slice %103 {offsets = [0, 0], sizes = [8, 384], strides = [1, 1]} : vector<8x512xf32> to vector<8x384xf32>
    %105 = arith.negf %104 : vector<8x384xf32>
    %106 = math.exp %105 : vector<8x384xf32>
    %cst_71 = arith.constant 1.000000e+00 : f32
    %107 = vector.broadcast %cst_71 : f32 to vector<8x384xf32>
    %108 = arith.addf %107, %106 : vector<8x384xf32>
    %109 = arith.divf %107, %108 : vector<8x384xf32>
    %110 = vector.extract_strided_slice %103 {offsets = [0, 384], sizes = [8, 128], strides = [1, 1]} : vector<8x512xf32> to vector<8x128xf32>
    %111 = math.tanh %110 : vector<8x128xf32>
    %112 = vector.extract_strided_slice %109 {offsets = [0, 0], sizes = [8, 128], strides = [1, 1]} : vector<8x384xf32> to vector<8x128xf32>
    %113 = vector.extract_strided_slice %109 {offsets = [0, 128], sizes = [8, 128], strides = [1, 1]} : vector<8x384xf32> to vector<8x128xf32>
    %114 = vector.extract_strided_slice %109 {offsets = [0, 256], sizes = [8, 128], strides = [1, 1]} : vector<8x384xf32> to vector<8x128xf32>
    %115 = arith.mulf %113, %41 : vector<8x128xf32>
    %116 = arith.mulf %112, %111 : vector<8x128xf32>
    %117 = arith.addf %115, %116 : vector<8x128xf32>
    %118 = math.tanh %117 : vector<8x128xf32>
    %119 = arith.mulf %114, %118 : vector<8x128xf32>
    %120 = arith.truncf %119 : vector<8x128xf32> to vector<8x128xbf16>
    %c16 = arith.constant 16 : index
    %c0_72 = arith.constant 0 : index
    %121 = vector.load %arg9[%c16, %c0_72] : memref<56x512xf32, #tpu.memory_space<vmem>>, vector<8x512xf32>
    %c0_73 = arith.constant 0 : index
    %c128_74 = arith.constant 128 : index
    %c0_75 = arith.constant 0 : index
    %122 = vector.load %arg7[%c0_73, %c128_74, %c0_75] : memref<4x256x512xbf16, #tpu.memory_space<vmem>>, vector<1x128x512xbf16>
    %123 = vector.shape_cast %122 : vector<1x128x512xbf16> to vector<128x512xbf16>
    %cst_76 = arith.constant dense<0.000000e+00> : vector<8x512xf32>
    %124 = tpu.matmul %86, %123, %cst_76 {dimension_numbers = #tpu.dot_dimension_numbers<[1], [0], [0], [1], [0, 0, 1, 1], [], []>} : vector<8x128xbf16>, vector<128x512xbf16>, vector<8x512xf32> -> vector<8x512xf32>
    %125 = arith.addf %121, %124 : vector<8x512xf32>
    %126 = vector.extract_strided_slice %125 {offsets = [0, 0], sizes = [8, 384], strides = [1, 1]} : vector<8x512xf32> to vector<8x384xf32>
    %127 = arith.negf %126 : vector<8x384xf32>
    %128 = math.exp %127 : vector<8x384xf32>
    %cst_77 = arith.constant 1.000000e+00 : f32
    %129 = vector.broadcast %cst_77 : f32 to vector<8x384xf32>
    %130 = arith.addf %129, %128 : vector<8x384xf32>
    %131 = arith.divf %129, %130 : vector<8x384xf32>
    %132 = vector.extract_strided_slice %125 {offsets = [0, 384], sizes = [8, 128], strides = [1, 1]} : vector<8x512xf32> to vector<8x128xf32>
    %133 = math.tanh %132 : vector<8x128xf32>
    %134 = vector.extract_strided_slice %131 {offsets = [0, 0], sizes = [8, 128], strides = [1, 1]} : vector<8x384xf32> to vector<8x128xf32>
    %135 = vector.extract_strided_slice %131 {offsets = [0, 128], sizes = [8, 128], strides = [1, 1]} : vector<8x384xf32> to vector<8x128xf32>
    %136 = vector.extract_strided_slice %131 {offsets = [0, 256], sizes = [8, 128], strides = [1, 1]} : vector<8x384xf32> to vector<8x128xf32>
    %137 = arith.mulf %135, %83 : vector<8x128xf32>
    %138 = arith.mulf %134, %133 : vector<8x128xf32>
    %139 = arith.addf %137, %138 : vector<8x128xf32>
    %140 = math.tanh %139 : vector<8x128xf32>
    %141 = arith.mulf %136, %140 : vector<8x128xf32>
    %142 = arith.truncf %141 : vector<8x128xf32> to vector<8x128xbf16>
    %c1_78 = arith.constant 1 : index
    %c0_79 = arith.constant 0 : index
    %c0_80 = arith.constant 0 : index
    %143 = vector.load %arg7[%c1_78, %c0_79, %c0_80] : memref<4x256x512xbf16, #tpu.memory_space<vmem>>, vector<1x128x512xbf16>
    %144 = vector.shape_cast %143 : vector<1x128x512xbf16> to vector<128x512xbf16>
    %cst_81 = arith.constant dense<0.000000e+00> : vector<8x512xf32>
    %145 = tpu.matmul %86, %144, %cst_81 {dimension_numbers = #tpu.dot_dimension_numbers<[1], [0], [0], [1], [0, 0, 1, 1], [], []>} : vector<8x128xbf16>, vector<128x512xbf16>, vector<8x512xf32> -> vector<8x512xf32>
    %c1_82 = arith.constant 1 : index
    %c128_83 = arith.constant 128 : index
    %c0_84 = arith.constant 0 : index
    %146 = vector.load %arg7[%c1_82, %c128_83, %c0_84] : memref<4x256x512xbf16, #tpu.memory_space<vmem>>, vector<1x128x512xbf16>
    %147 = vector.shape_cast %146 : vector<1x128x512xbf16> to vector<128x512xbf16>
    %cst_85 = arith.constant dense<0.000000e+00> : vector<8x512xf32>
    %148 = tpu.matmul %120, %147, %cst_85 {dimension_numbers = #tpu.dot_dimension_numbers<[1], [0], [0], [1], [0, 0, 1, 1], [], []>} : vector<8x128xbf16>, vector<128x512xbf16>, vector<8x512xf32> -> vector<8x512xf32>
    %149 = arith.addf %145, %148 : vector<8x512xf32>
    %c1_86 = arith.constant 1 : index
    %c0_87 = arith.constant 0 : index
    %c0_88 = arith.constant 0 : index
    %150 = vector.load %arg1[%c1_86, %c0_87, %c0_88] : memref<4x1x512xf32, #tpu.memory_space<vmem>>, vector<1x1x512xf32>
    %151 = vector.shape_cast %150 : vector<1x1x512xf32> to vector<1x512xf32>
    %152 = vector.broadcast %151 : vector<1x512xf32> to vector<8x512xf32>
    %153 = arith.addf %149, %152 : vector<8x512xf32>
    %154 = vector.extract_strided_slice %153 {offsets = [0, 0], sizes = [8, 384], strides = [1, 1]} : vector<8x512xf32> to vector<8x384xf32>
    %155 = arith.negf %154 : vector<8x384xf32>
    %156 = math.exp %155 : vector<8x384xf32>
    %cst_89 = arith.constant 1.000000e+00 : f32
    %157 = vector.broadcast %cst_89 : f32 to vector<8x384xf32>
    %158 = arith.addf %157, %156 : vector<8x384xf32>
    %159 = arith.divf %157, %158 : vector<8x384xf32>
    %160 = vector.extract_strided_slice %153 {offsets = [0, 384], sizes = [8, 128], strides = [1, 1]} : vector<8x512xf32> to vector<8x128xf32>
    %161 = math.tanh %160 : vector<8x128xf32>
    %162 = vector.extract_strided_slice %159 {offsets = [0, 0], sizes = [8, 128], strides = [1, 1]} : vector<8x384xf32> to vector<8x128xf32>
    %163 = vector.extract_strided_slice %159 {offsets = [0, 128], sizes = [8, 128], strides = [1, 1]} : vector<8x384xf32> to vector<8x128xf32>
    %164 = vector.extract_strided_slice %159 {offsets = [0, 256], sizes = [8, 128], strides = [1, 1]} : vector<8x384xf32> to vector<8x128xf32>
    %165 = arith.mulf %163, %117 : vector<8x128xf32>
    %166 = arith.mulf %162, %161 : vector<8x128xf32>
    %167 = arith.addf %165, %166 : vector<8x128xf32>
    %168 = math.tanh %167 : vector<8x128xf32>
    %169 = arith.mulf %164, %168 : vector<8x128xf32>
    %170 = arith.truncf %169 : vector<8x128xf32> to vector<8x128xbf16>
    %c2_i32_90 = arith.constant 2 : i32
    %c2_i32_91 = arith.constant 2 : i32
    %c2_i32_92 = arith.constant 2 : i32
    %c0_i32_93 = arith.constant 0 : i32
    %c0_i32_94 = arith.constant 0 : i32
    %171 = tpu.memref_slice %arg3[%c2_i32_90, %c0_i32_93, %c0_i32_94] : memref<4x256x512xbf16, #tpu.memory_space<any>> -> memref<1x256x512xbf16, #tpu.memory_space<any>>
    %172 = tpu.memref_squeeze %171 : memref<1x256x512xbf16, #tpu.memory_space<any>> -> memref<256x512xbf16, #tpu.memory_space<any>>
    %c0_i32_95 = arith.constant 0 : i32
    %c0_i32_96 = arith.constant 0 : i32
    %173 = tpu.memref_slice %arg7[%c2_i32_91, %c0_i32_95, %c0_i32_96] : memref<4x256x512xbf16, #tpu.memory_space<vmem>> -> memref<1x256x512xbf16, #tpu.memory_space<vmem>>
    %174 = tpu.memref_squeeze %173 : memref<1x256x512xbf16, #tpu.memory_space<vmem>> -> memref<256x512xbf16, #tpu.memory_space<vmem>>
    %175 = tpu.memref_slice %arg10[%c2_i32_92] : memref<5x!tpu.dma_semaphore, #tpu.memory_space<semaphore_mem>> -> memref<1x!tpu.dma_semaphore, #tpu.memory_space<semaphore_mem>>
    %176 = tpu.memref_squeeze %175 : memref<1x!tpu.dma_semaphore, #tpu.memory_space<semaphore_mem>> -> memref<!tpu.dma_semaphore, #tpu.memory_space<semaphore_mem>>
    tpu.wait_dma2 semaphore(%176 : memref<!tpu.dma_semaphore, #tpu.memory_space<semaphore_mem>>) src(%172 : memref<256x512xbf16, #tpu.memory_space<any>>) dst(%174 : memref<256x512xbf16, #tpu.memory_space<vmem>>)
    %c2 = arith.constant 2 : index
    %c0_97 = arith.constant 0 : index
    %c0_98 = arith.constant 0 : index
    %177 = vector.load %arg7[%c2, %c0_97, %c0_98] : memref<4x256x512xbf16, #tpu.memory_space<vmem>>, vector<1x128x512xbf16>
    %178 = vector.shape_cast %177 : vector<1x128x512xbf16> to vector<128x512xbf16>
    %cst_99 = arith.constant dense<0.000000e+00> : vector<8x512xf32>
    %179 = tpu.matmul %120, %178, %cst_99 {dimension_numbers = #tpu.dot_dimension_numbers<[1], [0], [0], [1], [0, 0, 1, 1], [], []>} : vector<8x128xbf16>, vector<128x512xbf16>, vector<8x512xf32> -> vector<8x512xf32>
    %c2_100 = arith.constant 2 : index
    %c128_101 = arith.constant 128 : index
    %c0_102 = arith.constant 0 : index
    %180 = vector.load %arg7[%c2_100, %c128_101, %c0_102] : memref<4x256x512xbf16, #tpu.memory_space<vmem>>, vector<1x128x512xbf16>
    %181 = vector.shape_cast %180 : vector<1x128x512xbf16> to vector<128x512xbf16>
    %cst_103 = arith.constant dense<0.000000e+00> : vector<8x512xf32>
    %182 = tpu.matmul %42, %181, %cst_103 {dimension_numbers = #tpu.dot_dimension_numbers<[1], [0], [0], [1], [0, 0, 1, 1], [], []>} : vector<8x128xbf16>, vector<128x512xbf16>, vector<8x512xf32> -> vector<8x512xf32>
    %183 = arith.addf %179, %182 : vector<8x512xf32>
    %c2_104 = arith.constant 2 : index
    %c0_105 = arith.constant 0 : index
    %c0_106 = arith.constant 0 : index
    %184 = vector.load %arg1[%c2_104, %c0_105, %c0_106] : memref<4x1x512xf32, #tpu.memory_space<vmem>>, vector<1x1x512xf32>
    %185 = vector.shape_cast %184 : vector<1x1x512xf32> to vector<1x512xf32>
    %186 = vector.broadcast %185 : vector<1x512xf32> to vector<8x512xf32>
    %187 = arith.addf %183, %186 : vector<8x512xf32>
    %188 = vector.extract_strided_slice %187 {offsets = [0, 0], sizes = [8, 384], strides = [1, 1]} : vector<8x512xf32> to vector<8x384xf32>
    %189 = arith.negf %188 : vector<8x384xf32>
    %190 = math.exp %189 : vector<8x384xf32>
    %cst_107 = arith.constant 1.000000e+00 : f32
    %191 = vector.broadcast %cst_107 : f32 to vector<8x384xf32>
    %192 = arith.addf %191, %190 : vector<8x384xf32>
    %193 = arith.divf %191, %192 : vector<8x384xf32>
    %194 = vector.extract_strided_slice %187 {offsets = [0, 384], sizes = [8, 128], strides = [1, 1]} : vector<8x512xf32> to vector<8x128xf32>
    %195 = math.tanh %194 : vector<8x128xf32>
    %196 = vector.extract_strided_slice %193 {offsets = [0, 0], sizes = [8, 128], strides = [1, 1]} : vector<8x384xf32> to vector<8x128xf32>
    %197 = vector.extract_strided_slice %193 {offsets = [0, 128], sizes = [8, 128], strides = [1, 1]} : vector<8x384xf32> to vector<8x128xf32>
    %198 = vector.extract_strided_slice %193 {offsets = [0, 256], sizes = [8, 128], strides = [1, 1]} : vector<8x384xf32> to vector<8x128xf32>
    %199 = arith.mulf %197, %41 : vector<8x128xf32>
    %200 = arith.mulf %196, %195 : vector<8x128xf32>
    %201 = arith.addf %199, %200 : vector<8x128xf32>
    %202 = math.tanh %201 : vector<8x128xf32>
    %203 = arith.mulf %198, %202 : vector<8x128xf32>
    %204 = arith.truncf %203 : vector<8x128xf32> to vector<8x128xbf16>
    %c24 = arith.constant 24 : index
    %c0_108 = arith.constant 0 : index
    %205 = vector.load %arg9[%c24, %c0_108] : memref<56x512xf32, #tpu.memory_space<vmem>>, vector<8x512xf32>
    %c0_109 = arith.constant 0 : index
    %c128_110 = arith.constant 128 : index
    %c0_111 = arith.constant 0 : index
    %206 = vector.load %arg7[%c0_109, %c128_110, %c0_111] : memref<4x256x512xbf16, #tpu.memory_space<vmem>>, vector<1x128x512xbf16>
    %207 = vector.shape_cast %206 : vector<1x128x512xbf16> to vector<128x512xbf16>
    %cst_112 = arith.constant dense<0.000000e+00> : vector<8x512xf32>
    %208 = tpu.matmul %142, %207, %cst_112 {dimension_numbers = #tpu.dot_dimension_numbers<[1], [0], [0], [1], [0, 0, 1, 1], [], []>} : vector<8x128xbf16>, vector<128x512xbf16>, vector<8x512xf32> -> vector<8x512xf32>
    %209 = arith.addf %205, %208 : vector<8x512xf32>
    %210 = vector.extract_strided_slice %209 {offsets = [0, 0], sizes = [8, 384], strides = [1, 1]} : vector<8x512xf32> to vector<8x384xf32>
    %211 = arith.negf %210 : vector<8x384xf32>
    %212 = math.exp %211 : vector<8x384xf32>
    %cst_113 = arith.constant 1.000000e+00 : f32
    %213 = vector.broadcast %cst_113 : f32 to vector<8x384xf32>
    %214 = arith.addf %213, %212 : vector<8x384xf32>
    %215 = arith.divf %213, %214 : vector<8x384xf32>
    %216 = vector.extract_strided_slice %209 {offsets = [0, 384], sizes = [8, 128], strides = [1, 1]} : vector<8x512xf32> to vector<8x128xf32>
    %217 = math.tanh %216 : vector<8x128xf32>
    %218 = vector.extract_strided_slice %215 {offsets = [0, 0], sizes = [8, 128], strides = [1, 1]} : vector<8x384xf32> to vector<8x128xf32>
    %219 = vector.extract_strided_slice %215 {offsets = [0, 128], sizes = [8, 128], strides = [1, 1]} : vector<8x384xf32> to vector<8x128xf32>
    %220 = vector.extract_strided_slice %215 {offsets = [0, 256], sizes = [8, 128], strides = [1, 1]} : vector<8x384xf32> to vector<8x128xf32>
    %221 = arith.mulf %219, %139 : vector<8x128xf32>
    %222 = arith.mulf %218, %217 : vector<8x128xf32>
    %223 = arith.addf %221, %222 : vector<8x128xf32>
    %224 = math.tanh %223 : vector<8x128xf32>
    %225 = arith.mulf %220, %224 : vector<8x128xf32>
    %226 = arith.truncf %225 : vector<8x128xf32> to vector<8x128xbf16>
    %c1_114 = arith.constant 1 : index
    %c0_115 = arith.constant 0 : index
    %c0_116 = arith.constant 0 : index
    %227 = vector.load %arg7[%c1_114, %c0_115, %c0_116] : memref<4x256x512xbf16, #tpu.memory_space<vmem>>, vector<1x128x512xbf16>
    %228 = vector.shape_cast %227 : vector<1x128x512xbf16> to vector<128x512xbf16>
    %cst_117 = arith.constant dense<0.000000e+00> : vector<8x512xf32>
    %229 = tpu.matmul %142, %228, %cst_117 {dimension_numbers = #tpu.dot_dimension_numbers<[1], [0], [0], [1], [0, 0, 1, 1], [], []>} : vector<8x128xbf16>, vector<128x512xbf16>, vector<8x512xf32> -> vector<8x512xf32>
    %c1_118 = arith.constant 1 : index
    %c128_119 = arith.constant 128 : index
    %c0_120 = arith.constant 0 : index
    %230 = vector.load %arg7[%c1_118, %c128_119, %c0_120] : memref<4x256x512xbf16, #tpu.memory_space<vmem>>, vector<1x128x512xbf16>
    %231 = vector.shape_cast %230 : vector<1x128x512xbf16> to vector<128x512xbf16>
    %cst_121 = arith.constant dense<0.000000e+00> : vector<8x512xf32>
    %232 = tpu.matmul %170, %231, %cst_121 {dimension_numbers = #tpu.dot_dimension_numbers<[1], [0], [0], [1], [0, 0, 1, 1], [], []>} : vector<8x128xbf16>, vector<128x512xbf16>, vector<8x512xf32> -> vector<8x512xf32>
    %233 = arith.addf %229, %232 : vector<8x512xf32>
    %c1_122 = arith.constant 1 : index
    %c0_123 = arith.constant 0 : index
    %c0_124 = arith.constant 0 : index
    %234 = vector.load %arg1[%c1_122, %c0_123, %c0_124] : memref<4x1x512xf32, #tpu.memory_space<vmem>>, vector<1x1x512xf32>
    %235 = vector.shape_cast %234 : vector<1x1x512xf32> to vector<1x512xf32>
    %236 = vector.broadcast %235 : vector<1x512xf32> to vector<8x512xf32>
    %237 = arith.addf %233, %236 : vector<8x512xf32>
    %238 = vector.extract_strided_slice %237 {offsets = [0, 0], sizes = [8, 384], strides = [1, 1]} : vector<8x512xf32> to vector<8x384xf32>
    %239 = arith.negf %238 : vector<8x384xf32>
    %240 = math.exp %239 : vector<8x384xf32>
    %cst_125 = arith.constant 1.000000e+00 : f32
    %241 = vector.broadcast %cst_125 : f32 to vector<8x384xf32>
    %242 = arith.addf %241, %240 : vector<8x384xf32>
    %243 = arith.divf %241, %242 : vector<8x384xf32>
    %244 = vector.extract_strided_slice %237 {offsets = [0, 384], sizes = [8, 128], strides = [1, 1]} : vector<8x512xf32> to vector<8x128xf32>
    %245 = math.tanh %244 : vector<8x128xf32>
    %246 = vector.extract_strided_slice %243 {offsets = [0, 0], sizes = [8, 128], strides = [1, 1]} : vector<8x384xf32> to vector<8x128xf32>
    %247 = vector.extract_strided_slice %243 {offsets = [0, 128], sizes = [8, 128], strides = [1, 1]} : vector<8x384xf32> to vector<8x128xf32>
    %248 = vector.extract_strided_slice %243 {offsets = [0, 256], sizes = [8, 128], strides = [1, 1]} : vector<8x384xf32> to vector<8x128xf32>
    %249 = arith.mulf %247, %167 : vector<8x128xf32>
    %250 = arith.mulf %246, %245 : vector<8x128xf32>
    %251 = arith.addf %249, %250 : vector<8x128xf32>
    %252 = math.tanh %251 : vector<8x128xf32>
    %253 = arith.mulf %248, %252 : vector<8x128xf32>
    %254 = arith.truncf %253 : vector<8x128xf32> to vector<8x128xbf16>
    %c2_126 = arith.constant 2 : index
    %c0_127 = arith.constant 0 : index
    %c0_128 = arith.constant 0 : index
    %255 = vector.load %arg7[%c2_126, %c0_127, %c0_128] : memref<4x256x512xbf16, #tpu.memory_space<vmem>>, vector<1x128x512xbf16>
    %256 = vector.shape_cast %255 : vector<1x128x512xbf16> to vector<128x512xbf16>
    %cst_129 = arith.constant dense<0.000000e+00> : vector<8x512xf32>
    %257 = tpu.matmul %170, %256, %cst_129 {dimension_numbers = #tpu.dot_dimension_numbers<[1], [0], [0], [1], [0, 0, 1, 1], [], []>} : vector<8x128xbf16>, vector<128x512xbf16>, vector<8x512xf32> -> vector<8x512xf32>
    %c2_130 = arith.constant 2 : index
    %c128_131 = arith.constant 128 : index
    %c0_132 = arith.constant 0 : index
    %258 = vector.load %arg7[%c2_130, %c128_131, %c0_132] : memref<4x256x512xbf16, #tpu.memory_space<vmem>>, vector<1x128x512xbf16>
    %259 = vector.shape_cast %258 : vector<1x128x512xbf16> to vector<128x512xbf16>
    %cst_133 = arith.constant dense<0.000000e+00> : vector<8x512xf32>
    %260 = tpu.matmul %204, %259, %cst_133 {dimension_numbers = #tpu.dot_dimension_numbers<[1], [0], [0], [1], [0, 0, 1, 1], [], []>} : vector<8x128xbf16>, vector<128x512xbf16>, vector<8x512xf32> -> vector<8x512xf32>
    %261 = arith.addf %257, %260 : vector<8x512xf32>
    %c2_134 = arith.constant 2 : index
    %c0_135 = arith.constant 0 : index
    %c0_136 = arith.constant 0 : index
    %262 = vector.load %arg1[%c2_134, %c0_135, %c0_136] : memref<4x1x512xf32, #tpu.memory_space<vmem>>, vector<1x1x512xf32>
    %263 = vector.shape_cast %262 : vector<1x1x512xf32> to vector<1x512xf32>
    %264 = vector.broadcast %263 : vector<1x512xf32> to vector<8x512xf32>
    %265 = arith.addf %261, %264 : vector<8x512xf32>
    %266 = vector.extract_strided_slice %265 {offsets = [0, 0], sizes = [8, 384], strides = [1, 1]} : vector<8x512xf32> to vector<8x384xf32>
    %267 = arith.negf %266 : vector<8x384xf32>
    %268 = math.exp %267 : vector<8x384xf32>
    %cst_137 = arith.constant 1.000000e+00 : f32
    %269 = vector.broadcast %cst_137 : f32 to vector<8x384xf32>
    %270 = arith.addf %269, %268 : vector<8x384xf32>
    %271 = arith.divf %269, %270 : vector<8x384xf32>
    %272 = vector.extract_strided_slice %265 {offsets = [0, 384], sizes = [8, 128], strides = [1, 1]} : vector<8x512xf32> to vector<8x128xf32>
    %273 = math.tanh %272 : vector<8x128xf32>
    %274 = vector.extract_strided_slice %271 {offsets = [0, 0], sizes = [8, 128], strides = [1, 1]} : vector<8x384xf32> to vector<8x128xf32>
    %275 = vector.extract_strided_slice %271 {offsets = [0, 128], sizes = [8, 128], strides = [1, 1]} : vector<8x384xf32> to vector<8x128xf32>
    %276 = vector.extract_strided_slice %271 {offsets = [0, 256], sizes = [8, 128], strides = [1, 1]} : vector<8x384xf32> to vector<8x128xf32>
    %277 = arith.mulf %275, %201 : vector<8x128xf32>
    %278 = arith.mulf %274, %273 : vector<8x128xf32>
    %279 = arith.addf %277, %278 : vector<8x128xf32>
    %280 = math.tanh %279 : vector<8x128xf32>
    %281 = arith.mulf %276, %280 : vector<8x128xf32>
    %282 = arith.truncf %281 : vector<8x128xf32> to vector<8x128xbf16>
    %c3_i32_138 = arith.constant 3 : i32
    %c3_i32_139 = arith.constant 3 : i32
    %c3_i32_140 = arith.constant 3 : i32
    %c0_i32_141 = arith.constant 0 : i32
    %c0_i32_142 = arith.constant 0 : i32
    %283 = tpu.memref_slice %arg3[%c3_i32_138, %c0_i32_141, %c0_i32_142] : memref<4x256x512xbf16, #tpu.memory_space<any>> -> memref<1x256x512xbf16, #tpu.memory_space<any>>
    %284 = tpu.memref_squeeze %283 : memref<1x256x512xbf16, #tpu.memory_space<any>> -> memref<256x512xbf16, #tpu.memory_space<any>>
    %c0_i32_143 = arith.constant 0 : i32
    %c0_i32_144 = arith.constant 0 : i32
    %285 = tpu.memref_slice %arg7[%c3_i32_139, %c0_i32_143, %c0_i32_144] : memref<4x256x512xbf16, #tpu.memory_space<vmem>> -> memref<1x256x512xbf16, #tpu.memory_space<vmem>>
    %286 = tpu.memref_squeeze %285 : memref<1x256x512xbf16, #tpu.memory_space<vmem>> -> memref<256x512xbf16, #tpu.memory_space<vmem>>
    %287 = tpu.memref_slice %arg10[%c3_i32_140] : memref<5x!tpu.dma_semaphore, #tpu.memory_space<semaphore_mem>> -> memref<1x!tpu.dma_semaphore, #tpu.memory_space<semaphore_mem>>
    %288 = tpu.memref_squeeze %287 : memref<1x!tpu.dma_semaphore, #tpu.memory_space<semaphore_mem>> -> memref<!tpu.dma_semaphore, #tpu.memory_space<semaphore_mem>>
    tpu.wait_dma2 semaphore(%288 : memref<!tpu.dma_semaphore, #tpu.memory_space<semaphore_mem>>) src(%284 : memref<256x512xbf16, #tpu.memory_space<any>>) dst(%286 : memref<256x512xbf16, #tpu.memory_space<vmem>>)
    %c3 = arith.constant 3 : index
    %c0_145 = arith.constant 0 : index
    %c0_146 = arith.constant 0 : index
    %289 = vector.load %arg7[%c3, %c0_145, %c0_146] : memref<4x256x512xbf16, #tpu.memory_space<vmem>>, vector<1x128x512xbf16>
    %290 = vector.shape_cast %289 : vector<1x128x512xbf16> to vector<128x512xbf16>
    %cst_147 = arith.constant dense<0.000000e+00> : vector<8x512xf32>
    %291 = tpu.matmul %204, %290, %cst_147 {dimension_numbers = #tpu.dot_dimension_numbers<[1], [0], [0], [1], [0, 0, 1, 1], [], []>} : vector<8x128xbf16>, vector<128x512xbf16>, vector<8x512xf32> -> vector<8x512xf32>
    %c3_148 = arith.constant 3 : index
    %c128_149 = arith.constant 128 : index
    %c0_150 = arith.constant 0 : index
    %292 = vector.load %arg7[%c3_148, %c128_149, %c0_150] : memref<4x256x512xbf16, #tpu.memory_space<vmem>>, vector<1x128x512xbf16>
    %293 = vector.shape_cast %292 : vector<1x128x512xbf16> to vector<128x512xbf16>
    %cst_151 = arith.constant dense<0.000000e+00> : vector<8x512xf32>
    %294 = tpu.matmul %42, %293, %cst_151 {dimension_numbers = #tpu.dot_dimension_numbers<[1], [0], [0], [1], [0, 0, 1, 1], [], []>} : vector<8x128xbf16>, vector<128x512xbf16>, vector<8x512xf32> -> vector<8x512xf32>
    %295 = arith.addf %291, %294 : vector<8x512xf32>
    %c3_152 = arith.constant 3 : index
    %c0_153 = arith.constant 0 : index
    %c0_154 = arith.constant 0 : index
    %296 = vector.load %arg1[%c3_152, %c0_153, %c0_154] : memref<4x1x512xf32, #tpu.memory_space<vmem>>, vector<1x1x512xf32>
    %297 = vector.shape_cast %296 : vector<1x1x512xf32> to vector<1x512xf32>
    %298 = vector.broadcast %297 : vector<1x512xf32> to vector<8x512xf32>
    %299 = arith.addf %295, %298 : vector<8x512xf32>
    %300 = vector.extract_strided_slice %299 {offsets = [0, 0], sizes = [8, 384], strides = [1, 1]} : vector<8x512xf32> to vector<8x384xf32>
    %301 = arith.negf %300 : vector<8x384xf32>
    %302 = math.exp %301 : vector<8x384xf32>
    %cst_155 = arith.constant 1.000000e+00 : f32
    %303 = vector.broadcast %cst_155 : f32 to vector<8x384xf32>
    %304 = arith.addf %303, %302 : vector<8x384xf32>
    %305 = arith.divf %303, %304 : vector<8x384xf32>
    %306 = vector.extract_strided_slice %299 {offsets = [0, 384], sizes = [8, 128], strides = [1, 1]} : vector<8x512xf32> to vector<8x128xf32>
    %307 = math.tanh %306 : vector<8x128xf32>
    %308 = vector.extract_strided_slice %305 {offsets = [0, 0], sizes = [8, 128], strides = [1, 1]} : vector<8x384xf32> to vector<8x128xf32>
    %309 = vector.extract_strided_slice %305 {offsets = [0, 128], sizes = [8, 128], strides = [1, 1]} : vector<8x384xf32> to vector<8x128xf32>
    %310 = vector.extract_strided_slice %305 {offsets = [0, 256], sizes = [8, 128], strides = [1, 1]} : vector<8x384xf32> to vector<8x128xf32>
    %311 = arith.mulf %309, %41 : vector<8x128xf32>
    %312 = arith.mulf %308, %307 : vector<8x128xf32>
    %313 = arith.addf %311, %312 : vector<8x128xf32>
    %314 = math.tanh %313 : vector<8x128xf32>
    %315 = arith.mulf %310, %314 : vector<8x128xf32>
    %316 = arith.truncf %315 : vector<8x128xf32> to vector<8x128xbf16>
    %c32 = arith.constant 32 : index
    %c0_156 = arith.constant 0 : index
    %317 = vector.load %arg9[%c32, %c0_156] : memref<56x512xf32, #tpu.memory_space<vmem>>, vector<8x512xf32>
    %c0_157 = arith.constant 0 : index
    %c128_158 = arith.constant 128 : index
    %c0_159 = arith.constant 0 : index
    %318 = vector.load %arg7[%c0_157, %c128_158, %c0_159] : memref<4x256x512xbf16, #tpu.memory_space<vmem>>, vector<1x128x512xbf16>
    %319 = vector.shape_cast %318 : vector<1x128x512xbf16> to vector<128x512xbf16>
    %cst_160 = arith.constant dense<0.000000e+00> : vector<8x512xf32>
    %320 = tpu.matmul %226, %319, %cst_160 {dimension_numbers = #tpu.dot_dimension_numbers<[1], [0], [0], [1], [0, 0, 1, 1], [], []>} : vector<8x128xbf16>, vector<128x512xbf16>, vector<8x512xf32> -> vector<8x512xf32>
    %321 = arith.addf %317, %320 : vector<8x512xf32>
    %322 = vector.extract_strided_slice %321 {offsets = [0, 0], sizes = [8, 384], strides = [1, 1]} : vector<8x512xf32> to vector<8x384xf32>
    %323 = arith.negf %322 : vector<8x384xf32>
    %324 = math.exp %323 : vector<8x384xf32>
    %cst_161 = arith.constant 1.000000e+00 : f32
    %325 = vector.broadcast %cst_161 : f32 to vector<8x384xf32>
    %326 = arith.addf %325, %324 : vector<8x384xf32>
    %327 = arith.divf %325, %326 : vector<8x384xf32>
    %328 = vector.extract_strided_slice %321 {offsets = [0, 384], sizes = [8, 128], strides = [1, 1]} : vector<8x512xf32> to vector<8x128xf32>
    %329 = math.tanh %328 : vector<8x128xf32>
    %330 = vector.extract_strided_slice %327 {offsets = [0, 0], sizes = [8, 128], strides = [1, 1]} : vector<8x384xf32> to vector<8x128xf32>
    %331 = vector.extract_strided_slice %327 {offsets = [0, 128], sizes = [8, 128], strides = [1, 1]} : vector<8x384xf32> to vector<8x128xf32>
    %332 = vector.extract_strided_slice %327 {offsets = [0, 256], sizes = [8, 128], strides = [1, 1]} : vector<8x384xf32> to vector<8x128xf32>
    %333 = arith.mulf %331, %223 : vector<8x128xf32>
    %334 = arith.mulf %330, %329 : vector<8x128xf32>
    %335 = arith.addf %333, %334 : vector<8x128xf32>
    %336 = math.tanh %335 : vector<8x128xf32>
    %337 = arith.mulf %332, %336 : vector<8x128xf32>
    %338 = arith.truncf %337 : vector<8x128xf32> to vector<8x128xbf16>
    %c1_162 = arith.constant 1 : index
    %c0_163 = arith.constant 0 : index
    %c0_164 = arith.constant 0 : index
    %339 = vector.load %arg7[%c1_162, %c0_163, %c0_164] : memref<4x256x512xbf16, #tpu.memory_space<vmem>>, vector<1x128x512xbf16>
    %340 = vector.shape_cast %339 : vector<1x128x512xbf16> to vector<128x512xbf16>
    %cst_165 = arith.constant dense<0.000000e+00> : vector<8x512xf32>
    %341 = tpu.matmul %226, %340, %cst_165 {dimension_numbers = #tpu.dot_dimension_numbers<[1], [0], [0], [1], [0, 0, 1, 1], [], []>} : vector<8x128xbf16>, vector<128x512xbf16>, vector<8x512xf32> -> vector<8x512xf32>
    %c1_166 = arith.constant 1 : index
    %c128_167 = arith.constant 128 : index
    %c0_168 = arith.constant 0 : index
    %342 = vector.load %arg7[%c1_166, %c128_167, %c0_168] : memref<4x256x512xbf16, #tpu.memory_space<vmem>>, vector<1x128x512xbf16>
    %343 = vector.shape_cast %342 : vector<1x128x512xbf16> to vector<128x512xbf16>
    %cst_169 = arith.constant dense<0.000000e+00> : vector<8x512xf32>
    %344 = tpu.matmul %254, %343, %cst_169 {dimension_numbers = #tpu.dot_dimension_numbers<[1], [0], [0], [1], [0, 0, 1, 1], [], []>} : vector<8x128xbf16>, vector<128x512xbf16>, vector<8x512xf32> -> vector<8x512xf32>
    %345 = arith.addf %341, %344 : vector<8x512xf32>
    %c1_170 = arith.constant 1 : index
    %c0_171 = arith.constant 0 : index
    %c0_172 = arith.constant 0 : index
    %346 = vector.load %arg1[%c1_170, %c0_171, %c0_172] : memref<4x1x512xf32, #tpu.memory_space<vmem>>, vector<1x1x512xf32>
    %347 = vector.shape_cast %346 : vector<1x1x512xf32> to vector<1x512xf32>
    %348 = vector.broadcast %347 : vector<1x512xf32> to vector<8x512xf32>
    %349 = arith.addf %345, %348 : vector<8x512xf32>
    %350 = vector.extract_strided_slice %349 {offsets = [0, 0], sizes = [8, 384], strides = [1, 1]} : vector<8x512xf32> to vector<8x384xf32>
    %351 = arith.negf %350 : vector<8x384xf32>
    %352 = math.exp %351 : vector<8x384xf32>
    %cst_173 = arith.constant 1.000000e+00 : f32
    %353 = vector.broadcast %cst_173 : f32 to vector<8x384xf32>
    %354 = arith.addf %353, %352 : vector<8x384xf32>
    %355 = arith.divf %353, %354 : vector<8x384xf32>
    %356 = vector.extract_strided_slice %349 {offsets = [0, 384], sizes = [8, 128], strides = [1, 1]} : vector<8x512xf32> to vector<8x128xf32>
    %357 = math.tanh %356 : vector<8x128xf32>
    %358 = vector.extract_strided_slice %355 {offsets = [0, 0], sizes = [8, 128], strides = [1, 1]} : vector<8x384xf32> to vector<8x128xf32>
    %359 = vector.extract_strided_slice %355 {offsets = [0, 128], sizes = [8, 128], strides = [1, 1]} : vector<8x384xf32> to vector<8x128xf32>
    %360 = vector.extract_strided_slice %355 {offsets = [0, 256], sizes = [8, 128], strides = [1, 1]} : vector<8x384xf32> to vector<8x128xf32>
    %361 = arith.mulf %359, %251 : vector<8x128xf32>
    %362 = arith.mulf %358, %357 : vector<8x128xf32>
    %363 = arith.addf %361, %362 : vector<8x128xf32>
    %364 = math.tanh %363 : vector<8x128xf32>
    %365 = arith.mulf %360, %364 : vector<8x128xf32>
    %366 = arith.truncf %365 : vector<8x128xf32> to vector<8x128xbf16>
    %c2_174 = arith.constant 2 : index
    %c0_175 = arith.constant 0 : index
    %c0_176 = arith.constant 0 : index
    %367 = vector.load %arg7[%c2_174, %c0_175, %c0_176] : memref<4x256x512xbf16, #tpu.memory_space<vmem>>, vector<1x128x512xbf16>
    %368 = vector.shape_cast %367 : vector<1x128x512xbf16> to vector<128x512xbf16>
    %cst_177 = arith.constant dense<0.000000e+00> : vector<8x512xf32>
    %369 = tpu.matmul %254, %368, %cst_177 {dimension_numbers = #tpu.dot_dimension_numbers<[1], [0], [0], [1], [0, 0, 1, 1], [], []>} : vector<8x128xbf16>, vector<128x512xbf16>, vector<8x512xf32> -> vector<8x512xf32>
    %c2_178 = arith.constant 2 : index
    %c128_179 = arith.constant 128 : index
    %c0_180 = arith.constant 0 : index
    %370 = vector.load %arg7[%c2_178, %c128_179, %c0_180] : memref<4x256x512xbf16, #tpu.memory_space<vmem>>, vector<1x128x512xbf16>
    %371 = vector.shape_cast %370 : vector<1x128x512xbf16> to vector<128x512xbf16>
    %cst_181 = arith.constant dense<0.000000e+00> : vector<8x512xf32>
    %372 = tpu.matmul %282, %371, %cst_181 {dimension_numbers = #tpu.dot_dimension_numbers<[1], [0], [0], [1], [0, 0, 1, 1], [], []>} : vector<8x128xbf16>, vector<128x512xbf16>, vector<8x512xf32> -> vector<8x512xf32>
    %373 = arith.addf %369, %372 : vector<8x512xf32>
    %c2_182 = arith.constant 2 : index
    %c0_183 = arith.constant 0 : index
    %c0_184 = arith.constant 0 : index
    %374 = vector.load %arg1[%c2_182, %c0_183, %c0_184] : memref<4x1x512xf32, #tpu.memory_space<vmem>>, vector<1x1x512xf32>
    %375 = vector.shape_cast %374 : vector<1x1x512xf32> to vector<1x512xf32>
    %376 = vector.broadcast %375 : vector<1x512xf32> to vector<8x512xf32>
    %377 = arith.addf %373, %376 : vector<8x512xf32>
    %378 = vector.extract_strided_slice %377 {offsets = [0, 0], sizes = [8, 384], strides = [1, 1]} : vector<8x512xf32> to vector<8x384xf32>
    %379 = arith.negf %378 : vector<8x384xf32>
    %380 = math.exp %379 : vector<8x384xf32>
    %cst_185 = arith.constant 1.000000e+00 : f32
    %381 = vector.broadcast %cst_185 : f32 to vector<8x384xf32>
    %382 = arith.addf %381, %380 : vector<8x384xf32>
    %383 = arith.divf %381, %382 : vector<8x384xf32>
    %384 = vector.extract_strided_slice %377 {offsets = [0, 384], sizes = [8, 128], strides = [1, 1]} : vector<8x512xf32> to vector<8x128xf32>
    %385 = math.tanh %384 : vector<8x128xf32>
    %386 = vector.extract_strided_slice %383 {offsets = [0, 0], sizes = [8, 128], strides = [1, 1]} : vector<8x384xf32> to vector<8x128xf32>
    %387 = vector.extract_strided_slice %383 {offsets = [0, 128], sizes = [8, 128], strides = [1, 1]} : vector<8x384xf32> to vector<8x128xf32>
    %388 = vector.extract_strided_slice %383 {offsets = [0, 256], sizes = [8, 128], strides = [1, 1]} : vector<8x384xf32> to vector<8x128xf32>
    %389 = arith.mulf %387, %279 : vector<8x128xf32>
    %390 = arith.mulf %386, %385 : vector<8x128xf32>
    %391 = arith.addf %389, %390 : vector<8x128xf32>
    %392 = math.tanh %391 : vector<8x128xf32>
    %393 = arith.mulf %388, %392 : vector<8x128xf32>
    %394 = arith.truncf %393 : vector<8x128xf32> to vector<8x128xbf16>
    %c3_186 = arith.constant 3 : index
    %c0_187 = arith.constant 0 : index
    %c0_188 = arith.constant 0 : index
    %395 = vector.load %arg7[%c3_186, %c0_187, %c0_188] : memref<4x256x512xbf16, #tpu.memory_space<vmem>>, vector<1x128x512xbf16>
    %396 = vector.shape_cast %395 : vector<1x128x512xbf16> to vector<128x512xbf16>
    %cst_189 = arith.constant dense<0.000000e+00> : vector<8x512xf32>
    %397 = tpu.matmul %282, %396, %cst_189 {dimension_numbers = #tpu.dot_dimension_numbers<[1], [0], [0], [1], [0, 0, 1, 1], [], []>} : vector<8x128xbf16>, vector<128x512xbf16>, vector<8x512xf32> -> vector<8x512xf32>
    %c3_190 = arith.constant 3 : index
    %c128_191 = arith.constant 128 : index
    %c0_192 = arith.constant 0 : index
    %398 = vector.load %arg7[%c3_190, %c128_191, %c0_192] : memref<4x256x512xbf16, #tpu.memory_space<vmem>>, vector<1x128x512xbf16>
    %399 = vector.shape_cast %398 : vector<1x128x512xbf16> to vector<128x512xbf16>
    %cst_193 = arith.constant dense<0.000000e+00> : vector<8x512xf32>
    %400 = tpu.matmul %316, %399, %cst_193 {dimension_numbers = #tpu.dot_dimension_numbers<[1], [0], [0], [1], [0, 0, 1, 1], [], []>} : vector<8x128xbf16>, vector<128x512xbf16>, vector<8x512xf32> -> vector<8x512xf32>
    %401 = arith.addf %397, %400 : vector<8x512xf32>
    %c3_194 = arith.constant 3 : index
    %c0_195 = arith.constant 0 : index
    %c0_196 = arith.constant 0 : index
    %402 = vector.load %arg1[%c3_194, %c0_195, %c0_196] : memref<4x1x512xf32, #tpu.memory_space<vmem>>, vector<1x1x512xf32>
    %403 = vector.shape_cast %402 : vector<1x1x512xf32> to vector<1x512xf32>
    %404 = vector.broadcast %403 : vector<1x512xf32> to vector<8x512xf32>
    %405 = arith.addf %401, %404 : vector<8x512xf32>
    %406 = vector.extract_strided_slice %405 {offsets = [0, 0], sizes = [8, 384], strides = [1, 1]} : vector<8x512xf32> to vector<8x384xf32>
    %407 = arith.negf %406 : vector<8x384xf32>
    %408 = math.exp %407 : vector<8x384xf32>
    %cst_197 = arith.constant 1.000000e+00 : f32
    %409 = vector.broadcast %cst_197 : f32 to vector<8x384xf32>
    %410 = arith.addf %409, %408 : vector<8x384xf32>
    %411 = arith.divf %409, %410 : vector<8x384xf32>
    %412 = vector.extract_strided_slice %405 {offsets = [0, 384], sizes = [8, 128], strides = [1, 1]} : vector<8x512xf32> to vector<8x128xf32>
    %413 = math.tanh %412 : vector<8x128xf32>
    %414 = vector.extract_strided_slice %411 {offsets = [0, 0], sizes = [8, 128], strides = [1, 1]} : vector<8x384xf32> to vector<8x128xf32>
    %415 = vector.extract_strided_slice %411 {offsets = [0, 128], sizes = [8, 128], strides = [1, 1]} : vector<8x384xf32> to vector<8x128xf32>
    %416 = vector.extract_strided_slice %411 {offsets = [0, 256], sizes = [8, 128], strides = [1, 1]} : vector<8x384xf32> to vector<8x128xf32>
    %417 = arith.mulf %415, %313 : vector<8x128xf32>
    %418 = arith.mulf %414, %413 : vector<8x128xf32>
    %419 = arith.addf %417, %418 : vector<8x128xf32>
    %420 = math.tanh %419 : vector<8x128xf32>
    %421 = arith.mulf %416, %420 : vector<8x128xf32>
    %422 = arith.truncf %421 : vector<8x128xf32> to vector<8x128xbf16>
    %c40 = arith.constant 40 : index
    %c0_198 = arith.constant 0 : index
    %423 = vector.load %arg9[%c40, %c0_198] : memref<56x512xf32, #tpu.memory_space<vmem>>, vector<8x512xf32>
    %c0_199 = arith.constant 0 : index
    %c128_200 = arith.constant 128 : index
    %c0_201 = arith.constant 0 : index
    %424 = vector.load %arg7[%c0_199, %c128_200, %c0_201] : memref<4x256x512xbf16, #tpu.memory_space<vmem>>, vector<1x128x512xbf16>
    %425 = vector.shape_cast %424 : vector<1x128x512xbf16> to vector<128x512xbf16>
    %cst_202 = arith.constant dense<0.000000e+00> : vector<8x512xf32>
    %426 = tpu.matmul %338, %425, %cst_202 {dimension_numbers = #tpu.dot_dimension_numbers<[1], [0], [0], [1], [0, 0, 1, 1], [], []>} : vector<8x128xbf16>, vector<128x512xbf16>, vector<8x512xf32> -> vector<8x512xf32>
    %427 = arith.addf %423, %426 : vector<8x512xf32>
    %428 = vector.extract_strided_slice %427 {offsets = [0, 0], sizes = [8, 384], strides = [1, 1]} : vector<8x512xf32> to vector<8x384xf32>
    %429 = arith.negf %428 : vector<8x384xf32>
    %430 = math.exp %429 : vector<8x384xf32>
    %cst_203 = arith.constant 1.000000e+00 : f32
    %431 = vector.broadcast %cst_203 : f32 to vector<8x384xf32>
    %432 = arith.addf %431, %430 : vector<8x384xf32>
    %433 = arith.divf %431, %432 : vector<8x384xf32>
    %434 = vector.extract_strided_slice %427 {offsets = [0, 384], sizes = [8, 128], strides = [1, 1]} : vector<8x512xf32> to vector<8x128xf32>
    %435 = math.tanh %434 : vector<8x128xf32>
    %436 = vector.extract_strided_slice %433 {offsets = [0, 0], sizes = [8, 128], strides = [1, 1]} : vector<8x384xf32> to vector<8x128xf32>
    %437 = vector.extract_strided_slice %433 {offsets = [0, 128], sizes = [8, 128], strides = [1, 1]} : vector<8x384xf32> to vector<8x128xf32>
    %438 = vector.extract_strided_slice %433 {offsets = [0, 256], sizes = [8, 128], strides = [1, 1]} : vector<8x384xf32> to vector<8x128xf32>
    %439 = arith.mulf %437, %335 : vector<8x128xf32>
    %440 = arith.mulf %436, %435 : vector<8x128xf32>
    %441 = arith.addf %439, %440 : vector<8x128xf32>
    %442 = math.tanh %441 : vector<8x128xf32>
    %443 = arith.mulf %438, %442 : vector<8x128xf32>
    %444 = arith.truncf %443 : vector<8x128xf32> to vector<8x128xbf16>
    %c1_204 = arith.constant 1 : index
    %c0_205 = arith.constant 0 : index
    %c0_206 = arith.constant 0 : index
    %445 = vector.load %arg7[%c1_204, %c0_205, %c0_206] : memref<4x256x512xbf16, #tpu.memory_space<vmem>>, vector<1x128x512xbf16>
    %446 = vector.shape_cast %445 : vector<1x128x512xbf16> to vector<128x512xbf16>
    %cst_207 = arith.constant dense<0.000000e+00> : vector<8x512xf32>
    %447 = tpu.matmul %338, %446, %cst_207 {dimension_numbers = #tpu.dot_dimension_numbers<[1], [0], [0], [1], [0, 0, 1, 1], [], []>} : vector<8x128xbf16>, vector<128x512xbf16>, vector<8x512xf32> -> vector<8x512xf32>
    %c1_208 = arith.constant 1 : index
    %c128_209 = arith.constant 128 : index
    %c0_210 = arith.constant 0 : index
    %448 = vector.load %arg7[%c1_208, %c128_209, %c0_210] : memref<4x256x512xbf16, #tpu.memory_space<vmem>>, vector<1x128x512xbf16>
    %449 = vector.shape_cast %448 : vector<1x128x512xbf16> to vector<128x512xbf16>
    %cst_211 = arith.constant dense<0.000000e+00> : vector<8x512xf32>
    %450 = tpu.matmul %366, %449, %cst_211 {dimension_numbers = #tpu.dot_dimension_numbers<[1], [0], [0], [1], [0, 0, 1, 1], [], []>} : vector<8x128xbf16>, vector<128x512xbf16>, vector<8x512xf32> -> vector<8x512xf32>
    %451 = arith.addf %447, %450 : vector<8x512xf32>
    %c1_212 = arith.constant 1 : index
    %c0_213 = arith.constant 0 : index
    %c0_214 = arith.constant 0 : index
    %452 = vector.load %arg1[%c1_212, %c0_213, %c0_214] : memref<4x1x512xf32, #tpu.memory_space<vmem>>, vector<1x1x512xf32>
    %453 = vector.shape_cast %452 : vector<1x1x512xf32> to vector<1x512xf32>
    %454 = vector.broadcast %453 : vector<1x512xf32> to vector<8x512xf32>
    %455 = arith.addf %451, %454 : vector<8x512xf32>
    %456 = vector.extract_strided_slice %455 {offsets = [0, 0], sizes = [8, 384], strides = [1, 1]} : vector<8x512xf32> to vector<8x384xf32>
    %457 = arith.negf %456 : vector<8x384xf32>
    %458 = math.exp %457 : vector<8x384xf32>
    %cst_215 = arith.constant 1.000000e+00 : f32
    %459 = vector.broadcast %cst_215 : f32 to vector<8x384xf32>
    %460 = arith.addf %459, %458 : vector<8x384xf32>
    %461 = arith.divf %459, %460 : vector<8x384xf32>
    %462 = vector.extract_strided_slice %455 {offsets = [0, 384], sizes = [8, 128], strides = [1, 1]} : vector<8x512xf32> to vector<8x128xf32>
    %463 = math.tanh %462 : vector<8x128xf32>
    %464 = vector.extract_strided_slice %461 {offsets = [0, 0], sizes = [8, 128], strides = [1, 1]} : vector<8x384xf32> to vector<8x128xf32>
    %465 = vector.extract_strided_slice %461 {offsets = [0, 128], sizes = [8, 128], strides = [1, 1]} : vector<8x384xf32> to vector<8x128xf32>
    %466 = vector.extract_strided_slice %461 {offsets = [0, 256], sizes = [8, 128], strides = [1, 1]} : vector<8x384xf32> to vector<8x128xf32>
    %467 = arith.mulf %465, %363 : vector<8x128xf32>
    %468 = arith.mulf %464, %463 : vector<8x128xf32>
    %469 = arith.addf %467, %468 : vector<8x128xf32>
    %470 = math.tanh %469 : vector<8x128xf32>
    %471 = arith.mulf %466, %470 : vector<8x128xf32>
    %472 = arith.truncf %471 : vector<8x128xf32> to vector<8x128xbf16>
    %c2_216 = arith.constant 2 : index
    %c0_217 = arith.constant 0 : index
    %c0_218 = arith.constant 0 : index
    %473 = vector.load %arg7[%c2_216, %c0_217, %c0_218] : memref<4x256x512xbf16, #tpu.memory_space<vmem>>, vector<1x128x512xbf16>
    %474 = vector.shape_cast %473 : vector<1x128x512xbf16> to vector<128x512xbf16>
    %cst_219 = arith.constant dense<0.000000e+00> : vector<8x512xf32>
    %475 = tpu.matmul %366, %474, %cst_219 {dimension_numbers = #tpu.dot_dimension_numbers<[1], [0], [0], [1], [0, 0, 1, 1], [], []>} : vector<8x128xbf16>, vector<128x512xbf16>, vector<8x512xf32> -> vector<8x512xf32>
    %c2_220 = arith.constant 2 : index
    %c128_221 = arith.constant 128 : index
    %c0_222 = arith.constant 0 : index
    %476 = vector.load %arg7[%c2_220, %c128_221, %c0_222] : memref<4x256x512xbf16, #tpu.memory_space<vmem>>, vector<1x128x512xbf16>
    %477 = vector.shape_cast %476 : vector<1x128x512xbf16> to vector<128x512xbf16>
    %cst_223 = arith.constant dense<0.000000e+00> : vector<8x512xf32>
    %478 = tpu.matmul %394, %477, %cst_223 {dimension_numbers = #tpu.dot_dimension_numbers<[1], [0], [0], [1], [0, 0, 1, 1], [], []>} : vector<8x128xbf16>, vector<128x512xbf16>, vector<8x512xf32> -> vector<8x512xf32>
    %479 = arith.addf %475, %478 : vector<8x512xf32>
    %c2_224 = arith.constant 2 : index
    %c0_225 = arith.constant 0 : index
    %c0_226 = arith.constant 0 : index
    %480 = vector.load %arg1[%c2_224, %c0_225, %c0_226] : memref<4x1x512xf32, #tpu.memory_space<vmem>>, vector<1x1x512xf32>
    %481 = vector.shape_cast %480 : vector<1x1x512xf32> to vector<1x512xf32>
    %482 = vector.broadcast %481 : vector<1x512xf32> to vector<8x512xf32>
    %483 = arith.addf %479, %482 : vector<8x512xf32>
    %484 = vector.extract_strided_slice %483 {offsets = [0, 0], sizes = [8, 384], strides = [1, 1]} : vector<8x512xf32> to vector<8x384xf32>
    %485 = arith.negf %484 : vector<8x384xf32>
    %486 = math.exp %485 : vector<8x384xf32>
    %cst_227 = arith.constant 1.000000e+00 : f32
    %487 = vector.broadcast %cst_227 : f32 to vector<8x384xf32>
    %488 = arith.addf %487, %486 : vector<8x384xf32>
    %489 = arith.divf %487, %488 : vector<8x384xf32>
    %490 = vector.extract_strided_slice %483 {offsets = [0, 384], sizes = [8, 128], strides = [1, 1]} : vector<8x512xf32> to vector<8x128xf32>
    %491 = math.tanh %490 : vector<8x128xf32>
    %492 = vector.extract_strided_slice %489 {offsets = [0, 0], sizes = [8, 128], strides = [1, 1]} : vector<8x384xf32> to vector<8x128xf32>
    %493 = vector.extract_strided_slice %489 {offsets = [0, 128], sizes = [8, 128], strides = [1, 1]} : vector<8x384xf32> to vector<8x128xf32>
    %494 = vector.extract_strided_slice %489 {offsets = [0, 256], sizes = [8, 128], strides = [1, 1]} : vector<8x384xf32> to vector<8x128xf32>
    %495 = arith.mulf %493, %391 : vector<8x128xf32>
    %496 = arith.mulf %492, %491 : vector<8x128xf32>
    %497 = arith.addf %495, %496 : vector<8x128xf32>
    %498 = math.tanh %497 : vector<8x128xf32>
    %499 = arith.mulf %494, %498 : vector<8x128xf32>
    %500 = arith.truncf %499 : vector<8x128xf32> to vector<8x128xbf16>
    %c3_228 = arith.constant 3 : index
    %c0_229 = arith.constant 0 : index
    %c0_230 = arith.constant 0 : index
    %501 = vector.load %arg7[%c3_228, %c0_229, %c0_230] : memref<4x256x512xbf16, #tpu.memory_space<vmem>>, vector<1x128x512xbf16>
    %502 = vector.shape_cast %501 : vector<1x128x512xbf16> to vector<128x512xbf16>
    %cst_231 = arith.constant dense<0.000000e+00> : vector<8x512xf32>
    %503 = tpu.matmul %394, %502, %cst_231 {dimension_numbers = #tpu.dot_dimension_numbers<[1], [0], [0], [1], [0, 0, 1, 1], [], []>} : vector<8x128xbf16>, vector<128x512xbf16>, vector<8x512xf32> -> vector<8x512xf32>
    %c3_232 = arith.constant 3 : index
    %c128_233 = arith.constant 128 : index
    %c0_234 = arith.constant 0 : index
    %504 = vector.load %arg7[%c3_232, %c128_233, %c0_234] : memref<4x256x512xbf16, #tpu.memory_space<vmem>>, vector<1x128x512xbf16>
    %505 = vector.shape_cast %504 : vector<1x128x512xbf16> to vector<128x512xbf16>
    %cst_235 = arith.constant dense<0.000000e+00> : vector<8x512xf32>
    %506 = tpu.matmul %422, %505, %cst_235 {dimension_numbers = #tpu.dot_dimension_numbers<[1], [0], [0], [1], [0, 0, 1, 1], [], []>} : vector<8x128xbf16>, vector<128x512xbf16>, vector<8x512xf32> -> vector<8x512xf32>
    %507 = arith.addf %503, %506 : vector<8x512xf32>
    %c3_236 = arith.constant 3 : index
    %c0_237 = arith.constant 0 : index
    %c0_238 = arith.constant 0 : index
    %508 = vector.load %arg1[%c3_236, %c0_237, %c0_238] : memref<4x1x512xf32, #tpu.memory_space<vmem>>, vector<1x1x512xf32>
    %509 = vector.shape_cast %508 : vector<1x1x512xf32> to vector<1x512xf32>
    %510 = vector.broadcast %509 : vector<1x512xf32> to vector<8x512xf32>
    %511 = arith.addf %507, %510 : vector<8x512xf32>
    %512 = vector.extract_strided_slice %511 {offsets = [0, 0], sizes = [8, 384], strides = [1, 1]} : vector<8x512xf32> to vector<8x384xf32>
    %513 = arith.negf %512 : vector<8x384xf32>
    %514 = math.exp %513 : vector<8x384xf32>
    %cst_239 = arith.constant 1.000000e+00 : f32
    %515 = vector.broadcast %cst_239 : f32 to vector<8x384xf32>
    %516 = arith.addf %515, %514 : vector<8x384xf32>
    %517 = arith.divf %515, %516 : vector<8x384xf32>
    %518 = vector.extract_strided_slice %511 {offsets = [0, 384], sizes = [8, 128], strides = [1, 1]} : vector<8x512xf32> to vector<8x128xf32>
    %519 = math.tanh %518 : vector<8x128xf32>
    %520 = vector.extract_strided_slice %517 {offsets = [0, 0], sizes = [8, 128], strides = [1, 1]} : vector<8x384xf32> to vector<8x128xf32>
    %521 = vector.extract_strided_slice %517 {offsets = [0, 128], sizes = [8, 128], strides = [1, 1]} : vector<8x384xf32> to vector<8x128xf32>
    %522 = vector.extract_strided_slice %517 {offsets = [0, 256], sizes = [8, 128], strides = [1, 1]} : vector<8x384xf32> to vector<8x128xf32>
    %523 = arith.mulf %521, %419 : vector<8x128xf32>
    %524 = arith.mulf %520, %519 : vector<8x128xf32>
    %525 = arith.addf %523, %524 : vector<8x128xf32>
    %526 = math.tanh %525 : vector<8x128xf32>
    %527 = arith.mulf %522, %526 : vector<8x128xf32>
    %528 = arith.truncf %527 : vector<8x128xf32> to vector<8x128xbf16>
    %c48 = arith.constant 48 : index
    %c0_240 = arith.constant 0 : index
    %529 = vector.load %arg9[%c48, %c0_240] : memref<56x512xf32, #tpu.memory_space<vmem>>, vector<8x512xf32>
    %c0_241 = arith.constant 0 : index
    %c128_242 = arith.constant 128 : index
    %c0_243 = arith.constant 0 : index
    %530 = vector.load %arg7[%c0_241, %c128_242, %c0_243] : memref<4x256x512xbf16, #tpu.memory_space<vmem>>, vector<1x128x512xbf16>
    %531 = vector.shape_cast %530 : vector<1x128x512xbf16> to vector<128x512xbf16>
    %cst_244 = arith.constant dense<0.000000e+00> : vector<8x512xf32>
    %532 = tpu.matmul %444, %531, %cst_244 {dimension_numbers = #tpu.dot_dimension_numbers<[1], [0], [0], [1], [0, 0, 1, 1], [], []>} : vector<8x128xbf16>, vector<128x512xbf16>, vector<8x512xf32> -> vector<8x512xf32>
    %533 = arith.addf %529, %532 : vector<8x512xf32>
    %534 = vector.extract_strided_slice %533 {offsets = [0, 0], sizes = [8, 384], strides = [1, 1]} : vector<8x512xf32> to vector<8x384xf32>
    %535 = arith.negf %534 : vector<8x384xf32>
    %536 = math.exp %535 : vector<8x384xf32>
    %cst_245 = arith.constant 1.000000e+00 : f32
    %537 = vector.broadcast %cst_245 : f32 to vector<8x384xf32>
    %538 = arith.addf %537, %536 : vector<8x384xf32>
    %539 = arith.divf %537, %538 : vector<8x384xf32>
    %540 = vector.extract_strided_slice %533 {offsets = [0, 384], sizes = [8, 128], strides = [1, 1]} : vector<8x512xf32> to vector<8x128xf32>
    %541 = math.tanh %540 : vector<8x128xf32>
    %542 = vector.extract_strided_slice %539 {offsets = [0, 0], sizes = [8, 128], strides = [1, 1]} : vector<8x384xf32> to vector<8x128xf32>
    %543 = vector.extract_strided_slice %539 {offsets = [0, 128], sizes = [8, 128], strides = [1, 1]} : vector<8x384xf32> to vector<8x128xf32>
    %544 = vector.extract_strided_slice %539 {offsets = [0, 256], sizes = [8, 128], strides = [1, 1]} : vector<8x384xf32> to vector<8x128xf32>
    %545 = arith.mulf %543, %441 : vector<8x128xf32>
    %546 = arith.mulf %542, %541 : vector<8x128xf32>
    %547 = arith.addf %545, %546 : vector<8x128xf32>
    %548 = math.tanh %547 : vector<8x128xf32>
    %549 = arith.mulf %544, %548 : vector<8x128xf32>
    %550 = arith.truncf %549 : vector<8x128xf32> to vector<8x128xbf16>
    %c1_246 = arith.constant 1 : index
    %c0_247 = arith.constant 0 : index
    %c0_248 = arith.constant 0 : index
    %551 = vector.load %arg7[%c1_246, %c0_247, %c0_248] : memref<4x256x512xbf16, #tpu.memory_space<vmem>>, vector<1x128x512xbf16>
    %552 = vector.shape_cast %551 : vector<1x128x512xbf16> to vector<128x512xbf16>
    %cst_249 = arith.constant dense<0.000000e+00> : vector<8x512xf32>
    %553 = tpu.matmul %444, %552, %cst_249 {dimension_numbers = #tpu.dot_dimension_numbers<[1], [0], [0], [1], [0, 0, 1, 1], [], []>} : vector<8x128xbf16>, vector<128x512xbf16>, vector<8x512xf32> -> vector<8x512xf32>
    %c1_250 = arith.constant 1 : index
    %c128_251 = arith.constant 128 : index
    %c0_252 = arith.constant 0 : index
    %554 = vector.load %arg7[%c1_250, %c128_251, %c0_252] : memref<4x256x512xbf16, #tpu.memory_space<vmem>>, vector<1x128x512xbf16>
    %555 = vector.shape_cast %554 : vector<1x128x512xbf16> to vector<128x512xbf16>
    %cst_253 = arith.constant dense<0.000000e+00> : vector<8x512xf32>
    %556 = tpu.matmul %472, %555, %cst_253 {dimension_numbers = #tpu.dot_dimension_numbers<[1], [0], [0], [1], [0, 0, 1, 1], [], []>} : vector<8x128xbf16>, vector<128x512xbf16>, vector<8x512xf32> -> vector<8x512xf32>
    %557 = arith.addf %553, %556 : vector<8x512xf32>
    %c1_254 = arith.constant 1 : index
    %c0_255 = arith.constant 0 : index
    %c0_256 = arith.constant 0 : index
    %558 = vector.load %arg1[%c1_254, %c0_255, %c0_256] : memref<4x1x512xf32, #tpu.memory_space<vmem>>, vector<1x1x512xf32>
    %559 = vector.shape_cast %558 : vector<1x1x512xf32> to vector<1x512xf32>
    %560 = vector.broadcast %559 : vector<1x512xf32> to vector<8x512xf32>
    %561 = arith.addf %557, %560 : vector<8x512xf32>
    %562 = vector.extract_strided_slice %561 {offsets = [0, 0], sizes = [8, 384], strides = [1, 1]} : vector<8x512xf32> to vector<8x384xf32>
    %563 = arith.negf %562 : vector<8x384xf32>
    %564 = math.exp %563 : vector<8x384xf32>
    %cst_257 = arith.constant 1.000000e+00 : f32
    %565 = vector.broadcast %cst_257 : f32 to vector<8x384xf32>
    %566 = arith.addf %565, %564 : vector<8x384xf32>
    %567 = arith.divf %565, %566 : vector<8x384xf32>
    %568 = vector.extract_strided_slice %561 {offsets = [0, 384], sizes = [8, 128], strides = [1, 1]} : vector<8x512xf32> to vector<8x128xf32>
    %569 = math.tanh %568 : vector<8x128xf32>
    %570 = vector.extract_strided_slice %567 {offsets = [0, 0], sizes = [8, 128], strides = [1, 1]} : vector<8x384xf32> to vector<8x128xf32>
    %571 = vector.extract_strided_slice %567 {offsets = [0, 128], sizes = [8, 128], strides = [1, 1]} : vector<8x384xf32> to vector<8x128xf32>
    %572 = vector.extract_strided_slice %567 {offsets = [0, 256], sizes = [8, 128], strides = [1, 1]} : vector<8x384xf32> to vector<8x128xf32>
    %573 = arith.mulf %571, %469 : vector<8x128xf32>
    %574 = arith.mulf %570, %569 : vector<8x128xf32>
    %575 = arith.addf %573, %574 : vector<8x128xf32>
    %576 = math.tanh %575 : vector<8x128xf32>
    %577 = arith.mulf %572, %576 : vector<8x128xf32>
    %578 = arith.truncf %577 : vector<8x128xf32> to vector<8x128xbf16>
    %c2_258 = arith.constant 2 : index
    %c0_259 = arith.constant 0 : index
    %c0_260 = arith.constant 0 : index
    %579 = vector.load %arg7[%c2_258, %c0_259, %c0_260] : memref<4x256x512xbf16, #tpu.memory_space<vmem>>, vector<1x128x512xbf16>
    %580 = vector.shape_cast %579 : vector<1x128x512xbf16> to vector<128x512xbf16>
    %cst_261 = arith.constant dense<0.000000e+00> : vector<8x512xf32>
    %581 = tpu.matmul %472, %580, %cst_261 {dimension_numbers = #tpu.dot_dimension_numbers<[1], [0], [0], [1], [0, 0, 1, 1], [], []>} : vector<8x128xbf16>, vector<128x512xbf16>, vector<8x512xf32> -> vector<8x512xf32>
    %c2_262 = arith.constant 2 : index
    %c128_263 = arith.constant 128 : index
    %c0_264 = arith.constant 0 : index
    %582 = vector.load %arg7[%c2_262, %c128_263, %c0_264] : memref<4x256x512xbf16, #tpu.memory_space<vmem>>, vector<1x128x512xbf16>
    %583 = vector.shape_cast %582 : vector<1x128x512xbf16> to vector<128x512xbf16>
    %cst_265 = arith.constant dense<0.000000e+00> : vector<8x512xf32>
    %584 = tpu.matmul %500, %583, %cst_265 {dimension_numbers = #tpu.dot_dimension_numbers<[1], [0], [0], [1], [0, 0, 1, 1], [], []>} : vector<8x128xbf16>, vector<128x512xbf16>, vector<8x512xf32> -> vector<8x512xf32>
    %585 = arith.addf %581, %584 : vector<8x512xf32>
    %c2_266 = arith.constant 2 : index
    %c0_267 = arith.constant 0 : index
    %c0_268 = arith.constant 0 : index
    %586 = vector.load %arg1[%c2_266, %c0_267, %c0_268] : memref<4x1x512xf32, #tpu.memory_space<vmem>>, vector<1x1x512xf32>
    %587 = vector.shape_cast %586 : vector<1x1x512xf32> to vector<1x512xf32>
    %588 = vector.broadcast %587 : vector<1x512xf32> to vector<8x512xf32>
    %589 = arith.addf %585, %588 : vector<8x512xf32>
    %590 = vector.extract_strided_slice %589 {offsets = [0, 0], sizes = [8, 384], strides = [1, 1]} : vector<8x512xf32> to vector<8x384xf32>
    %591 = arith.negf %590 : vector<8x384xf32>
    %592 = math.exp %591 : vector<8x384xf32>
    %cst_269 = arith.constant 1.000000e+00 : f32
    %593 = vector.broadcast %cst_269 : f32 to vector<8x384xf32>
    %594 = arith.addf %593, %592 : vector<8x384xf32>
    %595 = arith.divf %593, %594 : vector<8x384xf32>
    %596 = vector.extract_strided_slice %589 {offsets = [0, 384], sizes = [8, 128], strides = [1, 1]} : vector<8x512xf32> to vector<8x128xf32>
    %597 = math.tanh %596 : vector<8x128xf32>
    %598 = vector.extract_strided_slice %595 {offsets = [0, 0], sizes = [8, 128], strides = [1, 1]} : vector<8x384xf32> to vector<8x128xf32>
    %599 = vector.extract_strided_slice %595 {offsets = [0, 128], sizes = [8, 128], strides = [1, 1]} : vector<8x384xf32> to vector<8x128xf32>
    %600 = vector.extract_strided_slice %595 {offsets = [0, 256], sizes = [8, 128], strides = [1, 1]} : vector<8x384xf32> to vector<8x128xf32>
    %601 = arith.mulf %599, %497 : vector<8x128xf32>
    %602 = arith.mulf %598, %597 : vector<8x128xf32>
    %603 = arith.addf %601, %602 : vector<8x128xf32>
    %604 = math.tanh %603 : vector<8x128xf32>
    %605 = arith.mulf %600, %604 : vector<8x128xf32>
    %606 = arith.truncf %605 : vector<8x128xf32> to vector<8x128xbf16>
    %c3_270 = arith.constant 3 : index
    %c0_271 = arith.constant 0 : index
    %c0_272 = arith.constant 0 : index
    %607 = vector.load %arg7[%c3_270, %c0_271, %c0_272] : memref<4x256x512xbf16, #tpu.memory_space<vmem>>, vector<1x128x512xbf16>
    %608 = vector.shape_cast %607 : vector<1x128x512xbf16> to vector<128x512xbf16>
    %cst_273 = arith.constant dense<0.000000e+00> : vector<8x512xf32>
    %609 = tpu.matmul %500, %608, %cst_273 {dimension_numbers = #tpu.dot_dimension_numbers<[1], [0], [0], [1], [0, 0, 1, 1], [], []>} : vector<8x128xbf16>, vector<128x512xbf16>, vector<8x512xf32> -> vector<8x512xf32>
    %c3_274 = arith.constant 3 : index
    %c128_275 = arith.constant 128 : index
    %c0_276 = arith.constant 0 : index
    %610 = vector.load %arg7[%c3_274, %c128_275, %c0_276] : memref<4x256x512xbf16, #tpu.memory_space<vmem>>, vector<1x128x512xbf16>
    %611 = vector.shape_cast %610 : vector<1x128x512xbf16> to vector<128x512xbf16>
    %cst_277 = arith.constant dense<0.000000e+00> : vector<8x512xf32>
    %612 = tpu.matmul %528, %611, %cst_277 {dimension_numbers = #tpu.dot_dimension_numbers<[1], [0], [0], [1], [0, 0, 1, 1], [], []>} : vector<8x128xbf16>, vector<128x512xbf16>, vector<8x512xf32> -> vector<8x512xf32>
    %613 = arith.addf %609, %612 : vector<8x512xf32>
    %c3_278 = arith.constant 3 : index
    %c0_279 = arith.constant 0 : index
    %c0_280 = arith.constant 0 : index
    %614 = vector.load %arg1[%c3_278, %c0_279, %c0_280] : memref<4x1x512xf32, #tpu.memory_space<vmem>>, vector<1x1x512xf32>
    %615 = vector.shape_cast %614 : vector<1x1x512xf32> to vector<1x512xf32>
    %616 = vector.broadcast %615 : vector<1x512xf32> to vector<8x512xf32>
    %617 = arith.addf %613, %616 : vector<8x512xf32>
    %618 = vector.extract_strided_slice %617 {offsets = [0, 0], sizes = [8, 384], strides = [1, 1]} : vector<8x512xf32> to vector<8x384xf32>
    %619 = arith.negf %618 : vector<8x384xf32>
    %620 = math.exp %619 : vector<8x384xf32>
    %cst_281 = arith.constant 1.000000e+00 : f32
    %621 = vector.broadcast %cst_281 : f32 to vector<8x384xf32>
    %622 = arith.addf %621, %620 : vector<8x384xf32>
    %623 = arith.divf %621, %622 : vector<8x384xf32>
    %624 = vector.extract_strided_slice %617 {offsets = [0, 384], sizes = [8, 128], strides = [1, 1]} : vector<8x512xf32> to vector<8x128xf32>
    %625 = math.tanh %624 : vector<8x128xf32>
    %626 = vector.extract_strided_slice %623 {offsets = [0, 0], sizes = [8, 128], strides = [1, 1]} : vector<8x384xf32> to vector<8x128xf32>
    %627 = vector.extract_strided_slice %623 {offsets = [0, 128], sizes = [8, 128], strides = [1, 1]} : vector<8x384xf32> to vector<8x128xf32>
    %628 = vector.extract_strided_slice %623 {offsets = [0, 256], sizes = [8, 128], strides = [1, 1]} : vector<8x384xf32> to vector<8x128xf32>
    %629 = arith.mulf %627, %525 : vector<8x128xf32>
    %630 = arith.mulf %626, %625 : vector<8x128xf32>
    %631 = arith.addf %629, %630 : vector<8x128xf32>
    %632 = math.tanh %631 : vector<8x128xf32>
    %633 = arith.mulf %628, %632 : vector<8x128xf32>
    %634 = arith.truncf %633 : vector<8x128xf32> to vector<8x128xbf16>
    %c1_282 = arith.constant 1 : index
    %c0_283 = arith.constant 0 : index
    %c0_284 = arith.constant 0 : index
    %635 = vector.load %arg7[%c1_282, %c0_283, %c0_284] : memref<4x256x512xbf16, #tpu.memory_space<vmem>>, vector<1x128x512xbf16>
    %636 = vector.shape_cast %635 : vector<1x128x512xbf16> to vector<128x512xbf16>
    %cst_285 = arith.constant dense<0.000000e+00> : vector<8x512xf32>
    %637 = tpu.matmul %550, %636, %cst_285 {dimension_numbers = #tpu.dot_dimension_numbers<[1], [0], [0], [1], [0, 0, 1, 1], [], []>} : vector<8x128xbf16>, vector<128x512xbf16>, vector<8x512xf32> -> vector<8x512xf32>
    %c1_286 = arith.constant 1 : index
    %c128_287 = arith.constant 128 : index
    %c0_288 = arith.constant 0 : index
    %638 = vector.load %arg7[%c1_286, %c128_287, %c0_288] : memref<4x256x512xbf16, #tpu.memory_space<vmem>>, vector<1x128x512xbf16>
    %639 = vector.shape_cast %638 : vector<1x128x512xbf16> to vector<128x512xbf16>
    %cst_289 = arith.constant dense<0.000000e+00> : vector<8x512xf32>
    %640 = tpu.matmul %578, %639, %cst_289 {dimension_numbers = #tpu.dot_dimension_numbers<[1], [0], [0], [1], [0, 0, 1, 1], [], []>} : vector<8x128xbf16>, vector<128x512xbf16>, vector<8x512xf32> -> vector<8x512xf32>
    %641 = arith.addf %637, %640 : vector<8x512xf32>
    %c1_290 = arith.constant 1 : index
    %c0_291 = arith.constant 0 : index
    %c0_292 = arith.constant 0 : index
    %642 = vector.load %arg1[%c1_290, %c0_291, %c0_292] : memref<4x1x512xf32, #tpu.memory_space<vmem>>, vector<1x1x512xf32>
    %643 = vector.shape_cast %642 : vector<1x1x512xf32> to vector<1x512xf32>
    %644 = vector.broadcast %643 : vector<1x512xf32> to vector<8x512xf32>
    %645 = arith.addf %641, %644 : vector<8x512xf32>
    %646 = vector.extract_strided_slice %645 {offsets = [0, 0], sizes = [8, 384], strides = [1, 1]} : vector<8x512xf32> to vector<8x384xf32>
    %647 = arith.negf %646 : vector<8x384xf32>
    %648 = math.exp %647 : vector<8x384xf32>
    %cst_293 = arith.constant 1.000000e+00 : f32
    %649 = vector.broadcast %cst_293 : f32 to vector<8x384xf32>
    %650 = arith.addf %649, %648 : vector<8x384xf32>
    %651 = arith.divf %649, %650 : vector<8x384xf32>
    %652 = vector.extract_strided_slice %645 {offsets = [0, 384], sizes = [8, 128], strides = [1, 1]} : vector<8x512xf32> to vector<8x128xf32>
    %653 = math.tanh %652 : vector<8x128xf32>
    %654 = vector.extract_strided_slice %651 {offsets = [0, 0], sizes = [8, 128], strides = [1, 1]} : vector<8x384xf32> to vector<8x128xf32>
    %655 = vector.extract_strided_slice %651 {offsets = [0, 128], sizes = [8, 128], strides = [1, 1]} : vector<8x384xf32> to vector<8x128xf32>
    %656 = vector.extract_strided_slice %651 {offsets = [0, 256], sizes = [8, 128], strides = [1, 1]} : vector<8x384xf32> to vector<8x128xf32>
    %657 = arith.mulf %655, %575 : vector<8x128xf32>
    %658 = arith.mulf %654, %653 : vector<8x128xf32>
    %659 = arith.addf %657, %658 : vector<8x128xf32>
    %660 = math.tanh %659 : vector<8x128xf32>
    %661 = arith.mulf %656, %660 : vector<8x128xf32>
    %662 = arith.truncf %661 : vector<8x128xf32> to vector<8x128xbf16>
    %c2_294 = arith.constant 2 : index
    %c0_295 = arith.constant 0 : index
    %c0_296 = arith.constant 0 : index
    %663 = vector.load %arg7[%c2_294, %c0_295, %c0_296] : memref<4x256x512xbf16, #tpu.memory_space<vmem>>, vector<1x128x512xbf16>
    %664 = vector.shape_cast %663 : vector<1x128x512xbf16> to vector<128x512xbf16>
    %cst_297 = arith.constant dense<0.000000e+00> : vector<8x512xf32>
    %665 = tpu.matmul %578, %664, %cst_297 {dimension_numbers = #tpu.dot_dimension_numbers<[1], [0], [0], [1], [0, 0, 1, 1], [], []>} : vector<8x128xbf16>, vector<128x512xbf16>, vector<8x512xf32> -> vector<8x512xf32>
    %c2_298 = arith.constant 2 : index
    %c128_299 = arith.constant 128 : index
    %c0_300 = arith.constant 0 : index
    %666 = vector.load %arg7[%c2_298, %c128_299, %c0_300] : memref<4x256x512xbf16, #tpu.memory_space<vmem>>, vector<1x128x512xbf16>
    %667 = vector.shape_cast %666 : vector<1x128x512xbf16> to vector<128x512xbf16>
    %cst_301 = arith.constant dense<0.000000e+00> : vector<8x512xf32>
    %668 = tpu.matmul %606, %667, %cst_301 {dimension_numbers = #tpu.dot_dimension_numbers<[1], [0], [0], [1], [0, 0, 1, 1], [], []>} : vector<8x128xbf16>, vector<128x512xbf16>, vector<8x512xf32> -> vector<8x512xf32>
    %669 = arith.addf %665, %668 : vector<8x512xf32>
    %c2_302 = arith.constant 2 : index
    %c0_303 = arith.constant 0 : index
    %c0_304 = arith.constant 0 : index
    %670 = vector.load %arg1[%c2_302, %c0_303, %c0_304] : memref<4x1x512xf32, #tpu.memory_space<vmem>>, vector<1x1x512xf32>
    %671 = vector.shape_cast %670 : vector<1x1x512xf32> to vector<1x512xf32>
    %672 = vector.broadcast %671 : vector<1x512xf32> to vector<8x512xf32>
    %673 = arith.addf %669, %672 : vector<8x512xf32>
    %674 = vector.extract_strided_slice %673 {offsets = [0, 0], sizes = [8, 384], strides = [1, 1]} : vector<8x512xf32> to vector<8x384xf32>
    %675 = arith.negf %674 : vector<8x384xf32>
    %676 = math.exp %675 : vector<8x384xf32>
    %cst_305 = arith.constant 1.000000e+00 : f32
    %677 = vector.broadcast %cst_305 : f32 to vector<8x384xf32>
    %678 = arith.addf %677, %676 : vector<8x384xf32>
    %679 = arith.divf %677, %678 : vector<8x384xf32>
    %680 = vector.extract_strided_slice %673 {offsets = [0, 384], sizes = [8, 128], strides = [1, 1]} : vector<8x512xf32> to vector<8x128xf32>
    %681 = math.tanh %680 : vector<8x128xf32>
    %682 = vector.extract_strided_slice %679 {offsets = [0, 0], sizes = [8, 128], strides = [1, 1]} : vector<8x384xf32> to vector<8x128xf32>
    %683 = vector.extract_strided_slice %679 {offsets = [0, 128], sizes = [8, 128], strides = [1, 1]} : vector<8x384xf32> to vector<8x128xf32>
    %684 = vector.extract_strided_slice %679 {offsets = [0, 256], sizes = [8, 128], strides = [1, 1]} : vector<8x384xf32> to vector<8x128xf32>
    %685 = arith.mulf %683, %603 : vector<8x128xf32>
    %686 = arith.mulf %682, %681 : vector<8x128xf32>
    %687 = arith.addf %685, %686 : vector<8x128xf32>
    %688 = math.tanh %687 : vector<8x128xf32>
    %689 = arith.mulf %684, %688 : vector<8x128xf32>
    %690 = arith.truncf %689 : vector<8x128xf32> to vector<8x128xbf16>
    %c3_306 = arith.constant 3 : index
    %c0_307 = arith.constant 0 : index
    %c0_308 = arith.constant 0 : index
    %691 = vector.load %arg7[%c3_306, %c0_307, %c0_308] : memref<4x256x512xbf16, #tpu.memory_space<vmem>>, vector<1x128x512xbf16>
    %692 = vector.shape_cast %691 : vector<1x128x512xbf16> to vector<128x512xbf16>
    %cst_309 = arith.constant dense<0.000000e+00> : vector<8x512xf32>
    %693 = tpu.matmul %606, %692, %cst_309 {dimension_numbers = #tpu.dot_dimension_numbers<[1], [0], [0], [1], [0, 0, 1, 1], [], []>} : vector<8x128xbf16>, vector<128x512xbf16>, vector<8x512xf32> -> vector<8x512xf32>
    %c3_310 = arith.constant 3 : index
    %c128_311 = arith.constant 128 : index
    %c0_312 = arith.constant 0 : index
    %694 = vector.load %arg7[%c3_310, %c128_311, %c0_312] : memref<4x256x512xbf16, #tpu.memory_space<vmem>>, vector<1x128x512xbf16>
    %695 = vector.shape_cast %694 : vector<1x128x512xbf16> to vector<128x512xbf16>
    %cst_313 = arith.constant dense<0.000000e+00> : vector<8x512xf32>
    %696 = tpu.matmul %634, %695, %cst_313 {dimension_numbers = #tpu.dot_dimension_numbers<[1], [0], [0], [1], [0, 0, 1, 1], [], []>} : vector<8x128xbf16>, vector<128x512xbf16>, vector<8x512xf32> -> vector<8x512xf32>
    %697 = arith.addf %693, %696 : vector<8x512xf32>
    %c3_314 = arith.constant 3 : index
    %c0_315 = arith.constant 0 : index
    %c0_316 = arith.constant 0 : index
    %698 = vector.load %arg1[%c3_314, %c0_315, %c0_316] : memref<4x1x512xf32, #tpu.memory_space<vmem>>, vector<1x1x512xf32>
    %699 = vector.shape_cast %698 : vector<1x1x512xf32> to vector<1x512xf32>
    %700 = vector.broadcast %699 : vector<1x512xf32> to vector<8x512xf32>
    %701 = arith.addf %697, %700 : vector<8x512xf32>
    %702 = vector.extract_strided_slice %701 {offsets = [0, 0], sizes = [8, 384], strides = [1, 1]} : vector<8x512xf32> to vector<8x384xf32>
    %703 = arith.negf %702 : vector<8x384xf32>
    %704 = math.exp %703 : vector<8x384xf32>
    %cst_317 = arith.constant 1.000000e+00 : f32
    %705 = vector.broadcast %cst_317 : f32 to vector<8x384xf32>
    %706 = arith.addf %705, %704 : vector<8x384xf32>
    %707 = arith.divf %705, %706 : vector<8x384xf32>
    %708 = vector.extract_strided_slice %701 {offsets = [0, 384], sizes = [8, 128], strides = [1, 1]} : vector<8x512xf32> to vector<8x128xf32>
    %709 = math.tanh %708 : vector<8x128xf32>
    %710 = vector.extract_strided_slice %707 {offsets = [0, 0], sizes = [8, 128], strides = [1, 1]} : vector<8x384xf32> to vector<8x128xf32>
    %711 = vector.extract_strided_slice %707 {offsets = [0, 128], sizes = [8, 128], strides = [1, 1]} : vector<8x384xf32> to vector<8x128xf32>
    %712 = vector.extract_strided_slice %707 {offsets = [0, 256], sizes = [8, 128], strides = [1, 1]} : vector<8x384xf32> to vector<8x128xf32>
    %713 = arith.mulf %711, %631 : vector<8x128xf32>
    %714 = arith.mulf %710, %709 : vector<8x128xf32>
    %715 = arith.addf %713, %714 : vector<8x128xf32>
    %716 = math.tanh %715 : vector<8x128xf32>
    %717 = arith.mulf %712, %716 : vector<8x128xf32>
    %718 = arith.truncf %717 : vector<8x128xf32> to vector<8x128xbf16>
    %c2_318 = arith.constant 2 : index
    %c0_319 = arith.constant 0 : index
    %c0_320 = arith.constant 0 : index
    %719 = vector.load %arg7[%c2_318, %c0_319, %c0_320] : memref<4x256x512xbf16, #tpu.memory_space<vmem>>, vector<1x128x512xbf16>
    %720 = vector.shape_cast %719 : vector<1x128x512xbf16> to vector<128x512xbf16>
    %cst_321 = arith.constant dense<0.000000e+00> : vector<8x512xf32>
    %721 = tpu.matmul %662, %720, %cst_321 {dimension_numbers = #tpu.dot_dimension_numbers<[1], [0], [0], [1], [0, 0, 1, 1], [], []>} : vector<8x128xbf16>, vector<128x512xbf16>, vector<8x512xf32> -> vector<8x512xf32>
    %c2_322 = arith.constant 2 : index
    %c128_323 = arith.constant 128 : index
    %c0_324 = arith.constant 0 : index
    %722 = vector.load %arg7[%c2_322, %c128_323, %c0_324] : memref<4x256x512xbf16, #tpu.memory_space<vmem>>, vector<1x128x512xbf16>
    %723 = vector.shape_cast %722 : vector<1x128x512xbf16> to vector<128x512xbf16>
    %cst_325 = arith.constant dense<0.000000e+00> : vector<8x512xf32>
    %724 = tpu.matmul %690, %723, %cst_325 {dimension_numbers = #tpu.dot_dimension_numbers<[1], [0], [0], [1], [0, 0, 1, 1], [], []>} : vector<8x128xbf16>, vector<128x512xbf16>, vector<8x512xf32> -> vector<8x512xf32>
    %725 = arith.addf %721, %724 : vector<8x512xf32>
    %c2_326 = arith.constant 2 : index
    %c0_327 = arith.constant 0 : index
    %c0_328 = arith.constant 0 : index
    %726 = vector.load %arg1[%c2_326, %c0_327, %c0_328] : memref<4x1x512xf32, #tpu.memory_space<vmem>>, vector<1x1x512xf32>
    %727 = vector.shape_cast %726 : vector<1x1x512xf32> to vector<1x512xf32>
    %728 = vector.broadcast %727 : vector<1x512xf32> to vector<8x512xf32>
    %729 = arith.addf %725, %728 : vector<8x512xf32>
    %730 = vector.extract_strided_slice %729 {offsets = [0, 0], sizes = [8, 384], strides = [1, 1]} : vector<8x512xf32> to vector<8x384xf32>
    %731 = arith.negf %730 : vector<8x384xf32>
    %732 = math.exp %731 : vector<8x384xf32>
    %cst_329 = arith.constant 1.000000e+00 : f32
    %733 = vector.broadcast %cst_329 : f32 to vector<8x384xf32>
    %734 = arith.addf %733, %732 : vector<8x384xf32>
    %735 = arith.divf %733, %734 : vector<8x384xf32>
    %736 = vector.extract_strided_slice %729 {offsets = [0, 384], sizes = [8, 128], strides = [1, 1]} : vector<8x512xf32> to vector<8x128xf32>
    %737 = math.tanh %736 : vector<8x128xf32>
    %738 = vector.extract_strided_slice %735 {offsets = [0, 0], sizes = [8, 128], strides = [1, 1]} : vector<8x384xf32> to vector<8x128xf32>
    %739 = vector.extract_strided_slice %735 {offsets = [0, 128], sizes = [8, 128], strides = [1, 1]} : vector<8x384xf32> to vector<8x128xf32>
    %740 = vector.extract_strided_slice %735 {offsets = [0, 256], sizes = [8, 128], strides = [1, 1]} : vector<8x384xf32> to vector<8x128xf32>
    %741 = arith.mulf %739, %687 : vector<8x128xf32>
    %742 = arith.mulf %738, %737 : vector<8x128xf32>
    %743 = arith.addf %741, %742 : vector<8x128xf32>
    %744 = math.tanh %743 : vector<8x128xf32>
    %745 = arith.mulf %740, %744 : vector<8x128xf32>
    %746 = arith.truncf %745 : vector<8x128xf32> to vector<8x128xbf16>
    %c3_330 = arith.constant 3 : index
    %c0_331 = arith.constant 0 : index
    %c0_332 = arith.constant 0 : index
    %747 = vector.load %arg7[%c3_330, %c0_331, %c0_332] : memref<4x256x512xbf16, #tpu.memory_space<vmem>>, vector<1x128x512xbf16>
    %748 = vector.shape_cast %747 : vector<1x128x512xbf16> to vector<128x512xbf16>
    %cst_333 = arith.constant dense<0.000000e+00> : vector<8x512xf32>
    %749 = tpu.matmul %690, %748, %cst_333 {dimension_numbers = #tpu.dot_dimension_numbers<[1], [0], [0], [1], [0, 0, 1, 1], [], []>} : vector<8x128xbf16>, vector<128x512xbf16>, vector<8x512xf32> -> vector<8x512xf32>
    %c3_334 = arith.constant 3 : index
    %c128_335 = arith.constant 128 : index
    %c0_336 = arith.constant 0 : index
    %750 = vector.load %arg7[%c3_334, %c128_335, %c0_336] : memref<4x256x512xbf16, #tpu.memory_space<vmem>>, vector<1x128x512xbf16>
    %751 = vector.shape_cast %750 : vector<1x128x512xbf16> to vector<128x512xbf16>
    %cst_337 = arith.constant dense<0.000000e+00> : vector<8x512xf32>
    %752 = tpu.matmul %718, %751, %cst_337 {dimension_numbers = #tpu.dot_dimension_numbers<[1], [0], [0], [1], [0, 0, 1, 1], [], []>} : vector<8x128xbf16>, vector<128x512xbf16>, vector<8x512xf32> -> vector<8x512xf32>
    %753 = arith.addf %749, %752 : vector<8x512xf32>
    %c3_338 = arith.constant 3 : index
    %c0_339 = arith.constant 0 : index
    %c0_340 = arith.constant 0 : index
    %754 = vector.load %arg1[%c3_338, %c0_339, %c0_340] : memref<4x1x512xf32, #tpu.memory_space<vmem>>, vector<1x1x512xf32>
    %755 = vector.shape_cast %754 : vector<1x1x512xf32> to vector<1x512xf32>
    %756 = vector.broadcast %755 : vector<1x512xf32> to vector<8x512xf32>
    %757 = arith.addf %753, %756 : vector<8x512xf32>
    %758 = vector.extract_strided_slice %757 {offsets = [0, 0], sizes = [8, 384], strides = [1, 1]} : vector<8x512xf32> to vector<8x384xf32>
    %759 = arith.negf %758 : vector<8x384xf32>
    %760 = math.exp %759 : vector<8x384xf32>
    %cst_341 = arith.constant 1.000000e+00 : f32
    %761 = vector.broadcast %cst_341 : f32 to vector<8x384xf32>
    %762 = arith.addf %761, %760 : vector<8x384xf32>
    %763 = arith.divf %761, %762 : vector<8x384xf32>
    %764 = vector.extract_strided_slice %757 {offsets = [0, 384], sizes = [8, 128], strides = [1, 1]} : vector<8x512xf32> to vector<8x128xf32>
    %765 = math.tanh %764 : vector<8x128xf32>
    %766 = vector.extract_strided_slice %763 {offsets = [0, 0], sizes = [8, 128], strides = [1, 1]} : vector<8x384xf32> to vector<8x128xf32>
    %767 = vector.extract_strided_slice %763 {offsets = [0, 128], sizes = [8, 128], strides = [1, 1]} : vector<8x384xf32> to vector<8x128xf32>
    %768 = vector.extract_strided_slice %763 {offsets = [0, 256], sizes = [8, 128], strides = [1, 1]} : vector<8x384xf32> to vector<8x128xf32>
    %769 = arith.mulf %767, %715 : vector<8x128xf32>
    %770 = arith.mulf %766, %765 : vector<8x128xf32>
    %771 = arith.addf %769, %770 : vector<8x128xf32>
    %772 = math.tanh %771 : vector<8x128xf32>
    %773 = arith.mulf %768, %772 : vector<8x128xf32>
    %774 = arith.truncf %773 : vector<8x128xf32> to vector<8x128xbf16>
    %c3_342 = arith.constant 3 : index
    %c0_343 = arith.constant 0 : index
    %c0_344 = arith.constant 0 : index
    %775 = vector.load %arg7[%c3_342, %c0_343, %c0_344] : memref<4x256x512xbf16, #tpu.memory_space<vmem>>, vector<1x128x512xbf16>
    %776 = vector.shape_cast %775 : vector<1x128x512xbf16> to vector<128x512xbf16>
    %cst_345 = arith.constant dense<0.000000e+00> : vector<8x512xf32>
    %777 = tpu.matmul %746, %776, %cst_345 {dimension_numbers = #tpu.dot_dimension_numbers<[1], [0], [0], [1], [0, 0, 1, 1], [], []>} : vector<8x128xbf16>, vector<128x512xbf16>, vector<8x512xf32> -> vector<8x512xf32>
    %c3_346 = arith.constant 3 : index
    %c128_347 = arith.constant 128 : index
    %c0_348 = arith.constant 0 : index
    %778 = vector.load %arg7[%c3_346, %c128_347, %c0_348] : memref<4x256x512xbf16, #tpu.memory_space<vmem>>, vector<1x128x512xbf16>
    %779 = vector.shape_cast %778 : vector<1x128x512xbf16> to vector<128x512xbf16>
    %cst_349 = arith.constant dense<0.000000e+00> : vector<8x512xf32>
    %780 = tpu.matmul %774, %779, %cst_349 {dimension_numbers = #tpu.dot_dimension_numbers<[1], [0], [0], [1], [0, 0, 1, 1], [], []>} : vector<8x128xbf16>, vector<128x512xbf16>, vector<8x512xf32> -> vector<8x512xf32>
    %781 = arith.addf %777, %780 : vector<8x512xf32>
    %c3_350 = arith.constant 3 : index
    %c0_351 = arith.constant 0 : index
    %c0_352 = arith.constant 0 : index
    %782 = vector.load %arg1[%c3_350, %c0_351, %c0_352] : memref<4x1x512xf32, #tpu.memory_space<vmem>>, vector<1x1x512xf32>
    %783 = vector.shape_cast %782 : vector<1x1x512xf32> to vector<1x512xf32>
    %784 = vector.broadcast %783 : vector<1x512xf32> to vector<8x512xf32>
    %785 = arith.addf %781, %784 : vector<8x512xf32>
    %786 = vector.extract_strided_slice %785 {offsets = [0, 0], sizes = [8, 384], strides = [1, 1]} : vector<8x512xf32> to vector<8x384xf32>
    %787 = arith.negf %786 : vector<8x384xf32>
    %788 = math.exp %787 : vector<8x384xf32>
    %cst_353 = arith.constant 1.000000e+00 : f32
    %789 = vector.broadcast %cst_353 : f32 to vector<8x384xf32>
    %790 = arith.addf %789, %788 : vector<8x384xf32>
    %791 = arith.divf %789, %790 : vector<8x384xf32>
    %792 = vector.extract_strided_slice %785 {offsets = [0, 384], sizes = [8, 128], strides = [1, 1]} : vector<8x512xf32> to vector<8x128xf32>
    %793 = math.tanh %792 : vector<8x128xf32>
    %794 = vector.extract_strided_slice %791 {offsets = [0, 0], sizes = [8, 128], strides = [1, 1]} : vector<8x384xf32> to vector<8x128xf32>
    %795 = vector.extract_strided_slice %791 {offsets = [0, 128], sizes = [8, 128], strides = [1, 1]} : vector<8x384xf32> to vector<8x128xf32>
    %796 = vector.extract_strided_slice %791 {offsets = [0, 256], sizes = [8, 128], strides = [1, 1]} : vector<8x384xf32> to vector<8x128xf32>
    %797 = arith.mulf %795, %771 : vector<8x128xf32>
    %798 = arith.mulf %794, %793 : vector<8x128xf32>
    %799 = arith.addf %797, %798 : vector<8x128xf32>
    %800 = math.tanh %799 : vector<8x128xf32>
    %801 = arith.mulf %796, %800 : vector<8x128xf32>
    %802 = arith.truncf %801 : vector<8x128xf32> to vector<8x128xbf16>
    %c4_i32_354 = arith.constant 4 : i32
    %803 = tpu.memref_slice %arg10[%c4_i32_354] : memref<5x!tpu.dma_semaphore, #tpu.memory_space<semaphore_mem>> -> memref<1x!tpu.dma_semaphore, #tpu.memory_space<semaphore_mem>>
    %804 = tpu.memref_squeeze %803 : memref<1x!tpu.dma_semaphore, #tpu.memory_space<semaphore_mem>> -> memref<!tpu.dma_semaphore, #tpu.memory_space<semaphore_mem>>
    tpu.wait_dma2 semaphore(%804 : memref<!tpu.dma_semaphore, #tpu.memory_space<semaphore_mem>>) src(%arg4 : memref<128x128xbf16, #tpu.memory_space<any>>) dst(%arg8 : memref<128x128xbf16, #tpu.memory_space<vmem>>)
    %c0_355 = arith.constant 0 : index
    %c0_356 = arith.constant 0 : index
    %805 = vector.load %arg8[%c0_355, %c0_356] : memref<128x128xbf16, #tpu.memory_space<vmem>>, vector<128x128xbf16>
    %cst_357 = arith.constant dense<0.000000e+00> : vector<8x128xf32>
    %806 = tpu.matmul %802, %805, %cst_357 {dimension_numbers = #tpu.dot_dimension_numbers<[1], [0], [0], [1], [0, 0, 1, 1], [], []>} : vector<8x128xbf16>, vector<128x128xbf16>, vector<8x128xf32> -> vector<8x128xf32>
    %c0_358 = arith.constant 0 : index
    %c0_359 = arith.constant 0 : index
    %807 = vector.load %arg2[%c0_358, %c0_359] : memref<1x128xf32, #tpu.memory_space<vmem>>, vector<1x128xf32>
    %808 = vector.broadcast %807 : vector<1x128xf32> to vector<8x128xf32>
    %809 = arith.addf %806, %808 : vector<8x128xf32>
    %c0_360 = arith.constant 0 : index
    %c0_361 = arith.constant 0 : index
    %810 = vector.load %arg5[%c0_360, %c0_361] : memref<8x128xf32, #tpu.memory_space<vmem>>, vector<8x128xf32>
    tpu.vector_store %arg5[%c0_360, %c0_361], %809 {strides = array<i32>} : memref<8x128xf32, #tpu.memory_space<vmem>>, vector<8x128xf32>,
    %c0_362 = arith.constant 0 : index
    %c0_363 = arith.constant 0 : index
    %811 = vector.load %arg6[%c0_362, %c0_363] : memref<8x128xf32, #tpu.memory_space<vmem>>, vector<8x128xf32>
    tpu.vector_store %arg6[%c0_362, %c0_363], %801 {strides = array<i32>} : memref<8x128xf32, #tpu.memory_space<vmem>>, vector<8x128xf32>,
    return
  }
}

</mosaic_0001>

<llo_original>
// kernel: lstm_forward.1
$region0: #{lstm_forward.1}
  #allocation0 [shape = 'u32[]', space=smem, size = 0x4, offset = 0x4, fixed_abs, tag = 'smem constant byte address 0x4 - core index']
  #allocation1 [shape = 'u32[144,128]{1,0:T(1,128)}', space=vmem, size = 0x12000, scoped, tag = 'internal scratch']
  #allocation2 [shape = 'bf16[4,256,512]{2,1,0:T(16,128)(2,1)}', space=vmem, size = 0x100000, scoped, tag = 'scratch operand']
  #allocation3 [shape = 'bf16[128,128]{1,0:T(16,128)(2,1)}', space=vmem, size = 0x8000, scoped, tag = 'scratch operand']
  #allocation4 [shape = 'f32[56,512]{1,0:T(8,128)}', space=vmem, size = 0x1c000, scoped, tag = 'scratch operand']
  #allocation5 [shape = 's32[5]{0}', space=sflag, size = 0x14, scoped, tag = 'scratch operand']
  #allocation8 [shape = 's32[]', space=sflag, size = 0x4, offset = 0, fixed_abs, tag = 'sflag constant byte address 0x0 - dummy sync flag']
  #allocation10 [shape = 's32[]', space=sflag, size = 0x4, offset = 0, fixed_abs, tag = 'sflag constant byte address 0x0 - dummy sync flag']
  #allocation12 [shape = 's32[]', space=sflag, size = 0x4, offset = 0, fixed_abs, tag = 'sflag constant byte address 0x0 - dummy sync flag']
  #allocation14 [shape = 's32[]', space=sflag, size = 0x4, offset = 0, fixed_abs, tag = 'sflag constant byte address 0x0 - dummy sync flag']
  #allocation16 [shape = 's32[]', space=sflag, size = 0x4, offset = 0, fixed_abs, tag = 'sflag constant byte address 0x0 - dummy sync flag']
  %s0 = inlined_call_operand.vmem [shape: bf16[56,128], index: 0, kind: input, shape index: {}]
  %s1 = inlined_call_operand.hbm [shape: f32[4,1,512], index: 1, kind: input, shape index: {}]
  %s2 = inlined_call_operand.vmem [shape: f32[1,128], index: 2, kind: input, shape index: {}]
  %s3 = inlined_call_operand.hbm [shape: bf16[4,256,512], index: 3, kind: input, shape index: {}]
  %s4 = inlined_call_operand.vmem [shape: bf16[128,128], index: 4, kind: input, shape index: {}]
  %s5 = inlined_call_operand.vmem [shape: f32[8,128], index: 5, kind: output, shape index: {0}]
  %s6 = inlined_call_operand.vmem [shape: f32[8,128], index: 6, kind: output, shape index: {1}]
  %7 = xla_tuple %s5, %s6
  %s8 = sld [smem:[#allocation0]]
  $region68: #{lstm_forward.1} parent=0
    _
  %s10 = ssub.s32 1, %s8
  %s11 = scalar_select 0, %s10, %s8
  $region1: #{lstm_forward.1} parent=0
    #allocation6 [shape = 'u8[8192]{0}', space=vmem, size = 0x2000, scoped, tag = 'input window, operand 1, single buffered']
    #allocation7 [shape = 's32[1]{0}', space=sflag, size = 0x4, scoped, tag = 'scoped memory for lstm_forward.1']
    #allocation9 [shape = 'u32[9]{0}', space=smem, size = 0x24, scoped, tag = 'DMA stride descriptor']
    #allocation11 [shape = 'u32[9]{0}', space=smem, size = 0x24, scoped, tag = 'DMA stride descriptor']
    #allocation13 [shape = 'u32[9]{0}', space=smem, size = 0x24, scoped, tag = 'DMA stride descriptor']
    #allocation15 [shape = 'u32[9]{0}', space=smem, size = 0x24, scoped, tag = 'DMA stride descriptor']
    %12 = vsyncpa [#allocation7], 0
    // Predicated region
    $region2: #{lstm_forward.1} parent=1 // pred_check
      _
    $region3: #{lstm_forward.1} parent=1 // pred_check_branch
      %14 = sbr.rel (0) target = $region5
    $region4: #{lstm_forward.1} parent=1 // pred_region
      _
    $region5: #{lstm_forward.1} parent=1 // pred_fallthru
      _
    // Predicated region
    $region6: #{lstm_forward.1} parent=1 // pred_check
      _
    $region7: #{lstm_forward.1} parent=1 // pred_check_branch
      %16 = sbr.rel (0) target = $region9
    $region8: #{lstm_forward.1} parent=1 // pred_region
      %s18 = ssub.s32 256, 256
      %19 = vsyncadd [#allocation7], %s18
      %s20 = sshll.u32 [#allocation6], 4
      %s21 = int_to_ptr.vmem [resolvable:$true] %s20
      %26 = dma.hbm_to_vmem [thread:$0]  %s1, 256, %s21, [#allocation7], 64, 64, 4
    $region9: #{lstm_forward.1} parent=1 // pred_fallthru
      _
    // Predicated region
    $region10: #{lstm_forward.1} parent=1 // pred_check
      _
    $region11: #{lstm_forward.1} parent=1 // pred_check_branch
      %28 = sbr.rel (0) target = $region13
    $region12: #{lstm_forward.1} parent=1 // pred_region
      _
    $region13: #{lstm_forward.1} parent=1 // pred_fallthru
      _
    // Predicated region
    $region14: #{lstm_forward.1} parent=1 // pred_check
      _
    $region15: #{lstm_forward.1} parent=1 // pred_check_branch
      %30 = sbr.rel (0) target = $region17
    $region16: #{lstm_forward.1} parent=1 // pred_region
      %31 = dma.done [#allocation7], 256
    $region17: #{lstm_forward.1} parent=1 // pred_fallthru
      _
    %s34 = sshll.u32 1, 14
    %s35 = sxor.u32 4294967295, %s34
    %s37 = sld [smem:[#allocation0]]
    %s38 = sadd.s32 2, %s37
    %s40 = sshll.u32 7, 26
    %s41 = sxor.u32 4294967295, %s40
    %s42 = sand.u32 0, %s41
    %s43 = sshll.u32 %s38, 26
    %s44 = sor.u32 %s42, %s43
    %s45 = sshll.u32 [#allocation2], 4
    %s46 = int_to_ptr.vmem [resolvable:$true] %s45
    %49 = sst [smem:[#allocation9]] 512
    %s50 = scalar_lea.smem [#allocation9], 1
    %51 = sst [smem:[%s50]] 512
    %s52 = scalar_lea.smem [#allocation9], 2
    %53 = sst [smem:[%s52]] 4
    %s54 = scalar_lea.smem [#allocation9], 3
    %55 = sst [smem:[%s54]] 64
    %s56 = scalar_lea.smem [#allocation9], 4
    %57 = sst [smem:[%s56]] 128
    %s58 = scalar_lea.smem [#allocation9], 5
    %59 = sst [smem:[%s58]] 2
    %s60 = scalar_lea.smem [#allocation9], 6
    %61 = sst [smem:[%s60]] 256
    %s62 = scalar_lea.smem [#allocation9], 7
    %63 = sst [smem:[%s62]] 64
    %s64 = scalar_lea.smem [#allocation9], 8
    %65 = sst [smem:[%s64]] 4
    %67 = dma.general %s3, 8192, %s46, [#allocation5], [#allocation8], [#allocation9], %s44, 0
    %s68 = scalar_lea.hbm %s3, 8192
    %s69 = scalar_lea.vmem [#allocation2], 512
    %s70 = scalar_lea.sflag [#allocation5], 1
    %s72 = sshll.u32 1, 14
    %s73 = sxor.u32 4294967295, %s72
    %s75 = sadd.s32 2, %s37
    %s77 = sshll.u32 7, 26
    %s78 = sxor.u32 4294967295, %s77
    %s79 = sand.u32 0, %s78
    %s80 = sshll.u32 %s75, 26
    %s81 = sor.u32 %s79, %s80
    %s82 = sshll.u32 %s69, 4
    %s83 = int_to_ptr.vmem [resolvable:$true] %s82
    %86 = sst [smem:[#allocation11]] 512
    %s87 = scalar_lea.smem [#allocation11], 1
    %88 = sst [smem:[%s87]] 512
    %s89 = scalar_lea.smem [#allocation11], 2
    %90 = sst [smem:[%s89]] 4
    %s91 = scalar_lea.smem [#allocation11], 3
    %92 = sst [smem:[%s91]] 64
    %s93 = scalar_lea.smem [#allocation11], 4
    %94 = sst [smem:[%s93]] 128
    %s95 = scalar_lea.smem [#allocation11], 5
    %96 = sst [smem:[%s95]] 2
    %s97 = scalar_lea.smem [#allocation11], 6
    %98 = sst [smem:[%s97]] 256
    %s99 = scalar_lea.smem [#allocation11], 7
    %100 = sst [smem:[%s99]] 64
    %s101 = scalar_lea.smem [#allocation11], 8
    %102 = sst [smem:[%s101]] 4
    %104 = dma.general %s68, 8192, %s83, %s70, [#allocation10], [#allocation11], %s81, 0
    %s105 = scalar_lea.hbm %s3, 16384
    %s106 = scalar_lea.vmem [#allocation2], 1024
    %s107 = scalar_lea.sflag [#allocation5], 2
    %s109 = sshll.u32 1, 14
    %s110 = sxor.u32 4294967295, %s109
    %s112 = sadd.s32 2, %s37
    %s114 = sshll.u32 7, 26
    %s115 = sxor.u32 4294967295, %s114
    %s116 = sand.u32 0, %s115
    %s117 = sshll.u32 %s112, 26
    %s118 = sor.u32 %s116, %s117
    %s119 = sshll.u32 %s106, 4
    %s120 = int_to_ptr.vmem [resolvable:$true] %s119
    %123 = sst [smem:[#allocation13]] 512
    %s124 = scalar_lea.smem [#allocation13], 1
    %125 = sst [smem:[%s124]] 512
    %s126 = scalar_lea.smem [#allocation13], 2
    %127 = sst [smem:[%s126]] 4
    %s128 = scalar_lea.smem [#allocation13], 3
    %129 = sst [smem:[%s128]] 64
    %s130 = scalar_lea.smem [#allocation13], 4
    %131 = sst [smem:[%s130]] 128
    %s132 = scalar_lea.smem [#allocation13], 5
    %133 = sst [smem:[%s132]] 2
    %s134 = scalar_lea.smem [#allocation13], 6
    %135 = sst [smem:[%s134]] 256
    %s136 = scalar_lea.smem [#allocation13], 7
    %137 = sst [smem:[%s136]] 64
    %s138 = scalar_lea.smem [#allocation13], 8
    %139 = sst [smem:[%s138]] 4
    %141 = dma.general %s105, 8192, %s120, %s107, [#allocation12], [#allocation13], %s118, 0
    %s142 = scalar_lea.hbm %s3, 24576
    %s143 = scalar_lea.vmem [#allocation2], 1536
    %s144 = scalar_lea.sflag [#allocation5], 3
    %s146 = sshll.u32 1, 14
    %s147 = sxor.u32 4294967295, %s146
    %s149 = sadd.s32 2, %s37
    %s151 = sshll.u32 7, 26
    %s152 = sxor.u32 4294967295, %s151
    %s153 = sand.u32 0, %s152
    %s154 = sshll.u32 %s149, 26
    %s155 = sor.u32 %s153, %s154
    %s156 = sshll.u32 %s143, 4
    %s157 = int_to_ptr.vmem [resolvable:$true] %s156
    %160 = sst [smem:[#allocation15]] 512
    %s161 = scalar_lea.smem [#allocation15], 1
    %162 = sst [smem:[%s161]] 512
    %s163 = scalar_lea.smem [#allocation15], 2
    %164 = sst [smem:[%s163]] 4
    %s165 = scalar_lea.smem [#allocation15], 3
    %166 = sst [smem:[%s165]] 64
    %s167 = scalar_lea.smem [#allocation15], 4
    %168 = sst [smem:[%s167]] 128
    %s169 = scalar_lea.smem [#allocation15], 5
    %170 = sst [smem:[%s169]] 2
    %s171 = scalar_lea.smem [#allocation15], 6
    %172 = sst [smem:[%s171]] 256
    %s173 = scalar_lea.smem [#allocation15], 7
    %174 = sst [smem:[%s173]] 64
    %s175 = scalar_lea.smem [#allocation15], 8
    %176 = sst [smem:[%s175]] 4
    %178 = dma.general %s142, 8192, %s157, %s144, [#allocation14], [#allocation15], %s155, 0
    %s179 = scalar_lea.sflag [#allocation5], 4
    %p181 = scmp.lt.u32.totalorder 64, 8
    %p182 = pneg %p181
    // Predicated region
    $region18: #{lstm_forward.1} parent=1 // pred_check
      _
    $region19: #{lstm_forward.1} parent=1 // pred_check_branch
      %184 = sbr.rel (%p181) target = $region21
    $region20: #{lstm_forward.1} parent=1 // pred_region
      %s199 = sand.u32 64, 7
      %p200 = scmp.eq.s32.totalorder %s199, 0
      // Predicated region
      $region33: #{lstm_forward.1} parent=20 // pred_check
        %p201 = pneg %p200
      $region34: #{lstm_forward.1} parent=20 // pred_check_branch
        %203 = sbr.rel (%p201) target = $region36
      $region35: #{lstm_forward.1} parent=20 // pred_region
        loop: start=0, step=1, limit=1
        $region37: #{lstm_forward.1} parent=35 // loop_pre_header
          _
        $region38: #{lstm_forward.1} parent=35 // loop_header
          %s205 = sphi 0, %s209
          %p206 = scmp.ge.s32.totalorder %s205, 1
          %s210 = sphi %s4, %s4
          %s211 = sphi [#allocation3], [#allocation3]
        $region39: #{lstm_forward.1} parent=35 // loop_header_branch
          %208 = sbr.rel (%p206) target = $region43
        $region40: #{lstm_forward.1} parent=35 // loop_body
          %v212 = vld [vmem:[%s210] sm:$0xff]
          %213 = vst [vmem:[%s211] sm:$0xff] %v212
          %v214 = vld [vmem:[%s210 + $0x8] sm:$0xff]
          %215 = vst [vmem:[%s211 + $0x8] sm:$0xff] %v214
          %v216 = vld [vmem:[%s210 + $0x10] sm:$0xff]
          %217 = vst [vmem:[%s211 + $0x10] sm:$0xff] %v216
          %v218 = vld [vmem:[%s210 + $0x18] sm:$0xff]
          %219 = vst [vmem:[%s211 + $0x18] sm:$0xff] %v218
          %v220 = vld [vmem:[%s210 + $0x20] sm:$0xff]
          %221 = vst [vmem:[%s211 + $0x20] sm:$0xff] %v220
          %v222 = vld [vmem:[%s210 + $0x28] sm:$0xff]
          %223 = vst [vmem:[%s211 + $0x28] sm:$0xff] %v222
          %v224 = vld [vmem:[%s210 + $0x30] sm:$0xff]
          %225 = vst [vmem:[%s211 + $0x30] sm:$0xff] %v224
          %v226 = vld [vmem:[%s210 + $0x38] sm:$0xff]
          %227 = vst [vmem:[%s211 + $0x38] sm:$0xff] %v226
        $region41: #{lstm_forward.1} parent=35 // loop_footer
          %s209 = sadd.s32 1, %s205
        $region42: #{lstm_forward.1} parent=35 // loop_footer_branch
          %204 = sbr.rel target = $region38
        $region43: #{lstm_forward.1} parent=35 // loop_exit
          _
      $region36: #{lstm_forward.1} parent=20 // pred_fallthru
        _
      %p228 = pneg %p200
      // Predicated region
      $region44: #{lstm_forward.1} parent=20 // pred_check
        _
      $region45: #{lstm_forward.1} parent=20 // pred_check_branch
        %230 = sbr.rel (%p200) target = $region47
      $region46: #{lstm_forward.1} parent=20 // pred_region
        %s231 = sand.u32 64, 7
      $region47: #{lstm_forward.1} parent=20 // pred_fallthru
        _
    $region21: #{lstm_forward.1} parent=1 // pred_fallthru
      _
    // Predicated region
    $region22: #{lstm_forward.1} parent=1 // pred_check
      %p185 = pneg %p181
    $region23: #{lstm_forward.1} parent=1 // pred_check_branch
      %187 = sbr.rel (%p185) target = $region25
    $region24: #{lstm_forward.1} parent=1 // pred_region
      %s188 = sshllo.u32 0, 64
      loop: start=0, step=1, limit=1
      $region26: #{lstm_forward.1} parent=24 // loop_pre_header
        _
      $region27: #{lstm_forward.1} parent=24 // loop_header
        %s190 = sphi 0, %s194
        %p191 = scmp.ge.s32.totalorder %s190, 1
        %s195 = sphi %s4, %s4
        %s196 = sphi [#allocation3], [#allocation3]
      $region28: #{lstm_forward.1} parent=24 // loop_header_branch
        %193 = sbr.rel (%p191) target = $region32
      $region29: #{lstm_forward.1} parent=24 // loop_body
        %v197 = vld [vmem:[%s195] sm:%s188]
        %198 = vst [vmem:[%s196] sm:%s188] %v197
      $region30: #{lstm_forward.1} parent=24 // loop_footer
        %s194 = sadd.s32 1, %s190
      $region31: #{lstm_forward.1} parent=24 // loop_footer_branch
        %189 = sbr.rel target = $region27
      $region32: #{lstm_forward.1} parent=24 // loop_exit
        _
    $region25: #{lstm_forward.1} parent=1 // pred_fallthru
      _
    // Predicated region
    $region48: #{lstm_forward.1} parent=1 // pred_check
      _
    $region49: #{lstm_forward.1} parent=1 // pred_check_branch
      %234 = sbr.rel (0) target = $region51
    $region50: #{lstm_forward.1} parent=1 // pred_region
      %235 = vsyncadd %s179, 1024
    $region51: #{lstm_forward.1} parent=1 // pred_fallthru
      _
    %s236 = smul.u32 4, 32
    %s237 = smul.u32 %s236, 4
    %s238 = sshll.u32 %s237, 4
    %239 = dma.done [#allocation5], %s238
    %v240 = vld [vmem:[%s0] sm:$0xf]
    %v241 = vld [vmem:[%s0 + $0x4] sm:$0xf]
    %v242 = vld [vmem:[%s0 + $0x8] sm:$0xf]
    %v243 = vld [vmem:[%s0 + $0xc] sm:$0xf]
    %v244 = vld [vmem:[%s0 + $0x10] sm:$0xf]
    %v245 = vld [vmem:[%s0 + $0x14] sm:$0xf]
    %v246 = vld [vmem:[%s0 + $0x18] sm:$0xf]
    %v247 = vld [vmem:[#allocation2] sm:$0xff]
    %v248 = vld [vmem:[#allocation2 + $0x8] sm:$0xff]
    %v249 = vld [vmem:[#allocation2 + $0x10] sm:$0xff]
    %v250 = vld [vmem:[#allocation2 + $0x18] sm:$0xff]
    %v251 = vld [vmem:[#allocation2 + $0x20] sm:$0xff]
    %v252 = vld [vmem:[#allocation2 + $0x28] sm:$0xff]
    %v253 = vld [vmem:[#allocation2 + $0x30] sm:$0xff]
    %v254 = vld [vmem:[#allocation2 + $0x38] sm:$0xff]
    %v255 = vld [vmem:[#allocation2 + $0x40] sm:$0xff]
    %v256 = vld [vmem:[#allocation2 + $0x48] sm:$0xff]
    %v257 = vld [vmem:[#allocation2 + $0x50] sm:$0xff]
    %v258 = vld [vmem:[#allocation2 + $0x58] sm:$0xff]
    %v259 = vld [vmem:[#allocation2 + $0x60] sm:$0xff]
    %v260 = vld [vmem:[#allocation2 + $0x68] sm:$0xff]
    %v261 = vld [vmem:[#allocation2 + $0x70] sm:$0xff]
    %v262 = vld [vmem:[#allocation2 + $0x78] sm:$0xff]
    %v263 = vld [vmem:[#allocation2 + $0x80] sm:$0xff]
    %v264 = vld [vmem:[#allocation2 + $0x88] sm:$0xff]
    %v265 = vld [vmem:[#allocation2 + $0x90] sm:$0xff]
    %v266 = vld [vmem:[#allocation2 + $0x98] sm:$0xff]
    %v267 = vld [vmem:[#allocation2 + $0xa0] sm:$0xff]
    %v268 = vld [vmem:[#allocation2 + $0xa8] sm:$0xff]
    %v269 = vld [vmem:[#allocation2 + $0xb0] sm:$0xff]
    %v270 = vld [vmem:[#allocation2 + $0xb8] sm:$0xff]
    %v271 = vld [vmem:[#allocation2 + $0xc0] sm:$0xff]
    %v272 = vld [vmem:[#allocation2 + $0xc8] sm:$0xff]
    %v273 = vld [vmem:[#allocation2 + $0xd0] sm:$0xff]
    %v274 = vld [vmem:[#allocation2 + $0xd8] sm:$0xff]
    %v275 = vld [vmem:[#allocation2 + $0xe0] sm:$0xff]
    %v276 = vld [vmem:[#allocation2 + $0xe8] sm:$0xff]
    %v277 = vld [vmem:[#allocation2 + $0xf0] sm:$0xff]
    %v278 = vld [vmem:[#allocation2 + $0xf8] sm:$0xff]
    %v279 = vld [vmem:[#allocation6] sm:$0xf]
    %v281 = vlaneseq
    %v282 = vshrl.u32 %v281, 7
    %v283 = vsub.s32 0, %v282
    %v284 = vrot.slane %v279, %v283
    %v285 = vlaneseq
    %v286 = vshrl.u32 %v285, 7
    %v287 = vsub.s32 1, %v286
    %v288 = vrot.slane %v279, %v287
    %v289 = vlaneseq
    %v290 = vshrl.u32 %v289, 7
    %v291 = vsub.s32 2, %v290
    %v292 = vrot.slane %v279, %v291
    %v293 = vlaneseq
    %v294 = vshrl.u32 %v293, 7
    %v295 = vsub.s32 3, %v294
    %v296 = vrot.slane %v279, %v295
    %v308 = vunpack.c.l.b16 %v240
    %v309 = vunpack.c.l.b16 %v241
    %v310 = vunpack.c.l.b16 %v242
    %v311 = vunpack.c.l.b16 %v243
    %v312 = vunpack.c.l.b16 %v244
    %v313 = vunpack.c.l.b16 %v245
    %v314 = vunpack.c.l.b16 %v246
    %v315 = vpack.c.b16 %v309, %v308
    %v316 = vpack.c.b16 %v311, %v310
    %v317 = vpack.c.b16 %v313, %v312
    %v318 = vpack.c.b16 %v314, %v314
    %323 = vmatprep.subr.bf16.mxu0 %v248
    %324 = vmatpush1.bf16.msra.mxu0 %v247
    %325 = vmatprep.subr.bf16.mxu0 %v252
    %326 = vmatpush1.bf16.msra.mxu0 %v251
    %327 = vmatprep.subr.bf16.mxu0 %v256
    %328 = vmatpush1.bf16.msra.mxu0 %v255
    %329 = vmatprep.subr.bf16.mxu0 %v260
    %330 = vmatpush1.bf16.msra.mxu0 %v259
    %331 = vmatprep.subr.bf16.mxu0 %v264
    %332 = vmatpush1.bf16.msra.mxu0 %v263
    %333 = vmatprep.subr.bf16.mxu0 %v268
    %334 = vmatpush1.bf16.msra.mxu0 %v267
    %335 = vmatprep.subr.bf16.mxu0 %v272
    %336 = vmatpush1.bf16.msra.mxu0 %v271
    %337 = vmatprep.subr.bf16.mxu0 %v276
    %338 = vmatpush1.bf16.msra.mxu0 %v275
    %339 = vmatprep.subr.bf16.mxu0 0
    %340 = vmatpush1.bf16.msra.mxu0 0
    %341 = vmatprep.subr.bf16.mxu0 0
    %342 = vmatpush1.bf16.msra.mxu0 0
    %343 = vmatprep.subr.bf16.mxu0 0
    %344 = vmatpush1.bf16.msra.mxu0 0
    %345 = vmatprep.subr.bf16.mxu0 0
    %346 = vmatpush1.bf16.msra.mxu0 0
    %347 = vmatprep.subr.bf16.mxu0 0
    %348 = vmatpush1.bf16.msra.mxu0 0
    %349 = vmatprep.subr.bf16.mxu0 0
    %350 = vmatpush1.bf16.msra.mxu0 0
    %351 = vmatprep.subr.bf16.mxu0 0
    %352 = vmatpush1.bf16.msra.mxu0 0
    %353 = vmatprep.subr.bf16.mxu0 0
    %354 = vmatpush1.bf16.msra.mxu0 0
    %355 = vmatprep.mubr.bf16.mxu0 0
    %356 = vmatmul.mubr.bf16.gmra.mrb[0].mxu0 %v315
    %v357 = vpop.f32.mrb[0].mxu0
    %v358 = vadd.f32 %v284, %v357
    %v359 = vpop.f32.mrb[0].mxu0
    %v360 = vadd.f32 %v288, %v359
    %v361 = vpop.f32.mrb[0].mxu0
    %v362 = vadd.f32 %v284, %v361
    %v363 = vpop.f32.mrb[0].mxu0
    %v364 = vadd.f32 %v288, %v363
    %365 = vmatprep.mubr.bf16.mxu0 0
    %366 = vmatmul.mubr.bf16.gmra.mrb[0].mxu0 %v316
    %v367 = vpop.f32.mrb[0].mxu0
    %v368 = vadd.f32 %v284, %v367
    %v369 = vpop.f32.mrb[0].mxu0
    %v370 = vadd.f32 %v288, %v369
    %v371 = vpop.f32.mrb[0].mxu0
    %v372 = vadd.f32 %v284, %v371
    %v373 = vpop.f32.mrb[0].mxu0
    %v374 = vadd.f32 %v288, %v373
    %375 = vmatprep.mubr.bf16.mxu0 0
    %376 = vmatmul.mubr.bf16.gmra.mrb[0].mxu0 %v317
    %v377 = vpop.f32.mrb[0].mxu0
    %v378 = vadd.f32 %v284, %v377
    %v379 = vpop.f32.mrb[0].mxu0
    %v380 = vadd.f32 %v288, %v379
    %v381 = vpop.f32.mrb[0].mxu0
    %v382 = vadd.f32 %v284, %v381
    %v383 = vpop.f32.mrb[0].mxu0
    %v384 = vadd.f32 %v288, %v383
    %385 = vmatprep.mubr.bf16.mxu0 0
    %386 = vmatmul.mubr.bf16.gmra.mrb[0].mxu0 %v318
    %v387 = vpop.f32.mrb[0].mxu0
    %v388 = vadd.f32 %v284, %v387
    %v389 = vpop.f32.mrb[0].mxu0
    %v390 = vadd.f32 %v288, %v389
    %v391 = vpop.f32.mrb[0].mxu0
    %v392 = vpop.f32.mrb[0].mxu0
    %393 = vdwg.mxu0
    %394 = vmatprep.subr.bf16.mxu0 %v250
    %395 = vmatpush1.bf16.msra.mxu0 %v249
    %396 = vmatprep.subr.bf16.mxu0 %v254
    %397 = vmatpush1.bf16.msra.mxu0 %v253
    %398 = vmatprep.subr.bf16.mxu0 %v258
    %399 = vmatpush1.bf16.msra.mxu0 %v257
    %400 = vmatprep.subr.bf16.mxu0 %v262
    %401 = vmatpush1.bf16.msra.mxu0 %v261
    %402 = vmatprep.subr.bf16.mxu0 %v266
    %403 = vmatpush1.bf16.msra.mxu0 %v265
    %404 = vmatprep.subr.bf16.mxu0 %v270
    %405 = vmatpush1.bf16.msra.mxu0 %v269
    %406 = vmatprep.subr.bf16.mxu0 %v274
    %407 = vmatpush1.bf16.msra.mxu0 %v273
    %408 = vmatprep.subr.bf16.mxu0 %v278
    %409 = vmatpush1.bf16.msra.mxu0 %v277
    %410 = vmatprep.subr.bf16.mxu0 0
    %411 = vmatpush1.bf16.msra.mxu0 0
    %412 = vmatprep.subr.bf16.mxu0 0
    %413 = vmatpush1.bf16.msra.mxu0 0
    %414 = vmatprep.subr.bf16.mxu0 0
    %415 = vmatpush1.bf16.msra.mxu0 0
    %416 = vmatprep.subr.bf16.mxu0 0
    %417 = vmatpush1.bf16.msra.mxu0 0
    %418 = vmatprep.subr.bf16.mxu0 0
    %419 = vmatpush1.bf16.msra.mxu0 0
    %420 = vmatprep.subr.bf16.mxu0 0
    %421 = vmatpush1.bf16.msra.mxu0 0
    %422 = vmatprep.subr.bf16.mxu0 0
    %423 = vmatpush1.bf16.msra.mxu0 0
    %424 = vmatprep.subr.bf16.mxu0 0
    %425 = vmatpush1.bf16.msra.mxu0 0
    %426 = vmatprep.mubr.bf16.mxu0 0
    %427 = vmatmul.mubr.bf16.gmra.mrb[0].mxu0 %v315
    %v428 = vpop.f32.mrb[0].mxu0
    %v429 = vadd.f32 %v292, %v428
    %v430 = vpop.f32.mrb[0].mxu0
    %v431 = vadd.f32 %v296, %v430
    %v432 = vpop.f32.mrb[0].mxu0
    %v433 = vadd.f32 %v292, %v432
    %v434 = vpop.f32.mrb[0].mxu0
    %v435 = vadd.f32 %v296, %v434
    %436 = vmatprep.mubr.bf16.mxu0 0
    %437 = vmatmul.mubr.bf16.gmra.mrb[0].mxu0 %v316
    %v438 = vpop.f32.mrb[0].mxu0
    %v439 = vadd.f32 %v292, %v438
    %v440 = vpop.f32.mrb[0].mxu0
    %v441 = vadd.f32 %v296, %v440
    %v442 = vpop.f32.mrb[0].mxu0
    %v443 = vadd.f32 %v292, %v442
    %v444 = vpop.f32.mrb[0].mxu0
    %v445 = vadd.f32 %v296, %v444
    %446 = vmatprep.mubr.bf16.mxu0 0
    %447 = vmatmul.mubr.bf16.gmra.mrb[0].mxu0 %v317
    %v448 = vpop.f32.mrb[0].mxu0
    %v449 = vadd.f32 %v292, %v448
    %v450 = vpop.f32.mrb[0].mxu0
    %v451 = vadd.f32 %v296, %v450
    %v452 = vpop.f32.mrb[0].mxu0
    %v453 = vadd.f32 %v292, %v452
    %v454 = vpop.f32.mrb[0].mxu0
    %v455 = vadd.f32 %v296, %v454
    %456 = vmatprep.mubr.bf16.mxu0 0
    %457 = vmatmul.mubr.bf16.gmra.mrb[0].mxu0 %v318
    %v458 = vpop.f32.mrb[0].mxu0
    %v459 = vadd.f32 %v292, %v458
    %v460 = vpop.f32.mrb[0].mxu0
    %v461 = vadd.f32 %v296, %v460
    %v462 = vpop.f32.mrb[0].mxu0
    %v463 = vpop.f32.mrb[0].mxu0
    %464 = vdwg.mxu0
    %465 = vst [vmem:[#allocation4] sm:$0xff] %v358
    %466 = vst [vmem:[#allocation4 + $0x8] sm:$0xff] %v360
    %467 = vst [vmem:[#allocation4 + $0x10] sm:$0xff] %v429
    %468 = vst [vmem:[#allocation4 + $0x18] sm:$0xff] %v431
    %469 = vst [vmem:[#allocation4 + $0x20] sm:$0xff] %v362
    %470 = vst [vmem:[#allocation4 + $0x28] sm:$0xff] %v364
    %471 = vst [vmem:[#allocation4 + $0x30] sm:$0xff] %v433
    %472 = vst [vmem:[#allocation4 + $0x38] sm:$0xff] %v435
    %473 = vst [vmem:[#allocation4 + $0x40] sm:$0xff] %v368
    %474 = vst [vmem:[#allocation4 + $0x48] sm:$0xff] %v370
    %475 = vst [vmem:[#allocation4 + $0x50] sm:$0xff] %v439
    %476 = vst [vmem:[#allocation4 + $0x58] sm:$0xff] %v441
    %477 = vst [vmem:[#allocation4 + $0x60] sm:$0xff] %v372
    %478 = vst [vmem:[#allocation4 + $0x68] sm:$0xff] %v374
    %479 = vst [vmem:[#allocation4 + $0x70] sm:$0xff] %v443
    %480 = vst [vmem:[#allocation4 + $0x78] sm:$0xff] %v445
    %481 = vst [vmem:[#allocation4 + $0x80] sm:$0xff] %v378
    %482 = vst [vmem:[#allocation4 + $0x88] sm:$0xff] %v380
    %483 = vst [vmem:[#allocation4 + $0x90] sm:$0xff] %v449
    %484 = vst [vmem:[#allocation4 + $0x98] sm:$0xff] %v451
    %485 = vst [vmem:[#allocation4 + $0xa0] sm:$0xff] %v382
    %486 = vst [vmem:[#allocation4 + $0xa8] sm:$0xff] %v384
    %487 = vst [vmem:[#allocation4 + $0xb0] sm:$0xff] %v453
    %488 = vst [vmem:[#allocation4 + $0xb8] sm:$0xff] %v455
    %489 = vst [vmem:[#allocation4 + $0xc0] sm:$0xff] %v388
    %490 = vst [vmem:[#allocation4 + $0xc8] sm:$0xff] %v390
    %491 = vst [vmem:[#allocation4 + $0xd0] sm:$0xff] %v459
    %492 = vst [vmem:[#allocation4 + $0xd8] sm:$0xff] %v461
    %v493 = vld [vmem:[#allocation4] sm:$0xff]
    %v494 = vld [vmem:[#allocation4 + $0x8] sm:$0xff]
    %v495 = vld [vmem:[#allocation4 + $0x10] sm:$0xff]
    %v496 = vld [vmem:[#allocation4 + $0x18] sm:$0xff]
    %v497 = vld [vmem:[#allocation2 + $0x100] sm:$0xff]
    %v498 = vld [vmem:[#allocation2 + $0x108] sm:$0xff]
    %v499 = vld [vmem:[#allocation2 + $0x110] sm:$0xff]
    %v500 = vld [vmem:[#allocation2 + $0x118] sm:$0xff]
    %v501 = vld [vmem:[#allocation2 + $0x120] sm:$0xff]
    %v502 = vld [vmem:[#allocation2 + $0x128] sm:$0xff]
    %v503 = vld [vmem:[#allocation2 + $0x130] sm:$0xff]
    %v504 = vld [vmem:[#allocation2 + $0x138] sm:$0xff]
    %v505 = vld [vmem:[#allocation2 + $0x140] sm:$0xff]
    %v506 = vld [vmem:[#allocation2 + $0x148] sm:$0xff]
    %v507 = vld [vmem:[#allocation2 + $0x150] sm:$0xff]
    %v508 = vld [vmem:[#allocation2 + $0x158] sm:$0xff]
    %v509 = vld [vmem:[#allocation2 + $0x160] sm:$0xff]
    %v510 = vld [vmem:[#allocation2 + $0x168] sm:$0xff]
    %v511 = vld [vmem:[#allocation2 + $0x170] sm:$0xff]
    %v512 = vld [vmem:[#allocation2 + $0x178] sm:$0xff]
    %v513 = vld [vmem:[#allocation2 + $0x180] sm:$0xff]
    %v514 = vld [vmem:[#allocation2 + $0x188] sm:$0xff]
    %v515 = vld [vmem:[#allocation2 + $0x190] sm:$0xff]
    %v516 = vld [vmem:[#allocation2 + $0x198] sm:$0xff]
    %v517 = vld [vmem:[#allocation2 + $0x1a0] sm:$0xff]
    %v518 = vld [vmem:[#allocation2 + $0x1a8] sm:$0xff]
    %v519 = vld [vmem:[#allocation2 + $0x1b0] sm:$0xff]
    %v520 = vld [vmem:[#allocation2 + $0x1b8] sm:$0xff]
    %v521 = vld [vmem:[#allocation2 + $0x1c0] sm:$0xff]
    %v522 = vld [vmem:[#allocation2 + $0x1c8] sm:$0xff]
    %v523 = vld [vmem:[#allocation2 + $0x1d0] sm:$0xff]
    %v524 = vld [vmem:[#allocation2 + $0x1d8] sm:$0xff]
    %v525 = vld [vmem:[#allocation2 + $0x1e0] sm:$0xff]
    %v526 = vld [vmem:[#allocation2 + $0x1e8] sm:$0xff]
    %v527 = vld [vmem:[#allocation2 + $0x1f0] sm:$0xff]
    %v528 = vld [vmem:[#allocation2 + $0x1f8] sm:$0xff]
    %529 = vmatprep.subr.bf16.mxu0 %v498
    %530 = vmatpush1.bf16.msra.mxu0 %v497
    %531 = vmatprep.subr.bf16.mxu0 %v502
    %532 = vmatpush1.bf16.msra.mxu0 %v501
    %533 = vmatprep.subr.bf16.mxu0 %v506
    %534 = vmatpush1.bf16.msra.mxu0 %v505
    %535 = vmatprep.subr.bf16.mxu0 %v510
    %536 = vmatpush1.bf16.msra.mxu0 %v509
    %537 = vmatprep.subr.bf16.mxu0 %v514
    %538 = vmatpush1.bf16.msra.mxu0 %v513
    %539 = vmatprep.subr.bf16.mxu0 %v518
    %540 = vmatpush1.bf16.msra.mxu0 %v517
    %541 = vmatprep.subr.bf16.mxu0 %v522
    %542 = vmatpush1.bf16.msra.mxu0 %v521
    %543 = vmatprep.subr.bf16.mxu0 %v526
    %544 = vmatpush1.bf16.msra.mxu0 %v525
    %545 = vmatprep.subr.bf16.mxu0 0
    %546 = vmatpush1.bf16.msra.mxu0 0
    %547 = vmatprep.subr.bf16.mxu0 0
    %548 = vmatpush1.bf16.msra.mxu0 0
    %549 = vmatprep.subr.bf16.mxu0 0
    %550 = vmatpush1.bf16.msra.mxu0 0
    %551 = vmatprep.subr.bf16.mxu0 0
    %552 = vmatpush1.bf16.msra.mxu0 0
    %553 = vmatprep.subr.bf16.mxu0 0
    %554 = vmatpush1.bf16.msra.mxu0 0
    %555 = vmatprep.subr.bf16.mxu0 0
    %556 = vmatpush1.bf16.msra.mxu0 0
    %557 = vmatprep.subr.bf16.mxu0 0
    %558 = vmatpush1.bf16.msra.mxu0 0
    %559 = vmatprep.subr.bf16.mxu0 0
    %560 = vmatpush1.bf16.msra.mxu0 0
    %561 = vmatprep.mubr.bf16.mxu0 0
    %562 = vmatmul.mubr.bf16.gmra.mrb[0].mxu0 0
    %v563 = vpop.f32.mrb[0].mxu0
    %v564 = vadd.f32 0.0, %v563
    %v565 = vpop.f32.mrb[0].mxu0
    %v566 = vadd.f32 0.0, %v565
    %v567 = vpop.f32.mrb[0].mxu0
    %v568 = vpop.f32.mrb[0].mxu0
    %569 = vdwg.mxu0
    %570 = vmatprep.subr.bf16.mxu0 %v500
    %571 = vmatpush1.bf16.msra.mxu0 %v499
    %572 = vmatprep.subr.bf16.mxu0 %v504
    %573 = vmatpush1.bf16.msra.mxu0 %v503
    %574 = vmatprep.subr.bf16.mxu0 %v508
    %575 = vmatpush1.bf16.msra.mxu0 %v507
    %576 = vmatprep.subr.bf16.mxu0 %v512
    %577 = vmatpush1.bf16.msra.mxu0 %v511
    %578 = vmatprep.subr.bf16.mxu0 %v516
    %579 = vmatpush1.bf16.msra.mxu0 %v515
    %580 = vmatprep.subr.bf16.mxu0 %v520
    %581 = vmatpush1.bf16.msra.mxu0 %v519
    %582 = vmatprep.subr.bf16.mxu0 %v524
    %583 = vmatpush1.bf16.msra.mxu0 %v523
    %584 = vmatprep.subr.bf16.mxu0 %v528
    %585 = vmatpush1.bf16.msra.mxu0 %v527
    %586 = vmatprep.subr.bf16.mxu0 0
    %587 = vmatpush1.bf16.msra.mxu0 0
    %588 = vmatprep.subr.bf16.mxu0 0
    %589 = vmatpush1.bf16.msra.mxu0 0
    %590 = vmatprep.subr.bf16.mxu0 0
    %591 = vmatpush1.bf16.msra.mxu0 0
    %592 = vmatprep.subr.bf16.mxu0 0
    %593 = vmatpush1.bf16.msra.mxu0 0
    %594 = vmatprep.subr.bf16.mxu0 0
    %595 = vmatpush1.bf16.msra.mxu0 0
    %596 = vmatprep.subr.bf16.mxu0 0
    %597 = vmatpush1.bf16.msra.mxu0 0
    %598 = vmatprep.subr.bf16.mxu0 0
    %599 = vmatpush1.bf16.msra.mxu0 0
    %600 = vmatprep.subr.bf16.mxu0 0
    %601 = vmatpush1.bf16.msra.mxu0 0
    %602 = vmatprep.mubr.bf16.mxu0 0
    %603 = vmatmul.mubr.bf16.gmra.mrb[0].mxu0 0
    %v604 = vpop.f32.mrb[0].mxu0
    %v605 = vadd.f32 0.0, %v604
    %v606 = vpop.f32.mrb[0].mxu0
    %v607 = vadd.f32 0.0, %v606
    %v608 = vpop.f32.mrb[0].mxu0
    %v609 = vpop.f32.mrb[0].mxu0
    %610 = vdwg.mxu0
    %v611 = vadd.f32 %v493, %v564
    %v612 = vadd.f32 %v494, %v566
    %v613 = vadd.f32 %v495, %v605
    %v614 = vadd.f32 %v496, %v607
    %v615 = vxor.u32 %v611, 2147483648
    %v616 = vxor.u32 %v612, 2147483648
    %v617 = vxor.u32 %v613, 2147483648
    %v618 = vmul.f32 %v615, 1.442695
    %v619 = vpow.pop %v618
    %v620 = vmul.f32 %v616, 1.442695
    %v621 = vpow.pop %v620
    %v622 = vmul.f32 %v617, 1.442695
    %v623 = vpow.pop %v622
    %v624 = vadd.f32 %v619, 1.0
    %v625 = vadd.f32 %v621, 1.0
    %v626 = vadd.f32 %v623, 1.0
    %v627 = vrcp.pop %v624
    %v628 = vmul.f32 1.0, %v627
    %v629 = vrcp.pop %v625
    %v630 = vmul.f32 1.0, %v629
    %v631 = vrcp.pop %v626
    %v632 = vmul.f32 1.0, %v631
    %v633 = vtanh.pop %v614
    %v634 = vmul.f32 %v630, 0.0
    %v635 = vmul.f32 %v628, %v633
    %v636 = vadd.f32 %v634, %v635
    %v637 = vtanh.pop %v636
    %v638 = vmul.f32 %v632, %v637
    %v639 = vpack.c.bf16 %v638, %v638
    %v640 = vld [vmem:[#allocation4 + $0x20] sm:$0xff]
    %v641 = vld [vmem:[#allocation4 + $0x28] sm:$0xff]
    %v642 = vld [vmem:[#allocation4 + $0x30] sm:$0xff]
    %v643 = vld [vmem:[#allocation4 + $0x38] sm:$0xff]
    %644 = vmatprep.subr.bf16.mxu0 %v498
    %645 = vmatpush1.bf16.msra.mxu0 %v497
    %646 = vmatprep.subr.bf16.mxu0 %v502
    %647 = vmatpush1.bf16.msra.mxu0 %v501
    %648 = vmatprep.subr.bf16.mxu0 %v506
    %649 = vmatpush1.bf16.msra.mxu0 %v505
    %650 = vmatprep.subr.bf16.mxu0 %v510
    %651 = vmatpush1.bf16.msra.mxu0 %v509
    %652 = vmatprep.subr.bf16.mxu0 %v514
    %653 = vmatpush1.bf16.msra.mxu0 %v513
    %654 = vmatprep.subr.bf16.mxu0 %v518
    %655 = vmatpush1.bf16.msra.mxu0 %v517
    %656 = vmatprep.subr.bf16.mxu0 %v522
    %657 = vmatpush1.bf16.msra.mxu0 %v521
    %658 = vmatprep.subr.bf16.mxu0 %v526
    %659 = vmatpush1.bf16.msra.mxu0 %v525
    %660 = vmatprep.subr.bf16.mxu0 0
    %661 = vmatpush1.bf16.msra.mxu0 0
    %662 = vmatprep.subr.bf16.mxu0 0
    %663 = vmatpush1.bf16.msra.mxu0 0
    %664 = vmatprep.subr.bf16.mxu0 0
    %665 = vmatpush1.bf16.msra.mxu0 0
    %666 = vmatprep.subr.bf16.mxu0 0
    %667 = vmatpush1.bf16.msra.mxu0 0
    %668 = vmatprep.subr.bf16.mxu0 0
    %669 = vmatpush1.bf16.msra.mxu0 0
    %670 = vmatprep.subr.bf16.mxu0 0
    %671 = vmatpush1.bf16.msra.mxu0 0
    %672 = vmatprep.subr.bf16.mxu0 0
    %673 = vmatpush1.bf16.msra.mxu0 0
    %674 = vmatprep.subr.bf16.mxu0 0
    %675 = vmatpush1.bf16.msra.mxu0 0
    %676 = vmatprep.mubr.bf16.mxu0 0
    %677 = vmatmul.mubr.bf16.gmra.mrb[0].mxu0 %v639
    %v678 = vpop.f32.mrb[0].mxu0
    %v679 = vadd.f32 0.0, %v678
    %v680 = vpop.f32.mrb[0].mxu0
    %v681 = vadd.f32 0.0, %v680
    %v682 = vpop.f32.mrb[0].mxu0
    %v683 = vpop.f32.mrb[0].mxu0
    %684 = vdwg.mxu0
    %685 = vmatprep.subr.bf16.mxu0 %v500
    %686 = vmatpush1.bf16.msra.mxu0 %v499
    %687 = vmatprep.subr.bf16.mxu0 %v504
    %688 = vmatpush1.bf16.msra.mxu0 %v503
    %689 = vmatprep.subr.bf16.mxu0 %v508
    %690 = vmatpush1.bf16.msra.mxu0 %v507
    %691 = vmatprep.subr.bf16.mxu0 %v512
    %692 = vmatpush1.bf16.msra.mxu0 %v511
    %693 = vmatprep.subr.bf16.mxu0 %v516
    %694 = vmatpush1.bf16.msra.mxu0 %v515
    %695 = vmatprep.subr.bf16.mxu0 %v520
    %696 = vmatpush1.bf16.msra.mxu0 %v519
    %697 = vmatprep.subr.bf16.mxu0 %v524
    %698 = vmatpush1.bf16.msra.mxu0 %v523
    %699 = vmatprep.subr.bf16.mxu0 %v528
    %700 = vmatpush1.bf16.msra.mxu0 %v527
    %701 = vmatprep.subr.bf16.mxu0 0
    %702 = vmatpush1.bf16.msra.mxu0 0
    %703 = vmatprep.subr.bf16.mxu0 0
    %704 = vmatpush1.bf16.msra.mxu0 0
    %705 = vmatprep.subr.bf16.mxu0 0
    %706 = vmatpush1.bf16.msra.mxu0 0
    %707 = vmatprep.subr.bf16.mxu0 0
    %708 = vmatpush1.bf16.msra.mxu0 0
    %709 = vmatprep.subr.bf16.mxu0 0
    %710 = vmatpush1.bf16.msra.mxu0 0
    %711 = vmatprep.subr.bf16.mxu0 0
    %712 = vmatpush1.bf16.msra.mxu0 0
    %713 = vmatprep.subr.bf16.mxu0 0
    %714 = vmatpush1.bf16.msra.mxu0 0
    %715 = vmatprep.subr.bf16.mxu0 0
    %716 = vmatpush1.bf16.msra.mxu0 0
    %717 = vmatprep.mubr.bf16.mxu0 0
    %718 = vmatmul.mubr.bf16.gmra.mrb[0].mxu0 %v639
    %v719 = vpop.f32.mrb[0].mxu0
    %v720 = vadd.f32 0.0, %v719
    %v721 = vpop.f32.mrb[0].mxu0
    %v722 = vadd.f32 0.0, %v721
    %v723 = vpop.f32.mrb[0].mxu0
    %v724 = vpop.f32.mrb[0].mxu0
    %725 = vdwg.mxu0
    %v726 = vadd.f32 %v640, %v679
    %v727 = vadd.f32 %v641, %v681
    %v728 = vadd.f32 %v642, %v720
    %v729 = vadd.f32 %v643, %v722
    %v730 = vxor.u32 %v726, 2147483648
    %v731 = vxor.u32 %v727, 2147483648
    %v732 = vxor.u32 %v728, 2147483648
    %v733 = vmul.f32 %v730, 1.442695
    %v734 = vpow.pop %v733
    %v735 = vmul.f32 %v731, 1.442695
    %v736 = vpow.pop %v735
    %v737 = vmul.f32 %v732, 1.442695
    %v738 = vpow.pop %v737
    %v739 = vadd.f32 %v734, 1.0
    %v740 = vadd.f32 %v736, 1.0
    %v741 = vadd.f32 %v738, 1.0
    %v742 = vrcp.pop %v739
    %v743 = vmul.f32 1.0, %v742
    %v744 = vrcp.pop %v740
    %v745 = vmul.f32 1.0, %v744
    %v746 = vrcp.pop %v741
    %v747 = vmul.f32 1.0, %v746
    %v748 = vtanh.pop %v729
    %v749 = vmul.f32 %v745, %v636
    %v750 = vmul.f32 %v743, %v748
    %v751 = vadd.f32 %v749, %v750
    %v752 = vtanh.pop %v751
    %v753 = vmul.f32 %v747, %v752
    %v754 = vpack.c.bf16 %v753, %v753
    %s755 = sshll.u32 %s237, 4
    %756 = dma.done %s70, %s755
    %v757 = vld [vmem:[%s69] sm:$0xff]
    %v758 = vld [vmem:[%s69 + $0x8] sm:$0xff]
    %v759 = vld [vmem:[%s69 + $0x10] sm:$0xff]
    %v760 = vld [vmem:[%s69 + $0x18] sm:$0xff]
    %v761 = vld [vmem:[%s69 + $0x20] sm:$0xff]
    %v762 = vld [vmem:[%s69 + $0x28] sm:$0xff]
    %v763 = vld [vmem:[%s69 + $0x30] sm:$0xff]
    %v764 = vld [vmem:[%s69 + $0x38] sm:$0xff]
    %v765 = vld [vmem:[%s69 + $0x40] sm:$0xff]
    %v766 = vld [vmem:[%s69 + $0x48] sm:$0xff]
    %v767 = vld [vmem:[%s69 + $0x50] sm:$0xff]
    %v768 = vld [vmem:[%s69 + $0x58] sm:$0xff]
    %v769 = vld [vmem:[%s69 + $0x60] sm:$0xff]
    %v770 = vld [vmem:[%s69 + $0x68] sm:$0xff]
    %v771 = vld [vmem:[%s69 + $0x70] sm:$0xff]
    %v772 = vld [vmem:[%s69 + $0x78] sm:$0xff]
    %v773 = vld [vmem:[%s69 + $0x80] sm:$0xff]
    %v774 = vld [vmem:[%s69 + $0x88] sm:$0xff]
    %v775 = vld [vmem:[%s69 + $0x90] sm:$0xff]
    %v776 = vld [vmem:[%s69 + $0x98] sm:$0xff]
    %v777 = vld [vmem:[%s69 + $0xa0] sm:$0xff]
    %v778 = vld [vmem:[%s69 + $0xa8] sm:$0xff]
    %v779 = vld [vmem:[%s69 + $0xb0] sm:$0xff]
    %v780 = vld [vmem:[%s69 + $0xb8] sm:$0xff]
    %v781 = vld [vmem:[%s69 + $0xc0] sm:$0xff]
    %v782 = vld [vmem:[%s69 + $0xc8] sm:$0xff]
    %v783 = vld [vmem:[%s69 + $0xd0] sm:$0xff]
    %v784 = vld [vmem:[%s69 + $0xd8] sm:$0xff]
    %v785 = vld [vmem:[%s69 + $0xe0] sm:$0xff]
    %v786 = vld [vmem:[%s69 + $0xe8] sm:$0xff]
    %v787 = vld [vmem:[%s69 + $0xf0] sm:$0xff]
    %v788 = vld [vmem:[%s69 + $0xf8] sm:$0xff]
    %v789 = vld [vmem:[%s69 + $0x100] sm:$0xff]
    %v790 = vld [vmem:[%s69 + $0x108] sm:$0xff]
    %v791 = vld [vmem:[%s69 + $0x110] sm:$0xff]
    %v792 = vld [vmem:[%s69 + $0x118] sm:$0xff]
    %v793 = vld [vmem:[%s69 + $0x120] sm:$0xff]
    %v794 = vld [vmem:[%s69 + $0x128] sm:$0xff]
    %v795 = vld [vmem:[%s69 + $0x130] sm:$0xff]
    %v796 = vld [vmem:[%s69 + $0x138] sm:$0xff]
    %v797 = vld [vmem:[%s69 + $0x140] sm:$0xff]
    %v798 = vld [vmem:[%s69 + $0x148] sm:$0xff]
    %v799 = vld [vmem:[%s69 + $0x150] sm:$0xff]
    %v800 = vld [vmem:[%s69 + $0x158] sm:$0xff]
    %v801 = vld [vmem:[%s69 + $0x160] sm:$0xff]
    %v802 = vld [vmem:[%s69 + $0x168] sm:$0xff]
    %v803 = vld [vmem:[%s69 + $0x170] sm:$0xff]
    %v804 = vld [vmem:[%s69 + $0x178] sm:$0xff]
    %v805 = vld [vmem:[%s69 + $0x180] sm:$0xff]
    %v806 = vld [vmem:[%s69 + $0x188] sm:$0xff]
    %v807 = vld [vmem:[%s69 + $0x190] sm:$0xff]
    %v808 = vld [vmem:[%s69 + $0x198] sm:$0xff]
    %v809 = vld [vmem:[%s69 + $0x1a0] sm:$0xff]
    %v810 = vld [vmem:[%s69 + $0x1a8] sm:$0xff]
    %v811 = vld [vmem:[%s69 + $0x1b0] sm:$0xff]
    %v812 = vld [vmem:[%s69 + $0x1b8] sm:$0xff]
    %v813 = vld [vmem:[%s69 + $0x1c0] sm:$0xff]
    %v814 = vld [vmem:[%s69 + $0x1c8] sm:$0xff]
    %v815 = vld [vmem:[%s69 + $0x1d0] sm:$0xff]
    %v816 = vld [vmem:[%s69 + $0x1d8] sm:$0xff]
    %v817 = vld [vmem:[%s69 + $0x1e0] sm:$0xff]
    %v818 = vld [vmem:[%s69 + $0x1e8] sm:$0xff]
    %v819 = vld [vmem:[%s69 + $0x1f0] sm:$0xff]
    %v820 = vld [vmem:[%s69 + $0x1f8] sm:$0xff]
    %821 = vmatprep.subr.bf16.mxu0 %v790
    %822 = vmatpush1.bf16.msra.mxu0 %v789
    %823 = vmatprep.subr.bf16.mxu0 %v794
    %824 = vmatpush1.bf16.msra.mxu0 %v793
    %825 = vmatprep.subr.bf16.mxu0 %v798
    %826 = vmatpush1.bf16.msra.mxu0 %v797
    %827 = vmatprep.subr.bf16.mxu0 %v802
    %828 = vmatpush1.bf16.msra.mxu0 %v801
    %829 = vmatprep.subr.bf16.mxu0 %v806
    %830 = vmatpush1.bf16.msra.mxu0 %v805
    %831 = vmatprep.subr.bf16.mxu0 %v810
    %832 = vmatpush1.bf16.msra.mxu0 %v809
    %833 = vmatprep.subr.bf16.mxu0 %v814
    %834 = vmatpush1.bf16.msra.mxu0 %v813
    %835 = vmatprep.subr.bf16.mxu0 %v818
    %836 = vmatpush1.bf16.msra.mxu0 %v817
    %837 = vmatprep.subr.bf16.mxu0 0
    %838 = vmatpush1.bf16.msra.mxu0 0
    %839 = vmatprep.subr.bf16.mxu0 0
    %840 = vmatpush1.bf16.msra.mxu0 0
    %841 = vmatprep.subr.bf16.mxu0 0
    %842 = vmatpush1.bf16.msra.mxu0 0
    %843 = vmatprep.subr.bf16.mxu0 0
    %844 = vmatpush1.bf16.msra.mxu0 0
    %845 = vmatprep.subr.bf16.mxu0 0
    %846 = vmatpush1.bf16.msra.mxu0 0
    %847 = vmatprep.subr.bf16.mxu0 0
    %848 = vmatpush1.bf16.msra.mxu0 0
    %849 = vmatprep.subr.bf16.mxu0 0
    %850 = vmatpush1.bf16.msra.mxu0 0
    %851 = vmatprep.subr.bf16.mxu0 0
    %852 = vmatpush1.bf16.msra.mxu0 0
    %853 = vmatprep.mubr.bf16.mxu0 0
    %854 = vmatmul.mubr.bf16.gmra.mrb[0].mxu0 0
    %v855 = vpop.f32.mrb[0].mxu0
    %v856 = vadd.f32 0.0, %v855
    %v857 = vpop.f32.mrb[0].mxu0
    %v858 = vadd.f32 0.0, %v857
    %v859 = vpop.f32.mrb[0].mxu0
    %v860 = vpop.f32.mrb[0].mxu0
    %861 = vdwg.mxu0
    %862 = vmatprep.subr.bf16.mxu0 %v792
    %863 = vmatpush1.bf16.msra.mxu0 %v791
    %864 = vmatprep.subr.bf16.mxu0 %v796
    %865 = vmatpush1.bf16.msra.mxu0 %v795
    %866 = vmatprep.subr.bf16.mxu0 %v800
    %867 = vmatpush1.bf16.msra.mxu0 %v799
    %868 = vmatprep.subr.bf16.mxu0 %v804
    %869 = vmatpush1.bf16.msra.mxu0 %v803
    %870 = vmatprep.subr.bf16.mxu0 %v808
    %871 = vmatpush1.bf16.msra.mxu0 %v807
    %872 = vmatprep.subr.bf16.mxu0 %v812
    %873 = vmatpush1.bf16.msra.mxu0 %v811
    %874 = vmatprep.subr.bf16.mxu0 %v816
    %875 = vmatpush1.bf16.msra.mxu0 %v815
    %876 = vmatprep.subr.bf16.mxu0 %v820
    %877 = vmatpush1.bf16.msra.mxu0 %v819
    %878 = vmatprep.subr.bf16.mxu0 0
    %879 = vmatpush1.bf16.msra.mxu0 0
    %880 = vmatprep.subr.bf16.mxu0 0
    %881 = vmatpush1.bf16.msra.mxu0 0
    %882 = vmatprep.subr.bf16.mxu0 0
    %883 = vmatpush1.bf16.msra.mxu0 0
    %884 = vmatprep.subr.bf16.mxu0 0
    %885 = vmatpush1.bf16.msra.mxu0 0
    %886 = vmatprep.subr.bf16.mxu0 0
    %887 = vmatpush1.bf16.msra.mxu0 0
    %888 = vmatprep.subr.bf16.mxu0 0
    %889 = vmatpush1.bf16.msra.mxu0 0
    %890 = vmatprep.subr.bf16.mxu0 0
    %891 = vmatpush1.bf16.msra.mxu0 0
    %892 = vmatprep.subr.bf16.mxu0 0
    %893 = vmatpush1.bf16.msra.mxu0 0
    %894 = vmatprep.mubr.bf16.mxu0 0
    %895 = vmatmul.mubr.bf16.gmra.mrb[0].mxu0 0
    %v896 = vpop.f32.mrb[0].mxu0
    %v897 = vadd.f32 0.0, %v896
    %v898 = vpop.f32.mrb[0].mxu0
    %v899 = vadd.f32 0.0, %v898
    %v900 = vpop.f32.mrb[0].mxu0
    %v901 = vpop.f32.mrb[0].mxu0
    %902 = vdwg.mxu0
    %903 = vmatprep.subr.bf16.mxu0 %v758
    %904 = vmatpush1.bf16.msra.mxu0 %v757
    %905 = vmatprep.subr.bf16.mxu0 %v762
    %906 = vmatpush1.bf16.msra.mxu0 %v761
    %907 = vmatprep.subr.bf16.mxu0 %v766
    %908 = vmatpush1.bf16.msra.mxu0 %v765
    %909 = vmatprep.subr.bf16.mxu0 %v770
    %910 = vmatpush1.bf16.msra.mxu0 %v769
    %911 = vmatprep.subr.bf16.mxu0 %v774
    %912 = vmatpush1.bf16.msra.mxu0 %v773
    %913 = vmatprep.subr.bf16.mxu0 %v778
    %914 = vmatpush1.bf16.msra.mxu0 %v777
    %915 = vmatprep.subr.bf16.mxu0 %v782
    %916 = vmatpush1.bf16.msra.mxu0 %v781
    %917 = vmatprep.subr.bf16.mxu0 %v786
    %918 = vmatpush1.bf16.msra.mxu0 %v785
    %919 = vmatprep.subr.bf16.mxu0 0
    %920 = vmatpush1.bf16.msra.mxu0 0
    %921 = vmatprep.subr.bf16.mxu0 0
    %922 = vmatpush1.bf16.msra.mxu0 0
    %923 = vmatprep.subr.bf16.mxu0 0
    %924 = vmatpush1.bf16.msra.mxu0 0
    %925 = vmatprep.subr.bf16.mxu0 0
    %926 = vmatpush1.bf16.msra.mxu0 0
    %927 = vmatprep.subr.bf16.mxu0 0
    %928 = vmatpush1.bf16.msra.mxu0 0
    %929 = vmatprep.subr.bf16.mxu0 0
    %930 = vmatpush1.bf16.msra.mxu0 0
    %931 = vmatprep.subr.bf16.mxu0 0
    %932 = vmatpush1.bf16.msra.mxu0 0
    %933 = vmatprep.subr.bf16.mxu0 0
    %934 = vmatpush1.bf16.msra.mxu0 0
    %935 = vmatprep.mubr.bf16.mxu0 0
    %936 = vmatmul.mubr.bf16.gmra.mrb[0].mxu0 %v639
    %v937 = vpop.f32.mrb[0].mxu0
    %v938 = vadd.f32 %v856, %v937
    %v939 = vpop.f32.mrb[0].mxu0
    %v940 = vadd.f32 %v858, %v939
    %v941 = vpop.f32.mrb[0].mxu0
    %v942 = vpop.f32.mrb[0].mxu0
    %943 = vdwg.mxu0
    %944 = vmatprep.subr.bf16.mxu0 %v760
    %945 = vmatpush1.bf16.msra.mxu0 %v759
    %946 = vmatprep.subr.bf16.mxu0 %v764
    %947 = vmatpush1.bf16.msra.mxu0 %v763
    %948 = vmatprep.subr.bf16.mxu0 %v768
    %949 = vmatpush1.bf16.msra.mxu0 %v767
    %950 = vmatprep.subr.bf16.mxu0 %v772
    %951 = vmatpush1.bf16.msra.mxu0 %v771
    %952 = vmatprep.subr.bf16.mxu0 %v776
    %953 = vmatpush1.bf16.msra.mxu0 %v775
    %954 = vmatprep.subr.bf16.mxu0 %v780
    %955 = vmatpush1.bf16.msra.mxu0 %v779
    %956 = vmatprep.subr.bf16.mxu0 %v784
    %957 = vmatpush1.bf16.msra.mxu0 %v783
    %958 = vmatprep.subr.bf16.mxu0 %v788
    %959 = vmatpush1.bf16.msra.mxu0 %v787
    %960 = vmatprep.subr.bf16.mxu0 0
    %961 = vmatpush1.bf16.msra.mxu0 0
    %962 = vmatprep.subr.bf16.mxu0 0
    %963 = vmatpush1.bf16.msra.mxu0 0
    %964 = vmatprep.subr.bf16.mxu0 0
    %965 = vmatpush1.bf16.msra.mxu0 0
    %966 = vmatprep.subr.bf16.mxu0 0
    %967 = vmatpush1.bf16.msra.mxu0 0
    %968 = vmatprep.subr.bf16.mxu0 0
    %969 = vmatpush1.bf16.msra.mxu0 0
    %970 = vmatprep.subr.bf16.mxu0 0
    %971 = vmatpush1.bf16.msra.mxu0 0
    %972 = vmatprep.subr.bf16.mxu0 0
    %973 = vmatpush1.bf16.msra.mxu0 0
    %974 = vmatprep.subr.bf16.mxu0 0
    %975 = vmatpush1.bf16.msra.mxu0 0
    %976 = vmatprep.mubr.bf16.mxu0 0
    %977 = vmatmul.mubr.bf16.gmra.mrb[0].mxu0 %v639
    %v978 = vpop.f32.mrb[0].mxu0
    %v979 = vadd.f32 %v897, %v978
    %v980 = vpop.f32.mrb[0].mxu0
    %v981 = vadd.f32 %v899, %v980
    %v982 = vpop.f32.mrb[0].mxu0
    %v983 = vpop.f32.mrb[0].mxu0
    %984 = vdwg.mxu0
    %s985 = scalar_lea.vmem [#allocation6], 4
    %v986 = vld [vmem:[%s985] sm:$0xf]
    %v988 = vlaneseq
    %v989 = vshrl.u32 %v988, 7
    %v990 = vsub.s32 0, %v989
    %v991 = vrot.slane %v986, %v990
    %v992 = vlaneseq
    %v993 = vshrl.u32 %v992, 7
    %v994 = vsub.s32 1, %v993
    %v995 = vrot.slane %v986, %v994
    %v996 = vlaneseq
    %v997 = vshrl.u32 %v996, 7
    %v998 = vsub.s32 2, %v997
    %v999 = vrot.slane %v986, %v998
    %v1000 = vlaneseq
    %v1001 = vshrl.u32 %v1000, 7
    %v1002 = vsub.s32 3, %v1001
    %v1003 = vrot.slane %v986, %v1002
    %v1008 = vadd.f32 %v938, %v991
    %v1009 = vadd.f32 %v940, %v995
    %v1010 = vadd.f32 %v979, %v999
    %v1011 = vadd.f32 %v981, %v1003
    %v1012 = vxor.u32 %v1008, 2147483648
    %v1013 = vxor.u32 %v1009, 2147483648
    %v1014 = vxor.u32 %v1010, 2147483648
    %v1015 = vmul.f32 %v1012, 1.442695
    %v1016 = vpow.pop %v1015
    %v1017 = vmul.f32 %v1013, 1.442695
    %v1018 = vpow.pop %v1017
    %v1019 = vmul.f32 %v1014, 1.442695
    %v1020 = vpow.pop %v1019
    %v1021 = vadd.f32 %v1016, 1.0
    %v1022 = vadd.f32 %v1018, 1.0
    %v1023 = vadd.f32 %v1020, 1.0
    %v1024 = vrcp.pop %v1021
    %v1025 = vmul.f32 1.0, %v1024
    %v1026 = vrcp.pop %v1022
    %v1027 = vmul.f32 1.0, %v1026
    %v1028 = vrcp.pop %v1023
    %v1029 = vmul.f32 1.0, %v1028
    %v1030 = vtanh.pop %v1011
    %v1031 = vmul.f32 %v1027, 0.0
    %v1032 = vmul.f32 %v1025, %v1030
    %v1033 = vadd.f32 %v1031, %v1032
    %v1034 = vtanh.pop %v1033
    %v1035 = vmul.f32 %v1029, %v1034
    %v1036 = vpack.c.bf16 %v1035, %v1035
    %v1037 = vld [vmem:[#allocation4 + $0x40] sm:$0xff]
    %v1038 = vld [vmem:[#allocation4 + $0x48] sm:$0xff]
    %v1039 = vld [vmem:[#allocation4 + $0x50] sm:$0xff]
    %v1040 = vld [vmem:[#allocation4 + $0x58] sm:$0xff]
    %v1041 = vld [vmem:[#allocation2 + $0x100] sm:$0xff]
    %v1042 = vld [vmem:[#allocation2 + $0x108] sm:$0xff]
    %v1043 = vld [vmem:[#allocation2 + $0x110] sm:$0xff]
    %v1044 = vld [vmem:[#allocation2 + $0x118] sm:$0xff]
    %v1045 = vld [vmem:[#allocation2 + $0x120] sm:$0xff]
    %v1046 = vld [vmem:[#allocation2 + $0x128] sm:$0xff]
    %v1047 = vld [vmem:[#allocation2 + $0x130] sm:$0xff]
    %v1048 = vld [vmem:[#allocation2 + $0x138] sm:$0xff]
    %v1049 = vld [vmem:[#allocation2 + $0x140] sm:$0xff]
    %v1050 = vld [vmem:[#allocation2 + $0x148] sm:$0xff]
    %v1051 = vld [vmem:[#allocation2 + $0x150] sm:$0xff]
    %v1052 = vld [vmem:[#allocation2 + $0x158] sm:$0xff]
    %v1053 = vld [vmem:[#allocation2 + $0x160] sm:$0xff]
    %v1054 = vld [vmem:[#allocation2 + $0x168] sm:$0xff]
    %v1055 = vld [vmem:[#allocation2 + $0x170] sm:$0xff]
    %v1056 = vld [vmem:[#allocation2 + $0x178] sm:$0xff]
    %v1057 = vld [vmem:[#allocation2 + $0x180] sm:$0xff]
    %v1058 = vld [vmem:[#allocation2 + $0x188] sm:$0xff]
    %v1059 = vld [vmem:[#allocation2 + $0x190] sm:$0xff]
    %v1060 = vld [vmem:[#allocation2 + $0x198] sm:$0xff]
    %v1061 = vld [vmem:[#allocation2 + $0x1a0] sm:$0xff]
    %v1062 = vld [vmem:[#allocation2 + $0x1a8] sm:$0xff]
    %v1063 = vld [vmem:[#allocation2 + $0x1b0] sm:$0xff]
    %v1064 = vld [vmem:[#allocation2 + $0x1b8] sm:$0xff]
    %v1065 = vld [vmem:[#allocation2 + $0x1c0] sm:$0xff]
    %v1066 = vld [vmem:[#allocation2 + $0x1c8] sm:$0xff]
    %v1067 = vld [vmem:[#allocation2 + $0x1d0] sm:$0xff]
    %v1068 = vld [vmem:[#allocation2 + $0x1d8] sm:$0xff]
    %v1069 = vld [vmem:[#allocation2 + $0x1e0] sm:$0xff]
    %v1070 = vld [vmem:[#allocation2 + $0x1e8] sm:$0xff]
    %v1071 = vld [vmem:[#allocation2 + $0x1f0] sm:$0xff]
    %v1072 = vld [vmem:[#allocation2 + $0x1f8] sm:$0xff]
    %1073 = vmatprep.subr.bf16.mxu0 %v1042
    %1074 = vmatpush1.bf16.msra.mxu0 %v1041
    %1075 = vmatprep.subr.bf16.mxu0 %v1046
    %1076 = vmatpush1.bf16.msra.mxu0 %v1045
    %1077 = vmatprep.subr.bf16.mxu0 %v1050
    %1078 = vmatpush1.bf16.msra.mxu0 %v1049
    %1079 = vmatprep.subr.bf16.mxu0 %v1054
    %1080 = vmatpush1.bf16.msra.mxu0 %v1053
    %1081 = vmatprep.subr.bf16.mxu0 %v1058
    %1082 = vmatpush1.bf16.msra.mxu0 %v1057
    %1083 = vmatprep.subr.bf16.mxu0 %v1062
    %1084 = vmatpush1.bf16.msra.mxu0 %v1061
    %1085 = vmatprep.subr.bf16.mxu0 %v1066
    %1086 = vmatpush1.bf16.msra.mxu0 %v1065
    %1087 = vmatprep.subr.bf16.mxu0 %v1070
    %1088 = vmatpush1.bf16.msra.mxu0 %v1069
    %1089 = vmatprep.subr.bf16.mxu0 0
    %1090 = vmatpush1.bf16.msra.mxu0 0
    %1091 = vmatprep.subr.bf16.mxu0 0
    %1092 = vmatpush1.bf16.msra.mxu0 0
    %1093 = vmatprep.subr.bf16.mxu0 0
    %1094 = vmatpush1.bf16.msra.mxu0 0
    %1095 = vmatprep.subr.bf16.mxu0 0
    %1096 = vmatpush1.bf16.msra.mxu0 0
    %1097 = vmatprep.subr.bf16.mxu0 0
    %1098 = vmatpush1.bf16.msra.mxu0 0
    %1099 = vmatprep.subr.bf16.mxu0 0
    %1100 = vmatpush1.bf16.msra.mxu0 0
    %1101 = vmatprep.subr.bf16.mxu0 0
    %1102 = vmatpush1.bf16.msra.mxu0 0
    %1103 = vmatprep.subr.bf16.mxu0 0
    %1104 = vmatpush1.bf16.msra.mxu0 0
    %1105 = vmatprep.mubr.bf16.mxu0 0
    %1106 = vmatmul.mubr.bf16.gmra.mrb[0].mxu0 %v754
    %v1107 = vpop.f32.mrb[0].mxu0
    %v1108 = vadd.f32 0.0, %v1107
    %v1109 = vpop.f32.mrb[0].mxu0
    %v1110 = vadd.f32 0.0, %v1109
    %v1111 = vpop.f32.mrb[0].mxu0
    %v1112 = vpop.f32.mrb[0].mxu0
    %1113 = vdwg.mxu0
    %1114 = vmatprep.subr.bf16.mxu0 %v1044
    %1115 = vmatpush1.bf16.msra.mxu0 %v1043
    %1116 = vmatprep.subr.bf16.mxu0 %v1048
    %1117 = vmatpush1.bf16.msra.mxu0 %v1047
    %1118 = vmatprep.subr.bf16.mxu0 %v1052
    %1119 = vmatpush1.bf16.msra.mxu0 %v1051
    %1120 = vmatprep.subr.bf16.mxu0 %v1056
    %1121 = vmatpush1.bf16.msra.mxu0 %v1055
    %1122 = vmatprep.subr.bf16.mxu0 %v1060
    %1123 = vmatpush1.bf16.msra.mxu0 %v1059
    %1124 = vmatprep.subr.bf16.mxu0 %v1064
    %1125 = vmatpush1.bf16.msra.mxu0 %v1063
    %1126 = vmatprep.subr.bf16.mxu0 %v1068
    %1127 = vmatpush1.bf16.msra.mxu0 %v1067
    %1128 = vmatprep.subr.bf16.mxu0 %v1072
    %1129 = vmatpush1.bf16.msra.mxu0 %v1071
    %1130 = vmatprep.subr.bf16.mxu0 0
    %1131 = vmatpush1.bf16.msra.mxu0 0
    %1132 = vmatprep.subr.bf16.mxu0 0
    %1133 = vmatpush1.bf16.msra.mxu0 0
    %1134 = vmatprep.subr.bf16.mxu0 0
    %1135 = vmatpush1.bf16.msra.mxu0 0
    %1136 = vmatprep.subr.bf16.mxu0 0
    %1137 = vmatpush1.bf16.msra.mxu0 0
    %1138 = vmatprep.subr.bf16.mxu0 0
    %1139 = vmatpush1.bf16.msra.mxu0 0
    %1140 = vmatprep.subr.bf16.mxu0 0
    %1141 = vmatpush1.bf16.msra.mxu0 0
    %1142 = vmatprep.subr.bf16.mxu0 0
    %1143 = vmatpush1.bf16.msra.mxu0 0
    %1144 = vmatprep.subr.bf16.mxu0 0
    %1145 = vmatpush1.bf16.msra.mxu0 0
    %1146 = vmatprep.mubr.bf16.mxu0 0
    %1147 = vmatmul.mubr.bf16.gmra.mrb[0].mxu0 %v754
    %v1148 = vpop.f32.mrb[0].mxu0
    %v1149 = vadd.f32 0.0, %v1148
    %v1150 = vpop.f32.mrb[0].mxu0
    %v1151 = vadd.f32 0.0, %v1150
    %v1152 = vpop.f32.mrb[0].mxu0
    %v1153 = vpop.f32.mrb[0].mxu0
    %1154 = vdwg.mxu0
    %v1155 = vadd.f32 %v1037, %v1108
    %v1156 = vadd.f32 %v1038, %v1110
    %v1157 = vadd.f32 %v1039, %v1149
    %v1158 = vadd.f32 %v1040, %v1151
    %v1159 = vxor.u32 %v1155, 2147483648
    %v1160 = vxor.u32 %v1156, 2147483648
    %v1161 = vxor.u32 %v1157, 2147483648
    %v1162 = vmul.f32 %v1159, 1.442695
    %v1163 = vpow.pop %v1162
    %v1164 = vmul.f32 %v1160, 1.442695
    %v1165 = vpow.pop %v1164
    %v1166 = vmul.f32 %v1161, 1.442695
    %v1167 = vpow.pop %v1166
    %v1168 = vadd.f32 %v1163, 1.0
    %v1169 = vadd.f32 %v1165, 1.0
    %v1170 = vadd.f32 %v1167, 1.0
    %v1171 = vrcp.pop %v1168
    %v1172 = vmul.f32 1.0, %v1171
    %v1173 = vrcp.pop %v1169
    %v1174 = vmul.f32 1.0, %v1173
    %v1175 = vrcp.pop %v1170
    %v1176 = vmul.f32 1.0, %v1175
    %v1177 = vtanh.pop %v1158
    %v1178 = vmul.f32 %v1174, %v751
    %v1179 = vmul.f32 %v1172, %v1177
    %v1180 = vadd.f32 %v1178, %v1179
    %v1181 = vtanh.pop %v1180
    %v1182 = vmul.f32 %v1176, %v1181
    %v1183 = vpack.c.bf16 %v1182, %v1182
    %1184 = vmatprep.subr.bf16.mxu0 %v790
    %1185 = vmatpush1.bf16.msra.mxu0 %v789
    %1186 = vmatprep.subr.bf16.mxu0 %v794
    %1187 = vmatpush1.bf16.msra.mxu0 %v793
    %1188 = vmatprep.subr.bf16.mxu0 %v798
    %1189 = vmatpush1.bf16.msra.mxu0 %v797
    %1190 = vmatprep.subr.bf16.mxu0 %v802
    %1191 = vmatpush1.bf16.msra.mxu0 %v801
    %1192 = vmatprep.subr.bf16.mxu0 %v806
    %1193 = vmatpush1.bf16.msra.mxu0 %v805
    %1194 = vmatprep.subr.bf16.mxu0 %v810
    %1195 = vmatpush1.bf16.msra.mxu0 %v809
    %1196 = vmatprep.subr.bf16.mxu0 %v814
    %1197 = vmatpush1.bf16.msra.mxu0 %v813
    %1198 = vmatprep.subr.bf16.mxu0 %v818
    %1199 = vmatpush1.bf16.msra.mxu0 %v817
    %1200 = vmatprep.subr.bf16.mxu0 0
    %1201 = vmatpush1.bf16.msra.mxu0 0
    %1202 = vmatprep.subr.bf16.mxu0 0
    %1203 = vmatpush1.bf16.msra.mxu0 0
    %1204 = vmatprep.subr.bf16.mxu0 0
    %1205 = vmatpush1.bf16.msra.mxu0 0
    %1206 = vmatprep.subr.bf16.mxu0 0
    %1207 = vmatpush1.bf16.msra.mxu0 0
    %1208 = vmatprep.subr.bf16.mxu0 0
    %1209 = vmatpush1.bf16.msra.mxu0 0
    %1210 = vmatprep.subr.bf16.mxu0 0
    %1211 = vmatpush1.bf16.msra.mxu0 0
    %1212 = vmatprep.subr.bf16.mxu0 0
    %1213 = vmatpush1.bf16.msra.mxu0 0
    %1214 = vmatprep.subr.bf16.mxu0 0
    %1215 = vmatpush1.bf16.msra.mxu0 0
    %1216 = vmatprep.mubr.bf16.mxu0 0
    %1217 = vmatmul.mubr.bf16.gmra.mrb[0].mxu0 %v1036
    %v1218 = vpop.f32.mrb[0].mxu0
    %v1219 = vadd.f32 0.0, %v1218
    %v1220 = vpop.f32.mrb[0].mxu0
    %v1221 = vadd.f32 0.0, %v1220
    %v1222 = vpop.f32.mrb[0].mxu0
    %v1223 = vpop.f32.mrb[0].mxu0
    %1224 = vdwg.mxu0
    %1225 = vmatprep.subr.bf16.mxu0 %v792
    %1226 = vmatpush1.bf16.msra.mxu0 %v791
    %1227 = vmatprep.subr.bf16.mxu0 %v796
    %1228 = vmatpush1.bf16.msra.mxu0 %v795
    %1229 = vmatprep.subr.bf16.mxu0 %v800
    %1230 = vmatpush1.bf16.msra.mxu0 %v799
    %1231 = vmatprep.subr.bf16.mxu0 %v804
    %1232 = vmatpush1.bf16.msra.mxu0 %v803
    %1233 = vmatprep.subr.bf16.mxu0 %v808
    %1234 = vmatpush1.bf16.msra.mxu0 %v807
    %1235 = vmatprep.subr.bf16.mxu0 %v812
    %1236 = vmatpush1.bf16.msra.mxu0 %v811
    %1237 = vmatprep.subr.bf16.mxu0 %v816
    %1238 = vmatpush1.bf16.msra.mxu0 %v815
    %1239 = vmatprep.subr.bf16.mxu0 %v820
    %1240 = vmatpush1.bf16.msra.mxu0 %v819
    %1241 = vmatprep.subr.bf16.mxu0 0
    %1242 = vmatpush1.bf16.msra.mxu0 0
    %1243 = vmatprep.subr.bf16.mxu0 0
    %1244 = vmatpush1.bf16.msra.mxu0 0
    %1245 = vmatprep.subr.bf16.mxu0 0
    %1246 = vmatpush1.bf16.msra.mxu0 0
    %1247 = vmatprep.subr.bf16.mxu0 0
    %1248 = vmatpush1.bf16.msra.mxu0 0
    %1249 = vmatprep.subr.bf16.mxu0 0
    %1250 = vmatpush1.bf16.msra.mxu0 0
    %1251 = vmatprep.subr.bf16.mxu0 0
    %1252 = vmatpush1.bf16.msra.mxu0 0
    %1253 = vmatprep.subr.bf16.mxu0 0
    %1254 = vmatpush1.bf16.msra.mxu0 0
    %1255 = vmatprep.subr.bf16.mxu0 0
    %1256 = vmatpush1.bf16.msra.mxu0 0
    %1257 = vmatprep.mubr.bf16.mxu0 0
    %1258 = vmatmul.mubr.bf16.gmra.mrb[0].mxu0 %v1036
    %v1259 = vpop.f32.mrb[0].mxu0
    %v1260 = vadd.f32 0.0, %v1259
    %v1261 = vpop.f32.mrb[0].mxu0
    %v1262 = vadd.f32 0.0, %v1261
    %v1263 = vpop.f32.mrb[0].mxu0
    %v1264 = vpop.f32.mrb[0].mxu0
    %1265 = vdwg.mxu0
    %1266 = vmatprep.subr.bf16.mxu0 %v758
    %1267 = vmatpush1.bf16.msra.mxu0 %v757
    %1268 = vmatprep.subr.bf16.mxu0 %v762
    %1269 = vmatpush1.bf16.msra.mxu0 %v761
    %1270 = vmatprep.subr.bf16.mxu0 %v766
    %1271 = vmatpush1.bf16.msra.mxu0 %v765
    %1272 = vmatprep.subr.bf16.mxu0 %v770
    %1273 = vmatpush1.bf16.msra.mxu0 %v769
    %1274 = vmatprep.subr.bf16.mxu0 %v774
    %1275 = vmatpush1.bf16.msra.mxu0 %v773
    %1276 = vmatprep.subr.bf16.mxu0 %v778
    %1277 = vmatpush1.bf16.msra.mxu0 %v777
    %1278 = vmatprep.subr.bf16.mxu0 %v782
    %1279 = vmatpush1.bf16.msra.mxu0 %v781
    %1280 = vmatprep.subr.bf16.mxu0 %v786
    %1281 = vmatpush1.bf16.msra.mxu0 %v785
    %1282 = vmatprep.subr.bf16.mxu0 0
    %1283 = vmatpush1.bf16.msra.mxu0 0
    %1284 = vmatprep.subr.bf16.mxu0 0
    %1285 = vmatpush1.bf16.msra.mxu0 0
    %1286 = vmatprep.subr.bf16.mxu0 0
    %1287 = vmatpush1.bf16.msra.mxu0 0
    %1288 = vmatprep.subr.bf16.mxu0 0
    %1289 = vmatpush1.bf16.msra.mxu0 0
    %1290 = vmatprep.subr.bf16.mxu0 0
    %1291 = vmatpush1.bf16.msra.mxu0 0
    %1292 = vmatprep.subr.bf16.mxu0 0
    %1293 = vmatpush1.bf16.msra.mxu0 0
    %1294 = vmatprep.subr.bf16.mxu0 0
    %1295 = vmatpush1.bf16.msra.mxu0 0
    %1296 = vmatprep.subr.bf16.mxu0 0
    %1297 = vmatpush1.bf16.msra.mxu0 0
    %1298 = vmatprep.mubr.bf16.mxu0 0
    %1299 = vmatmul.mubr.bf16.gmra.mrb[0].mxu0 %v754
    %v1300 = vpop.f32.mrb[0].mxu0
    %v1301 = vadd.f32 %v1219, %v1300
    %v1302 = vpop.f32.mrb[0].mxu0
    %v1303 = vadd.f32 %v1221, %v1302
    %v1304 = vpop.f32.mrb[0].mxu0
    %v1305 = vpop.f32.mrb[0].mxu0
    %1306 = vdwg.mxu0
    %1307 = vmatprep.subr.bf16.mxu0 %v760
    %1308 = vmatpush1.bf16.msra.mxu0 %v759
    %1309 = vmatprep.subr.bf16.mxu0 %v764
    %1310 = vmatpush1.bf16.msra.mxu0 %v763
    %1311 = vmatprep.subr.bf16.mxu0 %v768
    %1312 = vmatpush1.bf16.msra.mxu0 %v767
    %1313 = vmatprep.subr.bf16.mxu0 %v772
    %1314 = vmatpush1.bf16.msra.mxu0 %v771
    %1315 = vmatprep.subr.bf16.mxu0 %v776
    %1316 = vmatpush1.bf16.msra.mxu0 %v775
    %1317 = vmatprep.subr.bf16.mxu0 %v780
    %1318 = vmatpush1.bf16.msra.mxu0 %v779
    %1319 = vmatprep.subr.bf16.mxu0 %v784
    %1320 = vmatpush1.bf16.msra.mxu0 %v783
    %1321 = vmatprep.subr.bf16.mxu0 %v788
    %1322 = vmatpush1.bf16.msra.mxu0 %v787
    %1323 = vmatprep.subr.bf16.mxu0 0
    %1324 = vmatpush1.bf16.msra.mxu0 0
    %1325 = vmatprep.subr.bf16.mxu0 0
    %1326 = vmatpush1.bf16.msra.mxu0 0
    %1327 = vmatprep.subr.bf16.mxu0 0
    %1328 = vmatpush1.bf16.msra.mxu0 0
    %1329 = vmatprep.subr.bf16.mxu0 0
    %1330 = vmatpush1.bf16.msra.mxu0 0
    %1331 = vmatprep.subr.bf16.mxu0 0
    %1332 = vmatpush1.bf16.msra.mxu0 0
    %1333 = vmatprep.subr.bf16.mxu0 0
    %1334 = vmatpush1.bf16.msra.mxu0 0
    %1335 = vmatprep.subr.bf16.mxu0 0
    %1336 = vmatpush1.bf16.msra.mxu0 0
    %1337 = vmatprep.subr.bf16.mxu0 0
    %1338 = vmatpush1.bf16.msra.mxu0 0
    %1339 = vmatprep.mubr.bf16.mxu0 0
    %1340 = vmatmul.mubr.bf16.gmra.mrb[0].mxu0 %v754
    %v1341 = vpop.f32.mrb[0].mxu0
    %v1342 = vadd.f32 %v1260, %v1341
    %v1343 = vpop.f32.mrb[0].mxu0
    %v1344 = vadd.f32 %v1262, %v1343
    %v1345 = vpop.f32.mrb[0].mxu0
    %v1346 = vpop.f32.mrb[0].mxu0
    %1347 = vdwg.mxu0
    %v1348 = vadd.f32 %v1301, %v991
    %v1349 = vadd.f32 %v1303, %v995
    %v1350 = vadd.f32 %v1342, %v999
    %v1351 = vadd.f32 %v1344, %v1003
    %v1352 = vxor.u32 %v1348, 2147483648
    %v1353 = vxor.u32 %v1349, 2147483648
    %v1354 = vxor.u32 %v1350, 2147483648
    %v1355 = vmul.f32 %v1352, 1.442695
    %v1356 = vpow.pop %v1355
    %v1357 = vmul.f32 %v1353, 1.442695
    %v1358 = vpow.pop %v1357
    %v1359 = vmul.f32 %v1354, 1.442695
    %v1360 = vpow.pop %v1359
    %v1361 = vadd.f32 %v1356, 1.0
    %v1362 = vadd.f32 %v1358, 1.0
    %v1363 = vadd.f32 %v1360, 1.0
    %v1364 = vrcp.pop %v1361
    %v1365 = vmul.f32 1.0, %v1364
    %v1366 = vrcp.pop %v1362
    %v1367 = vmul.f32 1.0, %v1366
    %v1368 = vrcp.pop %v1363
    %v1369 = vmul.f32 1.0, %v1368
    %v1370 = vtanh.pop %v1351
    %v1371 = vmul.f32 %v1367, %v1033
    %v1372 = vmul.f32 %v1365, %v1370
    %v1373 = vadd.f32 %v1371, %v1372
    %v1374 = vtanh.pop %v1373
    %v1375 = vmul.f32 %v1369, %v1374
    %v1376 = vpack.c.bf16 %v1375, %v1375
    %s1377 = sshll.u32 %s237, 4
    %1378 = dma.done %s107, %s1377
    %v1379 = vld [vmem:[%s106] sm:$0xff]
    %v1380 = vld [vmem:[%s106 + $0x8] sm:$0xff]
    %v1381 = vld [vmem:[%s106 + $0x10] sm:$0xff]
    %v1382 = vld [vmem:[%s106 + $0x18] sm:$0xff]
    %v1383 = vld [vmem:[%s106 + $0x20] sm:$0xff]
    %v1384 = vld [vmem:[%s106 + $0x28] sm:$0xff]
    %v1385 = vld [vmem:[%s106 + $0x30] sm:$0xff]
    %v1386 = vld [vmem:[%s106 + $0x38] sm:$0xff]
    %v1387 = vld [vmem:[%s106 + $0x40] sm:$0xff]
    %v1388 = vld [vmem:[%s106 + $0x48] sm:$0xff]
    %v1389 = vld [vmem:[%s106 + $0x50] sm:$0xff]
    %v1390 = vld [vmem:[%s106 + $0x58] sm:$0xff]
    %v1391 = vld [vmem:[%s106 + $0x60] sm:$0xff]
    %v1392 = vld [vmem:[%s106 + $0x68] sm:$0xff]
    %v1393 = vld [vmem:[%s106 + $0x70] sm:$0xff]
    %v1394 = vld [vmem:[%s106 + $0x78] sm:$0xff]
    %v1395 = vld [vmem:[%s106 + $0x80] sm:$0xff]
    %v1396 = vld [vmem:[%s106 + $0x88] sm:$0xff]
    %v1397 = vld [vmem:[%s106 + $0x90] sm:$0xff]
    %v1398 = vld [vmem:[%s106 + $0x98] sm:$0xff]
    %v1399 = vld [vmem:[%s106 + $0xa0] sm:$0xff]
    %v1400 = vld [vmem:[%s106 + $0xa8] sm:$0xff]
    %v1401 = vld [vmem:[%s106 + $0xb0] sm:$0xff]
    %v1402 = vld [vmem:[%s106 + $0xb8] sm:$0xff]
    %v1403 = vld [vmem:[%s106 + $0xc0] sm:$0xff]
    %v1404 = vld [vmem:[%s106 + $0xc8] sm:$0xff]
    %v1405 = vld [vmem:[%s106 + $0xd0] sm:$0xff]
    %v1406 = vld [vmem:[%s106 + $0xd8] sm:$0xff]
    %v1407 = vld [vmem:[%s106 + $0xe0] sm:$0xff]
    %v1408 = vld [vmem:[%s106 + $0xe8] sm:$0xff]
    %v1409 = vld [vmem:[%s106 + $0xf0] sm:$0xff]
    %v1410 = vld [vmem:[%s106 + $0xf8] sm:$0xff]
    %v1411 = vld [vmem:[%s106 + $0x100] sm:$0xff]
    %v1412 = vld [vmem:[%s106 + $0x108] sm:$0xff]
    %v1413 = vld [vmem:[%s106 + $0x110] sm:$0xff]
    %v1414 = vld [vmem:[%s106 + $0x118] sm:$0xff]
    %v1415 = vld [vmem:[%s106 + $0x120] sm:$0xff]
    %v1416 = vld [vmem:[%s106 + $0x128] sm:$0xff]
    %v1417 = vld [vmem:[%s106 + $0x130] sm:$0xff]
    %v1418 = vld [vmem:[%s106 + $0x138] sm:$0xff]
    %v1419 = vld [vmem:[%s106 + $0x140] sm:$0xff]
    %v1420 = vld [vmem:[%s106 + $0x148] sm:$0xff]
    %v1421 = vld [vmem:[%s106 + $0x150] sm:$0xff]
    %v1422 = vld [vmem:[%s106 + $0x158] sm:$0xff]
    %v1423 = vld [vmem:[%s106 + $0x160] sm:$0xff]
    %v1424 = vld [vmem:[%s106 + $0x168] sm:$0xff]
    %v1425 = vld [vmem:[%s106 + $0x170] sm:$0xff]
    %v1426 = vld [vmem:[%s106 + $0x178] sm:$0xff]
    %v1427 = vld [vmem:[%s106 + $0x180] sm:$0xff]
    %v1428 = vld [vmem:[%s106 + $0x188] sm:$0xff]
    %v1429 = vld [vmem:[%s106 + $0x190] sm:$0xff]
    %v1430 = vld [vmem:[%s106 + $0x198] sm:$0xff]
    %v1431 = vld [vmem:[%s106 + $0x1a0] sm:$0xff]
    %v1432 = vld [vmem:[%s106 + $0x1a8] sm:$0xff]
    %v1433 = vld [vmem:[%s106 + $0x1b0] sm:$0xff]
    %v1434 = vld [vmem:[%s106 + $0x1b8] sm:$0xff]
    %v1435 = vld [vmem:[%s106 + $0x1c0] sm:$0xff]
    %v1436 = vld [vmem:[%s106 + $0x1c8] sm:$0xff]
    %v1437 = vld [vmem:[%s106 + $0x1d0] sm:$0xff]
    %v1438 = vld [vmem:[%s106 + $0x1d8] sm:$0xff]
    %v1439 = vld [vmem:[%s106 + $0x1e0] sm:$0xff]
    %v1440 = vld [vmem:[%s106 + $0x1e8] sm:$0xff]
    %v1441 = vld [vmem:[%s106 + $0x1f0] sm:$0xff]
    %v1442 = vld [vmem:[%s106 + $0x1f8] sm:$0xff]
    %1443 = vmatprep.subr.bf16.mxu0 %v1412
    %1444 = vmatpush1.bf16.msra.mxu0 %v1411
    %1445 = vmatprep.subr.bf16.mxu0 %v1416
    %1446 = vmatpush1.bf16.msra.mxu0 %v1415
    %1447 = vmatprep.subr.bf16.mxu0 %v1420
    %1448 = vmatpush1.bf16.msra.mxu0 %v1419
    %1449 = vmatprep.subr.bf16.mxu0 %v1424
    %1450 = vmatpush1.bf16.msra.mxu0 %v1423
    %1451 = vmatprep.subr.bf16.mxu0 %v1428
    %1452 = vmatpush1.bf16.msra.mxu0 %v1427
    %1453 = vmatprep.subr.bf16.mxu0 %v1432
    %1454 = vmatpush1.bf16.msra.mxu0 %v1431
    %1455 = vmatprep.subr.bf16.mxu0 %v1436
    %1456 = vmatpush1.bf16.msra.mxu0 %v1435
    %1457 = vmatprep.subr.bf16.mxu0 %v1440
    %1458 = vmatpush1.bf16.msra.mxu0 %v1439
    %1459 = vmatprep.subr.bf16.mxu0 0
    %1460 = vmatpush1.bf16.msra.mxu0 0
    %1461 = vmatprep.subr.bf16.mxu0 0
    %1462 = vmatpush1.bf16.msra.mxu0 0
    %1463 = vmatprep.subr.bf16.mxu0 0
    %1464 = vmatpush1.bf16.msra.mxu0 0
    %1465 = vmatprep.subr.bf16.mxu0 0
    %1466 = vmatpush1.bf16.msra.mxu0 0
    %1467 = vmatprep.subr.bf16.mxu0 0
    %1468 = vmatpush1.bf16.msra.mxu0 0
    %1469 = vmatprep.subr.bf16.mxu0 0
    %1470 = vmatpush1.bf16.msra.mxu0 0
    %1471 = vmatprep.subr.bf16.mxu0 0
    %1472 = vmatpush1.bf16.msra.mxu0 0
    %1473 = vmatprep.subr.bf16.mxu0 0
    %1474 = vmatpush1.bf16.msra.mxu0 0
    %1475 = vmatprep.mubr.bf16.mxu0 0
    %1476 = vmatmul.mubr.bf16.gmra.mrb[0].mxu0 0
    %v1477 = vpop.f32.mrb[0].mxu0
    %v1478 = vadd.f32 0.0, %v1477
    %v1479 = vpop.f32.mrb[0].mxu0
    %v1480 = vadd.f32 0.0, %v1479
    %v1481 = vpop.f32.mrb[0].mxu0
    %v1482 = vpop.f32.mrb[0].mxu0
    %1483 = vdwg.mxu0
    %1484 = vmatprep.subr.bf16.mxu0 %v1414
    %1485 = vmatpush1.bf16.msra.mxu0 %v1413
    %1486 = vmatprep.subr.bf16.mxu0 %v1418
    %1487 = vmatpush1.bf16.msra.mxu0 %v1417
    %1488 = vmatprep.subr.bf16.mxu0 %v1422
    %1489 = vmatpush1.bf16.msra.mxu0 %v1421
    %1490 = vmatprep.subr.bf16.mxu0 %v1426
    %1491 = vmatpush1.bf16.msra.mxu0 %v1425
    %1492 = vmatprep.subr.bf16.mxu0 %v1430
    %1493 = vmatpush1.bf16.msra.mxu0 %v1429
    %1494 = vmatprep.subr.bf16.mxu0 %v1434
    %1495 = vmatpush1.bf16.msra.mxu0 %v1433
    %1496 = vmatprep.subr.bf16.mxu0 %v1438
    %1497 = vmatpush1.bf16.msra.mxu0 %v1437
    %1498 = vmatprep.subr.bf16.mxu0 %v1442
    %1499 = vmatpush1.bf16.msra.mxu0 %v1441
    %1500 = vmatprep.subr.bf16.mxu0 0
    %1501 = vmatpush1.bf16.msra.mxu0 0
    %1502 = vmatprep.subr.bf16.mxu0 0
    %1503 = vmatpush1.bf16.msra.mxu0 0
    %1504 = vmatprep.subr.bf16.mxu0 0
    %1505 = vmatpush1.bf16.msra.mxu0 0
    %1506 = vmatprep.subr.bf16.mxu0 0
    %1507 = vmatpush1.bf16.msra.mxu0 0
    %1508 = vmatprep.subr.bf16.mxu0 0
    %1509 = vmatpush1.bf16.msra.mxu0 0
    %1510 = vmatprep.subr.bf16.mxu0 0
    %1511 = vmatpush1.bf16.msra.mxu0 0
    %1512 = vmatprep.subr.bf16.mxu0 0
    %1513 = vmatpush1.bf16.msra.mxu0 0
    %1514 = vmatprep.subr.bf16.mxu0 0
    %1515 = vmatpush1.bf16.msra.mxu0 0
    %1516 = vmatprep.mubr.bf16.mxu0 0
    %1517 = vmatmul.mubr.bf16.gmra.mrb[0].mxu0 0
    %v1518 = vpop.f32.mrb[0].mxu0
    %v1519 = vadd.f32 0.0, %v1518
    %v1520 = vpop.f32.mrb[0].mxu0
    %v1521 = vadd.f32 0.0, %v1520
    %v1522 = vpop.f32.mrb[0].mxu0
    %v1523 = vpop.f32.mrb[0].mxu0
    %1524 = vdwg.mxu0
    %1525 = vmatprep.subr.bf16.mxu0 %v1380
    %1526 = vmatpush1.bf16.msra.mxu0 %v1379
    %1527 = vmatprep.subr.bf16.mxu0 %v1384
    %1528 = vmatpush1.bf16.msra.mxu0 %v1383
    %1529 = vmatprep.subr.bf16.mxu0 %v1388
    %1530 = vmatpush1.bf16.msra.mxu0 %v1387
    %1531 = vmatprep.subr.bf16.mxu0 %v1392
    %1532 = vmatpush1.bf16.msra.mxu0 %v1391
    %1533 = vmatprep.subr.bf16.mxu0 %v1396
    %1534 = vmatpush1.bf16.msra.mxu0 %v1395
    %1535 = vmatprep.subr.bf16.mxu0 %v1400
    %1536 = vmatpush1.bf16.msra.mxu0 %v1399
    %1537 = vmatprep.subr.bf16.mxu0 %v1404
    %1538 = vmatpush1.bf16.msra.mxu0 %v1403
    %1539 = vmatprep.subr.bf16.mxu0 %v1408
    %1540 = vmatpush1.bf16.msra.mxu0 %v1407
    %1541 = vmatprep.subr.bf16.mxu0 0
    %1542 = vmatpush1.bf16.msra.mxu0 0
    %1543 = vmatprep.subr.bf16.mxu0 0
    %1544 = vmatpush1.bf16.msra.mxu0 0
    %1545 = vmatprep.subr.bf16.mxu0 0
    %1546 = vmatpush1.bf16.msra.mxu0 0
    %1547 = vmatprep.subr.bf16.mxu0 0
    %1548 = vmatpush1.bf16.msra.mxu0 0
    %1549 = vmatprep.subr.bf16.mxu0 0
    %1550 = vmatpush1.bf16.msra.mxu0 0
    %1551 = vmatprep.subr.bf16.mxu0 0
    %1552 = vmatpush1.bf16.msra.mxu0 0
    %1553 = vmatprep.subr.bf16.mxu0 0
    %1554 = vmatpush1.bf16.msra.mxu0 0
    %1555 = vmatprep.subr.bf16.mxu0 0
    %1556 = vmatpush1.bf16.msra.mxu0 0
    %1557 = vmatprep.mubr.bf16.mxu0 0
    %1558 = vmatmul.mubr.bf16.gmra.mrb[0].mxu0 %v1036
    %v1559 = vpop.f32.mrb[0].mxu0
    %v1560 = vadd.f32 %v1478, %v1559
    %v1561 = vpop.f32.mrb[0].mxu0
    %v1562 = vadd.f32 %v1480, %v1561
    %v1563 = vpop.f32.mrb[0].mxu0
    %v1564 = vpop.f32.mrb[0].mxu0
    %1565 = vdwg.mxu0
    %1566 = vmatprep.subr.bf16.mxu0 %v1382
    %1567 = vmatpush1.bf16.msra.mxu0 %v1381
    %1568 = vmatprep.subr.bf16.mxu0 %v1386
    %1569 = vmatpush1.bf16.msra.mxu0 %v1385
    %1570 = vmatprep.subr.bf16.mxu0 %v1390
    %1571 = vmatpush1.bf16.msra.mxu0 %v1389
    %1572 = vmatprep.subr.bf16.mxu0 %v1394
    %1573 = vmatpush1.bf16.msra.mxu0 %v1393
    %1574 = vmatprep.subr.bf16.mxu0 %v1398
    %1575 = vmatpush1.bf16.msra.mxu0 %v1397
    %1576 = vmatprep.subr.bf16.mxu0 %v1402
    %1577 = vmatpush1.bf16.msra.mxu0 %v1401
    %1578 = vmatprep.subr.bf16.mxu0 %v1406
    %1579 = vmatpush1.bf16.msra.mxu0 %v1405
    %1580 = vmatprep.subr.bf16.mxu0 %v1410
    %1581 = vmatpush1.bf16.msra.mxu0 %v1409
    %1582 = vmatprep.subr.bf16.mxu0 0
    %1583 = vmatpush1.bf16.msra.mxu0 0
    %1584 = vmatprep.subr.bf16.mxu0 0
    %1585 = vmatpush1.bf16.msra.mxu0 0
    %1586 = vmatprep.subr.bf16.mxu0 0
    %1587 = vmatpush1.bf16.msra.mxu0 0
    %1588 = vmatprep.subr.bf16.mxu0 0
    %1589 = vmatpush1.bf16.msra.mxu0 0
    %1590 = vmatprep.subr.bf16.mxu0 0
    %1591 = vmatpush1.bf16.msra.mxu0 0
    %1592 = vmatprep.subr.bf16.mxu0 0
    %1593 = vmatpush1.bf16.msra.mxu0 0
    %1594 = vmatprep.subr.bf16.mxu0 0
    %1595 = vmatpush1.bf16.msra.mxu0 0
    %1596 = vmatprep.subr.bf16.mxu0 0
    %1597 = vmatpush1.bf16.msra.mxu0 0
    %1598 = vmatprep.mubr.bf16.mxu0 0
    %1599 = vmatmul.mubr.bf16.gmra.mrb[0].mxu0 %v1036
    %v1600 = vpop.f32.mrb[0].mxu0
    %v1601 = vadd.f32 %v1519, %v1600
    %v1602 = vpop.f32.mrb[0].mxu0
    %v1603 = vadd.f32 %v1521, %v1602
    %v1604 = vpop.f32.mrb[0].mxu0
    %v1605 = vpop.f32.mrb[0].mxu0
    %1606 = vdwg.mxu0
    %s1607 = scalar_lea.vmem [#allocation6], 8
    %v1608 = vld [vmem:[%s1607] sm:$0xf]
    %v1610 = vlaneseq
    %v1611 = vshrl.u32 %v1610, 7
    %v1612 = vsub.s32 0, %v1611
    %v1613 = vrot.slane %v1608, %v1612
    %v1614 = vlaneseq
    %v1615 = vshrl.u32 %v1614, 7
    %v1616 = vsub.s32 1, %v1615
    %v1617 = vrot.slane %v1608, %v1616
    %v1618 = vlaneseq
    %v1619 = vshrl.u32 %v1618, 7
    %v1620 = vsub.s32 2, %v1619
    %v1621 = vrot.slane %v1608, %v1620
    %v1622 = vlaneseq
    %v1623 = vshrl.u32 %v1622, 7
    %v1624 = vsub.s32 3, %v1623
    %v1625 = vrot.slane %v1608, %v1624
    %v1630 = vadd.f32 %v1560, %v1613
    %v1631 = vadd.f32 %v1562, %v1617
    %v1632 = vadd.f32 %v1601, %v1621
    %v1633 = vadd.f32 %v1603, %v1625
    %v1634 = vxor.u32 %v1630, 2147483648
    %v1635 = vxor.u32 %v1631, 2147483648
    %v1636 = vxor.u32 %v1632, 2147483648
    %v1637 = vmul.f32 %v1634, 1.442695
    %v1638 = vpow.pop %v1637
    %v1639 = vmul.f32 %v1635, 1.442695
    %v1640 = vpow.pop %v1639
    %v1641 = vmul.f32 %v1636, 1.442695
    %v1642 = vpow.pop %v1641
    %v1643 = vadd.f32 %v1638, 1.0
    %v1644 = vadd.f32 %v1640, 1.0
    %v1645 = vadd.f32 %v1642, 1.0
    %v1646 = vrcp.pop %v1643
    %v1647 = vmul.f32 1.0, %v1646
    %v1648 = vrcp.pop %v1644
    %v1649 = vmul.f32 1.0, %v1648
    %v1650 = vrcp.pop %v1645
    %v1651 = vmul.f32 1.0, %v1650
    %v1652 = vtanh.pop %v1633
    %v1653 = vmul.f32 %v1649, 0.0
    %v1654 = vmul.f32 %v1647, %v1652
    %v1655 = vadd.f32 %v1653, %v1654
    %v1656 = vtanh.pop %v1655
    %v1657 = vmul.f32 %v1651, %v1656
    %v1658 = vpack.c.bf16 %v1657, %v1657
    %v1659 = vld [vmem:[#allocation4 + $0x60] sm:$0xff]
    %v1660 = vld [vmem:[#allocation4 + $0x68] sm:$0xff]
    %v1661 = vld [vmem:[#allocation4 + $0x70] sm:$0xff]
    %v1662 = vld [vmem:[#allocation4 + $0x78] sm:$0xff]
    %v1663 = vld [vmem:[#allocation2 + $0x100] sm:$0xff]
    %v1664 = vld [vmem:[#allocation2 + $0x108] sm:$0xff]
    %v1665 = vld [vmem:[#allocation2 + $0x110] sm:$0xff]
    %v1666 = vld [vmem:[#allocation2 + $0x118] sm:$0xff]
    %v1667 = vld [vmem:[#allocation2 + $0x120] sm:$0xff]
    %v1668 = vld [vmem:[#allocation2 + $0x128] sm:$0xff]
    %v1669 = vld [vmem:[#allocation2 + $0x130] sm:$0xff]
    %v1670 = vld [vmem:[#allocation2 + $0x138] sm:$0xff]
    %v1671 = vld [vmem:[#allocation2 + $0x140] sm:$0xff]
    %v1672 = vld [vmem:[#allocation2 + $0x148] sm:$0xff]
    %v1673 = vld [vmem:[#allocation2 + $0x150] sm:$0xff]
    %v1674 = vld [vmem:[#allocation2 + $0x158] sm:$0xff]
    %v1675 = vld [vmem:[#allocation2 + $0x160] sm:$0xff]
    %v1676 = vld [vmem:[#allocation2 + $0x168] sm:$0xff]
    %v1677 = vld [vmem:[#allocation2 + $0x170] sm:$0xff]
    %v1678 = vld [vmem:[#allocation2 + $0x178] sm:$0xff]
    %v1679 = vld [vmem:[#allocation2 + $0x180] sm:$0xff]
    %v1680 = vld [vmem:[#allocation2 + $0x188] sm:$0xff]
    %v1681 = vld [vmem:[#allocation2 + $0x190] sm:$0xff]
    %v1682 = vld [vmem:[#allocation2 + $0x198] sm:$0xff]
    %v1683 = vld [vmem:[#allocation2 + $0x1a0] sm:$0xff]
    %v1684 = vld [vmem:[#allocation2 + $0x1a8] sm:$0xff]
    %v1685 = vld [vmem:[#allocation2 + $0x1b0] sm:$0xff]
    %v1686 = vld [vmem:[#allocation2 + $0x1b8] sm:$0xff]
    %v1687 = vld [vmem:[#allocation2 + $0x1c0] sm:$0xff]
    %v1688 = vld [vmem:[#allocation2 + $0x1c8] sm:$0xff]
    %v1689 = vld [vmem:[#allocation2 + $0x1d0] sm:$0xff]
    %v1690 = vld [vmem:[#allocation2 + $0x1d8] sm:$0xff]
    %v1691 = vld [vmem:[#allocation2 + $0x1e0] sm:$0xff]
    %v1692 = vld [vmem:[#allocation2 + $0x1e8] sm:$0xff]
    %v1693 = vld [vmem:[#allocation2 + $0x1f0] sm:$0xff]
    %v1694 = vld [vmem:[#allocation2 + $0x1f8] sm:$0xff]
    %1695 = vmatprep.subr.bf16.mxu0 %v1664
    %1696 = vmatpush1.bf16.msra.mxu0 %v1663
    %1697 = vmatprep.subr.bf16.mxu0 %v1668
    %1698 = vmatpush1.bf16.msra.mxu0 %v1667
    %1699 = vmatprep.subr.bf16.mxu0 %v1672
    %1700 = vmatpush1.bf16.msra.mxu0 %v1671
    %1701 = vmatprep.subr.bf16.mxu0 %v1676
    %1702 = vmatpush1.bf16.msra.mxu0 %v1675
    %1703 = vmatprep.subr.bf16.mxu0 %v1680
    %1704 = vmatpush1.bf16.msra.mxu0 %v1679
    %1705 = vmatprep.subr.bf16.mxu0 %v1684
    %1706 = vmatpush1.bf16.msra.mxu0 %v1683
    %1707 = vmatprep.subr.bf16.mxu0 %v1688
    %1708 = vmatpush1.bf16.msra.mxu0 %v1687
    %1709 = vmatprep.subr.bf16.mxu0 %v1692
    %1710 = vmatpush1.bf16.msra.mxu0 %v1691
    %1711 = vmatprep.subr.bf16.mxu0 0
    %1712 = vmatpush1.bf16.msra.mxu0 0
    %1713 = vmatprep.subr.bf16.mxu0 0
    %1714 = vmatpush1.bf16.msra.mxu0 0
    %1715 = vmatprep.subr.bf16.mxu0 0
    %1716 = vmatpush1.bf16.msra.mxu0 0
    %1717 = vmatprep.subr.bf16.mxu0 0
    %1718 = vmatpush1.bf16.msra.mxu0 0
    %1719 = vmatprep.subr.bf16.mxu0 0
    %1720 = vmatpush1.bf16.msra.mxu0 0
    %1721 = vmatprep.subr.bf16.mxu0 0
    %1722 = vmatpush1.bf16.msra.mxu0 0
    %1723 = vmatprep.subr.bf16.mxu0 0
    %1724 = vmatpush1.bf16.msra.mxu0 0
    %1725 = vmatprep.subr.bf16.mxu0 0
    %1726 = vmatpush1.bf16.msra.mxu0 0
    %1727 = vmatprep.mubr.bf16.mxu0 0
    %1728 = vmatmul.mubr.bf16.gmra.mrb[0].mxu0 %v1183
    %v1729 = vpop.f32.mrb[0].mxu0
    %v1730 = vadd.f32 0.0, %v1729
    %v1731 = vpop.f32.mrb[0].mxu0
    %v1732 = vadd.f32 0.0, %v1731
    %v1733 = vpop.f32.mrb[0].mxu0
    %v1734 = vpop.f32.mrb[0].mxu0
    %1735 = vdwg.mxu0
    %1736 = vmatprep.subr.bf16.mxu0 %v1666
    %1737 = vmatpush1.bf16.msra.mxu0 %v1665
    %1738 = vmatprep.subr.bf16.mxu0 %v1670
    %1739 = vmatpush1.bf16.msra.mxu0 %v1669
    %1740 = vmatprep.subr.bf16.mxu0 %v1674
    %1741 = vmatpush1.bf16.msra.mxu0 %v1673
    %1742 = vmatprep.subr.bf16.mxu0 %v1678
    %1743 = vmatpush1.bf16.msra.mxu0 %v1677
    %1744 = vmatprep.subr.bf16.mxu0 %v1682
    %1745 = vmatpush1.bf16.msra.mxu0 %v1681
    %1746 = vmatprep.subr.bf16.mxu0 %v1686
    %1747 = vmatpush1.bf16.msra.mxu0 %v1685
    %1748 = vmatprep.subr.bf16.mxu0 %v1690
    %1749 = vmatpush1.bf16.msra.mxu0 %v1689
    %1750 = vmatprep.subr.bf16.mxu0 %v1694
    %1751 = vmatpush1.bf16.msra.mxu0 %v1693
    %1752 = vmatprep.subr.bf16.mxu0 0
    %1753 = vmatpush1.bf16.msra.mxu0 0
    %1754 = vmatprep.subr.bf16.mxu0 0
    %1755 = vmatpush1.bf16.msra.mxu0 0
    %1756 = vmatprep.subr.bf16.mxu0 0
    %1757 = vmatpush1.bf16.msra.mxu0 0
    %1758 = vmatprep.subr.bf16.mxu0 0
    %1759 = vmatpush1.bf16.msra.mxu0 0
    %1760 = vmatprep.subr.bf16.mxu0 0
    %1761 = vmatpush1.bf16.msra.mxu0 0
    %1762 = vmatprep.subr.bf16.mxu0 0
    %1763 = vmatpush1.bf16.msra.mxu0 0
    %1764 = vmatprep.subr.bf16.mxu0 0
    %1765 = vmatpush1.bf16.msra.mxu0 0
    %1766 = vmatprep.subr.bf16.mxu0 0
    %1767 = vmatpush1.bf16.msra.mxu0 0
    %1768 = vmatprep.mubr.bf16.mxu0 0
    %1769 = vmatmul.mubr.bf16.gmra.mrb[0].mxu0 %v1183
    %v1770 = vpop.f32.mrb[0].mxu0
    %v1771 = vadd.f32 0.0, %v1770
    %v1772 = vpop.f32.mrb[0].mxu0
    %v1773 = vadd.f32 0.0, %v1772
    %v1774 = vpop.f32.mrb[0].mxu0
    %v1775 = vpop.f32.mrb[0].mxu0
    %1776 = vdwg.mxu0
    %v1777 = vadd.f32 %v1659, %v1730
    %v1778 = vadd.f32 %v1660, %v1732
    %v1779 = vadd.f32 %v1661, %v1771
    %v1780 = vadd.f32 %v1662, %v1773
    %v1781 = vxor.u32 %v1777, 2147483648
    %v1782 = vxor.u32 %v1778, 2147483648
    %v1783 = vxor.u32 %v1779, 2147483648
    %v1784 = vmul.f32 %v1781, 1.442695
    %v1785 = vpow.pop %v1784
    %v1786 = vmul.f32 %v1782, 1.442695
    %v1787 = vpow.pop %v1786
    %v1788 = vmul.f32 %v1783, 1.442695
    %v1789 = vpow.pop %v1788
    %v1790 = vadd.f32 %v1785, 1.0
    %v1791 = vadd.f32 %v1787, 1.0
    %v1792 = vadd.f32 %v1789, 1.0
    %v1793 = vrcp.pop %v1790
    %v1794 = vmul.f32 1.0, %v1793
    %v1795 = vrcp.pop %v1791
    %v1796 = vmul.f32 1.0, %v1795
    %v1797 = vrcp.pop %v1792
    %v1798 = vmul.f32 1.0, %v1797
    %v1799 = vtanh.pop %v1780
    %v1800 = vmul.f32 %v1796, %v1180
    %v1801 = vmul.f32 %v1794, %v1799
    %v1802 = vadd.f32 %v1800, %v1801
    %v1803 = vtanh.pop %v1802
    %v1804 = vmul.f32 %v1798, %v1803
    %v1805 = vpack.c.bf16 %v1804, %v1804
    %v1806 = vld [vmem:[%s69] sm:$0xff]
    %v1807 = vld [vmem:[%s69 + $0x8] sm:$0xff]
    %v1808 = vld [vmem:[%s69 + $0x10] sm:$0xff]
    %v1809 = vld [vmem:[%s69 + $0x18] sm:$0xff]
    %v1810 = vld [vmem:[%s69 + $0x20] sm:$0xff]
    %v1811 = vld [vmem:[%s69 + $0x28] sm:$0xff]
    %v1812 = vld [vmem:[%s69 + $0x30] sm:$0xff]
    %v1813 = vld [vmem:[%s69 + $0x38] sm:$0xff]
    %v1814 = vld [vmem:[%s69 + $0x40] sm:$0xff]
    %v1815 = vld [vmem:[%s69 + $0x48] sm:$0xff]
    %v1816 = vld [vmem:[%s69 + $0x50] sm:$0xff]
    %v1817 = vld [vmem:[%s69 + $0x58] sm:$0xff]
    %v1818 = vld [vmem:[%s69 + $0x60] sm:$0xff]
    %v1819 = vld [vmem:[%s69 + $0x68] sm:$0xff]
    %v1820 = vld [vmem:[%s69 + $0x70] sm:$0xff]
    %v1821 = vld [vmem:[%s69 + $0x78] sm:$0xff]
    %v1822 = vld [vmem:[%s69 + $0x80] sm:$0xff]
    %v1823 = vld [vmem:[%s69 + $0x88] sm:$0xff]
    %v1824 = vld [vmem:[%s69 + $0x90] sm:$0xff]
    %v1825 = vld [vmem:[%s69 + $0x98] sm:$0xff]
    %v1826 = vld [vmem:[%s69 + $0xa0] sm:$0xff]
    %v1827 = vld [vmem:[%s69 + $0xa8] sm:$0xff]
    %v1828 = vld [vmem:[%s69 + $0xb0] sm:$0xff]
    %v1829 = vld [vmem:[%s69 + $0xb8] sm:$0xff]
    %v1830 = vld [vmem:[%s69 + $0xc0] sm:$0xff]
    %v1831 = vld [vmem:[%s69 + $0xc8] sm:$0xff]
    %v1832 = vld [vmem:[%s69 + $0xd0] sm:$0xff]
    %v1833 = vld [vmem:[%s69 + $0xd8] sm:$0xff]
    %v1834 = vld [vmem:[%s69 + $0xe0] sm:$0xff]
    %v1835 = vld [vmem:[%s69 + $0xe8] sm:$0xff]
    %v1836 = vld [vmem:[%s69 + $0xf0] sm:$0xff]
    %v1837 = vld [vmem:[%s69 + $0xf8] sm:$0xff]
    %v1838 = vld [vmem:[%s69 + $0x100] sm:$0xff]
    %v1839 = vld [vmem:[%s69 + $0x108] sm:$0xff]
    %v1840 = vld [vmem:[%s69 + $0x110] sm:$0xff]
    %v1841 = vld [vmem:[%s69 + $0x118] sm:$0xff]
    %v1842 = vld [vmem:[%s69 + $0x120] sm:$0xff]
    %v1843 = vld [vmem:[%s69 + $0x128] sm:$0xff]
    %v1844 = vld [vmem:[%s69 + $0x130] sm:$0xff]
    %v1845 = vld [vmem:[%s69 + $0x138] sm:$0xff]
    %v1846 = vld [vmem:[%s69 + $0x140] sm:$0xff]
    %v1847 = vld [vmem:[%s69 + $0x148] sm:$0xff]
    %v1848 = vld [vmem:[%s69 + $0x150] sm:$0xff]
    %v1849 = vld [vmem:[%s69 + $0x158] sm:$0xff]
    %v1850 = vld [vmem:[%s69 + $0x160] sm:$0xff]
    %v1851 = vld [vmem:[%s69 + $0x168] sm:$0xff]
    %v1852 = vld [vmem:[%s69 + $0x170] sm:$0xff]
    %v1853 = vld [vmem:[%s69 + $0x178] sm:$0xff]
    %v1854 = vld [vmem:[%s69 + $0x180] sm:$0xff]
    %v1855 = vld [vmem:[%s69 + $0x188] sm:$0xff]
    %v1856 = vld [vmem:[%s69 + $0x190] sm:$0xff]
    %v1857 = vld [vmem:[%s69 + $0x198] sm:$0xff]
    %v1858 = vld [vmem:[%s69 + $0x1a0] sm:$0xff]
    %v1859 = vld [vmem:[%s69 + $0x1a8] sm:$0xff]
    %v1860 = vld [vmem:[%s69 + $0x1b0] sm:$0xff]
    %v1861 = vld [vmem:[%s69 + $0x1b8] sm:$0xff]
    %v1862 = vld [vmem:[%s69 + $0x1c0] sm:$0xff]
    %v1863 = vld [vmem:[%s69 + $0x1c8] sm:$0xff]
    %v1864 = vld [vmem:[%s69 + $0x1d0] sm:$0xff]
    %v1865 = vld [vmem:[%s69 + $0x1d8] sm:$0xff]
    %v1866 = vld [vmem:[%s69 + $0x1e0] sm:$0xff]
    %v1867 = vld [vmem:[%s69 + $0x1e8] sm:$0xff]
    %v1868 = vld [vmem:[%s69 + $0x1f0] sm:$0xff]
    %v1869 = vld [vmem:[%s69 + $0x1f8] sm:$0xff]
    %1870 = vmatprep.subr.bf16.mxu0 %v1839
    %1871 = vmatpush1.bf16.msra.mxu0 %v1838
    %1872 = vmatprep.subr.bf16.mxu0 %v1843
    %1873 = vmatpush1.bf16.msra.mxu0 %v1842
    %1874 = vmatprep.subr.bf16.mxu0 %v1847
    %1875 = vmatpush1.bf16.msra.mxu0 %v1846
    %1876 = vmatprep.subr.bf16.mxu0 %v1851
    %1877 = vmatpush1.bf16.msra.mxu0 %v1850
    %1878 = vmatprep.subr.bf16.mxu0 %v1855
    %1879 = vmatpush1.bf16.msra.mxu0 %v1854
    %1880 = vmatprep.subr.bf16.mxu0 %v1859
    %1881 = vmatpush1.bf16.msra.mxu0 %v1858
    %1882 = vmatprep.subr.bf16.mxu0 %v1863
    %1883 = vmatpush1.bf16.msra.mxu0 %v1862
    %1884 = vmatprep.subr.bf16.mxu0 %v1867
    %1885 = vmatpush1.bf16.msra.mxu0 %v1866
    %1886 = vmatprep.subr.bf16.mxu0 0
    %1887 = vmatpush1.bf16.msra.mxu0 0
    %1888 = vmatprep.subr.bf16.mxu0 0
    %1889 = vmatpush1.bf16.msra.mxu0 0
    %1890 = vmatprep.subr.bf16.mxu0 0
    %1891 = vmatpush1.bf16.msra.mxu0 0
    %1892 = vmatprep.subr.bf16.mxu0 0
    %1893 = vmatpush1.bf16.msra.mxu0 0
    %1894 = vmatprep.subr.bf16.mxu0 0
    %1895 = vmatpush1.bf16.msra.mxu0 0
    %1896 = vmatprep.subr.bf16.mxu0 0
    %1897 = vmatpush1.bf16.msra.mxu0 0
    %1898 = vmatprep.subr.bf16.mxu0 0
    %1899 = vmatpush1.bf16.msra.mxu0 0
    %1900 = vmatprep.subr.bf16.mxu0 0
    %1901 = vmatpush1.bf16.msra.mxu0 0
    %1902 = vmatprep.mubr.bf16.mxu0 0
    %1903 = vmatmul.mubr.bf16.gmra.mrb[0].mxu0 %v1376
    %v1904 = vpop.f32.mrb[0].mxu0
    %v1905 = vadd.f32 0.0, %v1904
    %v1906 = vpop.f32.mrb[0].mxu0
    %v1907 = vadd.f32 0.0, %v1906
    %v1908 = vpop.f32.mrb[0].mxu0
    %v1909 = vpop.f32.mrb[0].mxu0
    %1910 = vdwg.mxu0
    %1911 = vmatprep.subr.bf16.mxu0 %v1841
    %1912 = vmatpush1.bf16.msra.mxu0 %v1840
    %1913 = vmatprep.subr.bf16.mxu0 %v1845
    %1914 = vmatpush1.bf16.msra.mxu0 %v1844
    %1915 = vmatprep.subr.bf16.mxu0 %v1849
    %1916 = vmatpush1.bf16.msra.mxu0 %v1848
    %1917 = vmatprep.subr.bf16.mxu0 %v1853
    %1918 = vmatpush1.bf16.msra.mxu0 %v1852
    %1919 = vmatprep.subr.bf16.mxu0 %v1857
    %1920 = vmatpush1.bf16.msra.mxu0 %v1856
    %1921 = vmatprep.subr.bf16.mxu0 %v1861
    %1922 = vmatpush1.bf16.msra.mxu0 %v1860
    %1923 = vmatprep.subr.bf16.mxu0 %v1865
    %1924 = vmatpush1.bf16.msra.mxu0 %v1864
    %1925 = vmatprep.subr.bf16.mxu0 %v1869
    %1926 = vmatpush1.bf16.msra.mxu0 %v1868
    %1927 = vmatprep.subr.bf16.mxu0 0
    %1928 = vmatpush1.bf16.msra.mxu0 0
    %1929 = vmatprep.subr.bf16.mxu0 0
    %1930 = vmatpush1.bf16.msra.mxu0 0
    %1931 = vmatprep.subr.bf16.mxu0 0
    %1932 = vmatpush1.bf16.msra.mxu0 0
    %1933 = vmatprep.subr.bf16.mxu0 0
    %1934 = vmatpush1.bf16.msra.mxu0 0
    %1935 = vmatprep.subr.bf16.mxu0 0
    %1936 = vmatpush1.bf16.msra.mxu0 0
    %1937 = vmatprep.subr.bf16.mxu0 0
    %1938 = vmatpush1.bf16.msra.mxu0 0
    %1939 = vmatprep.subr.bf16.mxu0 0
    %1940 = vmatpush1.bf16.msra.mxu0 0
    %1941 = vmatprep.subr.bf16.mxu0 0
    %1942 = vmatpush1.bf16.msra.mxu0 0
    %1943 = vmatprep.mubr.bf16.mxu0 0
    %1944 = vmatmul.mubr.bf16.gmra.mrb[0].mxu0 %v1376
    %v1945 = vpop.f32.mrb[0].mxu0
    %v1946 = vadd.f32 0.0, %v1945
    %v1947 = vpop.f32.mrb[0].mxu0
    %v1948 = vadd.f32 0.0, %v1947
    %v1949 = vpop.f32.mrb[0].mxu0
    %v1950 = vpop.f32.mrb[0].mxu0
    %1951 = vdwg.mxu0
    %1952 = vmatprep.subr.bf16.mxu0 %v1807
    %1953 = vmatpush1.bf16.msra.mxu0 %v1806
    %1954 = vmatprep.subr.bf16.mxu0 %v1811
    %1955 = vmatpush1.bf16.msra.mxu0 %v1810
    %1956 = vmatprep.subr.bf16.mxu0 %v1815
    %1957 = vmatpush1.bf16.msra.mxu0 %v1814
    %1958 = vmatprep.subr.bf16.mxu0 %v1819
    %1959 = vmatpush1.bf16.msra.mxu0 %v1818
    %1960 = vmatprep.subr.bf16.mxu0 %v1823
    %1961 = vmatpush1.bf16.msra.mxu0 %v1822
    %1962 = vmatprep.subr.bf16.mxu0 %v1827
    %1963 = vmatpush1.bf16.msra.mxu0 %v1826
    %1964 = vmatprep.subr.bf16.mxu0 %v1831
    %1965 = vmatpush1.bf16.msra.mxu0 %v1830
    %1966 = vmatprep.subr.bf16.mxu0 %v1835
    %1967 = vmatpush1.bf16.msra.mxu0 %v1834
    %1968 = vmatprep.subr.bf16.mxu0 0
    %1969 = vmatpush1.bf16.msra.mxu0 0
    %1970 = vmatprep.subr.bf16.mxu0 0
    %1971 = vmatpush1.bf16.msra.mxu0 0
    %1972 = vmatprep.subr.bf16.mxu0 0
    %1973 = vmatpush1.bf16.msra.mxu0 0
    %1974 = vmatprep.subr.bf16.mxu0 0
    %1975 = vmatpush1.bf16.msra.mxu0 0
    %1976 = vmatprep.subr.bf16.mxu0 0
    %1977 = vmatpush1.bf16.msra.mxu0 0
    %1978 = vmatprep.subr.bf16.mxu0 0
    %1979 = vmatpush1.bf16.msra.mxu0 0
    %1980 = vmatprep.subr.bf16.mxu0 0
    %1981 = vmatpush1.bf16.msra.mxu0 0
    %1982 = vmatprep.subr.bf16.mxu0 0
    %1983 = vmatpush1.bf16.msra.mxu0 0
    %1984 = vmatprep.mubr.bf16.mxu0 0
    %1985 = vmatmul.mubr.bf16.gmra.mrb[0].mxu0 %v1183
    %v1986 = vpop.f32.mrb[0].mxu0
    %v1987 = vadd.f32 %v1905, %v1986
    %v1988 = vpop.f32.mrb[0].mxu0
    %v1989 = vadd.f32 %v1907, %v1988
    %v1990 = vpop.f32.mrb[0].mxu0
    %v1991 = vpop.f32.mrb[0].mxu0
    %1992 = vdwg.mxu0
    %1993 = vmatprep.subr.bf16.mxu0 %v1809
    %1994 = vmatpush1.bf16.msra.mxu0 %v1808
    %1995 = vmatprep.subr.bf16.mxu0 %v1813
    %1996 = vmatpush1.bf16.msra.mxu0 %v1812
    %1997 = vmatprep.subr.bf16.mxu0 %v1817
    %1998 = vmatpush1.bf16.msra.mxu0 %v1816
    %1999 = vmatprep.subr.bf16.mxu0 %v1821
    %2000 = vmatpush1.bf16.msra.mxu0 %v1820
    %2001 = vmatprep.subr.bf16.mxu0 %v1825
    %2002 = vmatpush1.bf16.msra.mxu0 %v1824
    %2003 = vmatprep.subr.bf16.mxu0 %v1829
    %2004 = vmatpush1.bf16.msra.mxu0 %v1828
    %2005 = vmatprep.subr.bf16.mxu0 %v1833
    %2006 = vmatpush1.bf16.msra.mxu0 %v1832
    %2007 = vmatprep.subr.bf16.mxu0 %v1837
    %2008 = vmatpush1.bf16.msra.mxu0 %v1836
    %2009 = vmatprep.subr.bf16.mxu0 0
    %2010 = vmatpush1.bf16.msra.mxu0 0
    %2011 = vmatprep.subr.bf16.mxu0 0
    %2012 = vmatpush1.bf16.msra.mxu0 0
    %2013 = vmatprep.subr.bf16.mxu0 0
    %2014 = vmatpush1.bf16.msra.mxu0 0
    %2015 = vmatprep.subr.bf16.mxu0 0
    %2016 = vmatpush1.bf16.msra.mxu0 0
    %2017 = vmatprep.subr.bf16.mxu0 0
    %2018 = vmatpush1.bf16.msra.mxu0 0
    %2019 = vmatprep.subr.bf16.mxu0 0
    %2020 = vmatpush1.bf16.msra.mxu0 0
    %2021 = vmatprep.subr.bf16.mxu0 0
    %2022 = vmatpush1.bf16.msra.mxu0 0
    %2023 = vmatprep.subr.bf16.mxu0 0
    %2024 = vmatpush1.bf16.msra.mxu0 0
    %2025 = vmatprep.mubr.bf16.mxu0 0
    %2026 = vmatmul.mubr.bf16.gmra.mrb[0].mxu0 %v1183
    %v2027 = vpop.f32.mrb[0].mxu0
    %v2028 = vadd.f32 %v1946, %v2027
    %v2029 = vpop.f32.mrb[0].mxu0
    %v2030 = vadd.f32 %v1948, %v2029
    %v2031 = vpop.f32.mrb[0].mxu0
    %v2032 = vpop.f32.mrb[0].mxu0
    %2033 = vdwg.mxu0
    %v2034 = vld [vmem:[%s985] sm:$0xf]
    %v2036 = vlaneseq
    %v2037 = vshrl.u32 %v2036, 7
    %v2038 = vsub.s32 0, %v2037
    %v2039 = vrot.slane %v2034, %v2038
    %v2040 = vlaneseq
    %v2041 = vshrl.u32 %v2040, 7
    %v2042 = vsub.s32 1, %v2041
    %v2043 = vrot.slane %v2034, %v2042
    %v2044 = vlaneseq
    %v2045 = vshrl.u32 %v2044, 7
    %v2046 = vsub.s32 2, %v2045
    %v2047 = vrot.slane %v2034, %v2046
    %v2048 = vlaneseq
    %v2049 = vshrl.u32 %v2048, 7
    %v2050 = vsub.s32 3, %v2049
    %v2051 = vrot.slane %v2034, %v2050
    %v2056 = vadd.f32 %v1987, %v2039
    %v2057 = vadd.f32 %v1989, %v2043
    %v2058 = vadd.f32 %v2028, %v2047
    %v2059 = vadd.f32 %v2030, %v2051
    %v2060 = vxor.u32 %v2056, 2147483648
    %v2061 = vxor.u32 %v2057, 2147483648
    %v2062 = vxor.u32 %v2058, 2147483648
    %v2063 = vmul.f32 %v2060, 1.442695
    %v2064 = vpow.pop %v2063
    %v2065 = vmul.f32 %v2061, 1.442695
    %v2066 = vpow.pop %v2065
    %v2067 = vmul.f32 %v2062, 1.442695
    %v2068 = vpow.pop %v2067
    %v2069 = vadd.f32 %v2064, 1.0
    %v2070 = vadd.f32 %v2066, 1.0
    %v2071 = vadd.f32 %v2068, 1.0
    %v2072 = vrcp.pop %v2069
    %v2073 = vmul.f32 1.0, %v2072
    %v2074 = vrcp.pop %v2070
    %v2075 = vmul.f32 1.0, %v2074
    %v2076 = vrcp.pop %v2071
    %v2077 = vmul.f32 1.0, %v2076
    %v2078 = vtanh.pop %v2059
    %v2079 = vmul.f32 %v2075, %v1373
    %v2080 = vmul.f32 %v2073, %v2078
    %v2081 = vadd.f32 %v2079, %v2080
    %v2082 = vtanh.pop %v2081
    %v2083 = vmul.f32 %v2077, %v2082
    %v2084 = vpack.c.bf16 %v2083, %v2083
    %2085 = vmatprep.subr.bf16.mxu0 %v1412
    %2086 = vmatpush1.bf16.msra.mxu0 %v1411
    %2087 = vmatprep.subr.bf16.mxu0 %v1416
    %2088 = vmatpush1.bf16.msra.mxu0 %v1415
    %2089 = vmatprep.subr.bf16.mxu0 %v1420
    %2090 = vmatpush1.bf16.msra.mxu0 %v1419
    %2091 = vmatprep.subr.bf16.mxu0 %v1424
    %2092 = vmatpush1.bf16.msra.mxu0 %v1423
    %2093 = vmatprep.subr.bf16.mxu0 %v1428
    %2094 = vmatpush1.bf16.msra.mxu0 %v1427
    %2095 = vmatprep.subr.bf16.mxu0 %v1432
    %2096 = vmatpush1.bf16.msra.mxu0 %v1431
    %2097 = vmatprep.subr.bf16.mxu0 %v1436
    %2098 = vmatpush1.bf16.msra.mxu0 %v1435
    %2099 = vmatprep.subr.bf16.mxu0 %v1440
    %2100 = vmatpush1.bf16.msra.mxu0 %v1439
    %2101 = vmatprep.subr.bf16.mxu0 0
    %2102 = vmatpush1.bf16.msra.mxu0 0
    %2103 = vmatprep.subr.bf16.mxu0 0
    %2104 = vmatpush1.bf16.msra.mxu0 0
    %2105 = vmatprep.subr.bf16.mxu0 0
    %2106 = vmatpush1.bf16.msra.mxu0 0
    %2107 = vmatprep.subr.bf16.mxu0 0
    %2108 = vmatpush1.bf16.msra.mxu0 0
    %2109 = vmatprep.subr.bf16.mxu0 0
    %2110 = vmatpush1.bf16.msra.mxu0 0
    %2111 = vmatprep.subr.bf16.mxu0 0
    %2112 = vmatpush1.bf16.msra.mxu0 0
    %2113 = vmatprep.subr.bf16.mxu0 0
    %2114 = vmatpush1.bf16.msra.mxu0 0
    %2115 = vmatprep.subr.bf16.mxu0 0
    %2116 = vmatpush1.bf16.msra.mxu0 0
    %2117 = vmatprep.mubr.bf16.mxu0 0
    %2118 = vmatmul.mubr.bf16.gmra.mrb[0].mxu0 %v1658
    %v2119 = vpop.f32.mrb[0].mxu0
    %v2120 = vadd.f32 0.0, %v2119
    %v2121 = vpop.f32.mrb[0].mxu0
    %v2122 = vadd.f32 0.0, %v2121
    %v2123 = vpop.f32.mrb[0].mxu0
    %v2124 = vpop.f32.mrb[0].mxu0
    %2125 = vdwg.mxu0
    %2126 = vmatprep.subr.bf16.mxu0 %v1414
    %2127 = vmatpush1.bf16.msra.mxu0 %v1413
    %2128 = vmatprep.subr.bf16.mxu0 %v1418
    %2129 = vmatpush1.bf16.msra.mxu0 %v1417
    %2130 = vmatprep.subr.bf16.mxu0 %v1422
    %2131 = vmatpush1.bf16.msra.mxu0 %v1421
    %2132 = vmatprep.subr.bf16.mxu0 %v1426
    %2133 = vmatpush1.bf16.msra.mxu0 %v1425
    %2134 = vmatprep.subr.bf16.mxu0 %v1430
    %2135 = vmatpush1.bf16.msra.mxu0 %v1429
    %2136 = vmatprep.subr.bf16.mxu0 %v1434
    %2137 = vmatpush1.bf16.msra.mxu0 %v1433
    %2138 = vmatprep.subr.bf16.mxu0 %v1438
    %2139 = vmatpush1.bf16.msra.mxu0 %v1437
    %2140 = vmatprep.subr.bf16.mxu0 %v1442
    %2141 = vmatpush1.bf16.msra.mxu0 %v1441
    %2142 = vmatprep.subr.bf16.mxu0 0
    %2143 = vmatpush1.bf16.msra.mxu0 0
    %2144 = vmatprep.subr.bf16.mxu0 0
    %2145 = vmatpush1.bf16.msra.mxu0 0
    %2146 = vmatprep.subr.bf16.mxu0 0
    %2147 = vmatpush1.bf16.msra.mxu0 0
    %2148 = vmatprep.subr.bf16.mxu0 0
    %2149 = vmatpush1.bf16.msra.mxu0 0
    %2150 = vmatprep.subr.bf16.mxu0 0
    %2151 = vmatpush1.bf16.msra.mxu0 0
    %2152 = vmatprep.subr.bf16.mxu0 0
    %2153 = vmatpush1.bf16.msra.mxu0 0
    %2154 = vmatprep.subr.bf16.mxu0 0
    %2155 = vmatpush1.bf16.msra.mxu0 0
    %2156 = vmatprep.subr.bf16.mxu0 0
    %2157 = vmatpush1.bf16.msra.mxu0 0
    %2158 = vmatprep.mubr.bf16.mxu0 0
    %2159 = vmatmul.mubr.bf16.gmra.mrb[0].mxu0 %v1658
    %v2160 = vpop.f32.mrb[0].mxu0
    %v2161 = vadd.f32 0.0, %v2160
    %v2162 = vpop.f32.mrb[0].mxu0
    %v2163 = vadd.f32 0.0, %v2162
    %v2164 = vpop.f32.mrb[0].mxu0
    %v2165 = vpop.f32.mrb[0].mxu0
    %2166 = vdwg.mxu0
    %2167 = vmatprep.subr.bf16.mxu0 %v1380
    %2168 = vmatpush1.bf16.msra.mxu0 %v1379
    %2169 = vmatprep.subr.bf16.mxu0 %v1384
    %2170 = vmatpush1.bf16.msra.mxu0 %v1383
    %2171 = vmatprep.subr.bf16.mxu0 %v1388
    %2172 = vmatpush1.bf16.msra.mxu0 %v1387
    %2173 = vmatprep.subr.bf16.mxu0 %v1392
    %2174 = vmatpush1.bf16.msra.mxu0 %v1391
    %2175 = vmatprep.subr.bf16.mxu0 %v1396
    %2176 = vmatpush1.bf16.msra.mxu0 %v1395
    %2177 = vmatprep.subr.bf16.mxu0 %v1400
    %2178 = vmatpush1.bf16.msra.mxu0 %v1399
    %2179 = vmatprep.subr.bf16.mxu0 %v1404
    %2180 = vmatpush1.bf16.msra.mxu0 %v1403
    %2181 = vmatprep.subr.bf16.mxu0 %v1408
    %2182 = vmatpush1.bf16.msra.mxu0 %v1407
    %2183 = vmatprep.subr.bf16.mxu0 0
    %2184 = vmatpush1.bf16.msra.mxu0 0
    %2185 = vmatprep.subr.bf16.mxu0 0
    %2186 = vmatpush1.bf16.msra.mxu0 0
    %2187 = vmatprep.subr.bf16.mxu0 0
    %2188 = vmatpush1.bf16.msra.mxu0 0
    %2189 = vmatprep.subr.bf16.mxu0 0
    %2190 = vmatpush1.bf16.msra.mxu0 0
    %2191 = vmatprep.subr.bf16.mxu0 0
    %2192 = vmatpush1.bf16.msra.mxu0 0
    %2193 = vmatprep.subr.bf16.mxu0 0
    %2194 = vmatpush1.bf16.msra.mxu0 0
    %2195 = vmatprep.subr.bf16.mxu0 0
    %2196 = vmatpush1.bf16.msra.mxu0 0
    %2197 = vmatprep.subr.bf16.mxu0 0
    %2198 = vmatpush1.bf16.msra.mxu0 0
    %2199 = vmatprep.mubr.bf16.mxu0 0
    %2200 = vmatmul.mubr.bf16.gmra.mrb[0].mxu0 %v1376
    %v2201 = vpop.f32.mrb[0].mxu0
    %v2202 = vadd.f32 %v2120, %v2201
    %v2203 = vpop.f32.mrb[0].mxu0
    %v2204 = vadd.f32 %v2122, %v2203
    %v2205 = vpop.f32.mrb[0].mxu0
    %v2206 = vpop.f32.mrb[0].mxu0
    %2207 = vdwg.mxu0
    %2208 = vmatprep.subr.bf16.mxu0 %v1382
    %2209 = vmatpush1.bf16.msra.mxu0 %v1381
    %2210 = vmatprep.subr.bf16.mxu0 %v1386
    %2211 = vmatpush1.bf16.msra.mxu0 %v1385
    %2212 = vmatprep.subr.bf16.mxu0 %v1390
    %2213 = vmatpush1.bf16.msra.mxu0 %v1389
    %2214 = vmatprep.subr.bf16.mxu0 %v1394
    %2215 = vmatpush1.bf16.msra.mxu0 %v1393
    %2216 = vmatprep.subr.bf16.mxu0 %v1398
    %2217 = vmatpush1.bf16.msra.mxu0 %v1397
    %2218 = vmatprep.subr.bf16.mxu0 %v1402
    %2219 = vmatpush1.bf16.msra.mxu0 %v1401
    %2220 = vmatprep.subr.bf16.mxu0 %v1406
    %2221 = vmatpush1.bf16.msra.mxu0 %v1405
    %2222 = vmatprep.subr.bf16.mxu0 %v1410
    %2223 = vmatpush1.bf16.msra.mxu0 %v1409
    %2224 = vmatprep.subr.bf16.mxu0 0
    %2225 = vmatpush1.bf16.msra.mxu0 0
    %2226 = vmatprep.subr.bf16.mxu0 0
    %2227 = vmatpush1.bf16.msra.mxu0 0
    %2228 = vmatprep.subr.bf16.mxu0 0
    %2229 = vmatpush1.bf16.msra.mxu0 0
    %2230 = vmatprep.subr.bf16.mxu0 0
    %2231 = vmatpush1.bf16.msra.mxu0 0
    %2232 = vmatprep.subr.bf16.mxu0 0
    %2233 = vmatpush1.bf16.msra.mxu0 0
    %2234 = vmatprep.subr.bf16.mxu0 0
    %2235 = vmatpush1.bf16.msra.mxu0 0
    %2236 = vmatprep.subr.bf16.mxu0 0
    %2237 = vmatpush1.bf16.msra.mxu0 0
    %2238 = vmatprep.subr.bf16.mxu0 0
    %2239 = vmatpush1.bf16.msra.mxu0 0
    %2240 = vmatprep.mubr.bf16.mxu0 0
    %2241 = vmatmul.mubr.bf16.gmra.mrb[0].mxu0 %v1376
    %v2242 = vpop.f32.mrb[0].mxu0
    %v2243 = vadd.f32 %v2161, %v2242
    %v2244 = vpop.f32.mrb[0].mxu0
    %v2245 = vadd.f32 %v2163, %v2244
    %v2246 = vpop.f32.mrb[0].mxu0
    %v2247 = vpop.f32.mrb[0].mxu0
    %2248 = vdwg.mxu0
    %v2249 = vadd.f32 %v2202, %v1613
    %v2250 = vadd.f32 %v2204, %v1617
    %v2251 = vadd.f32 %v2243, %v1621
    %v2252 = vadd.f32 %v2245, %v1625
    %v2253 = vxor.u32 %v2249, 2147483648
    %v2254 = vxor.u32 %v2250, 2147483648
    %v2255 = vxor.u32 %v2251, 2147483648
    %v2256 = vmul.f32 %v2253, 1.442695
    %v2257 = vpow.pop %v2256
    %v2258 = vmul.f32 %v2254, 1.442695
    %v2259 = vpow.pop %v2258
    %v2260 = vmul.f32 %v2255, 1.442695
    %v2261 = vpow.pop %v2260
    %v2262 = vadd.f32 %v2257, 1.0
    %v2263 = vadd.f32 %v2259, 1.0
    %v2264 = vadd.f32 %v2261, 1.0
    %v2265 = vrcp.pop %v2262
    %v2266 = vmul.f32 1.0, %v2265
    %v2267 = vrcp.pop %v2263
    %v2268 = vmul.f32 1.0, %v2267
    %v2269 = vrcp.pop %v2264
    %v2270 = vmul.f32 1.0, %v2269
    %v2271 = vtanh.pop %v2252
    %v2272 = vmul.f32 %v2268, %v1655
    %v2273 = vmul.f32 %v2266, %v2271
    %v2274 = vadd.f32 %v2272, %v2273
    %v2275 = vtanh.pop %v2274
    %v2276 = vmul.f32 %v2270, %v2275
    %v2277 = vpack.c.bf16 %v2276, %v2276
    %s2278 = sshll.u32 %s237, 4
    %2279 = dma.done %s144, %s2278
    %v2280 = vld [vmem:[%s143] sm:$0xff]
    %v2281 = vld [vmem:[%s143 + $0x8] sm:$0xff]
    %v2282 = vld [vmem:[%s143 + $0x10] sm:$0xff]
    %v2283 = vld [vmem:[%s143 + $0x18] sm:$0xff]
    %v2284 = vld [vmem:[%s143 + $0x20] sm:$0xff]
    %v2285 = vld [vmem:[%s143 + $0x28] sm:$0xff]
    %v2286 = vld [vmem:[%s143 + $0x30] sm:$0xff]
    %v2287 = vld [vmem:[%s143 + $0x38] sm:$0xff]
    %v2288 = vld [vmem:[%s143 + $0x40] sm:$0xff]
    %v2289 = vld [vmem:[%s143 + $0x48] sm:$0xff]
    %v2290 = vld [vmem:[%s143 + $0x50] sm:$0xff]
    %v2291 = vld [vmem:[%s143 + $0x58] sm:$0xff]
    %v2292 = vld [vmem:[%s143 + $0x60] sm:$0xff]
    %v2293 = vld [vmem:[%s143 + $0x68] sm:$0xff]
    %v2294 = vld [vmem:[%s143 + $0x70] sm:$0xff]
    %v2295 = vld [vmem:[%s143 + $0x78] sm:$0xff]
    %v2296 = vld [vmem:[%s143 + $0x80] sm:$0xff]
    %v2297 = vld [vmem:[%s143 + $0x88] sm:$0xff]
    %v2298 = vld [vmem:[%s143 + $0x90] sm:$0xff]
    %v2299 = vld [vmem:[%s143 + $0x98] sm:$0xff]
    %v2300 = vld [vmem:[%s143 + $0xa0] sm:$0xff]
    %v2301 = vld [vmem:[%s143 + $0xa8] sm:$0xff]
    %v2302 = vld [vmem:[%s143 + $0xb0] sm:$0xff]
    %v2303 = vld [vmem:[%s143 + $0xb8] sm:$0xff]
    %v2304 = vld [vmem:[%s143 + $0xc0] sm:$0xff]
    %v2305 = vld [vmem:[%s143 + $0xc8] sm:$0xff]
    %v2306 = vld [vmem:[%s143 + $0xd0] sm:$0xff]
    %v2307 = vld [vmem:[%s143 + $0xd8] sm:$0xff]
    %v2308 = vld [vmem:[%s143 + $0xe0] sm:$0xff]
    %v2309 = vld [vmem:[%s143 + $0xe8] sm:$0xff]
    %v2310 = vld [vmem:[%s143 + $0xf0] sm:$0xff]
    %v2311 = vld [vmem:[%s143 + $0xf8] sm:$0xff]
    %v2312 = vld [vmem:[%s143 + $0x100] sm:$0xff]
    %v2313 = vld [vmem:[%s143 + $0x108] sm:$0xff]
    %v2314 = vld [vmem:[%s143 + $0x110] sm:$0xff]
    %v2315 = vld [vmem:[%s143 + $0x118] sm:$0xff]
    %v2316 = vld [vmem:[%s143 + $0x120] sm:$0xff]
    %v2317 = vld [vmem:[%s143 + $0x128] sm:$0xff]
    %v2318 = vld [vmem:[%s143 + $0x130] sm:$0xff]
    %v2319 = vld [vmem:[%s143 + $0x138] sm:$0xff]
    %v2320 = vld [vmem:[%s143 + $0x140] sm:$0xff]
    %v2321 = vld [vmem:[%s143 + $0x148] sm:$0xff]
    %v2322 = vld [vmem:[%s143 + $0x150] sm:$0xff]
    %v2323 = vld [vmem:[%s143 + $0x158] sm:$0xff]
    %v2324 = vld [vmem:[%s143 + $0x160] sm:$0xff]
    %v2325 = vld [vmem:[%s143 + $0x168] sm:$0xff]
    %v2326 = vld [vmem:[%s143 + $0x170] sm:$0xff]
    %v2327 = vld [vmem:[%s143 + $0x178] sm:$0xff]
    %v2328 = vld [vmem:[%s143 + $0x180] sm:$0xff]
    %v2329 = vld [vmem:[%s143 + $0x188] sm:$0xff]
    %v2330 = vld [vmem:[%s143 + $0x190] sm:$0xff]
    %v2331 = vld [vmem:[%s143 + $0x198] sm:$0xff]
    %v2332 = vld [vmem:[%s143 + $0x1a0] sm:$0xff]
    %v2333 = vld [vmem:[%s143 + $0x1a8] sm:$0xff]
    %v2334 = vld [vmem:[%s143 + $0x1b0] sm:$0xff]
    %v2335 = vld [vmem:[%s143 + $0x1b8] sm:$0xff]
    %v2336 = vld [vmem:[%s143 + $0x1c0] sm:$0xff]
    %v2337 = vld [vmem:[%s143 + $0x1c8] sm:$0xff]
    %v2338 = vld [vmem:[%s143 + $0x1d0] sm:$0xff]
    %v2339 = vld [vmem:[%s143 + $0x1d8] sm:$0xff]
    %v2340 = vld [vmem:[%s143 + $0x1e0] sm:$0xff]
    %v2341 = vld [vmem:[%s143 + $0x1e8] sm:$0xff]
    %v2342 = vld [vmem:[%s143 + $0x1f0] sm:$0xff]
    %v2343 = vld [vmem:[%s143 + $0x1f8] sm:$0xff]
    %2344 = vmatprep.subr.bf16.mxu0 %v2313
    %2345 = vmatpush1.bf16.msra.mxu0 %v2312
    %2346 = vmatprep.subr.bf16.mxu0 %v2317
    %2347 = vmatpush1.bf16.msra.mxu0 %v2316
    %2348 = vmatprep.subr.bf16.mxu0 %v2321
    %2349 = vmatpush1.bf16.msra.mxu0 %v2320
    %2350 = vmatprep.subr.bf16.mxu0 %v2325
    %2351 = vmatpush1.bf16.msra.mxu0 %v2324
    %2352 = vmatprep.subr.bf16.mxu0 %v2329
    %2353 = vmatpush1.bf16.msra.mxu0 %v2328
    %2354 = vmatprep.subr.bf16.mxu0 %v2333
    %2355 = vmatpush1.bf16.msra.mxu0 %v2332
    %2356 = vmatprep.subr.bf16.mxu0 %v2337
    %2357 = vmatpush1.bf16.msra.mxu0 %v2336
    %2358 = vmatprep.subr.bf16.mxu0 %v2341
    %2359 = vmatpush1.bf16.msra.mxu0 %v2340
    %2360 = vmatprep.subr.bf16.mxu0 0
    %2361 = vmatpush1.bf16.msra.mxu0 0
    %2362 = vmatprep.subr.bf16.mxu0 0
    %2363 = vmatpush1.bf16.msra.mxu0 0
    %2364 = vmatprep.subr.bf16.mxu0 0
    %2365 = vmatpush1.bf16.msra.mxu0 0
    %2366 = vmatprep.subr.bf16.mxu0 0
    %2367 = vmatpush1.bf16.msra.mxu0 0
    %2368 = vmatprep.subr.bf16.mxu0 0
    %2369 = vmatpush1.bf16.msra.mxu0 0
    %2370 = vmatprep.subr.bf16.mxu0 0
    %2371 = vmatpush1.bf16.msra.mxu0 0
    %2372 = vmatprep.subr.bf16.mxu0 0
    %2373 = vmatpush1.bf16.msra.mxu0 0
    %2374 = vmatprep.subr.bf16.mxu0 0
    %2375 = vmatpush1.bf16.msra.mxu0 0
    %2376 = vmatprep.mubr.bf16.mxu0 0
    %2377 = vmatmul.mubr.bf16.gmra.mrb[0].mxu0 0
    %v2378 = vpop.f32.mrb[0].mxu0
    %v2379 = vadd.f32 0.0, %v2378
    %v2380 = vpop.f32.mrb[0].mxu0
    %v2381 = vadd.f32 0.0, %v2380
    %v2382 = vpop.f32.mrb[0].mxu0
    %v2383 = vpop.f32.mrb[0].mxu0
    %2384 = vdwg.mxu0
    %2385 = vmatprep.subr.bf16.mxu0 %v2315
    %2386 = vmatpush1.bf16.msra.mxu0 %v2314
    %2387 = vmatprep.subr.bf16.mxu0 %v2319
    %2388 = vmatpush1.bf16.msra.mxu0 %v2318
    %2389 = vmatprep.subr.bf16.mxu0 %v2323
    %2390 = vmatpush1.bf16.msra.mxu0 %v2322
    %2391 = vmatprep.subr.bf16.mxu0 %v2327
    %2392 = vmatpush1.bf16.msra.mxu0 %v2326
    %2393 = vmatprep.subr.bf16.mxu0 %v2331
    %2394 = vmatpush1.bf16.msra.mxu0 %v2330
    %2395 = vmatprep.subr.bf16.mxu0 %v2335
    %2396 = vmatpush1.bf16.msra.mxu0 %v2334
    %2397 = vmatprep.subr.bf16.mxu0 %v2339
    %2398 = vmatpush1.bf16.msra.mxu0 %v2338
    %2399 = vmatprep.subr.bf16.mxu0 %v2343
    %2400 = vmatpush1.bf16.msra.mxu0 %v2342
    %2401 = vmatprep.subr.bf16.mxu0 0
    %2402 = vmatpush1.bf16.msra.mxu0 0
    %2403 = vmatprep.subr.bf16.mxu0 0
    %2404 = vmatpush1.bf16.msra.mxu0 0
    %2405 = vmatprep.subr.bf16.mxu0 0
    %2406 = vmatpush1.bf16.msra.mxu0 0
    %2407 = vmatprep.subr.bf16.mxu0 0
    %2408 = vmatpush1.bf16.msra.mxu0 0
    %2409 = vmatprep.subr.bf16.mxu0 0
    %2410 = vmatpush1.bf16.msra.mxu0 0
    %2411 = vmatprep.subr.bf16.mxu0 0
    %2412 = vmatpush1.bf16.msra.mxu0 0
    %2413 = vmatprep.subr.bf16.mxu0 0
    %2414 = vmatpush1.bf16.msra.mxu0 0
    %2415 = vmatprep.subr.bf16.mxu0 0
    %2416 = vmatpush1.bf16.msra.mxu0 0
    %2417 = vmatprep.mubr.bf16.mxu0 0
    %2418 = vmatmul.mubr.bf16.gmra.mrb[0].mxu0 0
    %v2419 = vpop.f32.mrb[0].mxu0
    %v2420 = vadd.f32 0.0, %v2419
    %v2421 = vpop.f32.mrb[0].mxu0
    %v2422 = vadd.f32 0.0, %v2421
    %v2423 = vpop.f32.mrb[0].mxu0
    %v2424 = vpop.f32.mrb[0].mxu0
    %2425 = vdwg.mxu0
    %2426 = vmatprep.subr.bf16.mxu0 %v2281
    %2427 = vmatpush1.bf16.msra.mxu0 %v2280
    %2428 = vmatprep.subr.bf16.mxu0 %v2285
    %2429 = vmatpush1.bf16.msra.mxu0 %v2284
    %2430 = vmatprep.subr.bf16.mxu0 %v2289
    %2431 = vmatpush1.bf16.msra.mxu0 %v2288
    %2432 = vmatprep.subr.bf16.mxu0 %v2293
    %2433 = vmatpush1.bf16.msra.mxu0 %v2292
    %2434 = vmatprep.subr.bf16.mxu0 %v2297
    %2435 = vmatpush1.bf16.msra.mxu0 %v2296
    %2436 = vmatprep.subr.bf16.mxu0 %v2301
    %2437 = vmatpush1.bf16.msra.mxu0 %v2300
    %2438 = vmatprep.subr.bf16.mxu0 %v2305
    %2439 = vmatpush1.bf16.msra.mxu0 %v2304
    %2440 = vmatprep.subr.bf16.mxu0 %v2309
    %2441 = vmatpush1.bf16.msra.mxu0 %v2308
    %2442 = vmatprep.subr.bf16.mxu0 0
    %2443 = vmatpush1.bf16.msra.mxu0 0
    %2444 = vmatprep.subr.bf16.mxu0 0
    %2445 = vmatpush1.bf16.msra.mxu0 0
    %2446 = vmatprep.subr.bf16.mxu0 0
    %2447 = vmatpush1.bf16.msra.mxu0 0
    %2448 = vmatprep.subr.bf16.mxu0 0
    %2449 = vmatpush1.bf16.msra.mxu0 0
    %2450 = vmatprep.subr.bf16.mxu0 0
    %2451 = vmatpush1.bf16.msra.mxu0 0
    %2452 = vmatprep.subr.bf16.mxu0 0
    %2453 = vmatpush1.bf16.msra.mxu0 0
    %2454 = vmatprep.subr.bf16.mxu0 0
    %2455 = vmatpush1.bf16.msra.mxu0 0
    %2456 = vmatprep.subr.bf16.mxu0 0
    %2457 = vmatpush1.bf16.msra.mxu0 0
    %2458 = vmatprep.mubr.bf16.mxu0 0
    %2459 = vmatmul.mubr.bf16.gmra.mrb[0].mxu0 %v1658
    %v2460 = vpop.f32.mrb[0].mxu0
    %v2461 = vadd.f32 %v2379, %v2460
    %v2462 = vpop.f32.mrb[0].mxu0
    %v2463 = vadd.f32 %v2381, %v2462
    %v2464 = vpop.f32.mrb[0].mxu0
    %v2465 = vpop.f32.mrb[0].mxu0
    %2466 = vdwg.mxu0
    %2467 = vmatprep.subr.bf16.mxu0 %v2283
    %2468 = vmatpush1.bf16.msra.mxu0 %v2282
    %2469 = vmatprep.subr.bf16.mxu0 %v2287
    %2470 = vmatpush1.bf16.msra.mxu0 %v2286
    %2471 = vmatprep.subr.bf16.mxu0 %v2291
    %2472 = vmatpush1.bf16.msra.mxu0 %v2290
    %2473 = vmatprep.subr.bf16.mxu0 %v2295
    %2474 = vmatpush1.bf16.msra.mxu0 %v2294
    %2475 = vmatprep.subr.bf16.mxu0 %v2299
    %2476 = vmatpush1.bf16.msra.mxu0 %v2298
    %2477 = vmatprep.subr.bf16.mxu0 %v2303
    %2478 = vmatpush1.bf16.msra.mxu0 %v2302
    %2479 = vmatprep.subr.bf16.mxu0 %v2307
    %2480 = vmatpush1.bf16.msra.mxu0 %v2306
    %2481 = vmatprep.subr.bf16.mxu0 %v2311
    %2482 = vmatpush1.bf16.msra.mxu0 %v2310
    %2483 = vmatprep.subr.bf16.mxu0 0
    %2484 = vmatpush1.bf16.msra.mxu0 0
    %2485 = vmatprep.subr.bf16.mxu0 0
    %2486 = vmatpush1.bf16.msra.mxu0 0
    %2487 = vmatprep.subr.bf16.mxu0 0
    %2488 = vmatpush1.bf16.msra.mxu0 0
    %2489 = vmatprep.subr.bf16.mxu0 0
    %2490 = vmatpush1.bf16.msra.mxu0 0
    %2491 = vmatprep.subr.bf16.mxu0 0
    %2492 = vmatpush1.bf16.msra.mxu0 0
    %2493 = vmatprep.subr.bf16.mxu0 0
    %2494 = vmatpush1.bf16.msra.mxu0 0
    %2495 = vmatprep.subr.bf16.mxu0 0
    %2496 = vmatpush1.bf16.msra.mxu0 0
    %2497 = vmatprep.subr.bf16.mxu0 0
    %2498 = vmatpush1.bf16.msra.mxu0 0
    %2499 = vmatprep.mubr.bf16.mxu0 0
    %2500 = vmatmul.mubr.bf16.gmra.mrb[0].mxu0 %v1658
    %v2501 = vpop.f32.mrb[0].mxu0
    %v2502 = vadd.f32 %v2420, %v2501
    %v2503 = vpop.f32.mrb[0].mxu0
    %v2504 = vadd.f32 %v2422, %v2503
    %v2505 = vpop.f32.mrb[0].mxu0
    %v2506 = vpop.f32.mrb[0].mxu0
    %2507 = vdwg.mxu0
    %s2508 = scalar_lea.vmem [#allocation6], 12
    %v2509 = vld [vmem:[%s2508] sm:$0xf]
    %v2511 = vlaneseq
    %v2512 = vshrl.u32 %v2511, 7
    %v2513 = vsub.s32 0, %v2512
    %v2514 = vrot.slane %v2509, %v2513
    %v2515 = vlaneseq
    %v2516 = vshrl.u32 %v2515, 7
    %v2517 = vsub.s32 1, %v2516
    %v2518 = vrot.slane %v2509, %v2517
    %v2519 = vlaneseq
    %v2520 = vshrl.u32 %v2519, 7
    %v2521 = vsub.s32 2, %v2520
    %v2522 = vrot.slane %v2509, %v2521
    %v2523 = vlaneseq
    %v2524 = vshrl.u32 %v2523, 7
    %v2525 = vsub.s32 3, %v2524
    %v2526 = vrot.slane %v2509, %v2525
    %v2531 = vadd.f32 %v2461, %v2514
    %v2532 = vadd.f32 %v2463, %v2518
    %v2533 = vadd.f32 %v2502, %v2522
    %v2534 = vadd.f32 %v2504, %v2526
    %v2535 = vxor.u32 %v2531, 2147483648
    %v2536 = vxor.u32 %v2532, 2147483648
    %v2537 = vxor.u32 %v2533, 2147483648
    %v2538 = vmul.f32 %v2535, 1.442695
    %v2539 = vpow.pop %v2538
    %v2540 = vmul.f32 %v2536, 1.442695
    %v2541 = vpow.pop %v2540
    %v2542 = vmul.f32 %v2537, 1.442695
    %v2543 = vpow.pop %v2542
    %v2544 = vadd.f32 %v2539, 1.0
    %v2545 = vadd.f32 %v2541, 1.0
    %v2546 = vadd.f32 %v2543, 1.0
    %v2547 = vrcp.pop %v2544
    %v2548 = vmul.f32 1.0, %v2547
    %v2549 = vrcp.pop %v2545
    %v2550 = vmul.f32 1.0, %v2549
    %v2551 = vrcp.pop %v2546
    %v2552 = vmul.f32 1.0, %v2551
    %v2553 = vtanh.pop %v2534
    %v2554 = vmul.f32 %v2550, 0.0
    %v2555 = vmul.f32 %v2548, %v2553
    %v2556 = vadd.f32 %v2554, %v2555
    %v2557 = vtanh.pop %v2556
    %v2558 = vmul.f32 %v2552, %v2557
    %v2559 = vpack.c.bf16 %v2558, %v2558
    %v2560 = vld [vmem:[#allocation4 + $0x80] sm:$0xff]
    %v2561 = vld [vmem:[#allocation4 + $0x88] sm:$0xff]
    %v2562 = vld [vmem:[#allocation4 + $0x90] sm:$0xff]
    %v2563 = vld [vmem:[#allocation4 + $0x98] sm:$0xff]
    %v2564 = vld [vmem:[#allocation2 + $0x100] sm:$0xff]
    %v2565 = vld [vmem:[#allocation2 + $0x108] sm:$0xff]
    %v2566 = vld [vmem:[#allocation2 + $0x110] sm:$0xff]
    %v2567 = vld [vmem:[#allocation2 + $0x118] sm:$0xff]
    %v2568 = vld [vmem:[#allocation2 + $0x120] sm:$0xff]
    %v2569 = vld [vmem:[#allocation2 + $0x128] sm:$0xff]
    %v2570 = vld [vmem:[#allocation2 + $0x130] sm:$0xff]
    %v2571 = vld [vmem:[#allocation2 + $0x138] sm:$0xff]
    %v2572 = vld [vmem:[#allocation2 + $0x140] sm:$0xff]
    %v2573 = vld [vmem:[#allocation2 + $0x148] sm:$0xff]
    %v2574 = vld [vmem:[#allocation2 + $0x150] sm:$0xff]
    %v2575 = vld [vmem:[#allocation2 + $0x158] sm:$0xff]
    %v2576 = vld [vmem:[#allocation2 + $0x160] sm:$0xff]
    %v2577 = vld [vmem:[#allocation2 + $0x168] sm:$0xff]
    %v2578 = vld [vmem:[#allocation2 + $0x170] sm:$0xff]
    %v2579 = vld [vmem:[#allocation2 + $0x178] sm:$0xff]
    %v2580 = vld [vmem:[#allocation2 + $0x180] sm:$0xff]
    %v2581 = vld [vmem:[#allocation2 + $0x188] sm:$0xff]
    %v2582 = vld [vmem:[#allocation2 + $0x190] sm:$0xff]
    %v2583 = vld [vmem:[#allocation2 + $0x198] sm:$0xff]
    %v2584 = vld [vmem:[#allocation2 + $0x1a0] sm:$0xff]
    %v2585 = vld [vmem:[#allocation2 + $0x1a8] sm:$0xff]
    %v2586 = vld [vmem:[#allocation2 + $0x1b0] sm:$0xff]
    %v2587 = vld [vmem:[#allocation2 + $0x1b8] sm:$0xff]
    %v2588 = vld [vmem:[#allocation2 + $0x1c0] sm:$0xff]
    %v2589 = vld [vmem:[#allocation2 + $0x1c8] sm:$0xff]
    %v2590 = vld [vmem:[#allocation2 + $0x1d0] sm:$0xff]
    %v2591 = vld [vmem:[#allocation2 + $0x1d8] sm:$0xff]
    %v2592 = vld [vmem:[#allocation2 + $0x1e0] sm:$0xff]
    %v2593 = vld [vmem:[#allocation2 + $0x1e8] sm:$0xff]
    %v2594 = vld [vmem:[#allocation2 + $0x1f0] sm:$0xff]
    %v2595 = vld [vmem:[#allocation2 + $0x1f8] sm:$0xff]
    %2596 = vmatprep.subr.bf16.mxu0 %v2565
    %2597 = vmatpush1.bf16.msra.mxu0 %v2564
    %2598 = vmatprep.subr.bf16.mxu0 %v2569
    %2599 = vmatpush1.bf16.msra.mxu0 %v2568
    %2600 = vmatprep.subr.bf16.mxu0 %v2573
    %2601 = vmatpush1.bf16.msra.mxu0 %v2572
    %2602 = vmatprep.subr.bf16.mxu0 %v2577
    %2603 = vmatpush1.bf16.msra.mxu0 %v2576
    %2604 = vmatprep.subr.bf16.mxu0 %v2581
    %2605 = vmatpush1.bf16.msra.mxu0 %v2580
    %2606 = vmatprep.subr.bf16.mxu0 %v2585
    %2607 = vmatpush1.bf16.msra.mxu0 %v2584
    %2608 = vmatprep.subr.bf16.mxu0 %v2589
    %2609 = vmatpush1.bf16.msra.mxu0 %v2588
    %2610 = vmatprep.subr.bf16.mxu0 %v2593
    %2611 = vmatpush1.bf16.msra.mxu0 %v2592
    %2612 = vmatprep.subr.bf16.mxu0 0
    %2613 = vmatpush1.bf16.msra.mxu0 0
    %2614 = vmatprep.subr.bf16.mxu0 0
    %2615 = vmatpush1.bf16.msra.mxu0 0
    %2616 = vmatprep.subr.bf16.mxu0 0
    %2617 = vmatpush1.bf16.msra.mxu0 0
    %2618 = vmatprep.subr.bf16.mxu0 0
    %2619 = vmatpush1.bf16.msra.mxu0 0
    %2620 = vmatprep.subr.bf16.mxu0 0
    %2621 = vmatpush1.bf16.msra.mxu0 0
    %2622 = vmatprep.subr.bf16.mxu0 0
    %2623 = vmatpush1.bf16.msra.mxu0 0
    %2624 = vmatprep.subr.bf16.mxu0 0
    %2625 = vmatpush1.bf16.msra.mxu0 0
    %2626 = vmatprep.subr.bf16.mxu0 0
    %2627 = vmatpush1.bf16.msra.mxu0 0
    %2628 = vmatprep.mubr.bf16.mxu0 0
    %2629 = vmatmul.mubr.bf16.gmra.mrb[0].mxu0 %v1805
    %v2630 = vpop.f32.mrb[0].mxu0
    %v2631 = vadd.f32 0.0, %v2630
    %v2632 = vpop.f32.mrb[0].mxu0
    %v2633 = vadd.f32 0.0, %v2632
    %v2634 = vpop.f32.mrb[0].mxu0
    %v2635 = vpop.f32.mrb[0].mxu0
    %2636 = vdwg.mxu0
    %2637 = vmatprep.subr.bf16.mxu0 %v2567
    %2638 = vmatpush1.bf16.msra.mxu0 %v2566
    %2639 = vmatprep.subr.bf16.mxu0 %v2571
    %2640 = vmatpush1.bf16.msra.mxu0 %v2570
    %2641 = vmatprep.subr.bf16.mxu0 %v2575
    %2642 = vmatpush1.bf16.msra.mxu0 %v2574
    %2643 = vmatprep.subr.bf16.mxu0 %v2579
    %2644 = vmatpush1.bf16.msra.mxu0 %v2578
    %2645 = vmatprep.subr.bf16.mxu0 %v2583
    %2646 = vmatpush1.bf16.msra.mxu0 %v2582
    %2647 = vmatprep.subr.bf16.mxu0 %v2587
    %2648 = vmatpush1.bf16.msra.mxu0 %v2586
    %2649 = vmatprep.subr.bf16.mxu0 %v2591
    %2650 = vmatpush1.bf16.msra.mxu0 %v2590
    %2651 = vmatprep.subr.bf16.mxu0 %v2595
    %2652 = vmatpush1.bf16.msra.mxu0 %v2594
    %2653 = vmatprep.subr.bf16.mxu0 0
    %2654 = vmatpush1.bf16.msra.mxu0 0
    %2655 = vmatprep.subr.bf16.mxu0 0
    %2656 = vmatpush1.bf16.msra.mxu0 0
    %2657 = vmatprep.subr.bf16.mxu0 0
    %2658 = vmatpush1.bf16.msra.mxu0 0
    %2659 = vmatprep.subr.bf16.mxu0 0
    %2660 = vmatpush1.bf16.msra.mxu0 0
    %2661 = vmatprep.subr.bf16.mxu0 0
    %2662 = vmatpush1.bf16.msra.mxu0 0
    %2663 = vmatprep.subr.bf16.mxu0 0
    %2664 = vmatpush1.bf16.msra.mxu0 0
    %2665 = vmatprep.subr.bf16.mxu0 0
    %2666 = vmatpush1.bf16.msra.mxu0 0
    %2667 = vmatprep.subr.bf16.mxu0 0
    %2668 = vmatpush1.bf16.msra.mxu0 0
    %2669 = vmatprep.mubr.bf16.mxu0 0
    %2670 = vmatmul.mubr.bf16.gmra.mrb[0].mxu0 %v1805
    %v2671 = vpop.f32.mrb[0].mxu0
    %v2672 = vadd.f32 0.0, %v2671
    %v2673 = vpop.f32.mrb[0].mxu0
    %v2674 = vadd.f32 0.0, %v2673
    %v2675 = vpop.f32.mrb[0].mxu0
    %v2676 = vpop.f32.mrb[0].mxu0
    %2677 = vdwg.mxu0
    %v2678 = vadd.f32 %v2560, %v2631
    %v2679 = vadd.f32 %v2561, %v2633
    %v2680 = vadd.f32 %v2562, %v2672
    %v2681 = vadd.f32 %v2563, %v2674
    %v2682 = vxor.u32 %v2678, 2147483648
    %v2683 = vxor.u32 %v2679, 2147483648
    %v2684 = vxor.u32 %v2680, 2147483648
    %v2685 = vmul.f32 %v2682, 1.442695
    %v2686 = vpow.pop %v2685
    %v2687 = vmul.f32 %v2683, 1.442695
    %v2688 = vpow.pop %v2687
    %v2689 = vmul.f32 %v2684, 1.442695
    %v2690 = vpow.pop %v2689
    %v2691 = vadd.f32 %v2686, 1.0
    %v2692 = vadd.f32 %v2688, 1.0
    %v2693 = vadd.f32 %v2690, 1.0
    %v2694 = vrcp.pop %v2691
    %v2695 = vmul.f32 1.0, %v2694
    %v2696 = vrcp.pop %v2692
    %v2697 = vmul.f32 1.0, %v2696
    %v2698 = vrcp.pop %v2693
    %v2699 = vmul.f32 1.0, %v2698
    %v2700 = vtanh.pop %v2681
    %v2701 = vmul.f32 %v2697, %v1802
    %v2702 = vmul.f32 %v2695, %v2700
    %v2703 = vadd.f32 %v2701, %v2702
    %v2704 = vtanh.pop %v2703
    %v2705 = vmul.f32 %v2699, %v2704
    %v2706 = vpack.c.bf16 %v2705, %v2705
    %v2707 = vld [vmem:[%s69] sm:$0xff]
    %v2708 = vld [vmem:[%s69 + $0x8] sm:$0xff]
    %v2709 = vld [vmem:[%s69 + $0x10] sm:$0xff]
    %v2710 = vld [vmem:[%s69 + $0x18] sm:$0xff]
    %v2711 = vld [vmem:[%s69 + $0x20] sm:$0xff]
    %v2712 = vld [vmem:[%s69 + $0x28] sm:$0xff]
    %v2713 = vld [vmem:[%s69 + $0x30] sm:$0xff]
    %v2714 = vld [vmem:[%s69 + $0x38] sm:$0xff]
    %v2715 = vld [vmem:[%s69 + $0x40] sm:$0xff]
    %v2716 = vld [vmem:[%s69 + $0x48] sm:$0xff]
    %v2717 = vld [vmem:[%s69 + $0x50] sm:$0xff]
    %v2718 = vld [vmem:[%s69 + $0x58] sm:$0xff]
    %v2719 = vld [vmem:[%s69 + $0x60] sm:$0xff]
    %v2720 = vld [vmem:[%s69 + $0x68] sm:$0xff]
    %v2721 = vld [vmem:[%s69 + $0x70] sm:$0xff]
    %v2722 = vld [vmem:[%s69 + $0x78] sm:$0xff]
    %v2723 = vld [vmem:[%s69 + $0x80] sm:$0xff]
    %v2724 = vld [vmem:[%s69 + $0x88] sm:$0xff]
    %v2725 = vld [vmem:[%s69 + $0x90] sm:$0xff]
    %v2726 = vld [vmem:[%s69 + $0x98] sm:$0xff]
    %v2727 = vld [vmem:[%s69 + $0xa0] sm:$0xff]
    %v2728 = vld [vmem:[%s69 + $0xa8] sm:$0xff]
    %v2729 = vld [vmem:[%s69 + $0xb0] sm:$0xff]
    %v2730 = vld [vmem:[%s69 + $0xb8] sm:$0xff]
    %v2731 = vld [vmem:[%s69 + $0xc0] sm:$0xff]
    %v2732 = vld [vmem:[%s69 + $0xc8] sm:$0xff]
    %v2733 = vld [vmem:[%s69 + $0xd0] sm:$0xff]
    %v2734 = vld [vmem:[%s69 + $0xd8] sm:$0xff]
    %v2735 = vld [vmem:[%s69 + $0xe0] sm:$0xff]
    %v2736 = vld [vmem:[%s69 + $0xe8] sm:$0xff]
    %v2737 = vld [vmem:[%s69 + $0xf0] sm:$0xff]
    %v2738 = vld [vmem:[%s69 + $0xf8] sm:$0xff]
    %v2739 = vld [vmem:[%s69 + $0x100] sm:$0xff]
    %v2740 = vld [vmem:[%s69 + $0x108] sm:$0xff]
    %v2741 = vld [vmem:[%s69 + $0x110] sm:$0xff]
    %v2742 = vld [vmem:[%s69 + $0x118] sm:$0xff]
    %v2743 = vld [vmem:[%s69 + $0x120] sm:$0xff]
    %v2744 = vld [vmem:[%s69 + $0x128] sm:$0xff]
    %v2745 = vld [vmem:[%s69 + $0x130] sm:$0xff]
    %v2746 = vld [vmem:[%s69 + $0x138] sm:$0xff]
    %v2747 = vld [vmem:[%s69 + $0x140] sm:$0xff]
    %v2748 = vld [vmem:[%s69 + $0x148] sm:$0xff]
    %v2749 = vld [vmem:[%s69 + $0x150] sm:$0xff]
    %v2750 = vld [vmem:[%s69 + $0x158] sm:$0xff]
    %v2751 = vld [vmem:[%s69 + $0x160] sm:$0xff]
    %v2752 = vld [vmem:[%s69 + $0x168] sm:$0xff]
    %v2753 = vld [vmem:[%s69 + $0x170] sm:$0xff]
    %v2754 = vld [vmem:[%s69 + $0x178] sm:$0xff]
    %v2755 = vld [vmem:[%s69 + $0x180] sm:$0xff]
    %v2756 = vld [vmem:[%s69 + $0x188] sm:$0xff]
    %v2757 = vld [vmem:[%s69 + $0x190] sm:$0xff]
    %v2758 = vld [vmem:[%s69 + $0x198] sm:$0xff]
    %v2759 = vld [vmem:[%s69 + $0x1a0] sm:$0xff]
    %v2760 = vld [vmem:[%s69 + $0x1a8] sm:$0xff]
    %v2761 = vld [vmem:[%s69 + $0x1b0] sm:$0xff]
    %v2762 = vld [vmem:[%s69 + $0x1b8] sm:$0xff]
    %v2763 = vld [vmem:[%s69 + $0x1c0] sm:$0xff]
    %v2764 = vld [vmem:[%s69 + $0x1c8] sm:$0xff]
    %v2765 = vld [vmem:[%s69 + $0x1d0] sm:$0xff]
    %v2766 = vld [vmem:[%s69 + $0x1d8] sm:$0xff]
    %v2767 = vld [vmem:[%s69 + $0x1e0] sm:$0xff]
    %v2768 = vld [vmem:[%s69 + $0x1e8] sm:$0xff]
    %v2769 = vld [vmem:[%s69 + $0x1f0] sm:$0xff]
    %v2770 = vld [vmem:[%s69 + $0x1f8] sm:$0xff]
    %2771 = vmatprep.subr.bf16.mxu0 %v2740
    %2772 = vmatpush1.bf16.msra.mxu0 %v2739
    %2773 = vmatprep.subr.bf16.mxu0 %v2744
    %2774 = vmatpush1.bf16.msra.mxu0 %v2743
    %2775 = vmatprep.subr.bf16.mxu0 %v2748
    %2776 = vmatpush1.bf16.msra.mxu0 %v2747
    %2777 = vmatprep.subr.bf16.mxu0 %v2752
    %2778 = vmatpush1.bf16.msra.mxu0 %v2751
    %2779 = vmatprep.subr.bf16.mxu0 %v2756
    %2780 = vmatpush1.bf16.msra.mxu0 %v2755
    %2781 = vmatprep.subr.bf16.mxu0 %v2760
    %2782 = vmatpush1.bf16.msra.mxu0 %v2759
    %2783 = vmatprep.subr.bf16.mxu0 %v2764
    %2784 = vmatpush1.bf16.msra.mxu0 %v2763
    %2785 = vmatprep.subr.bf16.mxu0 %v2768
    %2786 = vmatpush1.bf16.msra.mxu0 %v2767
    %2787 = vmatprep.subr.bf16.mxu0 0
    %2788 = vmatpush1.bf16.msra.mxu0 0
    %2789 = vmatprep.subr.bf16.mxu0 0
    %2790 = vmatpush1.bf16.msra.mxu0 0
    %2791 = vmatprep.subr.bf16.mxu0 0
    %2792 = vmatpush1.bf16.msra.mxu0 0
    %2793 = vmatprep.subr.bf16.mxu0 0
    %2794 = vmatpush1.bf16.msra.mxu0 0
    %2795 = vmatprep.subr.bf16.mxu0 0
    %2796 = vmatpush1.bf16.msra.mxu0 0
    %2797 = vmatprep.subr.bf16.mxu0 0
    %2798 = vmatpush1.bf16.msra.mxu0 0
    %2799 = vmatprep.subr.bf16.mxu0 0
    %2800 = vmatpush1.bf16.msra.mxu0 0
    %2801 = vmatprep.subr.bf16.mxu0 0
    %2802 = vmatpush1.bf16.msra.mxu0 0
    %2803 = vmatprep.mubr.bf16.mxu0 0
    %2804 = vmatmul.mubr.bf16.gmra.mrb[0].mxu0 %v2084
    %v2805 = vpop.f32.mrb[0].mxu0
    %v2806 = vadd.f32 0.0, %v2805
    %v2807 = vpop.f32.mrb[0].mxu0
    %v2808 = vadd.f32 0.0, %v2807
    %v2809 = vpop.f32.mrb[0].mxu0
    %v2810 = vpop.f32.mrb[0].mxu0
    %2811 = vdwg.mxu0
    %2812 = vmatprep.subr.bf16.mxu0 %v2742
    %2813 = vmatpush1.bf16.msra.mxu0 %v2741
    %2814 = vmatprep.subr.bf16.mxu0 %v2746
    %2815 = vmatpush1.bf16.msra.mxu0 %v2745
    %2816 = vmatprep.subr.bf16.mxu0 %v2750
    %2817 = vmatpush1.bf16.msra.mxu0 %v2749
    %2818 = vmatprep.subr.bf16.mxu0 %v2754
    %2819 = vmatpush1.bf16.msra.mxu0 %v2753
    %2820 = vmatprep.subr.bf16.mxu0 %v2758
    %2821 = vmatpush1.bf16.msra.mxu0 %v2757
    %2822 = vmatprep.subr.bf16.mxu0 %v2762
    %2823 = vmatpush1.bf16.msra.mxu0 %v2761
    %2824 = vmatprep.subr.bf16.mxu0 %v2766
    %2825 = vmatpush1.bf16.msra.mxu0 %v2765
    %2826 = vmatprep.subr.bf16.mxu0 %v2770
    %2827 = vmatpush1.bf16.msra.mxu0 %v2769
    %2828 = vmatprep.subr.bf16.mxu0 0
    %2829 = vmatpush1.bf16.msra.mxu0 0
    %2830 = vmatprep.subr.bf16.mxu0 0
    %2831 = vmatpush1.bf16.msra.mxu0 0
    %2832 = vmatprep.subr.bf16.mxu0 0
    %2833 = vmatpush1.bf16.msra.mxu0 0
    %2834 = vmatprep.subr.bf16.mxu0 0
    %2835 = vmatpush1.bf16.msra.mxu0 0
    %2836 = vmatprep.subr.bf16.mxu0 0
    %2837 = vmatpush1.bf16.msra.mxu0 0
    %2838 = vmatprep.subr.bf16.mxu0 0
    %2839 = vmatpush1.bf16.msra.mxu0 0
    %2840 = vmatprep.subr.bf16.mxu0 0
    %2841 = vmatpush1.bf16.msra.mxu0 0
    %2842 = vmatprep.subr.bf16.mxu0 0
    %2843 = vmatpush1.bf16.msra.mxu0 0
    %2844 = vmatprep.mubr.bf16.mxu0 0
    %2845 = vmatmul.mubr.bf16.gmra.mrb[0].mxu0 %v2084
    %v2846 = vpop.f32.mrb[0].mxu0
    %v2847 = vadd.f32 0.0, %v2846
    %v2848 = vpop.f32.mrb[0].mxu0
    %v2849 = vadd.f32 0.0, %v2848
    %v2850 = vpop.f32.mrb[0].mxu0
    %v2851 = vpop.f32.mrb[0].mxu0
    %2852 = vdwg.mxu0
    %2853 = vmatprep.subr.bf16.mxu0 %v2708
    %2854 = vmatpush1.bf16.msra.mxu0 %v2707
    %2855 = vmatprep.subr.bf16.mxu0 %v2712
    %2856 = vmatpush1.bf16.msra.mxu0 %v2711
    %2857 = vmatprep.subr.bf16.mxu0 %v2716
    %2858 = vmatpush1.bf16.msra.mxu0 %v2715
    %2859 = vmatprep.subr.bf16.mxu0 %v2720
    %2860 = vmatpush1.bf16.msra.mxu0 %v2719
    %2861 = vmatprep.subr.bf16.mxu0 %v2724
    %2862 = vmatpush1.bf16.msra.mxu0 %v2723
    %2863 = vmatprep.subr.bf16.mxu0 %v2728
    %2864 = vmatpush1.bf16.msra.mxu0 %v2727
    %2865 = vmatprep.subr.bf16.mxu0 %v2732
    %2866 = vmatpush1.bf16.msra.mxu0 %v2731
    %2867 = vmatprep.subr.bf16.mxu0 %v2736
    %2868 = vmatpush1.bf16.msra.mxu0 %v2735
    %2869 = vmatprep.subr.bf16.mxu0 0
    %2870 = vmatpush1.bf16.msra.mxu0 0
    %2871 = vmatprep.subr.bf16.mxu0 0
    %2872 = vmatpush1.bf16.msra.mxu0 0
    %2873 = vmatprep.subr.bf16.mxu0 0
    %2874 = vmatpush1.bf16.msra.mxu0 0
    %2875 = vmatprep.subr.bf16.mxu0 0
    %2876 = vmatpush1.bf16.msra.mxu0 0
    %2877 = vmatprep.subr.bf16.mxu0 0
    %2878 = vmatpush1.bf16.msra.mxu0 0
    %2879 = vmatprep.subr.bf16.mxu0 0
    %2880 = vmatpush1.bf16.msra.mxu0 0
    %2881 = vmatprep.subr.bf16.mxu0 0
    %2882 = vmatpush1.bf16.msra.mxu0 0
    %2883 = vmatprep.subr.bf16.mxu0 0
    %2884 = vmatpush1.bf16.msra.mxu0 0
    %2885 = vmatprep.mubr.bf16.mxu0 0
    %2886 = vmatmul.mubr.bf16.gmra.mrb[0].mxu0 %v1805
    %v2887 = vpop.f32.mrb[0].mxu0
    %v2888 = vadd.f32 %v2806, %v2887
    %v2889 = vpop.f32.mrb[0].mxu0
    %v2890 = vadd.f32 %v2808, %v2889
    %v2891 = vpop.f32.mrb[0].mxu0
    %v2892 = vpop.f32.mrb[0].mxu0
    %2893 = vdwg.mxu0
    %2894 = vmatprep.subr.bf16.mxu0 %v2710
    %2895 = vmatpush1.bf16.msra.mxu0 %v2709
    %2896 = vmatprep.subr.bf16.mxu0 %v2714
    %2897 = vmatpush1.bf16.msra.mxu0 %v2713
    %2898 = vmatprep.subr.bf16.mxu0 %v2718
    %2899 = vmatpush1.bf16.msra.mxu0 %v2717
    %2900 = vmatprep.subr.bf16.mxu0 %v2722
    %2901 = vmatpush1.bf16.msra.mxu0 %v2721
    %2902 = vmatprep.subr.bf16.mxu0 %v2726
    %2903 = vmatpush1.bf16.msra.mxu0 %v2725
    %2904 = vmatprep.subr.bf16.mxu0 %v2730
    %2905 = vmatpush1.bf16.msra.mxu0 %v2729
    %2906 = vmatprep.subr.bf16.mxu0 %v2734
    %2907 = vmatpush1.bf16.msra.mxu0 %v2733
    %2908 = vmatprep.subr.bf16.mxu0 %v2738
    %2909 = vmatpush1.bf16.msra.mxu0 %v2737
    %2910 = vmatprep.subr.bf16.mxu0 0
    %2911 = vmatpush1.bf16.msra.mxu0 0
    %2912 = vmatprep.subr.bf16.mxu0 0
    %2913 = vmatpush1.bf16.msra.mxu0 0
    %2914 = vmatprep.subr.bf16.mxu0 0
    %2915 = vmatpush1.bf16.msra.mxu0 0
    %2916 = vmatprep.subr.bf16.mxu0 0
    %2917 = vmatpush1.bf16.msra.mxu0 0
    %2918 = vmatprep.subr.bf16.mxu0 0
    %2919 = vmatpush1.bf16.msra.mxu0 0
    %2920 = vmatprep.subr.bf16.mxu0 0
    %2921 = vmatpush1.bf16.msra.mxu0 0
    %2922 = vmatprep.subr.bf16.mxu0 0
    %2923 = vmatpush1.bf16.msra.mxu0 0
    %2924 = vmatprep.subr.bf16.mxu0 0
    %2925 = vmatpush1.bf16.msra.mxu0 0
    %2926 = vmatprep.mubr.bf16.mxu0 0
    %2927 = vmatmul.mubr.bf16.gmra.mrb[0].mxu0 %v1805
    %v2928 = vpop.f32.mrb[0].mxu0
    %v2929 = vadd.f32 %v2847, %v2928
    %v2930 = vpop.f32.mrb[0].mxu0
    %v2931 = vadd.f32 %v2849, %v2930
    %v2932 = vpop.f32.mrb[0].mxu0
    %v2933 = vpop.f32.mrb[0].mxu0
    %2934 = vdwg.mxu0
    %v2935 = vld [vmem:[%s985] sm:$0xf]
    %v2937 = vlaneseq
    %v2938 = vshrl.u32 %v2937, 7
    %v2939 = vsub.s32 0, %v2938
    %v2940 = vrot.slane %v2935, %v2939
    %v2941 = vlaneseq
    %v2942 = vshrl.u32 %v2941, 7
    %v2943 = vsub.s32 1, %v2942
    %v2944 = vrot.slane %v2935, %v2943
    %v2945 = vlaneseq
    %v2946 = vshrl.u32 %v2945, 7
    %v2947 = vsub.s32 2, %v2946
    %v2948 = vrot.slane %v2935, %v2947
    %v2949 = vlaneseq
    %v2950 = vshrl.u32 %v2949, 7
    %v2951 = vsub.s32 3, %v2950
    %v2952 = vrot.slane %v2935, %v2951
    %v2957 = vadd.f32 %v2888, %v2940
    %v2958 = vadd.f32 %v2890, %v2944
    %v2959 = vadd.f32 %v2929, %v2948
    %v2960 = vadd.f32 %v2931, %v2952
    %v2961 = vxor.u32 %v2957, 2147483648
    %v2962 = vxor.u32 %v2958, 2147483648
    %v2963 = vxor.u32 %v2959, 2147483648
    %v2964 = vmul.f32 %v2961, 1.442695
    %v2965 = vpow.pop %v2964
    %v2966 = vmul.f32 %v2962, 1.442695
    %v2967 = vpow.pop %v2966
    %v2968 = vmul.f32 %v2963, 1.442695
    %v2969 = vpow.pop %v2968
    %v2970 = vadd.f32 %v2965, 1.0
    %v2971 = vadd.f32 %v2967, 1.0
    %v2972 = vadd.f32 %v2969, 1.0
    %v2973 = vrcp.pop %v2970
    %v2974 = vmul.f32 1.0, %v2973
    %v2975 = vrcp.pop %v2971
    %v2976 = vmul.f32 1.0, %v2975
    %v2977 = vrcp.pop %v2972
    %v2978 = vmul.f32 1.0, %v2977
    %v2979 = vtanh.pop %v2960
    %v2980 = vmul.f32 %v2976, %v2081
    %v2981 = vmul.f32 %v2974, %v2979
    %v2982 = vadd.f32 %v2980, %v2981
    %v2983 = vtanh.pop %v2982
    %v2984 = vmul.f32 %v2978, %v2983
    %v2985 = vpack.c.bf16 %v2984, %v2984
    %v2986 = vld [vmem:[%s106] sm:$0xff]
    %v2987 = vld [vmem:[%s106 + $0x8] sm:$0xff]
    %v2988 = vld [vmem:[%s106 + $0x10] sm:$0xff]
    %v2989 = vld [vmem:[%s106 + $0x18] sm:$0xff]
    %v2990 = vld [vmem:[%s106 + $0x20] sm:$0xff]
    %v2991 = vld [vmem:[%s106 + $0x28] sm:$0xff]
    %v2992 = vld [vmem:[%s106 + $0x30] sm:$0xff]
    %v2993 = vld [vmem:[%s106 + $0x38] sm:$0xff]
    %v2994 = vld [vmem:[%s106 + $0x40] sm:$0xff]
    %v2995 = vld [vmem:[%s106 + $0x48] sm:$0xff]
    %v2996 = vld [vmem:[%s106 + $0x50] sm:$0xff]
    %v2997 = vld [vmem:[%s106 + $0x58] sm:$0xff]
    %v2998 = vld [vmem:[%s106 + $0x60] sm:$0xff]
    %v2999 = vld [vmem:[%s106 + $0x68] sm:$0xff]
    %v3000 = vld [vmem:[%s106 + $0x70] sm:$0xff]
    %v3001 = vld [vmem:[%s106 + $0x78] sm:$0xff]
    %v3002 = vld [vmem:[%s106 + $0x80] sm:$0xff]
    %v3003 = vld [vmem:[%s106 + $0x88] sm:$0xff]
    %v3004 = vld [vmem:[%s106 + $0x90] sm:$0xff]
    %v3005 = vld [vmem:[%s106 + $0x98] sm:$0xff]
    %v3006 = vld [vmem:[%s106 + $0xa0] sm:$0xff]
    %v3007 = vld [vmem:[%s106 + $0xa8] sm:$0xff]
    %v3008 = vld [vmem:[%s106 + $0xb0] sm:$0xff]
    %v3009 = vld [vmem:[%s106 + $0xb8] sm:$0xff]
    %v3010 = vld [vmem:[%s106 + $0xc0] sm:$0xff]
    %v3011 = vld [vmem:[%s106 + $0xc8] sm:$0xff]
    %v3012 = vld [vmem:[%s106 + $0xd0] sm:$0xff]
    %v3013 = vld [vmem:[%s106 + $0xd8] sm:$0xff]
    %v3014 = vld [vmem:[%s106 + $0xe0] sm:$0xff]
    %v3015 = vld [vmem:[%s106 + $0xe8] sm:$0xff]
    %v3016 = vld [vmem:[%s106 + $0xf0] sm:$0xff]
    %v3017 = vld [vmem:[%s106 + $0xf8] sm:$0xff]
    %v3018 = vld [vmem:[%s106 + $0x100] sm:$0xff]
    %v3019 = vld [vmem:[%s106 + $0x108] sm:$0xff]
    %v3020 = vld [vmem:[%s106 + $0x110] sm:$0xff]
    %v3021 = vld [vmem:[%s106 + $0x118] sm:$0xff]
    %v3022 = vld [vmem:[%s106 + $0x120] sm:$0xff]
    %v3023 = vld [vmem:[%s106 + $0x128] sm:$0xff]
    %v3024 = vld [vmem:[%s106 + $0x130] sm:$0xff]
    %v3025 = vld [vmem:[%s106 + $0x138] sm:$0xff]
    %v3026 = vld [vmem:[%s106 + $0x140] sm:$0xff]
    %v3027 = vld [vmem:[%s106 + $0x148] sm:$0xff]
    %v3028 = vld [vmem:[%s106 + $0x150] sm:$0xff]
    %v3029 = vld [vmem:[%s106 + $0x158] sm:$0xff]
    %v3030 = vld [vmem:[%s106 + $0x160] sm:$0xff]
    %v3031 = vld [vmem:[%s106 + $0x168] sm:$0xff]
    %v3032 = vld [vmem:[%s106 + $0x170] sm:$0xff]
    %v3033 = vld [vmem:[%s106 + $0x178] sm:$0xff]
    %v3034 = vld [vmem:[%s106 + $0x180] sm:$0xff]
    %v3035 = vld [vmem:[%s106 + $0x188] sm:$0xff]
    %v3036 = vld [vmem:[%s106 + $0x190] sm:$0xff]
    %v3037 = vld [vmem:[%s106 + $0x198] sm:$0xff]
    %v3038 = vld [vmem:[%s106 + $0x1a0] sm:$0xff]
    %v3039 = vld [vmem:[%s106 + $0x1a8] sm:$0xff]
    %v3040 = vld [vmem:[%s106 + $0x1b0] sm:$0xff]
    %v3041 = vld [vmem:[%s106 + $0x1b8] sm:$0xff]
    %v3042 = vld [vmem:[%s106 + $0x1c0] sm:$0xff]
    %v3043 = vld [vmem:[%s106 + $0x1c8] sm:$0xff]
    %v3044 = vld [vmem:[%s106 + $0x1d0] sm:$0xff]
    %v3045 = vld [vmem:[%s106 + $0x1d8] sm:$0xff]
    %v3046 = vld [vmem:[%s106 + $0x1e0] sm:$0xff]
    %v3047 = vld [vmem:[%s106 + $0x1e8] sm:$0xff]
    %v3048 = vld [vmem:[%s106 + $0x1f0] sm:$0xff]
    %v3049 = vld [vmem:[%s106 + $0x1f8] sm:$0xff]
    %3050 = vmatprep.subr.bf16.mxu0 %v3019
    %3051 = vmatpush1.bf16.msra.mxu0 %v3018
    %3052 = vmatprep.subr.bf16.mxu0 %v3023
    %3053 = vmatpush1.bf16.msra.mxu0 %v3022
    %3054 = vmatprep.subr.bf16.mxu0 %v3027
    %3055 = vmatpush1.bf16.msra.mxu0 %v3026
    %3056 = vmatprep.subr.bf16.mxu0 %v3031
    %3057 = vmatpush1.bf16.msra.mxu0 %v3030
    %3058 = vmatprep.subr.bf16.mxu0 %v3035
    %3059 = vmatpush1.bf16.msra.mxu0 %v3034
    %3060 = vmatprep.subr.bf16.mxu0 %v3039
    %3061 = vmatpush1.bf16.msra.mxu0 %v3038
    %3062 = vmatprep.subr.bf16.mxu0 %v3043
    %3063 = vmatpush1.bf16.msra.mxu0 %v3042
    %3064 = vmatprep.subr.bf16.mxu0 %v3047
    %3065 = vmatpush1.bf16.msra.mxu0 %v3046
    %3066 = vmatprep.subr.bf16.mxu0 0
    %3067 = vmatpush1.bf16.msra.mxu0 0
    %3068 = vmatprep.subr.bf16.mxu0 0
    %3069 = vmatpush1.bf16.msra.mxu0 0
    %3070 = vmatprep.subr.bf16.mxu0 0
    %3071 = vmatpush1.bf16.msra.mxu0 0
    %3072 = vmatprep.subr.bf16.mxu0 0
    %3073 = vmatpush1.bf16.msra.mxu0 0
    %3074 = vmatprep.subr.bf16.mxu0 0
    %3075 = vmatpush1.bf16.msra.mxu0 0
    %3076 = vmatprep.subr.bf16.mxu0 0
    %3077 = vmatpush1.bf16.msra.mxu0 0
    %3078 = vmatprep.subr.bf16.mxu0 0
    %3079 = vmatpush1.bf16.msra.mxu0 0
    %3080 = vmatprep.subr.bf16.mxu0 0
    %3081 = vmatpush1.bf16.msra.mxu0 0
    %3082 = vmatprep.mubr.bf16.mxu0 0
    %3083 = vmatmul.mubr.bf16.gmra.mrb[0].mxu0 %v2277
    %v3084 = vpop.f32.mrb[0].mxu0
    %v3085 = vadd.f32 0.0, %v3084
    %v3086 = vpop.f32.mrb[0].mxu0
    %v3087 = vadd.f32 0.0, %v3086
    %v3088 = vpop.f32.mrb[0].mxu0
    %v3089 = vpop.f32.mrb[0].mxu0
    %3090 = vdwg.mxu0
    %3091 = vmatprep.subr.bf16.mxu0 %v3021
    %3092 = vmatpush1.bf16.msra.mxu0 %v3020
    %3093 = vmatprep.subr.bf16.mxu0 %v3025
    %3094 = vmatpush1.bf16.msra.mxu0 %v3024
    %3095 = vmatprep.subr.bf16.mxu0 %v3029
    %3096 = vmatpush1.bf16.msra.mxu0 %v3028
    %3097 = vmatprep.subr.bf16.mxu0 %v3033
    %3098 = vmatpush1.bf16.msra.mxu0 %v3032
    %3099 = vmatprep.subr.bf16.mxu0 %v3037
    %3100 = vmatpush1.bf16.msra.mxu0 %v3036
    %3101 = vmatprep.subr.bf16.mxu0 %v3041
    %3102 = vmatpush1.bf16.msra.mxu0 %v3040
    %3103 = vmatprep.subr.bf16.mxu0 %v3045
    %3104 = vmatpush1.bf16.msra.mxu0 %v3044
    %3105 = vmatprep.subr.bf16.mxu0 %v3049
    %3106 = vmatpush1.bf16.msra.mxu0 %v3048
    %3107 = vmatprep.subr.bf16.mxu0 0
    %3108 = vmatpush1.bf16.msra.mxu0 0
    %3109 = vmatprep.subr.bf16.mxu0 0
    %3110 = vmatpush1.bf16.msra.mxu0 0
    %3111 = vmatprep.subr.bf16.mxu0 0
    %3112 = vmatpush1.bf16.msra.mxu0 0
    %3113 = vmatprep.subr.bf16.mxu0 0
    %3114 = vmatpush1.bf16.msra.mxu0 0
    %3115 = vmatprep.subr.bf16.mxu0 0
    %3116 = vmatpush1.bf16.msra.mxu0 0
    %3117 = vmatprep.subr.bf16.mxu0 0
    %3118 = vmatpush1.bf16.msra.mxu0 0
    %3119 = vmatprep.subr.bf16.mxu0 0
    %3120 = vmatpush1.bf16.msra.mxu0 0
    %3121 = vmatprep.subr.bf16.mxu0 0
    %3122 = vmatpush1.bf16.msra.mxu0 0
    %3123 = vmatprep.mubr.bf16.mxu0 0
    %3124 = vmatmul.mubr.bf16.gmra.mrb[0].mxu0 %v2277
    %v3125 = vpop.f32.mrb[0].mxu0
    %v3126 = vadd.f32 0.0, %v3125
    %v3127 = vpop.f32.mrb[0].mxu0
    %v3128 = vadd.f32 0.0, %v3127
    %v3129 = vpop.f32.mrb[0].mxu0
    %v3130 = vpop.f32.mrb[0].mxu0
    %3131 = vdwg.mxu0
    %3132 = vmatprep.subr.bf16.mxu0 %v2987
    %3133 = vmatpush1.bf16.msra.mxu0 %v2986
    %3134 = vmatprep.subr.bf16.mxu0 %v2991
    %3135 = vmatpush1.bf16.msra.mxu0 %v2990
    %3136 = vmatprep.subr.bf16.mxu0 %v2995
    %3137 = vmatpush1.bf16.msra.mxu0 %v2994
    %3138 = vmatprep.subr.bf16.mxu0 %v2999
    %3139 = vmatpush1.bf16.msra.mxu0 %v2998
    %3140 = vmatprep.subr.bf16.mxu0 %v3003
    %3141 = vmatpush1.bf16.msra.mxu0 %v3002
    %3142 = vmatprep.subr.bf16.mxu0 %v3007
    %3143 = vmatpush1.bf16.msra.mxu0 %v3006
    %3144 = vmatprep.subr.bf16.mxu0 %v3011
    %3145 = vmatpush1.bf16.msra.mxu0 %v3010
    %3146 = vmatprep.subr.bf16.mxu0 %v3015
    %3147 = vmatpush1.bf16.msra.mxu0 %v3014
    %3148 = vmatprep.subr.bf16.mxu0 0
    %3149 = vmatpush1.bf16.msra.mxu0 0
    %3150 = vmatprep.subr.bf16.mxu0 0
    %3151 = vmatpush1.bf16.msra.mxu0 0
    %3152 = vmatprep.subr.bf16.mxu0 0
    %3153 = vmatpush1.bf16.msra.mxu0 0
    %3154 = vmatprep.subr.bf16.mxu0 0
    %3155 = vmatpush1.bf16.msra.mxu0 0
    %3156 = vmatprep.subr.bf16.mxu0 0
    %3157 = vmatpush1.bf16.msra.mxu0 0
    %3158 = vmatprep.subr.bf16.mxu0 0
    %3159 = vmatpush1.bf16.msra.mxu0 0
    %3160 = vmatprep.subr.bf16.mxu0 0
    %3161 = vmatpush1.bf16.msra.mxu0 0
    %3162 = vmatprep.subr.bf16.mxu0 0
    %3163 = vmatpush1.bf16.msra.mxu0 0
    %3164 = vmatprep.mubr.bf16.mxu0 0
    %3165 = vmatmul.mubr.bf16.gmra.mrb[0].mxu0 %v2084
    %v3166 = vpop.f32.mrb[0].mxu0
    %v3167 = vadd.f32 %v3085, %v3166
    %v3168 = vpop.f32.mrb[0].mxu0
    %v3169 = vadd.f32 %v3087, %v3168
    %v3170 = vpop.f32.mrb[0].mxu0
    %v3171 = vpop.f32.mrb[0].mxu0
    %3172 = vdwg.mxu0
    %3173 = vmatprep.subr.bf16.mxu0 %v2989
    %3174 = vmatpush1.bf16.msra.mxu0 %v2988
    %3175 = vmatprep.subr.bf16.mxu0 %v2993
    %3176 = vmatpush1.bf16.msra.mxu0 %v2992
    %3177 = vmatprep.subr.bf16.mxu0 %v2997
    %3178 = vmatpush1.bf16.msra.mxu0 %v2996
    %3179 = vmatprep.subr.bf16.mxu0 %v3001
    %3180 = vmatpush1.bf16.msra.mxu0 %v3000
    %3181 = vmatprep.subr.bf16.mxu0 %v3005
    %3182 = vmatpush1.bf16.msra.mxu0 %v3004
    %3183 = vmatprep.subr.bf16.mxu0 %v3009
    %3184 = vmatpush1.bf16.msra.mxu0 %v3008
    %3185 = vmatprep.subr.bf16.mxu0 %v3013
    %3186 = vmatpush1.bf16.msra.mxu0 %v3012
    %3187 = vmatprep.subr.bf16.mxu0 %v3017
    %3188 = vmatpush1.bf16.msra.mxu0 %v3016
    %3189 = vmatprep.subr.bf16.mxu0 0
    %3190 = vmatpush1.bf16.msra.mxu0 0
    %3191 = vmatprep.subr.bf16.mxu0 0
    %3192 = vmatpush1.bf16.msra.mxu0 0
    %3193 = vmatprep.subr.bf16.mxu0 0
    %3194 = vmatpush1.bf16.msra.mxu0 0
    %3195 = vmatprep.subr.bf16.mxu0 0
    %3196 = vmatpush1.bf16.msra.mxu0 0
    %3197 = vmatprep.subr.bf16.mxu0 0
    %3198 = vmatpush1.bf16.msra.mxu0 0
    %3199 = vmatprep.subr.bf16.mxu0 0
    %3200 = vmatpush1.bf16.msra.mxu0 0
    %3201 = vmatprep.subr.bf16.mxu0 0
    %3202 = vmatpush1.bf16.msra.mxu0 0
    %3203 = vmatprep.subr.bf16.mxu0 0
    %3204 = vmatpush1.bf16.msra.mxu0 0
    %3205 = vmatprep.mubr.bf16.mxu0 0
    %3206 = vmatmul.mubr.bf16.gmra.mrb[0].mxu0 %v2084
    %v3207 = vpop.f32.mrb[0].mxu0
    %v3208 = vadd.f32 %v3126, %v3207
    %v3209 = vpop.f32.mrb[0].mxu0
    %v3210 = vadd.f32 %v3128, %v3209
    %v3211 = vpop.f32.mrb[0].mxu0
    %v3212 = vpop.f32.mrb[0].mxu0
    %3213 = vdwg.mxu0
    %v3214 = vld [vmem:[%s1607] sm:$0xf]
    %v3216 = vlaneseq
    %v3217 = vshrl.u32 %v3216, 7
    %v3218 = vsub.s32 0, %v3217
    %v3219 = vrot.slane %v3214, %v3218
    %v3220 = vlaneseq
    %v3221 = vshrl.u32 %v3220, 7
    %v3222 = vsub.s32 1, %v3221
    %v3223 = vrot.slane %v3214, %v3222
    %v3224 = vlaneseq
    %v3225 = vshrl.u32 %v3224, 7
    %v3226 = vsub.s32 2, %v3225
    %v3227 = vrot.slane %v3214, %v3226
    %v3228 = vlaneseq
    %v3229 = vshrl.u32 %v3228, 7
    %v3230 = vsub.s32 3, %v3229
    %v3231 = vrot.slane %v3214, %v3230
    %v3236 = vadd.f32 %v3167, %v3219
    %v3237 = vadd.f32 %v3169, %v3223
    %v3238 = vadd.f32 %v3208, %v3227
    %v3239 = vadd.f32 %v3210, %v3231
    %v3240 = vxor.u32 %v3236, 2147483648
    %v3241 = vxor.u32 %v3237, 2147483648
    %v3242 = vxor.u32 %v3238, 2147483648
    %v3243 = vmul.f32 %v3240, 1.442695
    %v3244 = vpow.pop %v3243
    %v3245 = vmul.f32 %v3241, 1.442695
    %v3246 = vpow.pop %v3245
    %v3247 = vmul.f32 %v3242, 1.442695
    %v3248 = vpow.pop %v3247
    %v3249 = vadd.f32 %v3244, 1.0
    %v3250 = vadd.f32 %v3246, 1.0
    %v3251 = vadd.f32 %v3248, 1.0
    %v3252 = vrcp.pop %v3249
    %v3253 = vmul.f32 1.0, %v3252
    %v3254 = vrcp.pop %v3250
    %v3255 = vmul.f32 1.0, %v3254
    %v3256 = vrcp.pop %v3251
    %v3257 = vmul.f32 1.0, %v3256
    %v3258 = vtanh.pop %v3239
    %v3259 = vmul.f32 %v3255, %v2274
    %v3260 = vmul.f32 %v3253, %v3258
    %v3261 = vadd.f32 %v3259, %v3260
    %v3262 = vtanh.pop %v3261
    %v3263 = vmul.f32 %v3257, %v3262
    %v3264 = vpack.c.bf16 %v3263, %v3263
    %3265 = vmatprep.subr.bf16.mxu0 %v2313
    %3266 = vmatpush1.bf16.msra.mxu0 %v2312
    %3267 = vmatprep.subr.bf16.mxu0 %v2317
    %3268 = vmatpush1.bf16.msra.mxu0 %v2316
    %3269 = vmatprep.subr.bf16.mxu0 %v2321
    %3270 = vmatpush1.bf16.msra.mxu0 %v2320
    %3271 = vmatprep.subr.bf16.mxu0 %v2325
    %3272 = vmatpush1.bf16.msra.mxu0 %v2324
    %3273 = vmatprep.subr.bf16.mxu0 %v2329
    %3274 = vmatpush1.bf16.msra.mxu0 %v2328
    %3275 = vmatprep.subr.bf16.mxu0 %v2333
    %3276 = vmatpush1.bf16.msra.mxu0 %v2332
    %3277 = vmatprep.subr.bf16.mxu0 %v2337
    %3278 = vmatpush1.bf16.msra.mxu0 %v2336
    %3279 = vmatprep.subr.bf16.mxu0 %v2341
    %3280 = vmatpush1.bf16.msra.mxu0 %v2340
    %3281 = vmatprep.subr.bf16.mxu0 0
    %3282 = vmatpush1.bf16.msra.mxu0 0
    %3283 = vmatprep.subr.bf16.mxu0 0
    %3284 = vmatpush1.bf16.msra.mxu0 0
    %3285 = vmatprep.subr.bf16.mxu0 0
    %3286 = vmatpush1.bf16.msra.mxu0 0
    %3287 = vmatprep.subr.bf16.mxu0 0
    %3288 = vmatpush1.bf16.msra.mxu0 0
    %3289 = vmatprep.subr.bf16.mxu0 0
    %3290 = vmatpush1.bf16.msra.mxu0 0
    %3291 = vmatprep.subr.bf16.mxu0 0
    %3292 = vmatpush1.bf16.msra.mxu0 0
    %3293 = vmatprep.subr.bf16.mxu0 0
    %3294 = vmatpush1.bf16.msra.mxu0 0
    %3295 = vmatprep.subr.bf16.mxu0 0
    %3296 = vmatpush1.bf16.msra.mxu0 0
    %3297 = vmatprep.mubr.bf16.mxu0 0
    %3298 = vmatmul.mubr.bf16.gmra.mrb[0].mxu0 %v2559
    %v3299 = vpop.f32.mrb[0].mxu0
    %v3300 = vadd.f32 0.0, %v3299
    %v3301 = vpop.f32.mrb[0].mxu0
    %v3302 = vadd.f32 0.0, %v3301
    %v3303 = vpop.f32.mrb[0].mxu0
    %v3304 = vpop.f32.mrb[0].mxu0
    %3305 = vdwg.mxu0
    %3306 = vmatprep.subr.bf16.mxu0 %v2315
    %3307 = vmatpush1.bf16.msra.mxu0 %v2314
    %3308 = vmatprep.subr.bf16.mxu0 %v2319
    %3309 = vmatpush1.bf16.msra.mxu0 %v2318
    %3310 = vmatprep.subr.bf16.mxu0 %v2323
    %3311 = vmatpush1.bf16.msra.mxu0 %v2322
    %3312 = vmatprep.subr.bf16.mxu0 %v2327
    %3313 = vmatpush1.bf16.msra.mxu0 %v2326
    %3314 = vmatprep.subr.bf16.mxu0 %v2331
    %3315 = vmatpush1.bf16.msra.mxu0 %v2330
    %3316 = vmatprep.subr.bf16.mxu0 %v2335
    %3317 = vmatpush1.bf16.msra.mxu0 %v2334
    %3318 = vmatprep.subr.bf16.mxu0 %v2339
    %3319 = vmatpush1.bf16.msra.mxu0 %v2338
    %3320 = vmatprep.subr.bf16.mxu0 %v2343
    %3321 = vmatpush1.bf16.msra.mxu0 %v2342
    %3322 = vmatprep.subr.bf16.mxu0 0
    %3323 = vmatpush1.bf16.msra.mxu0 0
    %3324 = vmatprep.subr.bf16.mxu0 0
    %3325 = vmatpush1.bf16.msra.mxu0 0
    %3326 = vmatprep.subr.bf16.mxu0 0
    %3327 = vmatpush1.bf16.msra.mxu0 0
    %3328 = vmatprep.subr.bf16.mxu0 0
    %3329 = vmatpush1.bf16.msra.mxu0 0
    %3330 = vmatprep.subr.bf16.mxu0 0
    %3331 = vmatpush1.bf16.msra.mxu0 0
    %3332 = vmatprep.subr.bf16.mxu0 0
    %3333 = vmatpush1.bf16.msra.mxu0 0
    %3334 = vmatprep.subr.bf16.mxu0 0
    %3335 = vmatpush1.bf16.msra.mxu0 0
    %3336 = vmatprep.subr.bf16.mxu0 0
    %3337 = vmatpush1.bf16.msra.mxu0 0
    %3338 = vmatprep.mubr.bf16.mxu0 0
    %3339 = vmatmul.mubr.bf16.gmra.mrb[0].mxu0 %v2559
    %v3340 = vpop.f32.mrb[0].mxu0
    %v3341 = vadd.f32 0.0, %v3340
    %v3342 = vpop.f32.mrb[0].mxu0
    %v3343 = vadd.f32 0.0, %v3342
    %v3344 = vpop.f32.mrb[0].mxu0
    %v3345 = vpop.f32.mrb[0].mxu0
    %3346 = vdwg.mxu0
    %3347 = vmatprep.subr.bf16.mxu0 %v2281
    %3348 = vmatpush1.bf16.msra.mxu0 %v2280
    %3349 = vmatprep.subr.bf16.mxu0 %v2285
    %3350 = vmatpush1.bf16.msra.mxu0 %v2284
    %3351 = vmatprep.subr.bf16.mxu0 %v2289
    %3352 = vmatpush1.bf16.msra.mxu0 %v2288
    %3353 = vmatprep.subr.bf16.mxu0 %v2293
    %3354 = vmatpush1.bf16.msra.mxu0 %v2292
    %3355 = vmatprep.subr.bf16.mxu0 %v2297
    %3356 = vmatpush1.bf16.msra.mxu0 %v2296
    %3357 = vmatprep.subr.bf16.mxu0 %v2301
    %3358 = vmatpush1.bf16.msra.mxu0 %v2300
    %3359 = vmatprep.subr.bf16.mxu0 %v2305
    %3360 = vmatpush1.bf16.msra.mxu0 %v2304
    %3361 = vmatprep.subr.bf16.mxu0 %v2309
    %3362 = vmatpush1.bf16.msra.mxu0 %v2308
    %3363 = vmatprep.subr.bf16.mxu0 0
    %3364 = vmatpush1.bf16.msra.mxu0 0
    %3365 = vmatprep.subr.bf16.mxu0 0
    %3366 = vmatpush1.bf16.msra.mxu0 0
    %3367 = vmatprep.subr.bf16.mxu0 0
    %3368 = vmatpush1.bf16.msra.mxu0 0
    %3369 = vmatprep.subr.bf16.mxu0 0
    %3370 = vmatpush1.bf16.msra.mxu0 0
    %3371 = vmatprep.subr.bf16.mxu0 0
    %3372 = vmatpush1.bf16.msra.mxu0 0
    %3373 = vmatprep.subr.bf16.mxu0 0
    %3374 = vmatpush1.bf16.msra.mxu0 0
    %3375 = vmatprep.subr.bf16.mxu0 0
    %3376 = vmatpush1.bf16.msra.mxu0 0
    %3377 = vmatprep.subr.bf16.mxu0 0
    %3378 = vmatpush1.bf16.msra.mxu0 0
    %3379 = vmatprep.mubr.bf16.mxu0 0
    %3380 = vmatmul.mubr.bf16.gmra.mrb[0].mxu0 %v2277
    %v3381 = vpop.f32.mrb[0].mxu0
    %v3382 = vadd.f32 %v3300, %v3381
    %v3383 = vpop.f32.mrb[0].mxu0
    %v3384 = vadd.f32 %v3302, %v3383
    %v3385 = vpop.f32.mrb[0].mxu0
    %v3386 = vpop.f32.mrb[0].mxu0
    %3387 = vdwg.mxu0
    %3388 = vmatprep.subr.bf16.mxu0 %v2283
    %3389 = vmatpush1.bf16.msra.mxu0 %v2282
    %3390 = vmatprep.subr.bf16.mxu0 %v2287
    %3391 = vmatpush1.bf16.msra.mxu0 %v2286
    %3392 = vmatprep.subr.bf16.mxu0 %v2291
    %3393 = vmatpush1.bf16.msra.mxu0 %v2290
    %3394 = vmatprep.subr.bf16.mxu0 %v2295
    %3395 = vmatpush1.bf16.msra.mxu0 %v2294
    %3396 = vmatprep.subr.bf16.mxu0 %v2299
    %3397 = vmatpush1.bf16.msra.mxu0 %v2298
    %3398 = vmatprep.subr.bf16.mxu0 %v2303
    %3399 = vmatpush1.bf16.msra.mxu0 %v2302
    %3400 = vmatprep.subr.bf16.mxu0 %v2307
    %3401 = vmatpush1.bf16.msra.mxu0 %v2306
    %3402 = vmatprep.subr.bf16.mxu0 %v2311
    %3403 = vmatpush1.bf16.msra.mxu0 %v2310
    %3404 = vmatprep.subr.bf16.mxu0 0
    %3405 = vmatpush1.bf16.msra.mxu0 0
    %3406 = vmatprep.subr.bf16.mxu0 0
    %3407 = vmatpush1.bf16.msra.mxu0 0
    %3408 = vmatprep.subr.bf16.mxu0 0
    %3409 = vmatpush1.bf16.msra.mxu0 0
    %3410 = vmatprep.subr.bf16.mxu0 0
    %3411 = vmatpush1.bf16.msra.mxu0 0
    %3412 = vmatprep.subr.bf16.mxu0 0
    %3413 = vmatpush1.bf16.msra.mxu0 0
    %3414 = vmatprep.subr.bf16.mxu0 0
    %3415 = vmatpush1.bf16.msra.mxu0 0
    %3416 = vmatprep.subr.bf16.mxu0 0
    %3417 = vmatpush1.bf16.msra.mxu0 0
    %3418 = vmatprep.subr.bf16.mxu0 0
    %3419 = vmatpush1.bf16.msra.mxu0 0
    %3420 = vmatprep.mubr.bf16.mxu0 0
    %3421 = vmatmul.mubr.bf16.gmra.mrb[0].mxu0 %v2277
    %v3422 = vpop.f32.mrb[0].mxu0
    %v3423 = vadd.f32 %v3341, %v3422
    %v3424 = vpop.f32.mrb[0].mxu0
    %v3425 = vadd.f32 %v3343, %v3424
    %v3426 = vpop.f32.mrb[0].mxu0
    %v3427 = vpop.f32.mrb[0].mxu0
    %3428 = vdwg.mxu0
    %v3429 = vadd.f32 %v3382, %v2514
    %v3430 = vadd.f32 %v3384, %v2518
    %v3431 = vadd.f32 %v3423, %v2522
    %v3432 = vadd.f32 %v3425, %v2526
    %v3433 = vxor.u32 %v3429, 2147483648
    %v3434 = vxor.u32 %v3430, 2147483648
    %v3435 = vxor.u32 %v3431, 2147483648
    %v3436 = vmul.f32 %v3433, 1.442695
    %v3437 = vpow.pop %v3436
    %v3438 = vmul.f32 %v3434, 1.442695
    %v3439 = vpow.pop %v3438
    %v3440 = vmul.f32 %v3435, 1.442695
    %v3441 = vpow.pop %v3440
    %v3442 = vadd.f32 %v3437, 1.0
    %v3443 = vadd.f32 %v3439, 1.0
    %v3444 = vadd.f32 %v3441, 1.0
    %v3445 = vrcp.pop %v3442
    %v3446 = vmul.f32 1.0, %v3445
    %v3447 = vrcp.pop %v3443
    %v3448 = vmul.f32 1.0, %v3447
    %v3449 = vrcp.pop %v3444
    %v3450 = vmul.f32 1.0, %v3449
    %v3451 = vtanh.pop %v3432
    %v3452 = vmul.f32 %v3448, %v2556
    %v3453 = vmul.f32 %v3446, %v3451
    %v3454 = vadd.f32 %v3452, %v3453
    %v3455 = vtanh.pop %v3454
    %v3456 = vmul.f32 %v3450, %v3455
    %v3457 = vpack.c.bf16 %v3456, %v3456
    %v3458 = vld [vmem:[#allocation4 + $0xa0] sm:$0xff]
    %v3459 = vld [vmem:[#allocation4 + $0xa8] sm:$0xff]
    %v3460 = vld [vmem:[#allocation4 + $0xb0] sm:$0xff]
    %v3461 = vld [vmem:[#allocation4 + $0xb8] sm:$0xff]
    %3462 = vmatprep.subr.bf16.mxu0 %v2565
    %3463 = vmatpush1.bf16.msra.mxu0 %v2564
    %3464 = vmatprep.subr.bf16.mxu0 %v2569
    %3465 = vmatpush1.bf16.msra.mxu0 %v2568
    %3466 = vmatprep.subr.bf16.mxu0 %v2573
    %3467 = vmatpush1.bf16.msra.mxu0 %v2572
    %3468 = vmatprep.subr.bf16.mxu0 %v2577
    %3469 = vmatpush1.bf16.msra.mxu0 %v2576
    %3470 = vmatprep.subr.bf16.mxu0 %v2581
    %3471 = vmatpush1.bf16.msra.mxu0 %v2580
    %3472 = vmatprep.subr.bf16.mxu0 %v2585
    %3473 = vmatpush1.bf16.msra.mxu0 %v2584
    %3474 = vmatprep.subr.bf16.mxu0 %v2589
    %3475 = vmatpush1.bf16.msra.mxu0 %v2588
    %3476 = vmatprep.subr.bf16.mxu0 %v2593
    %3477 = vmatpush1.bf16.msra.mxu0 %v2592
    %3478 = vmatprep.subr.bf16.mxu0 0
    %3479 = vmatpush1.bf16.msra.mxu0 0
    %3480 = vmatprep.subr.bf16.mxu0 0
    %3481 = vmatpush1.bf16.msra.mxu0 0
    %3482 = vmatprep.subr.bf16.mxu0 0
    %3483 = vmatpush1.bf16.msra.mxu0 0
    %3484 = vmatprep.subr.bf16.mxu0 0
    %3485 = vmatpush1.bf16.msra.mxu0 0
    %3486 = vmatprep.subr.bf16.mxu0 0
    %3487 = vmatpush1.bf16.msra.mxu0 0
    %3488 = vmatprep.subr.bf16.mxu0 0
    %3489 = vmatpush1.bf16.msra.mxu0 0
    %3490 = vmatprep.subr.bf16.mxu0 0
    %3491 = vmatpush1.bf16.msra.mxu0 0
    %3492 = vmatprep.subr.bf16.mxu0 0
    %3493 = vmatpush1.bf16.msra.mxu0 0
    %3494 = vmatprep.mubr.bf16.mxu0 0
    %3495 = vmatmul.mubr.bf16.gmra.mrb[0].mxu0 %v2706
    %v3496 = vpop.f32.mrb[0].mxu0
    %v3497 = vadd.f32 0.0, %v3496
    %v3498 = vpop.f32.mrb[0].mxu0
    %v3499 = vadd.f32 0.0, %v3498
    %v3500 = vpop.f32.mrb[0].mxu0
    %v3501 = vpop.f32.mrb[0].mxu0
    %3502 = vdwg.mxu0
    %3503 = vmatprep.subr.bf16.mxu0 %v2567
    %3504 = vmatpush1.bf16.msra.mxu0 %v2566
    %3505 = vmatprep.subr.bf16.mxu0 %v2571
    %3506 = vmatpush1.bf16.msra.mxu0 %v2570
    %3507 = vmatprep.subr.bf16.mxu0 %v2575
    %3508 = vmatpush1.bf16.msra.mxu0 %v2574
    %3509 = vmatprep.subr.bf16.mxu0 %v2579
    %3510 = vmatpush1.bf16.msra.mxu0 %v2578
    %3511 = vmatprep.subr.bf16.mxu0 %v2583
    %3512 = vmatpush1.bf16.msra.mxu0 %v2582
    %3513 = vmatprep.subr.bf16.mxu0 %v2587
    %3514 = vmatpush1.bf16.msra.mxu0 %v2586
    %3515 = vmatprep.subr.bf16.mxu0 %v2591
    %3516 = vmatpush1.bf16.msra.mxu0 %v2590
    %3517 = vmatprep.subr.bf16.mxu0 %v2595
    %3518 = vmatpush1.bf16.msra.mxu0 %v2594
    %3519 = vmatprep.subr.bf16.mxu0 0
    %3520 = vmatpush1.bf16.msra.mxu0 0
    %3521 = vmatprep.subr.bf16.mxu0 0
    %3522 = vmatpush1.bf16.msra.mxu0 0
    %3523 = vmatprep.subr.bf16.mxu0 0
    %3524 = vmatpush1.bf16.msra.mxu0 0
    %3525 = vmatprep.subr.bf16.mxu0 0
    %3526 = vmatpush1.bf16.msra.mxu0 0
    %3527 = vmatprep.subr.bf16.mxu0 0
    %3528 = vmatpush1.bf16.msra.mxu0 0
    %3529 = vmatprep.subr.bf16.mxu0 0
    %3530 = vmatpush1.bf16.msra.mxu0 0
    %3531 = vmatprep.subr.bf16.mxu0 0
    %3532 = vmatpush1.bf16.msra.mxu0 0
    %3533 = vmatprep.subr.bf16.mxu0 0
    %3534 = vmatpush1.bf16.msra.mxu0 0
    %3535 = vmatprep.mubr.bf16.mxu0 0
    %3536 = vmatmul.mubr.bf16.gmra.mrb[0].mxu0 %v2706
    %v3537 = vpop.f32.mrb[0].mxu0
    %v3538 = vadd.f32 0.0, %v3537
    %v3539 = vpop.f32.mrb[0].mxu0
    %v3540 = vadd.f32 0.0, %v3539
    %v3541 = vpop.f32.mrb[0].mxu0
    %v3542 = vpop.f32.mrb[0].mxu0
    %3543 = vdwg.mxu0
    %v3544 = vadd.f32 %v3458, %v3497
    %v3545 = vadd.f32 %v3459, %v3499
    %v3546 = vadd.f32 %v3460, %v3538
    %v3547 = vadd.f32 %v3461, %v3540
    %v3548 = vxor.u32 %v3544, 2147483648
    %v3549 = vxor.u32 %v3545, 2147483648
    %v3550 = vxor.u32 %v3546, 2147483648
    %v3551 = vmul.f32 %v3548, 1.442695
    %v3552 = vpow.pop %v3551
    %v3553 = vmul.f32 %v3549, 1.442695
    %v3554 = vpow.pop %v3553
    %v3555 = vmul.f32 %v3550, 1.442695
    %v3556 = vpow.pop %v3555
    %v3557 = vadd.f32 %v3552, 1.0
    %v3558 = vadd.f32 %v3554, 1.0
    %v3559 = vadd.f32 %v3556, 1.0
    %v3560 = vrcp.pop %v3557
    %v3561 = vmul.f32 1.0, %v3560
    %v3562 = vrcp.pop %v3558
    %v3563 = vmul.f32 1.0, %v3562
    %v3564 = vrcp.pop %v3559
    %v3565 = vmul.f32 1.0, %v3564
    %v3566 = vtanh.pop %v3547
    %v3567 = vmul.f32 %v3563, %v2703
    %v3568 = vmul.f32 %v3561, %v3566
    %v3569 = vadd.f32 %v3567, %v3568
    %v3570 = vtanh.pop %v3569
    %v3571 = vmul.f32 %v3565, %v3570
    %v3572 = vpack.c.bf16 %v3571, %v3571
    %3573 = vmatprep.subr.bf16.mxu0 %v2740
    %3574 = vmatpush1.bf16.msra.mxu0 %v2739
    %3575 = vmatprep.subr.bf16.mxu0 %v2744
    %3576 = vmatpush1.bf16.msra.mxu0 %v2743
    %3577 = vmatprep.subr.bf16.mxu0 %v2748
    %3578 = vmatpush1.bf16.msra.mxu0 %v2747
    %3579 = vmatprep.subr.bf16.mxu0 %v2752
    %3580 = vmatpush1.bf16.msra.mxu0 %v2751
    %3581 = vmatprep.subr.bf16.mxu0 %v2756
    %3582 = vmatpush1.bf16.msra.mxu0 %v2755
    %3583 = vmatprep.subr.bf16.mxu0 %v2760
    %3584 = vmatpush1.bf16.msra.mxu0 %v2759
    %3585 = vmatprep.subr.bf16.mxu0 %v2764
    %3586 = vmatpush1.bf16.msra.mxu0 %v2763
    %3587 = vmatprep.subr.bf16.mxu0 %v2768
    %3588 = vmatpush1.bf16.msra.mxu0 %v2767
    %3589 = vmatprep.subr.bf16.mxu0 0
    %3590 = vmatpush1.bf16.msra.mxu0 0
    %3591 = vmatprep.subr.bf16.mxu0 0
    %3592 = vmatpush1.bf16.msra.mxu0 0
    %3593 = vmatprep.subr.bf16.mxu0 0
    %3594 = vmatpush1.bf16.msra.mxu0 0
    %3595 = vmatprep.subr.bf16.mxu0 0
    %3596 = vmatpush1.bf16.msra.mxu0 0
    %3597 = vmatprep.subr.bf16.mxu0 0
    %3598 = vmatpush1.bf16.msra.mxu0 0
    %3599 = vmatprep.subr.bf16.mxu0 0
    %3600 = vmatpush1.bf16.msra.mxu0 0
    %3601 = vmatprep.subr.bf16.mxu0 0
    %3602 = vmatpush1.bf16.msra.mxu0 0
    %3603 = vmatprep.subr.bf16.mxu0 0
    %3604 = vmatpush1.bf16.msra.mxu0 0
    %3605 = vmatprep.mubr.bf16.mxu0 0
    %3606 = vmatmul.mubr.bf16.gmra.mrb[0].mxu0 %v2985
    %v3607 = vpop.f32.mrb[0].mxu0
    %v3608 = vadd.f32 0.0, %v3607
    %v3609 = vpop.f32.mrb[0].mxu0
    %v3610 = vadd.f32 0.0, %v3609
    %v3611 = vpop.f32.mrb[0].mxu0
    %v3612 = vpop.f32.mrb[0].mxu0
    %3613 = vdwg.mxu0
    %3614 = vmatprep.subr.bf16.mxu0 %v2742
    %3615 = vmatpush1.bf16.msra.mxu0 %v2741
    %3616 = vmatprep.subr.bf16.mxu0 %v2746
    %3617 = vmatpush1.bf16.msra.mxu0 %v2745
    %3618 = vmatprep.subr.bf16.mxu0 %v2750
    %3619 = vmatpush1.bf16.msra.mxu0 %v2749
    %3620 = vmatprep.subr.bf16.mxu0 %v2754
    %3621 = vmatpush1.bf16.msra.mxu0 %v2753
    %3622 = vmatprep.subr.bf16.mxu0 %v2758
    %3623 = vmatpush1.bf16.msra.mxu0 %v2757
    %3624 = vmatprep.subr.bf16.mxu0 %v2762
    %3625 = vmatpush1.bf16.msra.mxu0 %v2761
    %3626 = vmatprep.subr.bf16.mxu0 %v2766
    %3627 = vmatpush1.bf16.msra.mxu0 %v2765
    %3628 = vmatprep.subr.bf16.mxu0 %v2770
    %3629 = vmatpush1.bf16.msra.mxu0 %v2769
    %3630 = vmatprep.subr.bf16.mxu0 0
    %3631 = vmatpush1.bf16.msra.mxu0 0
    %3632 = vmatprep.subr.bf16.mxu0 0
    %3633 = vmatpush1.bf16.msra.mxu0 0
    %3634 = vmatprep.subr.bf16.mxu0 0
    %3635 = vmatpush1.bf16.msra.mxu0 0
    %3636 = vmatprep.subr.bf16.mxu0 0
    %3637 = vmatpush1.bf16.msra.mxu0 0
    %3638 = vmatprep.subr.bf16.mxu0 0
    %3639 = vmatpush1.bf16.msra.mxu0 0
    %3640 = vmatprep.subr.bf16.mxu0 0
    %3641 = vmatpush1.bf16.msra.mxu0 0
    %3642 = vmatprep.subr.bf16.mxu0 0
    %3643 = vmatpush1.bf16.msra.mxu0 0
    %3644 = vmatprep.subr.bf16.mxu0 0
    %3645 = vmatpush1.bf16.msra.mxu0 0
    %3646 = vmatprep.mubr.bf16.mxu0 0
    %3647 = vmatmul.mubr.bf16.gmra.mrb[0].mxu0 %v2985
    %v3648 = vpop.f32.mrb[0].mxu0
    %v3649 = vadd.f32 0.0, %v3648
    %v3650 = vpop.f32.mrb[0].mxu0
    %v3651 = vadd.f32 0.0, %v3650
    %v3652 = vpop.f32.mrb[0].mxu0
    %v3653 = vpop.f32.mrb[0].mxu0
    %3654 = vdwg.mxu0
    %3655 = vmatprep.subr.bf16.mxu0 %v2708
    %3656 = vmatpush1.bf16.msra.mxu0 %v2707
    %3657 = vmatprep.subr.bf16.mxu0 %v2712
    %3658 = vmatpush1.bf16.msra.mxu0 %v2711
    %3659 = vmatprep.subr.bf16.mxu0 %v2716
    %3660 = vmatpush1.bf16.msra.mxu0 %v2715
    %3661 = vmatprep.subr.bf16.mxu0 %v2720
    %3662 = vmatpush1.bf16.msra.mxu0 %v2719
    %3663 = vmatprep.subr.bf16.mxu0 %v2724
    %3664 = vmatpush1.bf16.msra.mxu0 %v2723
    %3665 = vmatprep.subr.bf16.mxu0 %v2728
    %3666 = vmatpush1.bf16.msra.mxu0 %v2727
    %3667 = vmatprep.subr.bf16.mxu0 %v2732
    %3668 = vmatpush1.bf16.msra.mxu0 %v2731
    %3669 = vmatprep.subr.bf16.mxu0 %v2736
    %3670 = vmatpush1.bf16.msra.mxu0 %v2735
    %3671 = vmatprep.subr.bf16.mxu0 0
    %3672 = vmatpush1.bf16.msra.mxu0 0
    %3673 = vmatprep.subr.bf16.mxu0 0
    %3674 = vmatpush1.bf16.msra.mxu0 0
    %3675 = vmatprep.subr.bf16.mxu0 0
    %3676 = vmatpush1.bf16.msra.mxu0 0
    %3677 = vmatprep.subr.bf16.mxu0 0
    %3678 = vmatpush1.bf16.msra.mxu0 0
    %3679 = vmatprep.subr.bf16.mxu0 0
    %3680 = vmatpush1.bf16.msra.mxu0 0
    %3681 = vmatprep.subr.bf16.mxu0 0
    %3682 = vmatpush1.bf16.msra.mxu0 0
    %3683 = vmatprep.subr.bf16.mxu0 0
    %3684 = vmatpush1.bf16.msra.mxu0 0
    %3685 = vmatprep.subr.bf16.mxu0 0
    %3686 = vmatpush1.bf16.msra.mxu0 0
    %3687 = vmatprep.mubr.bf16.mxu0 0
    %3688 = vmatmul.mubr.bf16.gmra.mrb[0].mxu0 %v2706
    %v3689 = vpop.f32.mrb[0].mxu0
    %v3690 = vadd.f32 %v3608, %v3689
    %v3691 = vpop.f32.mrb[0].mxu0
    %v3692 = vadd.f32 %v3610, %v3691
    %v3693 = vpop.f32.mrb[0].mxu0
    %v3694 = vpop.f32.mrb[0].mxu0
    %3695 = vdwg.mxu0
    %3696 = vmatprep.subr.bf16.mxu0 %v2710
    %3697 = vmatpush1.bf16.msra.mxu0 %v2709
    %3698 = vmatprep.subr.bf16.mxu0 %v2714
    %3699 = vmatpush1.bf16.msra.mxu0 %v2713
    %3700 = vmatprep.subr.bf16.mxu0 %v2718
    %3701 = vmatpush1.bf16.msra.mxu0 %v2717
    %3702 = vmatprep.subr.bf16.mxu0 %v2722
    %3703 = vmatpush1.bf16.msra.mxu0 %v2721
    %3704 = vmatprep.subr.bf16.mxu0 %v2726
    %3705 = vmatpush1.bf16.msra.mxu0 %v2725
    %3706 = vmatprep.subr.bf16.mxu0 %v2730
    %3707 = vmatpush1.bf16.msra.mxu0 %v2729
    %3708 = vmatprep.subr.bf16.mxu0 %v2734
    %3709 = vmatpush1.bf16.msra.mxu0 %v2733
    %3710 = vmatprep.subr.bf16.mxu0 %v2738
    %3711 = vmatpush1.bf16.msra.mxu0 %v2737
    %3712 = vmatprep.subr.bf16.mxu0 0
    %3713 = vmatpush1.bf16.msra.mxu0 0
    %3714 = vmatprep.subr.bf16.mxu0 0
    %3715 = vmatpush1.bf16.msra.mxu0 0
    %3716 = vmatprep.subr.bf16.mxu0 0
    %3717 = vmatpush1.bf16.msra.mxu0 0
    %3718 = vmatprep.subr.bf16.mxu0 0
    %3719 = vmatpush1.bf16.msra.mxu0 0
    %3720 = vmatprep.subr.bf16.mxu0 0
    %3721 = vmatpush1.bf16.msra.mxu0 0
    %3722 = vmatprep.subr.bf16.mxu0 0
    %3723 = vmatpush1.bf16.msra.mxu0 0
    %3724 = vmatprep.subr.bf16.mxu0 0
    %3725 = vmatpush1.bf16.msra.mxu0 0
    %3726 = vmatprep.subr.bf16.mxu0 0
    %3727 = vmatpush1.bf16.msra.mxu0 0
    %3728 = vmatprep.mubr.bf16.mxu0 0
    %3729 = vmatmul.mubr.bf16.gmra.mrb[0].mxu0 %v2706
    %v3730 = vpop.f32.mrb[0].mxu0
    %v3731 = vadd.f32 %v3649, %v3730
    %v3732 = vpop.f32.mrb[0].mxu0
    %v3733 = vadd.f32 %v3651, %v3732
    %v3734 = vpop.f32.mrb[0].mxu0
    %v3735 = vpop.f32.mrb[0].mxu0
    %3736 = vdwg.mxu0
    %v3737 = vadd.f32 %v3690, %v2940
    %v3738 = vadd.f32 %v3692, %v2944
    %v3739 = vadd.f32 %v3731, %v2948
    %v3740 = vadd.f32 %v3733, %v2952
    %v3741 = vxor.u32 %v3737, 2147483648
    %v3742 = vxor.u32 %v3738, 2147483648
    %v3743 = vxor.u32 %v3739, 2147483648
    %v3744 = vmul.f32 %v3741, 1.442695
    %v3745 = vpow.pop %v3744
    %v3746 = vmul.f32 %v3742, 1.442695
    %v3747 = vpow.pop %v3746
    %v3748 = vmul.f32 %v3743, 1.442695
    %v3749 = vpow.pop %v3748
    %v3750 = vadd.f32 %v3745, 1.0
    %v3751 = vadd.f32 %v3747, 1.0
    %v3752 = vadd.f32 %v3749, 1.0
    %v3753 = vrcp.pop %v3750
    %v3754 = vmul.f32 1.0, %v3753
    %v3755 = vrcp.pop %v3751
    %v3756 = vmul.f32 1.0, %v3755
    %v3757 = vrcp.pop %v3752
    %v3758 = vmul.f32 1.0, %v3757
    %v3759 = vtanh.pop %v3740
    %v3760 = vmul.f32 %v3756, %v2982
    %v3761 = vmul.f32 %v3754, %v3759
    %v3762 = vadd.f32 %v3760, %v3761
    %v3763 = vtanh.pop %v3762
    %v3764 = vmul.f32 %v3758, %v3763
    %v3765 = vpack.c.bf16 %v3764, %v3764
    %3766 = vmatprep.subr.bf16.mxu0 %v3019
    %3767 = vmatpush1.bf16.msra.mxu0 %v3018
    %3768 = vmatprep.subr.bf16.mxu0 %v3023
    %3769 = vmatpush1.bf16.msra.mxu0 %v3022
    %3770 = vmatprep.subr.bf16.mxu0 %v3027
    %3771 = vmatpush1.bf16.msra.mxu0 %v3026
    %3772 = vmatprep.subr.bf16.mxu0 %v3031
    %3773 = vmatpush1.bf16.msra.mxu0 %v3030
    %3774 = vmatprep.subr.bf16.mxu0 %v3035
    %3775 = vmatpush1.bf16.msra.mxu0 %v3034
    %3776 = vmatprep.subr.bf16.mxu0 %v3039
    %3777 = vmatpush1.bf16.msra.mxu0 %v3038
    %3778 = vmatprep.subr.bf16.mxu0 %v3043
    %3779 = vmatpush1.bf16.msra.mxu0 %v3042
    %3780 = vmatprep.subr.bf16.mxu0 %v3047
    %3781 = vmatpush1.bf16.msra.mxu0 %v3046
    %3782 = vmatprep.subr.bf16.mxu0 0
    %3783 = vmatpush1.bf16.msra.mxu0 0
    %3784 = vmatprep.subr.bf16.mxu0 0
    %3785 = vmatpush1.bf16.msra.mxu0 0
    %3786 = vmatprep.subr.bf16.mxu0 0
    %3787 = vmatpush1.bf16.msra.mxu0 0
    %3788 = vmatprep.subr.bf16.mxu0 0
    %3789 = vmatpush1.bf16.msra.mxu0 0
    %3790 = vmatprep.subr.bf16.mxu0 0
    %3791 = vmatpush1.bf16.msra.mxu0 0
    %3792 = vmatprep.subr.bf16.mxu0 0
    %3793 = vmatpush1.bf16.msra.mxu0 0
    %3794 = vmatprep.subr.bf16.mxu0 0
    %3795 = vmatpush1.bf16.msra.mxu0 0
    %3796 = vmatprep.subr.bf16.mxu0 0
    %3797 = vmatpush1.bf16.msra.mxu0 0
    %3798 = vmatprep.mubr.bf16.mxu0 0
    %3799 = vmatmul.mubr.bf16.gmra.mrb[0].mxu0 %v3264
    %v3800 = vpop.f32.mrb[0].mxu0
    %v3801 = vadd.f32 0.0, %v3800
    %v3802 = vpop.f32.mrb[0].mxu0
    %v3803 = vadd.f32 0.0, %v3802
    %v3804 = vpop.f32.mrb[0].mxu0
    %v3805 = vpop.f32.mrb[0].mxu0
    %3806 = vdwg.mxu0
    %3807 = vmatprep.subr.bf16.mxu0 %v3021
    %3808 = vmatpush1.bf16.msra.mxu0 %v3020
    %3809 = vmatprep.subr.bf16.mxu0 %v3025
    %3810 = vmatpush1.bf16.msra.mxu0 %v3024
    %3811 = vmatprep.subr.bf16.mxu0 %v3029
    %3812 = vmatpush1.bf16.msra.mxu0 %v3028
    %3813 = vmatprep.subr.bf16.mxu0 %v3033
    %3814 = vmatpush1.bf16.msra.mxu0 %v3032
    %3815 = vmatprep.subr.bf16.mxu0 %v3037
    %3816 = vmatpush1.bf16.msra.mxu0 %v3036
    %3817 = vmatprep.subr.bf16.mxu0 %v3041
    %3818 = vmatpush1.bf16.msra.mxu0 %v3040
    %3819 = vmatprep.subr.bf16.mxu0 %v3045
    %3820 = vmatpush1.bf16.msra.mxu0 %v3044
    %3821 = vmatprep.subr.bf16.mxu0 %v3049
    %3822 = vmatpush1.bf16.msra.mxu0 %v3048
    %3823 = vmatprep.subr.bf16.mxu0 0
    %3824 = vmatpush1.bf16.msra.mxu0 0
    %3825 = vmatprep.subr.bf16.mxu0 0
    %3826 = vmatpush1.bf16.msra.mxu0 0
    %3827 = vmatprep.subr.bf16.mxu0 0
    %3828 = vmatpush1.bf16.msra.mxu0 0
    %3829 = vmatprep.subr.bf16.mxu0 0
    %3830 = vmatpush1.bf16.msra.mxu0 0
    %3831 = vmatprep.subr.bf16.mxu0 0
    %3832 = vmatpush1.bf16.msra.mxu0 0
    %3833 = vmatprep.subr.bf16.mxu0 0
    %3834 = vmatpush1.bf16.msra.mxu0 0
    %3835 = vmatprep.subr.bf16.mxu0 0
    %3836 = vmatpush1.bf16.msra.mxu0 0
    %3837 = vmatprep.subr.bf16.mxu0 0
    %3838 = vmatpush1.bf16.msra.mxu0 0
    %3839 = vmatprep.mubr.bf16.mxu0 0
    %3840 = vmatmul.mubr.bf16.gmra.mrb[0].mxu0 %v3264
    %v3841 = vpop.f32.mrb[0].mxu0
    %v3842 = vadd.f32 0.0, %v3841
    %v3843 = vpop.f32.mrb[0].mxu0
    %v3844 = vadd.f32 0.0, %v3843
    %v3845 = vpop.f32.mrb[0].mxu0
    %v3846 = vpop.f32.mrb[0].mxu0
    %3847 = vdwg.mxu0
    %3848 = vmatprep.subr.bf16.mxu0 %v2987
    %3849 = vmatpush1.bf16.msra.mxu0 %v2986
    %3850 = vmatprep.subr.bf16.mxu0 %v2991
    %3851 = vmatpush1.bf16.msra.mxu0 %v2990
    %3852 = vmatprep.subr.bf16.mxu0 %v2995
    %3853 = vmatpush1.bf16.msra.mxu0 %v2994
    %3854 = vmatprep.subr.bf16.mxu0 %v2999
    %3855 = vmatpush1.bf16.msra.mxu0 %v2998
    %3856 = vmatprep.subr.bf16.mxu0 %v3003
    %3857 = vmatpush1.bf16.msra.mxu0 %v3002
    %3858 = vmatprep.subr.bf16.mxu0 %v3007
    %3859 = vmatpush1.bf16.msra.mxu0 %v3006
    %3860 = vmatprep.subr.bf16.mxu0 %v3011
    %3861 = vmatpush1.bf16.msra.mxu0 %v3010
    %3862 = vmatprep.subr.bf16.mxu0 %v3015
    %3863 = vmatpush1.bf16.msra.mxu0 %v3014
    %3864 = vmatprep.subr.bf16.mxu0 0
    %3865 = vmatpush1.bf16.msra.mxu0 0
    %3866 = vmatprep.subr.bf16.mxu0 0
    %3867 = vmatpush1.bf16.msra.mxu0 0
    %3868 = vmatprep.subr.bf16.mxu0 0
    %3869 = vmatpush1.bf16.msra.mxu0 0
    %3870 = vmatprep.subr.bf16.mxu0 0
    %3871 = vmatpush1.bf16.msra.mxu0 0
    %3872 = vmatprep.subr.bf16.mxu0 0
    %3873 = vmatpush1.bf16.msra.mxu0 0
    %3874 = vmatprep.subr.bf16.mxu0 0
    %3875 = vmatpush1.bf16.msra.mxu0 0
    %3876 = vmatprep.subr.bf16.mxu0 0
    %3877 = vmatpush1.bf16.msra.mxu0 0
    %3878 = vmatprep.subr.bf16.mxu0 0
    %3879 = vmatpush1.bf16.msra.mxu0 0
    %3880 = vmatprep.mubr.bf16.mxu0 0
    %3881 = vmatmul.mubr.bf16.gmra.mrb[0].mxu0 %v2985
    %v3882 = vpop.f32.mrb[0].mxu0
    %v3883 = vadd.f32 %v3801, %v3882
    %v3884 = vpop.f32.mrb[0].mxu0
    %v3885 = vadd.f32 %v3803, %v3884
    %v3886 = vpop.f32.mrb[0].mxu0
    %v3887 = vpop.f32.mrb[0].mxu0
    %3888 = vdwg.mxu0
    %3889 = vmatprep.subr.bf16.mxu0 %v2989
    %3890 = vmatpush1.bf16.msra.mxu0 %v2988
    %3891 = vmatprep.subr.bf16.mxu0 %v2993
    %3892 = vmatpush1.bf16.msra.mxu0 %v2992
    %3893 = vmatprep.subr.bf16.mxu0 %v2997
    %3894 = vmatpush1.bf16.msra.mxu0 %v2996
    %3895 = vmatprep.subr.bf16.mxu0 %v3001
    %3896 = vmatpush1.bf16.msra.mxu0 %v3000
    %3897 = vmatprep.subr.bf16.mxu0 %v3005
    %3898 = vmatpush1.bf16.msra.mxu0 %v3004
    %3899 = vmatprep.subr.bf16.mxu0 %v3009
    %3900 = vmatpush1.bf16.msra.mxu0 %v3008
    %3901 = vmatprep.subr.bf16.mxu0 %v3013
    %3902 = vmatpush1.bf16.msra.mxu0 %v3012
    %3903 = vmatprep.subr.bf16.mxu0 %v3017
    %3904 = vmatpush1.bf16.msra.mxu0 %v3016
    %3905 = vmatprep.subr.bf16.mxu0 0
    %3906 = vmatpush1.bf16.msra.mxu0 0
    %3907 = vmatprep.subr.bf16.mxu0 0
    %3908 = vmatpush1.bf16.msra.mxu0 0
    %3909 = vmatprep.subr.bf16.mxu0 0
    %3910 = vmatpush1.bf16.msra.mxu0 0
    %3911 = vmatprep.subr.bf16.mxu0 0
    %3912 = vmatpush1.bf16.msra.mxu0 0
    %3913 = vmatprep.subr.bf16.mxu0 0
    %3914 = vmatpush1.bf16.msra.mxu0 0
    %3915 = vmatprep.subr.bf16.mxu0 0
    %3916 = vmatpush1.bf16.msra.mxu0 0
    %3917 = vmatprep.subr.bf16.mxu0 0
    %3918 = vmatpush1.bf16.msra.mxu0 0
    %3919 = vmatprep.subr.bf16.mxu0 0
    %3920 = vmatpush1.bf16.msra.mxu0 0
    %3921 = vmatprep.mubr.bf16.mxu0 0
    %3922 = vmatmul.mubr.bf16.gmra.mrb[0].mxu0 %v2985
    %v3923 = vpop.f32.mrb[0].mxu0
    %v3924 = vadd.f32 %v3842, %v3923
    %v3925 = vpop.f32.mrb[0].mxu0
    %v3926 = vadd.f32 %v3844, %v3925
    %v3927 = vpop.f32.mrb[0].mxu0
    %v3928 = vpop.f32.mrb[0].mxu0
    %3929 = vdwg.mxu0
    %v3930 = vadd.f32 %v3883, %v3219
    %v3931 = vadd.f32 %v3885, %v3223
    %v3932 = vadd.f32 %v3924, %v3227
    %v3933 = vadd.f32 %v3926, %v3231
    %v3934 = vxor.u32 %v3930, 2147483648
    %v3935 = vxor.u32 %v3931, 2147483648
    %v3936 = vxor.u32 %v3932, 2147483648
    %v3937 = vmul.f32 %v3934, 1.442695
    %v3938 = vpow.pop %v3937
    %v3939 = vmul.f32 %v3935, 1.442695
    %v3940 = vpow.pop %v3939
    %v3941 = vmul.f32 %v3936, 1.442695
    %v3942 = vpow.pop %v3941
    %v3943 = vadd.f32 %v3938, 1.0
    %v3944 = vadd.f32 %v3940, 1.0
    %v3945 = vadd.f32 %v3942, 1.0
    %v3946 = vrcp.pop %v3943
    %v3947 = vmul.f32 1.0, %v3946
    %v3948 = vrcp.pop %v3944
    %v3949 = vmul.f32 1.0, %v3948
    %v3950 = vrcp.pop %v3945
    %v3951 = vmul.f32 1.0, %v3950
    %v3952 = vtanh.pop %v3933
    %v3953 = vmul.f32 %v3949, %v3261
    %v3954 = vmul.f32 %v3947, %v3952
    %v3955 = vadd.f32 %v3953, %v3954
    %v3956 = vtanh.pop %v3955
    %v3957 = vmul.f32 %v3951, %v3956
    %v3958 = vpack.c.bf16 %v3957, %v3957
    %3959 = vmatprep.subr.bf16.mxu0 %v2313
    %3960 = vmatpush1.bf16.msra.mxu0 %v2312
    %3961 = vmatprep.subr.bf16.mxu0 %v2317
    %3962 = vmatpush1.bf16.msra.mxu0 %v2316
    %3963 = vmatprep.subr.bf16.mxu0 %v2321
    %3964 = vmatpush1.bf16.msra.mxu0 %v2320
    %3965 = vmatprep.subr.bf16.mxu0 %v2325
    %3966 = vmatpush1.bf16.msra.mxu0 %v2324
    %3967 = vmatprep.subr.bf16.mxu0 %v2329
    %3968 = vmatpush1.bf16.msra.mxu0 %v2328
    %3969 = vmatprep.subr.bf16.mxu0 %v2333
    %3970 = vmatpush1.bf16.msra.mxu0 %v2332
    %3971 = vmatprep.subr.bf16.mxu0 %v2337
    %3972 = vmatpush1.bf16.msra.mxu0 %v2336
    %3973 = vmatprep.subr.bf16.mxu0 %v2341
    %3974 = vmatpush1.bf16.msra.mxu0 %v2340
    %3975 = vmatprep.subr.bf16.mxu0 0
    %3976 = vmatpush1.bf16.msra.mxu0 0
    %3977 = vmatprep.subr.bf16.mxu0 0
    %3978 = vmatpush1.bf16.msra.mxu0 0
    %3979 = vmatprep.subr.bf16.mxu0 0
    %3980 = vmatpush1.bf16.msra.mxu0 0
    %3981 = vmatprep.subr.bf16.mxu0 0
    %3982 = vmatpush1.bf16.msra.mxu0 0
    %3983 = vmatprep.subr.bf16.mxu0 0
    %3984 = vmatpush1.bf16.msra.mxu0 0
    %3985 = vmatprep.subr.bf16.mxu0 0
    %3986 = vmatpush1.bf16.msra.mxu0 0
    %3987 = vmatprep.subr.bf16.mxu0 0
    %3988 = vmatpush1.bf16.msra.mxu0 0
    %3989 = vmatprep.subr.bf16.mxu0 0
    %3990 = vmatpush1.bf16.msra.mxu0 0
    %3991 = vmatprep.mubr.bf16.mxu0 0
    %3992 = vmatmul.mubr.bf16.gmra.mrb[0].mxu0 %v3457
    %v3993 = vpop.f32.mrb[0].mxu0
    %v3994 = vadd.f32 0.0, %v3993
    %v3995 = vpop.f32.mrb[0].mxu0
    %v3996 = vadd.f32 0.0, %v3995
    %v3997 = vpop.f32.mrb[0].mxu0
    %v3998 = vpop.f32.mrb[0].mxu0
    %3999 = vdwg.mxu0
    %4000 = vmatprep.subr.bf16.mxu0 %v2315
    %4001 = vmatpush1.bf16.msra.mxu0 %v2314
    %4002 = vmatprep.subr.bf16.mxu0 %v2319
    %4003 = vmatpush1.bf16.msra.mxu0 %v2318
    %4004 = vmatprep.subr.bf16.mxu0 %v2323
    %4005 = vmatpush1.bf16.msra.mxu0 %v2322
    %4006 = vmatprep.subr.bf16.mxu0 %v2327
    %4007 = vmatpush1.bf16.msra.mxu0 %v2326
    %4008 = vmatprep.subr.bf16.mxu0 %v2331
    %4009 = vmatpush1.bf16.msra.mxu0 %v2330
    %4010 = vmatprep.subr.bf16.mxu0 %v2335
    %4011 = vmatpush1.bf16.msra.mxu0 %v2334
    %4012 = vmatprep.subr.bf16.mxu0 %v2339
    %4013 = vmatpush1.bf16.msra.mxu0 %v2338
    %4014 = vmatprep.subr.bf16.mxu0 %v2343
    %4015 = vmatpush1.bf16.msra.mxu0 %v2342
    %4016 = vmatprep.subr.bf16.mxu0 0
    %4017 = vmatpush1.bf16.msra.mxu0 0
    %4018 = vmatprep.subr.bf16.mxu0 0
    %4019 = vmatpush1.bf16.msra.mxu0 0
    %4020 = vmatprep.subr.bf16.mxu0 0
    %4021 = vmatpush1.bf16.msra.mxu0 0
    %4022 = vmatprep.subr.bf16.mxu0 0
    %4023 = vmatpush1.bf16.msra.mxu0 0
    %4024 = vmatprep.subr.bf16.mxu0 0
    %4025 = vmatpush1.bf16.msra.mxu0 0
    %4026 = vmatprep.subr.bf16.mxu0 0
    %4027 = vmatpush1.bf16.msra.mxu0 0
    %4028 = vmatprep.subr.bf16.mxu0 0
    %4029 = vmatpush1.bf16.msra.mxu0 0
    %4030 = vmatprep.subr.bf16.mxu0 0
    %4031 = vmatpush1.bf16.msra.mxu0 0
    %4032 = vmatprep.mubr.bf16.mxu0 0
    %4033 = vmatmul.mubr.bf16.gmra.mrb[0].mxu0 %v3457
    %v4034 = vpop.f32.mrb[0].mxu0
    %v4035 = vadd.f32 0.0, %v4034
    %v4036 = vpop.f32.mrb[0].mxu0
    %v4037 = vadd.f32 0.0, %v4036
    %v4038 = vpop.f32.mrb[0].mxu0
    %v4039 = vpop.f32.mrb[0].mxu0
    %4040 = vdwg.mxu0
    %4041 = vmatprep.subr.bf16.mxu0 %v2281
    %4042 = vmatpush1.bf16.msra.mxu0 %v2280
    %4043 = vmatprep.subr.bf16.mxu0 %v2285
    %4044 = vmatpush1.bf16.msra.mxu0 %v2284
    %4045 = vmatprep.subr.bf16.mxu0 %v2289
    %4046 = vmatpush1.bf16.msra.mxu0 %v2288
    %4047 = vmatprep.subr.bf16.mxu0 %v2293
    %4048 = vmatpush1.bf16.msra.mxu0 %v2292
    %4049 = vmatprep.subr.bf16.mxu0 %v2297
    %4050 = vmatpush1.bf16.msra.mxu0 %v2296
    %4051 = vmatprep.subr.bf16.mxu0 %v2301
    %4052 = vmatpush1.bf16.msra.mxu0 %v2300
    %4053 = vmatprep.subr.bf16.mxu0 %v2305
    %4054 = vmatpush1.bf16.msra.mxu0 %v2304
    %4055 = vmatprep.subr.bf16.mxu0 %v2309
    %4056 = vmatpush1.bf16.msra.mxu0 %v2308
    %4057 = vmatprep.subr.bf16.mxu0 0
    %4058 = vmatpush1.bf16.msra.mxu0 0
    %4059 = vmatprep.subr.bf16.mxu0 0
    %4060 = vmatpush1.bf16.msra.mxu0 0
    %4061 = vmatprep.subr.bf16.mxu0 0
    %4062 = vmatpush1.bf16.msra.mxu0 0
    %4063 = vmatprep.subr.bf16.mxu0 0
    %4064 = vmatpush1.bf16.msra.mxu0 0
    %4065 = vmatprep.subr.bf16.mxu0 0
    %4066 = vmatpush1.bf16.msra.mxu0 0
    %4067 = vmatprep.subr.bf16.mxu0 0
    %4068 = vmatpush1.bf16.msra.mxu0 0
    %4069 = vmatprep.subr.bf16.mxu0 0
    %4070 = vmatpush1.bf16.msra.mxu0 0
    %4071 = vmatprep.subr.bf16.mxu0 0
    %4072 = vmatpush1.bf16.msra.mxu0 0
    %4073 = vmatprep.mubr.bf16.mxu0 0
    %4074 = vmatmul.mubr.bf16.gmra.mrb[0].mxu0 %v3264
    %v4075 = vpop.f32.mrb[0].mxu0
    %v4076 = vadd.f32 %v3994, %v4075
    %v4077 = vpop.f32.mrb[0].mxu0
    %v4078 = vadd.f32 %v3996, %v4077
    %v4079 = vpop.f32.mrb[0].mxu0
    %v4080 = vpop.f32.mrb[0].mxu0
    %4081 = vdwg.mxu0
    %4082 = vmatprep.subr.bf16.mxu0 %v2283
    %4083 = vmatpush1.bf16.msra.mxu0 %v2282
    %4084 = vmatprep.subr.bf16.mxu0 %v2287
    %4085 = vmatpush1.bf16.msra.mxu0 %v2286
    %4086 = vmatprep.subr.bf16.mxu0 %v2291
    %4087 = vmatpush1.bf16.msra.mxu0 %v2290
    %4088 = vmatprep.subr.bf16.mxu0 %v2295
    %4089 = vmatpush1.bf16.msra.mxu0 %v2294
    %4090 = vmatprep.subr.bf16.mxu0 %v2299
    %4091 = vmatpush1.bf16.msra.mxu0 %v2298
    %4092 = vmatprep.subr.bf16.mxu0 %v2303
    %4093 = vmatpush1.bf16.msra.mxu0 %v2302
    %4094 = vmatprep.subr.bf16.mxu0 %v2307
    %4095 = vmatpush1.bf16.msra.mxu0 %v2306
    %4096 = vmatprep.subr.bf16.mxu0 %v2311
    %4097 = vmatpush1.bf16.msra.mxu0 %v2310
    %4098 = vmatprep.subr.bf16.mxu0 0
    %4099 = vmatpush1.bf16.msra.mxu0 0
    %4100 = vmatprep.subr.bf16.mxu0 0
    %4101 = vmatpush1.bf16.msra.mxu0 0
    %4102 = vmatprep.subr.bf16.mxu0 0
    %4103 = vmatpush1.bf16.msra.mxu0 0
    %4104 = vmatprep.subr.bf16.mxu0 0
    %4105 = vmatpush1.bf16.msra.mxu0 0
    %4106 = vmatprep.subr.bf16.mxu0 0
    %4107 = vmatpush1.bf16.msra.mxu0 0
    %4108 = vmatprep.subr.bf16.mxu0 0
    %4109 = vmatpush1.bf16.msra.mxu0 0
    %4110 = vmatprep.subr.bf16.mxu0 0
    %4111 = vmatpush1.bf16.msra.mxu0 0
    %4112 = vmatprep.subr.bf16.mxu0 0
    %4113 = vmatpush1.bf16.msra.mxu0 0
    %4114 = vmatprep.mubr.bf16.mxu0 0
    %4115 = vmatmul.mubr.bf16.gmra.mrb[0].mxu0 %v3264
    %v4116 = vpop.f32.mrb[0].mxu0
    %v4117 = vadd.f32 %v4035, %v4116
    %v4118 = vpop.f32.mrb[0].mxu0
    %v4119 = vadd.f32 %v4037, %v4118
    %v4120 = vpop.f32.mrb[0].mxu0
    %v4121 = vpop.f32.mrb[0].mxu0
    %4122 = vdwg.mxu0
    %v4123 = vadd.f32 %v4076, %v2514
    %v4124 = vadd.f32 %v4078, %v2518
    %v4125 = vadd.f32 %v4117, %v2522
    %v4126 = vadd.f32 %v4119, %v2526
    %v4127 = vxor.u32 %v4123, 2147483648
    %v4128 = vxor.u32 %v4124, 2147483648
    %v4129 = vxor.u32 %v4125, 2147483648
    %v4130 = vmul.f32 %v4127, 1.442695
    %v4131 = vpow.pop %v4130
    %v4132 = vmul.f32 %v4128, 1.442695
    %v4133 = vpow.pop %v4132
    %v4134 = vmul.f32 %v4129, 1.442695
    %v4135 = vpow.pop %v4134
    %v4136 = vadd.f32 %v4131, 1.0
    %v4137 = vadd.f32 %v4133, 1.0
    %v4138 = vadd.f32 %v4135, 1.0
    %v4139 = vrcp.pop %v4136
    %v4140 = vmul.f32 1.0, %v4139
    %v4141 = vrcp.pop %v4137
    %v4142 = vmul.f32 1.0, %v4141
    %v4143 = vrcp.pop %v4138
    %v4144 = vmul.f32 1.0, %v4143
    %v4145 = vtanh.pop %v4126
    %v4146 = vmul.f32 %v4142, %v3454
    %v4147 = vmul.f32 %v4140, %v4145
    %v4148 = vadd.f32 %v4146, %v4147
    %v4149 = vtanh.pop %v4148
    %v4150 = vmul.f32 %v4144, %v4149
    %v4151 = vpack.c.bf16 %v4150, %v4150
    %v4152 = vld [vmem:[#allocation4 + $0xc0] sm:$0xff]
    %v4153 = vld [vmem:[#allocation4 + $0xc8] sm:$0xff]
    %v4154 = vld [vmem:[#allocation4 + $0xd0] sm:$0xff]
    %v4155 = vld [vmem:[#allocation4 + $0xd8] sm:$0xff]
    %4156 = vmatprep.subr.bf16.mxu0 %v2565
    %4157 = vmatpush1.bf16.msra.mxu0 %v2564
    %4158 = vmatprep.subr.bf16.mxu0 %v2569
    %4159 = vmatpush1.bf16.msra.mxu0 %v2568
    %4160 = vmatprep.subr.bf16.mxu0 %v2573
    %4161 = vmatpush1.bf16.msra.mxu0 %v2572
    %4162 = vmatprep.subr.bf16.mxu0 %v2577
    %4163 = vmatpush1.bf16.msra.mxu0 %v2576
    %4164 = vmatprep.subr.bf16.mxu0 %v2581
    %4165 = vmatpush1.bf16.msra.mxu0 %v2580
    %4166 = vmatprep.subr.bf16.mxu0 %v2585
    %4167 = vmatpush1.bf16.msra.mxu0 %v2584
    %4168 = vmatprep.subr.bf16.mxu0 %v2589
    %4169 = vmatpush1.bf16.msra.mxu0 %v2588
    %4170 = vmatprep.subr.bf16.mxu0 %v2593
    %4171 = vmatpush1.bf16.msra.mxu0 %v2592
    %4172 = vmatprep.subr.bf16.mxu0 0
    %4173 = vmatpush1.bf16.msra.mxu0 0
    %4174 = vmatprep.subr.bf16.mxu0 0
    %4175 = vmatpush1.bf16.msra.mxu0 0
    %4176 = vmatprep.subr.bf16.mxu0 0
    %4177 = vmatpush1.bf16.msra.mxu0 0
    %4178 = vmatprep.subr.bf16.mxu0 0
    %4179 = vmatpush1.bf16.msra.mxu0 0
    %4180 = vmatprep.subr.bf16.mxu0 0
    %4181 = vmatpush1.bf16.msra.mxu0 0
    %4182 = vmatprep.subr.bf16.mxu0 0
    %4183 = vmatpush1.bf16.msra.mxu0 0
    %4184 = vmatprep.subr.bf16.mxu0 0
    %4185 = vmatpush1.bf16.msra.mxu0 0
    %4186 = vmatprep.subr.bf16.mxu0 0
    %4187 = vmatpush1.bf16.msra.mxu0 0
    %4188 = vmatprep.mubr.bf16.mxu0 0
    %4189 = vmatmul.mubr.bf16.gmra.mrb[0].mxu0 %v3572
    %v4190 = vpop.f32.mrb[0].mxu0
    %v4191 = vadd.f32 0.0, %v4190
    %v4192 = vpop.f32.mrb[0].mxu0
    %v4193 = vadd.f32 0.0, %v4192
    %v4194 = vpop.f32.mrb[0].mxu0
    %v4195 = vpop.f32.mrb[0].mxu0
    %4196 = vdwg.mxu0
    %4197 = vmatprep.subr.bf16.mxu0 %v2567
    %4198 = vmatpush1.bf16.msra.mxu0 %v2566
    %4199 = vmatprep.subr.bf16.mxu0 %v2571
    %4200 = vmatpush1.bf16.msra.mxu0 %v2570
    %4201 = vmatprep.subr.bf16.mxu0 %v2575
    %4202 = vmatpush1.bf16.msra.mxu0 %v2574
    %4203 = vmatprep.subr.bf16.mxu0 %v2579
    %4204 = vmatpush1.bf16.msra.mxu0 %v2578
    %4205 = vmatprep.subr.bf16.mxu0 %v2583
    %4206 = vmatpush1.bf16.msra.mxu0 %v2582
    %4207 = vmatprep.subr.bf16.mxu0 %v2587
    %4208 = vmatpush1.bf16.msra.mxu0 %v2586
    %4209 = vmatprep.subr.bf16.mxu0 %v2591
    %4210 = vmatpush1.bf16.msra.mxu0 %v2590
    %4211 = vmatprep.subr.bf16.mxu0 %v2595
    %4212 = vmatpush1.bf16.msra.mxu0 %v2594
    %4213 = vmatprep.subr.bf16.mxu0 0
    %4214 = vmatpush1.bf16.msra.mxu0 0
    %4215 = vmatprep.subr.bf16.mxu0 0
    %4216 = vmatpush1.bf16.msra.mxu0 0
    %4217 = vmatprep.subr.bf16.mxu0 0
    %4218 = vmatpush1.bf16.msra.mxu0 0
    %4219 = vmatprep.subr.bf16.mxu0 0
    %4220 = vmatpush1.bf16.msra.mxu0 0
    %4221 = vmatprep.subr.bf16.mxu0 0
    %4222 = vmatpush1.bf16.msra.mxu0 0
    %4223 = vmatprep.subr.bf16.mxu0 0
    %4224 = vmatpush1.bf16.msra.mxu0 0
    %4225 = vmatprep.subr.bf16.mxu0 0
    %4226 = vmatpush1.bf16.msra.mxu0 0
    %4227 = vmatprep.subr.bf16.mxu0 0
    %4228 = vmatpush1.bf16.msra.mxu0 0
    %4229 = vmatprep.mubr.bf16.mxu0 0
    %4230 = vmatmul.mubr.bf16.gmra.mrb[0].mxu0 %v3572
    %v4231 = vpop.f32.mrb[0].mxu0
    %v4232 = vadd.f32 0.0, %v4231
    %v4233 = vpop.f32.mrb[0].mxu0
    %v4234 = vadd.f32 0.0, %v4233
    %v4235 = vpop.f32.mrb[0].mxu0
    %v4236 = vpop.f32.mrb[0].mxu0
    %4237 = vdwg.mxu0
    %v4238 = vadd.f32 %v4152, %v4191
    %v4239 = vadd.f32 %v4153, %v4193
    %v4240 = vadd.f32 %v4154, %v4232
    %v4241 = vadd.f32 %v4155, %v4234
    %v4242 = vxor.u32 %v4238, 2147483648
    %v4243 = vxor.u32 %v4239, 2147483648
    %v4244 = vxor.u32 %v4240, 2147483648
    %v4245 = vmul.f32 %v4242, 1.442695
    %v4246 = vpow.pop %v4245
    %v4247 = vmul.f32 %v4243, 1.442695
    %v4248 = vpow.pop %v4247
    %v4249 = vmul.f32 %v4244, 1.442695
    %v4250 = vpow.pop %v4249
    %v4251 = vadd.f32 %v4246, 1.0
    %v4252 = vadd.f32 %v4248, 1.0
    %v4253 = vadd.f32 %v4250, 1.0
    %v4254 = vrcp.pop %v4251
    %v4255 = vmul.f32 1.0, %v4254
    %v4256 = vrcp.pop %v4252
    %v4257 = vmul.f32 1.0, %v4256
    %v4258 = vrcp.pop %v4253
    %v4259 = vmul.f32 1.0, %v4258
    %v4260 = vtanh.pop %v4241
    %v4261 = vmul.f32 %v4257, %v3569
    %v4262 = vmul.f32 %v4255, %v4260
    %v4263 = vadd.f32 %v4261, %v4262
    %v4264 = vtanh.pop %v4263
    %v4265 = vmul.f32 %v4259, %v4264
    %v4266 = vpack.c.bf16 %v4265, %v4265
    %4267 = vmatprep.subr.bf16.mxu0 %v2740
    %4268 = vmatpush1.bf16.msra.mxu0 %v2739
    %4269 = vmatprep.subr.bf16.mxu0 %v2744
    %4270 = vmatpush1.bf16.msra.mxu0 %v2743
    %4271 = vmatprep.subr.bf16.mxu0 %v2748
    %4272 = vmatpush1.bf16.msra.mxu0 %v2747
    %4273 = vmatprep.subr.bf16.mxu0 %v2752
    %4274 = vmatpush1.bf16.msra.mxu0 %v2751
    %4275 = vmatprep.subr.bf16.mxu0 %v2756
    %4276 = vmatpush1.bf16.msra.mxu0 %v2755
    %4277 = vmatprep.subr.bf16.mxu0 %v2760
    %4278 = vmatpush1.bf16.msra.mxu0 %v2759
    %4279 = vmatprep.subr.bf16.mxu0 %v2764
    %4280 = vmatpush1.bf16.msra.mxu0 %v2763
    %4281 = vmatprep.subr.bf16.mxu0 %v2768
    %4282 = vmatpush1.bf16.msra.mxu0 %v2767
    %4283 = vmatprep.subr.bf16.mxu0 0
    %4284 = vmatpush1.bf16.msra.mxu0 0
    %4285 = vmatprep.subr.bf16.mxu0 0
    %4286 = vmatpush1.bf16.msra.mxu0 0
    %4287 = vmatprep.subr.bf16.mxu0 0
    %4288 = vmatpush1.bf16.msra.mxu0 0
    %4289 = vmatprep.subr.bf16.mxu0 0
    %4290 = vmatpush1.bf16.msra.mxu0 0
    %4291 = vmatprep.subr.bf16.mxu0 0
    %4292 = vmatpush1.bf16.msra.mxu0 0
    %4293 = vmatprep.subr.bf16.mxu0 0
    %4294 = vmatpush1.bf16.msra.mxu0 0
    %4295 = vmatprep.subr.bf16.mxu0 0
    %4296 = vmatpush1.bf16.msra.mxu0 0
    %4297 = vmatprep.subr.bf16.mxu0 0
    %4298 = vmatpush1.bf16.msra.mxu0 0
    %4299 = vmatprep.mubr.bf16.mxu0 0
    %4300 = vmatmul.mubr.bf16.gmra.mrb[0].mxu0 %v3765
    %v4301 = vpop.f32.mrb[0].mxu0
    %v4302 = vadd.f32 0.0, %v4301
    %v4303 = vpop.f32.mrb[0].mxu0
    %v4304 = vadd.f32 0.0, %v4303
    %v4305 = vpop.f32.mrb[0].mxu0
    %v4306 = vpop.f32.mrb[0].mxu0
    %4307 = vdwg.mxu0
    %4308 = vmatprep.subr.bf16.mxu0 %v2742
    %4309 = vmatpush1.bf16.msra.mxu0 %v2741
    %4310 = vmatprep.subr.bf16.mxu0 %v2746
    %4311 = vmatpush1.bf16.msra.mxu0 %v2745
    %4312 = vmatprep.subr.bf16.mxu0 %v2750
    %4313 = vmatpush1.bf16.msra.mxu0 %v2749
    %4314 = vmatprep.subr.bf16.mxu0 %v2754
    %4315 = vmatpush1.bf16.msra.mxu0 %v2753
    %4316 = vmatprep.subr.bf16.mxu0 %v2758
    %4317 = vmatpush1.bf16.msra.mxu0 %v2757
    %4318 = vmatprep.subr.bf16.mxu0 %v2762
    %4319 = vmatpush1.bf16.msra.mxu0 %v2761
    %4320 = vmatprep.subr.bf16.mxu0 %v2766
    %4321 = vmatpush1.bf16.msra.mxu0 %v2765
    %4322 = vmatprep.subr.bf16.mxu0 %v2770
    %4323 = vmatpush1.bf16.msra.mxu0 %v2769
    %4324 = vmatprep.subr.bf16.mxu0 0
    %4325 = vmatpush1.bf16.msra.mxu0 0
    %4326 = vmatprep.subr.bf16.mxu0 0
    %4327 = vmatpush1.bf16.msra.mxu0 0
    %4328 = vmatprep.subr.bf16.mxu0 0
    %4329 = vmatpush1.bf16.msra.mxu0 0
    %4330 = vmatprep.subr.bf16.mxu0 0
    %4331 = vmatpush1.bf16.msra.mxu0 0
    %4332 = vmatprep.subr.bf16.mxu0 0
    %4333 = vmatpush1.bf16.msra.mxu0 0
    %4334 = vmatprep.subr.bf16.mxu0 0
    %4335 = vmatpush1.bf16.msra.mxu0 0
    %4336 = vmatprep.subr.bf16.mxu0 0
    %4337 = vmatpush1.bf16.msra.mxu0 0
    %4338 = vmatprep.subr.bf16.mxu0 0
    %4339 = vmatpush1.bf16.msra.mxu0 0
    %4340 = vmatprep.mubr.bf16.mxu0 0
    %4341 = vmatmul.mubr.bf16.gmra.mrb[0].mxu0 %v3765
    %v4342 = vpop.f32.mrb[0].mxu0
    %v4343 = vadd.f32 0.0, %v4342
    %v4344 = vpop.f32.mrb[0].mxu0
    %v4345 = vadd.f32 0.0, %v4344
    %v4346 = vpop.f32.mrb[0].mxu0
    %v4347 = vpop.f32.mrb[0].mxu0
    %4348 = vdwg.mxu0
    %4349 = vmatprep.subr.bf16.mxu0 %v2708
    %4350 = vmatpush1.bf16.msra.mxu0 %v2707
    %4351 = vmatprep.subr.bf16.mxu0 %v2712
    %4352 = vmatpush1.bf16.msra.mxu0 %v2711
    %4353 = vmatprep.subr.bf16.mxu0 %v2716
    %4354 = vmatpush1.bf16.msra.mxu0 %v2715
    %4355 = vmatprep.subr.bf16.mxu0 %v2720
    %4356 = vmatpush1.bf16.msra.mxu0 %v2719
    %4357 = vmatprep.subr.bf16.mxu0 %v2724
    %4358 = vmatpush1.bf16.msra.mxu0 %v2723
    %4359 = vmatprep.subr.bf16.mxu0 %v2728
    %4360 = vmatpush1.bf16.msra.mxu0 %v2727
    %4361 = vmatprep.subr.bf16.mxu0 %v2732
    %4362 = vmatpush1.bf16.msra.mxu0 %v2731
    %4363 = vmatprep.subr.bf16.mxu0 %v2736
    %4364 = vmatpush1.bf16.msra.mxu0 %v2735
    %4365 = vmatprep.subr.bf16.mxu0 0
    %4366 = vmatpush1.bf16.msra.mxu0 0
    %4367 = vmatprep.subr.bf16.mxu0 0
    %4368 = vmatpush1.bf16.msra.mxu0 0
    %4369 = vmatprep.subr.bf16.mxu0 0
    %4370 = vmatpush1.bf16.msra.mxu0 0
    %4371 = vmatprep.subr.bf16.mxu0 0
    %4372 = vmatpush1.bf16.msra.mxu0 0
    %4373 = vmatprep.subr.bf16.mxu0 0
    %4374 = vmatpush1.bf16.msra.mxu0 0
    %4375 = vmatprep.subr.bf16.mxu0 0
    %4376 = vmatpush1.bf16.msra.mxu0 0
    %4377 = vmatprep.subr.bf16.mxu0 0
    %4378 = vmatpush1.bf16.msra.mxu0 0
    %4379 = vmatprep.subr.bf16.mxu0 0
    %4380 = vmatpush1.bf16.msra.mxu0 0
    %4381 = vmatprep.mubr.bf16.mxu0 0
    %4382 = vmatmul.mubr.bf16.gmra.mrb[0].mxu0 %v3572
    %v4383 = vpop.f32.mrb[0].mxu0
    %v4384 = vadd.f32 %v4302, %v4383
    %v4385 = vpop.f32.mrb[0].mxu0
    %v4386 = vadd.f32 %v4304, %v4385
    %v4387 = vpop.f32.mrb[0].mxu0
    %v4388 = vpop.f32.mrb[0].mxu0
    %4389 = vdwg.mxu0
    %4390 = vmatprep.subr.bf16.mxu0 %v2710
    %4391 = vmatpush1.bf16.msra.mxu0 %v2709
    %4392 = vmatprep.subr.bf16.mxu0 %v2714
    %4393 = vmatpush1.bf16.msra.mxu0 %v2713
    %4394 = vmatprep.subr.bf16.mxu0 %v2718
    %4395 = vmatpush1.bf16.msra.mxu0 %v2717
    %4396 = vmatprep.subr.bf16.mxu0 %v2722
    %4397 = vmatpush1.bf16.msra.mxu0 %v2721
    %4398 = vmatprep.subr.bf16.mxu0 %v2726
    %4399 = vmatpush1.bf16.msra.mxu0 %v2725
    %4400 = vmatprep.subr.bf16.mxu0 %v2730
    %4401 = vmatpush1.bf16.msra.mxu0 %v2729
    %4402 = vmatprep.subr.bf16.mxu0 %v2734
    %4403 = vmatpush1.bf16.msra.mxu0 %v2733
    %4404 = vmatprep.subr.bf16.mxu0 %v2738
    %4405 = vmatpush1.bf16.msra.mxu0 %v2737
    %4406 = vmatprep.subr.bf16.mxu0 0
    %4407 = vmatpush1.bf16.msra.mxu0 0
    %4408 = vmatprep.subr.bf16.mxu0 0
    %4409 = vmatpush1.bf16.msra.mxu0 0
    %4410 = vmatprep.subr.bf16.mxu0 0
    %4411 = vmatpush1.bf16.msra.mxu0 0
    %4412 = vmatprep.subr.bf16.mxu0 0
    %4413 = vmatpush1.bf16.msra.mxu0 0
    %4414 = vmatprep.subr.bf16.mxu0 0
    %4415 = vmatpush1.bf16.msra.mxu0 0
    %4416 = vmatprep.subr.bf16.mxu0 0
    %4417 = vmatpush1.bf16.msra.mxu0 0
    %4418 = vmatprep.subr.bf16.mxu0 0
    %4419 = vmatpush1.bf16.msra.mxu0 0
    %4420 = vmatprep.subr.bf16.mxu0 0
    %4421 = vmatpush1.bf16.msra.mxu0 0
    %4422 = vmatprep.mubr.bf16.mxu0 0
    %4423 = vmatmul.mubr.bf16.gmra.mrb[0].mxu0 %v3572
    %v4424 = vpop.f32.mrb[0].mxu0
    %v4425 = vadd.f32 %v4343, %v4424
    %v4426 = vpop.f32.mrb[0].mxu0
    %v4427 = vadd.f32 %v4345, %v4426
    %v4428 = vpop.f32.mrb[0].mxu0
    %v4429 = vpop.f32.mrb[0].mxu0
    %4430 = vdwg.mxu0
    %v4431 = vadd.f32 %v4384, %v2940
    %v4432 = vadd.f32 %v4386, %v2944
    %v4433 = vadd.f32 %v4425, %v2948
    %v4434 = vadd.f32 %v4427, %v2952
    %v4435 = vxor.u32 %v4431, 2147483648
    %v4436 = vxor.u32 %v4432, 2147483648
    %v4437 = vxor.u32 %v4433, 2147483648
    %v4438 = vmul.f32 %v4435, 1.442695
    %v4439 = vpow.pop %v4438
    %v4440 = vmul.f32 %v4436, 1.442695
    %v4441 = vpow.pop %v4440
    %v4442 = vmul.f32 %v4437, 1.442695
    %v4443 = vpow.pop %v4442
    %v4444 = vadd.f32 %v4439, 1.0
    %v4445 = vadd.f32 %v4441, 1.0
    %v4446 = vadd.f32 %v4443, 1.0
    %v4447 = vrcp.pop %v4444
    %v4448 = vmul.f32 1.0, %v4447
    %v4449 = vrcp.pop %v4445
    %v4450 = vmul.f32 1.0, %v4449
    %v4451 = vrcp.pop %v4446
    %v4452 = vmul.f32 1.0, %v4451
    %v4453 = vtanh.pop %v4434
    %v4454 = vmul.f32 %v4450, %v3762
    %v4455 = vmul.f32 %v4448, %v4453
    %v4456 = vadd.f32 %v4454, %v4455
    %v4457 = vtanh.pop %v4456
    %v4458 = vmul.f32 %v4452, %v4457
    %v4459 = vpack.c.bf16 %v4458, %v4458
    %4460 = vmatprep.subr.bf16.mxu0 %v3019
    %4461 = vmatpush1.bf16.msra.mxu0 %v3018
    %4462 = vmatprep.subr.bf16.mxu0 %v3023
    %4463 = vmatpush1.bf16.msra.mxu0 %v3022
    %4464 = vmatprep.subr.bf16.mxu0 %v3027
    %4465 = vmatpush1.bf16.msra.mxu0 %v3026
    %4466 = vmatprep.subr.bf16.mxu0 %v3031
    %4467 = vmatpush1.bf16.msra.mxu0 %v3030
    %4468 = vmatprep.subr.bf16.mxu0 %v3035
    %4469 = vmatpush1.bf16.msra.mxu0 %v3034
    %4470 = vmatprep.subr.bf16.mxu0 %v3039
    %4471 = vmatpush1.bf16.msra.mxu0 %v3038
    %4472 = vmatprep.subr.bf16.mxu0 %v3043
    %4473 = vmatpush1.bf16.msra.mxu0 %v3042
    %4474 = vmatprep.subr.bf16.mxu0 %v3047
    %4475 = vmatpush1.bf16.msra.mxu0 %v3046
    %4476 = vmatprep.subr.bf16.mxu0 0
    %4477 = vmatpush1.bf16.msra.mxu0 0
    %4478 = vmatprep.subr.bf16.mxu0 0
    %4479 = vmatpush1.bf16.msra.mxu0 0
    %4480 = vmatprep.subr.bf16.mxu0 0
    %4481 = vmatpush1.bf16.msra.mxu0 0
    %4482 = vmatprep.subr.bf16.mxu0 0
    %4483 = vmatpush1.bf16.msra.mxu0 0
    %4484 = vmatprep.subr.bf16.mxu0 0
    %4485 = vmatpush1.bf16.msra.mxu0 0
    %4486 = vmatprep.subr.bf16.mxu0 0
    %4487 = vmatpush1.bf16.msra.mxu0 0
    %4488 = vmatprep.subr.bf16.mxu0 0
    %4489 = vmatpush1.bf16.msra.mxu0 0
    %4490 = vmatprep.subr.bf16.mxu0 0
    %4491 = vmatpush1.bf16.msra.mxu0 0
    %4492 = vmatprep.mubr.bf16.mxu0 0
    %4493 = vmatmul.mubr.bf16.gmra.mrb[0].mxu0 %v3958
    %v4494 = vpop.f32.mrb[0].mxu0
    %v4495 = vadd.f32 0.0, %v4494
    %v4496 = vpop.f32.mrb[0].mxu0
    %v4497 = vadd.f32 0.0, %v4496
    %v4498 = vpop.f32.mrb[0].mxu0
    %v4499 = vpop.f32.mrb[0].mxu0
    %4500 = vdwg.mxu0
    %4501 = vmatprep.subr.bf16.mxu0 %v3021
    %4502 = vmatpush1.bf16.msra.mxu0 %v3020
    %4503 = vmatprep.subr.bf16.mxu0 %v3025
    %4504 = vmatpush1.bf16.msra.mxu0 %v3024
    %4505 = vmatprep.subr.bf16.mxu0 %v3029
    %4506 = vmatpush1.bf16.msra.mxu0 %v3028
    %4507 = vmatprep.subr.bf16.mxu0 %v3033
    %4508 = vmatpush1.bf16.msra.mxu0 %v3032
    %4509 = vmatprep.subr.bf16.mxu0 %v3037
    %4510 = vmatpush1.bf16.msra.mxu0 %v3036
    %4511 = vmatprep.subr.bf16.mxu0 %v3041
    %4512 = vmatpush1.bf16.msra.mxu0 %v3040
    %4513 = vmatprep.subr.bf16.mxu0 %v3045
    %4514 = vmatpush1.bf16.msra.mxu0 %v3044
    %4515 = vmatprep.subr.bf16.mxu0 %v3049
    %4516 = vmatpush1.bf16.msra.mxu0 %v3048
    %4517 = vmatprep.subr.bf16.mxu0 0
    %4518 = vmatpush1.bf16.msra.mxu0 0
    %4519 = vmatprep.subr.bf16.mxu0 0
    %4520 = vmatpush1.bf16.msra.mxu0 0
    %4521 = vmatprep.subr.bf16.mxu0 0
    %4522 = vmatpush1.bf16.msra.mxu0 0
    %4523 = vmatprep.subr.bf16.mxu0 0
    %4524 = vmatpush1.bf16.msra.mxu0 0
    %4525 = vmatprep.subr.bf16.mxu0 0
    %4526 = vmatpush1.bf16.msra.mxu0 0
    %4527 = vmatprep.subr.bf16.mxu0 0
    %4528 = vmatpush1.bf16.msra.mxu0 0
    %4529 = vmatprep.subr.bf16.mxu0 0
    %4530 = vmatpush1.bf16.msra.mxu0 0
    %4531 = vmatprep.subr.bf16.mxu0 0
    %4532 = vmatpush1.bf16.msra.mxu0 0
    %4533 = vmatprep.mubr.bf16.mxu0 0
    %4534 = vmatmul.mubr.bf16.gmra.mrb[0].mxu0 %v3958
    %v4535 = vpop.f32.mrb[0].mxu0
    %v4536 = vadd.f32 0.0, %v4535
    %v4537 = vpop.f32.mrb[0].mxu0
    %v4538 = vadd.f32 0.0, %v4537
    %v4539 = vpop.f32.mrb[0].mxu0
    %v4540 = vpop.f32.mrb[0].mxu0
    %4541 = vdwg.mxu0
    %4542 = vmatprep.subr.bf16.mxu0 %v2987
    %4543 = vmatpush1.bf16.msra.mxu0 %v2986
    %4544 = vmatprep.subr.bf16.mxu0 %v2991
    %4545 = vmatpush1.bf16.msra.mxu0 %v2990
    %4546 = vmatprep.subr.bf16.mxu0 %v2995
    %4547 = vmatpush1.bf16.msra.mxu0 %v2994
    %4548 = vmatprep.subr.bf16.mxu0 %v2999
    %4549 = vmatpush1.bf16.msra.mxu0 %v2998
    %4550 = vmatprep.subr.bf16.mxu0 %v3003
    %4551 = vmatpush1.bf16.msra.mxu0 %v3002
    %4552 = vmatprep.subr.bf16.mxu0 %v3007
    %4553 = vmatpush1.bf16.msra.mxu0 %v3006
    %4554 = vmatprep.subr.bf16.mxu0 %v3011
    %4555 = vmatpush1.bf16.msra.mxu0 %v3010
    %4556 = vmatprep.subr.bf16.mxu0 %v3015
    %4557 = vmatpush1.bf16.msra.mxu0 %v3014
    %4558 = vmatprep.subr.bf16.mxu0 0
    %4559 = vmatpush1.bf16.msra.mxu0 0
    %4560 = vmatprep.subr.bf16.mxu0 0
    %4561 = vmatpush1.bf16.msra.mxu0 0
    %4562 = vmatprep.subr.bf16.mxu0 0
    %4563 = vmatpush1.bf16.msra.mxu0 0
    %4564 = vmatprep.subr.bf16.mxu0 0
    %4565 = vmatpush1.bf16.msra.mxu0 0
    %4566 = vmatprep.subr.bf16.mxu0 0
    %4567 = vmatpush1.bf16.msra.mxu0 0
    %4568 = vmatprep.subr.bf16.mxu0 0
    %4569 = vmatpush1.bf16.msra.mxu0 0
    %4570 = vmatprep.subr.bf16.mxu0 0
    %4571 = vmatpush1.bf16.msra.mxu0 0
    %4572 = vmatprep.subr.bf16.mxu0 0
    %4573 = vmatpush1.bf16.msra.mxu0 0
    %4574 = vmatprep.mubr.bf16.mxu0 0
    %4575 = vmatmul.mubr.bf16.gmra.mrb[0].mxu0 %v3765
    %v4576 = vpop.f32.mrb[0].mxu0
    %v4577 = vadd.f32 %v4495, %v4576
    %v4578 = vpop.f32.mrb[0].mxu0
    %v4579 = vadd.f32 %v4497, %v4578
    %v4580 = vpop.f32.mrb[0].mxu0
    %v4581 = vpop.f32.mrb[0].mxu0
    %4582 = vdwg.mxu0
    %4583 = vmatprep.subr.bf16.mxu0 %v2989
    %4584 = vmatpush1.bf16.msra.mxu0 %v2988
    %4585 = vmatprep.subr.bf16.mxu0 %v2993
    %4586 = vmatpush1.bf16.msra.mxu0 %v2992
    %4587 = vmatprep.subr.bf16.mxu0 %v2997
    %4588 = vmatpush1.bf16.msra.mxu0 %v2996
    %4589 = vmatprep.subr.bf16.mxu0 %v3001
    %4590 = vmatpush1.bf16.msra.mxu0 %v3000
    %4591 = vmatprep.subr.bf16.mxu0 %v3005
    %4592 = vmatpush1.bf16.msra.mxu0 %v3004
    %4593 = vmatprep.subr.bf16.mxu0 %v3009
    %4594 = vmatpush1.bf16.msra.mxu0 %v3008
    %4595 = vmatprep.subr.bf16.mxu0 %v3013
    %4596 = vmatpush1.bf16.msra.mxu0 %v3012
    %4597 = vmatprep.subr.bf16.mxu0 %v3017
    %4598 = vmatpush1.bf16.msra.mxu0 %v3016
    %4599 = vmatprep.subr.bf16.mxu0 0
    %4600 = vmatpush1.bf16.msra.mxu0 0
    %4601 = vmatprep.subr.bf16.mxu0 0
    %4602 = vmatpush1.bf16.msra.mxu0 0
    %4603 = vmatprep.subr.bf16.mxu0 0
    %4604 = vmatpush1.bf16.msra.mxu0 0
    %4605 = vmatprep.subr.bf16.mxu0 0
    %4606 = vmatpush1.bf16.msra.mxu0 0
    %4607 = vmatprep.subr.bf16.mxu0 0
    %4608 = vmatpush1.bf16.msra.mxu0 0
    %4609 = vmatprep.subr.bf16.mxu0 0
    %4610 = vmatpush1.bf16.msra.mxu0 0
    %4611 = vmatprep.subr.bf16.mxu0 0
    %4612 = vmatpush1.bf16.msra.mxu0 0
    %4613 = vmatprep.subr.bf16.mxu0 0
    %4614 = vmatpush1.bf16.msra.mxu0 0
    %4615 = vmatprep.mubr.bf16.mxu0 0
    %4616 = vmatmul.mubr.bf16.gmra.mrb[0].mxu0 %v3765
    %v4617 = vpop.f32.mrb[0].mxu0
    %v4618 = vadd.f32 %v4536, %v4617
    %v4619 = vpop.f32.mrb[0].mxu0
    %v4620 = vadd.f32 %v4538, %v4619
    %v4621 = vpop.f32.mrb[0].mxu0
    %v4622 = vpop.f32.mrb[0].mxu0
    %4623 = vdwg.mxu0
    %v4624 = vadd.f32 %v4577, %v3219
    %v4625 = vadd.f32 %v4579, %v3223
    %v4626 = vadd.f32 %v4618, %v3227
    %v4627 = vadd.f32 %v4620, %v3231
    %v4628 = vxor.u32 %v4624, 2147483648
    %v4629 = vxor.u32 %v4625, 2147483648
    %v4630 = vxor.u32 %v4626, 2147483648
    %v4631 = vmul.f32 %v4628, 1.442695
    %v4632 = vpow.pop %v4631
    %v4633 = vmul.f32 %v4629, 1.442695
    %v4634 = vpow.pop %v4633
    %v4635 = vmul.f32 %v4630, 1.442695
    %v4636 = vpow.pop %v4635
    %v4637 = vadd.f32 %v4632, 1.0
    %v4638 = vadd.f32 %v4634, 1.0
    %v4639 = vadd.f32 %v4636, 1.0
    %v4640 = vrcp.pop %v4637
    %v4641 = vmul.f32 1.0, %v4640
    %v4642 = vrcp.pop %v4638
    %v4643 = vmul.f32 1.0, %v4642
    %v4644 = vrcp.pop %v4639
    %v4645 = vmul.f32 1.0, %v4644
    %v4646 = vtanh.pop %v4627
    %v4647 = vmul.f32 %v4643, %v3955
    %v4648 = vmul.f32 %v4641, %v4646
    %v4649 = vadd.f32 %v4647, %v4648
    %v4650 = vtanh.pop %v4649
    %v4651 = vmul.f32 %v4645, %v4650
    %v4652 = vpack.c.bf16 %v4651, %v4651
    %4653 = vmatprep.subr.bf16.mxu0 %v2313
    %4654 = vmatpush1.bf16.msra.mxu0 %v2312
    %4655 = vmatprep.subr.bf16.mxu0 %v2317
    %4656 = vmatpush1.bf16.msra.mxu0 %v2316
    %4657 = vmatprep.subr.bf16.mxu0 %v2321
    %4658 = vmatpush1.bf16.msra.mxu0 %v2320
    %4659 = vmatprep.subr.bf16.mxu0 %v2325
    %4660 = vmatpush1.bf16.msra.mxu0 %v2324
    %4661 = vmatprep.subr.bf16.mxu0 %v2329
    %4662 = vmatpush1.bf16.msra.mxu0 %v2328
    %4663 = vmatprep.subr.bf16.mxu0 %v2333
    %4664 = vmatpush1.bf16.msra.mxu0 %v2332
    %4665 = vmatprep.subr.bf16.mxu0 %v2337
    %4666 = vmatpush1.bf16.msra.mxu0 %v2336
    %4667 = vmatprep.subr.bf16.mxu0 %v2341
    %4668 = vmatpush1.bf16.msra.mxu0 %v2340
    %4669 = vmatprep.subr.bf16.mxu0 0
    %4670 = vmatpush1.bf16.msra.mxu0 0
    %4671 = vmatprep.subr.bf16.mxu0 0
    %4672 = vmatpush1.bf16.msra.mxu0 0
    %4673 = vmatprep.subr.bf16.mxu0 0
    %4674 = vmatpush1.bf16.msra.mxu0 0
    %4675 = vmatprep.subr.bf16.mxu0 0
    %4676 = vmatpush1.bf16.msra.mxu0 0
    %4677 = vmatprep.subr.bf16.mxu0 0
    %4678 = vmatpush1.bf16.msra.mxu0 0
    %4679 = vmatprep.subr.bf16.mxu0 0
    %4680 = vmatpush1.bf16.msra.mxu0 0
    %4681 = vmatprep.subr.bf16.mxu0 0
    %4682 = vmatpush1.bf16.msra.mxu0 0
    %4683 = vmatprep.subr.bf16.mxu0 0
    %4684 = vmatpush1.bf16.msra.mxu0 0
    %4685 = vmatprep.mubr.bf16.mxu0 0
    %4686 = vmatmul.mubr.bf16.gmra.mrb[0].mxu0 %v4151
    %v4687 = vpop.f32.mrb[0].mxu0
    %v4688 = vadd.f32 0.0, %v4687
    %v4689 = vpop.f32.mrb[0].mxu0
    %v4690 = vadd.f32 0.0, %v4689
    %v4691 = vpop.f32.mrb[0].mxu0
    %v4692 = vpop.f32.mrb[0].mxu0
    %4693 = vdwg.mxu0
    %4694 = vmatprep.subr.bf16.mxu0 %v2315
    %4695 = vmatpush1.bf16.msra.mxu0 %v2314
    %4696 = vmatprep.subr.bf16.mxu0 %v2319
    %4697 = vmatpush1.bf16.msra.mxu0 %v2318
    %4698 = vmatprep.subr.bf16.mxu0 %v2323
    %4699 = vmatpush1.bf16.msra.mxu0 %v2322
    %4700 = vmatprep.subr.bf16.mxu0 %v2327
    %4701 = vmatpush1.bf16.msra.mxu0 %v2326
    %4702 = vmatprep.subr.bf16.mxu0 %v2331
    %4703 = vmatpush1.bf16.msra.mxu0 %v2330
    %4704 = vmatprep.subr.bf16.mxu0 %v2335
    %4705 = vmatpush1.bf16.msra.mxu0 %v2334
    %4706 = vmatprep.subr.bf16.mxu0 %v2339
    %4707 = vmatpush1.bf16.msra.mxu0 %v2338
    %4708 = vmatprep.subr.bf16.mxu0 %v2343
    %4709 = vmatpush1.bf16.msra.mxu0 %v2342
    %4710 = vmatprep.subr.bf16.mxu0 0
    %4711 = vmatpush1.bf16.msra.mxu0 0
    %4712 = vmatprep.subr.bf16.mxu0 0
    %4713 = vmatpush1.bf16.msra.mxu0 0
    %4714 = vmatprep.subr.bf16.mxu0 0
    %4715 = vmatpush1.bf16.msra.mxu0 0
    %4716 = vmatprep.subr.bf16.mxu0 0
    %4717 = vmatpush1.bf16.msra.mxu0 0
    %4718 = vmatprep.subr.bf16.mxu0 0
    %4719 = vmatpush1.bf16.msra.mxu0 0
    %4720 = vmatprep.subr.bf16.mxu0 0
    %4721 = vmatpush1.bf16.msra.mxu0 0
    %4722 = vmatprep.subr.bf16.mxu0 0
    %4723 = vmatpush1.bf16.msra.mxu0 0
    %4724 = vmatprep.subr.bf16.mxu0 0
    %4725 = vmatpush1.bf16.msra.mxu0 0
    %4726 = vmatprep.mubr.bf16.mxu0 0
    %4727 = vmatmul.mubr.bf16.gmra.mrb[0].mxu0 %v4151
    %v4728 = vpop.f32.mrb[0].mxu0
    %v4729 = vadd.f32 0.0, %v4728
    %v4730 = vpop.f32.mrb[0].mxu0
    %v4731 = vadd.f32 0.0, %v4730
    %v4732 = vpop.f32.mrb[0].mxu0
    %v4733 = vpop.f32.mrb[0].mxu0
    %4734 = vdwg.mxu0
    %4735 = vmatprep.subr.bf16.mxu0 %v2281
    %4736 = vmatpush1.bf16.msra.mxu0 %v2280
    %4737 = vmatprep.subr.bf16.mxu0 %v2285
    %4738 = vmatpush1.bf16.msra.mxu0 %v2284
    %4739 = vmatprep.subr.bf16.mxu0 %v2289
    %4740 = vmatpush1.bf16.msra.mxu0 %v2288
    %4741 = vmatprep.subr.bf16.mxu0 %v2293
    %4742 = vmatpush1.bf16.msra.mxu0 %v2292
    %4743 = vmatprep.subr.bf16.mxu0 %v2297
    %4744 = vmatpush1.bf16.msra.mxu0 %v2296
    %4745 = vmatprep.subr.bf16.mxu0 %v2301
    %4746 = vmatpush1.bf16.msra.mxu0 %v2300
    %4747 = vmatprep.subr.bf16.mxu0 %v2305
    %4748 = vmatpush1.bf16.msra.mxu0 %v2304
    %4749 = vmatprep.subr.bf16.mxu0 %v2309
    %4750 = vmatpush1.bf16.msra.mxu0 %v2308
    %4751 = vmatprep.subr.bf16.mxu0 0
    %4752 = vmatpush1.bf16.msra.mxu0 0
    %4753 = vmatprep.subr.bf16.mxu0 0
    %4754 = vmatpush1.bf16.msra.mxu0 0
    %4755 = vmatprep.subr.bf16.mxu0 0
    %4756 = vmatpush1.bf16.msra.mxu0 0
    %4757 = vmatprep.subr.bf16.mxu0 0
    %4758 = vmatpush1.bf16.msra.mxu0 0
    %4759 = vmatprep.subr.bf16.mxu0 0
    %4760 = vmatpush1.bf16.msra.mxu0 0
    %4761 = vmatprep.subr.bf16.mxu0 0
    %4762 = vmatpush1.bf16.msra.mxu0 0
    %4763 = vmatprep.subr.bf16.mxu0 0
    %4764 = vmatpush1.bf16.msra.mxu0 0
    %4765 = vmatprep.subr.bf16.mxu0 0
    %4766 = vmatpush1.bf16.msra.mxu0 0
    %4767 = vmatprep.mubr.bf16.mxu0 0
    %4768 = vmatmul.mubr.bf16.gmra.mrb[0].mxu0 %v3958
    %v4769 = vpop.f32.mrb[0].mxu0
    %v4770 = vadd.f32 %v4688, %v4769
    %v4771 = vpop.f32.mrb[0].mxu0
    %v4772 = vadd.f32 %v4690, %v4771
    %v4773 = vpop.f32.mrb[0].mxu0
    %v4774 = vpop.f32.mrb[0].mxu0
    %4775 = vdwg.mxu0
    %4776 = vmatprep.subr.bf16.mxu0 %v2283
    %4777 = vmatpush1.bf16.msra.mxu0 %v2282
    %4778 = vmatprep.subr.bf16.mxu0 %v2287
    %4779 = vmatpush1.bf16.msra.mxu0 %v2286
    %4780 = vmatprep.subr.bf16.mxu0 %v2291
    %4781 = vmatpush1.bf16.msra.mxu0 %v2290
    %4782 = vmatprep.subr.bf16.mxu0 %v2295
    %4783 = vmatpush1.bf16.msra.mxu0 %v2294
    %4784 = vmatprep.subr.bf16.mxu0 %v2299
    %4785 = vmatpush1.bf16.msra.mxu0 %v2298
    %4786 = vmatprep.subr.bf16.mxu0 %v2303
    %4787 = vmatpush1.bf16.msra.mxu0 %v2302
    %4788 = vmatprep.subr.bf16.mxu0 %v2307
    %4789 = vmatpush1.bf16.msra.mxu0 %v2306
    %4790 = vmatprep.subr.bf16.mxu0 %v2311
    %4791 = vmatpush1.bf16.msra.mxu0 %v2310
    %4792 = vmatprep.subr.bf16.mxu0 0
    %4793 = vmatpush1.bf16.msra.mxu0 0
    %4794 = vmatprep.subr.bf16.mxu0 0
    %4795 = vmatpush1.bf16.msra.mxu0 0
    %4796 = vmatprep.subr.bf16.mxu0 0
    %4797 = vmatpush1.bf16.msra.mxu0 0
    %4798 = vmatprep.subr.bf16.mxu0 0
    %4799 = vmatpush1.bf16.msra.mxu0 0
    %4800 = vmatprep.subr.bf16.mxu0 0
    %4801 = vmatpush1.bf16.msra.mxu0 0
    %4802 = vmatprep.subr.bf16.mxu0 0
    %4803 = vmatpush1.bf16.msra.mxu0 0
    %4804 = vmatprep.subr.bf16.mxu0 0
    %4805 = vmatpush1.bf16.msra.mxu0 0
    %4806 = vmatprep.subr.bf16.mxu0 0
    %4807 = vmatpush1.bf16.msra.mxu0 0
    %4808 = vmatprep.mubr.bf16.mxu0 0
    %4809 = vmatmul.mubr.bf16.gmra.mrb[0].mxu0 %v3958
    %v4810 = vpop.f32.mrb[0].mxu0
    %v4811 = vadd.f32 %v4729, %v4810
    %v4812 = vpop.f32.mrb[0].mxu0
    %v4813 = vadd.f32 %v4731, %v4812
    %v4814 = vpop.f32.mrb[0].mxu0
    %v4815 = vpop.f32.mrb[0].mxu0
    %4816 = vdwg.mxu0
    %v4817 = vadd.f32 %v4770, %v2514
    %v4818 = vadd.f32 %v4772, %v2518
    %v4819 = vadd.f32 %v4811, %v2522
    %v4820 = vadd.f32 %v4813, %v2526
    %v4821 = vxor.u32 %v4817, 2147483648
    %v4822 = vxor.u32 %v4818, 2147483648
    %v4823 = vxor.u32 %v4819, 2147483648
    %v4824 = vmul.f32 %v4821, 1.442695
    %v4825 = vpow.pop %v4824
    %v4826 = vmul.f32 %v4822, 1.442695
    %v4827 = vpow.pop %v4826
    %v4828 = vmul.f32 %v4823, 1.442695
    %v4829 = vpow.pop %v4828
    %v4830 = vadd.f32 %v4825, 1.0
    %v4831 = vadd.f32 %v4827, 1.0
    %v4832 = vadd.f32 %v4829, 1.0
    %v4833 = vrcp.pop %v4830
    %v4834 = vmul.f32 1.0, %v4833
    %v4835 = vrcp.pop %v4831
    %v4836 = vmul.f32 1.0, %v4835
    %v4837 = vrcp.pop %v4832
    %v4838 = vmul.f32 1.0, %v4837
    %v4839 = vtanh.pop %v4820
    %v4840 = vmul.f32 %v4836, %v4148
    %v4841 = vmul.f32 %v4834, %v4839
    %v4842 = vadd.f32 %v4840, %v4841
    %v4843 = vtanh.pop %v4842
    %v4844 = vmul.f32 %v4838, %v4843
    %v4845 = vpack.c.bf16 %v4844, %v4844
    %4846 = vmatprep.subr.bf16.mxu0 %v2740
    %4847 = vmatpush1.bf16.msra.mxu0 %v2739
    %4848 = vmatprep.subr.bf16.mxu0 %v2744
    %4849 = vmatpush1.bf16.msra.mxu0 %v2743
    %4850 = vmatprep.subr.bf16.mxu0 %v2748
    %4851 = vmatpush1.bf16.msra.mxu0 %v2747
    %4852 = vmatprep.subr.bf16.mxu0 %v2752
    %4853 = vmatpush1.bf16.msra.mxu0 %v2751
    %4854 = vmatprep.subr.bf16.mxu0 %v2756
    %4855 = vmatpush1.bf16.msra.mxu0 %v2755
    %4856 = vmatprep.subr.bf16.mxu0 %v2760
    %4857 = vmatpush1.bf16.msra.mxu0 %v2759
    %4858 = vmatprep.subr.bf16.mxu0 %v2764
    %4859 = vmatpush1.bf16.msra.mxu0 %v2763
    %4860 = vmatprep.subr.bf16.mxu0 %v2768
    %4861 = vmatpush1.bf16.msra.mxu0 %v2767
    %4862 = vmatprep.subr.bf16.mxu0 0
    %4863 = vmatpush1.bf16.msra.mxu0 0
    %4864 = vmatprep.subr.bf16.mxu0 0
    %4865 = vmatpush1.bf16.msra.mxu0 0
    %4866 = vmatprep.subr.bf16.mxu0 0
    %4867 = vmatpush1.bf16.msra.mxu0 0
    %4868 = vmatprep.subr.bf16.mxu0 0
    %4869 = vmatpush1.bf16.msra.mxu0 0
    %4870 = vmatprep.subr.bf16.mxu0 0
    %4871 = vmatpush1.bf16.msra.mxu0 0
    %4872 = vmatprep.subr.bf16.mxu0 0
    %4873 = vmatpush1.bf16.msra.mxu0 0
    %4874 = vmatprep.subr.bf16.mxu0 0
    %4875 = vmatpush1.bf16.msra.mxu0 0
    %4876 = vmatprep.subr.bf16.mxu0 0
    %4877 = vmatpush1.bf16.msra.mxu0 0
    %4878 = vmatprep.mubr.bf16.mxu0 0
    %4879 = vmatmul.mubr.bf16.gmra.mrb[0].mxu0 %v4459
    %v4880 = vpop.f32.mrb[0].mxu0
    %v4881 = vadd.f32 0.0, %v4880
    %v4882 = vpop.f32.mrb[0].mxu0
    %v4883 = vadd.f32 0.0, %v4882
    %v4884 = vpop.f32.mrb[0].mxu0
    %v4885 = vpop.f32.mrb[0].mxu0
    %4886 = vdwg.mxu0
    %4887 = vmatprep.subr.bf16.mxu0 %v2742
    %4888 = vmatpush1.bf16.msra.mxu0 %v2741
    %4889 = vmatprep.subr.bf16.mxu0 %v2746
    %4890 = vmatpush1.bf16.msra.mxu0 %v2745
    %4891 = vmatprep.subr.bf16.mxu0 %v2750
    %4892 = vmatpush1.bf16.msra.mxu0 %v2749
    %4893 = vmatprep.subr.bf16.mxu0 %v2754
    %4894 = vmatpush1.bf16.msra.mxu0 %v2753
    %4895 = vmatprep.subr.bf16.mxu0 %v2758
    %4896 = vmatpush1.bf16.msra.mxu0 %v2757
    %4897 = vmatprep.subr.bf16.mxu0 %v2762
    %4898 = vmatpush1.bf16.msra.mxu0 %v2761
    %4899 = vmatprep.subr.bf16.mxu0 %v2766
    %4900 = vmatpush1.bf16.msra.mxu0 %v2765
    %4901 = vmatprep.subr.bf16.mxu0 %v2770
    %4902 = vmatpush1.bf16.msra.mxu0 %v2769
    %4903 = vmatprep.subr.bf16.mxu0 0
    %4904 = vmatpush1.bf16.msra.mxu0 0
    %4905 = vmatprep.subr.bf16.mxu0 0
    %4906 = vmatpush1.bf16.msra.mxu0 0
    %4907 = vmatprep.subr.bf16.mxu0 0
    %4908 = vmatpush1.bf16.msra.mxu0 0
    %4909 = vmatprep.subr.bf16.mxu0 0
    %4910 = vmatpush1.bf16.msra.mxu0 0
    %4911 = vmatprep.subr.bf16.mxu0 0
    %4912 = vmatpush1.bf16.msra.mxu0 0
    %4913 = vmatprep.subr.bf16.mxu0 0
    %4914 = vmatpush1.bf16.msra.mxu0 0
    %4915 = vmatprep.subr.bf16.mxu0 0
    %4916 = vmatpush1.bf16.msra.mxu0 0
    %4917 = vmatprep.subr.bf16.mxu0 0
    %4918 = vmatpush1.bf16.msra.mxu0 0
    %4919 = vmatprep.mubr.bf16.mxu0 0
    %4920 = vmatmul.mubr.bf16.gmra.mrb[0].mxu0 %v4459
    %v4921 = vpop.f32.mrb[0].mxu0
    %v4922 = vadd.f32 0.0, %v4921
    %v4923 = vpop.f32.mrb[0].mxu0
    %v4924 = vadd.f32 0.0, %v4923
    %v4925 = vpop.f32.mrb[0].mxu0
    %v4926 = vpop.f32.mrb[0].mxu0
    %4927 = vdwg.mxu0
    %4928 = vmatprep.subr.bf16.mxu0 %v2708
    %4929 = vmatpush1.bf16.msra.mxu0 %v2707
    %4930 = vmatprep.subr.bf16.mxu0 %v2712
    %4931 = vmatpush1.bf16.msra.mxu0 %v2711
    %4932 = vmatprep.subr.bf16.mxu0 %v2716
    %4933 = vmatpush1.bf16.msra.mxu0 %v2715
    %4934 = vmatprep.subr.bf16.mxu0 %v2720
    %4935 = vmatpush1.bf16.msra.mxu0 %v2719
    %4936 = vmatprep.subr.bf16.mxu0 %v2724
    %4937 = vmatpush1.bf16.msra.mxu0 %v2723
    %4938 = vmatprep.subr.bf16.mxu0 %v2728
    %4939 = vmatpush1.bf16.msra.mxu0 %v2727
    %4940 = vmatprep.subr.bf16.mxu0 %v2732
    %4941 = vmatpush1.bf16.msra.mxu0 %v2731
    %4942 = vmatprep.subr.bf16.mxu0 %v2736
    %4943 = vmatpush1.bf16.msra.mxu0 %v2735
    %4944 = vmatprep.subr.bf16.mxu0 0
    %4945 = vmatpush1.bf16.msra.mxu0 0
    %4946 = vmatprep.subr.bf16.mxu0 0
    %4947 = vmatpush1.bf16.msra.mxu0 0
    %4948 = vmatprep.subr.bf16.mxu0 0
    %4949 = vmatpush1.bf16.msra.mxu0 0
    %4950 = vmatprep.subr.bf16.mxu0 0
    %4951 = vmatpush1.bf16.msra.mxu0 0
    %4952 = vmatprep.subr.bf16.mxu0 0
    %4953 = vmatpush1.bf16.msra.mxu0 0
    %4954 = vmatprep.subr.bf16.mxu0 0
    %4955 = vmatpush1.bf16.msra.mxu0 0
    %4956 = vmatprep.subr.bf16.mxu0 0
    %4957 = vmatpush1.bf16.msra.mxu0 0
    %4958 = vmatprep.subr.bf16.mxu0 0
    %4959 = vmatpush1.bf16.msra.mxu0 0
    %4960 = vmatprep.mubr.bf16.mxu0 0
    %4961 = vmatmul.mubr.bf16.gmra.mrb[0].mxu0 %v4266
    %v4962 = vpop.f32.mrb[0].mxu0
    %v4963 = vadd.f32 %v4881, %v4962
    %v4964 = vpop.f32.mrb[0].mxu0
    %v4965 = vadd.f32 %v4883, %v4964
    %v4966 = vpop.f32.mrb[0].mxu0
    %v4967 = vpop.f32.mrb[0].mxu0
    %4968 = vdwg.mxu0
    %4969 = vmatprep.subr.bf16.mxu0 %v2710
    %4970 = vmatpush1.bf16.msra.mxu0 %v2709
    %4971 = vmatprep.subr.bf16.mxu0 %v2714
    %4972 = vmatpush1.bf16.msra.mxu0 %v2713
    %4973 = vmatprep.subr.bf16.mxu0 %v2718
    %4974 = vmatpush1.bf16.msra.mxu0 %v2717
    %4975 = vmatprep.subr.bf16.mxu0 %v2722
    %4976 = vmatpush1.bf16.msra.mxu0 %v2721
    %4977 = vmatprep.subr.bf16.mxu0 %v2726
    %4978 = vmatpush1.bf16.msra.mxu0 %v2725
    %4979 = vmatprep.subr.bf16.mxu0 %v2730
    %4980 = vmatpush1.bf16.msra.mxu0 %v2729
    %4981 = vmatprep.subr.bf16.mxu0 %v2734
    %4982 = vmatpush1.bf16.msra.mxu0 %v2733
    %4983 = vmatprep.subr.bf16.mxu0 %v2738
    %4984 = vmatpush1.bf16.msra.mxu0 %v2737
    %4985 = vmatprep.subr.bf16.mxu0 0
    %4986 = vmatpush1.bf16.msra.mxu0 0
    %4987 = vmatprep.subr.bf16.mxu0 0
    %4988 = vmatpush1.bf16.msra.mxu0 0
    %4989 = vmatprep.subr.bf16.mxu0 0
    %4990 = vmatpush1.bf16.msra.mxu0 0
    %4991 = vmatprep.subr.bf16.mxu0 0
    %4992 = vmatpush1.bf16.msra.mxu0 0
    %4993 = vmatprep.subr.bf16.mxu0 0
    %4994 = vmatpush1.bf16.msra.mxu0 0
    %4995 = vmatprep.subr.bf16.mxu0 0
    %4996 = vmatpush1.bf16.msra.mxu0 0
    %4997 = vmatprep.subr.bf16.mxu0 0
    %4998 = vmatpush1.bf16.msra.mxu0 0
    %4999 = vmatprep.subr.bf16.mxu0 0
    %5000 = vmatpush1.bf16.msra.mxu0 0
    %5001 = vmatprep.mubr.bf16.mxu0 0
    %5002 = vmatmul.mubr.bf16.gmra.mrb[0].mxu0 %v4266
    %v5003 = vpop.f32.mrb[0].mxu0
    %v5004 = vadd.f32 %v4922, %v5003
    %v5005 = vpop.f32.mrb[0].mxu0
    %v5006 = vadd.f32 %v4924, %v5005
    %v5007 = vpop.f32.mrb[0].mxu0
    %v5008 = vpop.f32.mrb[0].mxu0
    %5009 = vdwg.mxu0
    %v5010 = vadd.f32 %v4963, %v2940
    %v5011 = vadd.f32 %v4965, %v2944
    %v5012 = vadd.f32 %v5004, %v2948
    %v5013 = vadd.f32 %v5006, %v2952
    %v5014 = vxor.u32 %v5010, 2147483648
    %v5015 = vxor.u32 %v5011, 2147483648
    %v5016 = vxor.u32 %v5012, 2147483648
    %v5017 = vmul.f32 %v5014, 1.442695
    %v5018 = vpow.pop %v5017
    %v5019 = vmul.f32 %v5015, 1.442695
    %v5020 = vpow.pop %v5019
    %v5021 = vmul.f32 %v5016, 1.442695
    %v5022 = vpow.pop %v5021
    %v5023 = vadd.f32 %v5018, 1.0
    %v5024 = vadd.f32 %v5020, 1.0
    %v5025 = vadd.f32 %v5022, 1.0
    %v5026 = vrcp.pop %v5023
    %v5027 = vmul.f32 1.0, %v5026
    %v5028 = vrcp.pop %v5024
    %v5029 = vmul.f32 1.0, %v5028
    %v5030 = vrcp.pop %v5025
    %v5031 = vmul.f32 1.0, %v5030
    %v5032 = vtanh.pop %v5013
    %v5033 = vmul.f32 %v5029, %v4456
    %v5034 = vmul.f32 %v5027, %v5032
    %v5035 = vadd.f32 %v5033, %v5034
    %v5036 = vtanh.pop %v5035
    %v5037 = vmul.f32 %v5031, %v5036
    %v5038 = vpack.c.bf16 %v5037, %v5037
    %5039 = vmatprep.subr.bf16.mxu0 %v3019
    %5040 = vmatpush1.bf16.msra.mxu0 %v3018
    %5041 = vmatprep.subr.bf16.mxu0 %v3023
    %5042 = vmatpush1.bf16.msra.mxu0 %v3022
    %5043 = vmatprep.subr.bf16.mxu0 %v3027
    %5044 = vmatpush1.bf16.msra.mxu0 %v3026
    %5045 = vmatprep.subr.bf16.mxu0 %v3031
    %5046 = vmatpush1.bf16.msra.mxu0 %v3030
    %5047 = vmatprep.subr.bf16.mxu0 %v3035
    %5048 = vmatpush1.bf16.msra.mxu0 %v3034
    %5049 = vmatprep.subr.bf16.mxu0 %v3039
    %5050 = vmatpush1.bf16.msra.mxu0 %v3038
    %5051 = vmatprep.subr.bf16.mxu0 %v3043
    %5052 = vmatpush1.bf16.msra.mxu0 %v3042
    %5053 = vmatprep.subr.bf16.mxu0 %v3047
    %5054 = vmatpush1.bf16.msra.mxu0 %v3046
    %5055 = vmatprep.subr.bf16.mxu0 0
    %5056 = vmatpush1.bf16.msra.mxu0 0
    %5057 = vmatprep.subr.bf16.mxu0 0
    %5058 = vmatpush1.bf16.msra.mxu0 0
    %5059 = vmatprep.subr.bf16.mxu0 0
    %5060 = vmatpush1.bf16.msra.mxu0 0
    %5061 = vmatprep.subr.bf16.mxu0 0
    %5062 = vmatpush1.bf16.msra.mxu0 0
    %5063 = vmatprep.subr.bf16.mxu0 0
    %5064 = vmatpush1.bf16.msra.mxu0 0
    %5065 = vmatprep.subr.bf16.mxu0 0
    %5066 = vmatpush1.bf16.msra.mxu0 0
    %5067 = vmatprep.subr.bf16.mxu0 0
    %5068 = vmatpush1.bf16.msra.mxu0 0
    %5069 = vmatprep.subr.bf16.mxu0 0
    %5070 = vmatpush1.bf16.msra.mxu0 0
    %5071 = vmatprep.mubr.bf16.mxu0 0
    %5072 = vmatmul.mubr.bf16.gmra.mrb[0].mxu0 %v4652
    %v5073 = vpop.f32.mrb[0].mxu0
    %v5074 = vadd.f32 0.0, %v5073
    %v5075 = vpop.f32.mrb[0].mxu0
    %v5076 = vadd.f32 0.0, %v5075
    %v5077 = vpop.f32.mrb[0].mxu0
    %v5078 = vpop.f32.mrb[0].mxu0
    %5079 = vdwg.mxu0
    %5080 = vmatprep.subr.bf16.mxu0 %v3021
    %5081 = vmatpush1.bf16.msra.mxu0 %v3020
    %5082 = vmatprep.subr.bf16.mxu0 %v3025
    %5083 = vmatpush1.bf16.msra.mxu0 %v3024
    %5084 = vmatprep.subr.bf16.mxu0 %v3029
    %5085 = vmatpush1.bf16.msra.mxu0 %v3028
    %5086 = vmatprep.subr.bf16.mxu0 %v3033
    %5087 = vmatpush1.bf16.msra.mxu0 %v3032
    %5088 = vmatprep.subr.bf16.mxu0 %v3037
    %5089 = vmatpush1.bf16.msra.mxu0 %v3036
    %5090 = vmatprep.subr.bf16.mxu0 %v3041
    %5091 = vmatpush1.bf16.msra.mxu0 %v3040
    %5092 = vmatprep.subr.bf16.mxu0 %v3045
    %5093 = vmatpush1.bf16.msra.mxu0 %v3044
    %5094 = vmatprep.subr.bf16.mxu0 %v3049
    %5095 = vmatpush1.bf16.msra.mxu0 %v3048
    %5096 = vmatprep.subr.bf16.mxu0 0
    %5097 = vmatpush1.bf16.msra.mxu0 0
    %5098 = vmatprep.subr.bf16.mxu0 0
    %5099 = vmatpush1.bf16.msra.mxu0 0
    %5100 = vmatprep.subr.bf16.mxu0 0
    %5101 = vmatpush1.bf16.msra.mxu0 0
    %5102 = vmatprep.subr.bf16.mxu0 0
    %5103 = vmatpush1.bf16.msra.mxu0 0
    %5104 = vmatprep.subr.bf16.mxu0 0
    %5105 = vmatpush1.bf16.msra.mxu0 0
    %5106 = vmatprep.subr.bf16.mxu0 0
    %5107 = vmatpush1.bf16.msra.mxu0 0
    %5108 = vmatprep.subr.bf16.mxu0 0
    %5109 = vmatpush1.bf16.msra.mxu0 0
    %5110 = vmatprep.subr.bf16.mxu0 0
    %5111 = vmatpush1.bf16.msra.mxu0 0
    %5112 = vmatprep.mubr.bf16.mxu0 0
    %5113 = vmatmul.mubr.bf16.gmra.mrb[0].mxu0 %v4652
    %v5114 = vpop.f32.mrb[0].mxu0
    %v5115 = vadd.f32 0.0, %v5114
    %v5116 = vpop.f32.mrb[0].mxu0
    %v5117 = vadd.f32 0.0, %v5116
    %v5118 = vpop.f32.mrb[0].mxu0
    %v5119 = vpop.f32.mrb[0].mxu0
    %5120 = vdwg.mxu0
    %5121 = vmatprep.subr.bf16.mxu0 %v2987
    %5122 = vmatpush1.bf16.msra.mxu0 %v2986
    %5123 = vmatprep.subr.bf16.mxu0 %v2991
    %5124 = vmatpush1.bf16.msra.mxu0 %v2990
    %5125 = vmatprep.subr.bf16.mxu0 %v2995
    %5126 = vmatpush1.bf16.msra.mxu0 %v2994
    %5127 = vmatprep.subr.bf16.mxu0 %v2999
    %5128 = vmatpush1.bf16.msra.mxu0 %v2998
    %5129 = vmatprep.subr.bf16.mxu0 %v3003
    %5130 = vmatpush1.bf16.msra.mxu0 %v3002
    %5131 = vmatprep.subr.bf16.mxu0 %v3007
    %5132 = vmatpush1.bf16.msra.mxu0 %v3006
    %5133 = vmatprep.subr.bf16.mxu0 %v3011
    %5134 = vmatpush1.bf16.msra.mxu0 %v3010
    %5135 = vmatprep.subr.bf16.mxu0 %v3015
    %5136 = vmatpush1.bf16.msra.mxu0 %v3014
    %5137 = vmatprep.subr.bf16.mxu0 0
    %5138 = vmatpush1.bf16.msra.mxu0 0
    %5139 = vmatprep.subr.bf16.mxu0 0
    %5140 = vmatpush1.bf16.msra.mxu0 0
    %5141 = vmatprep.subr.bf16.mxu0 0
    %5142 = vmatpush1.bf16.msra.mxu0 0
    %5143 = vmatprep.subr.bf16.mxu0 0
    %5144 = vmatpush1.bf16.msra.mxu0 0
    %5145 = vmatprep.subr.bf16.mxu0 0
    %5146 = vmatpush1.bf16.msra.mxu0 0
    %5147 = vmatprep.subr.bf16.mxu0 0
    %5148 = vmatpush1.bf16.msra.mxu0 0
    %5149 = vmatprep.subr.bf16.mxu0 0
    %5150 = vmatpush1.bf16.msra.mxu0 0
    %5151 = vmatprep.subr.bf16.mxu0 0
    %5152 = vmatpush1.bf16.msra.mxu0 0
    %5153 = vmatprep.mubr.bf16.mxu0 0
    %5154 = vmatmul.mubr.bf16.gmra.mrb[0].mxu0 %v4459
    %v5155 = vpop.f32.mrb[0].mxu0
    %v5156 = vadd.f32 %v5074, %v5155
    %v5157 = vpop.f32.mrb[0].mxu0
    %v5158 = vadd.f32 %v5076, %v5157
    %v5159 = vpop.f32.mrb[0].mxu0
    %v5160 = vpop.f32.mrb[0].mxu0
    %5161 = vdwg.mxu0
    %5162 = vmatprep.subr.bf16.mxu0 %v2989
    %5163 = vmatpush1.bf16.msra.mxu0 %v2988
    %5164 = vmatprep.subr.bf16.mxu0 %v2993
    %5165 = vmatpush1.bf16.msra.mxu0 %v2992
    %5166 = vmatprep.subr.bf16.mxu0 %v2997
    %5167 = vmatpush1.bf16.msra.mxu0 %v2996
    %5168 = vmatprep.subr.bf16.mxu0 %v3001
    %5169 = vmatpush1.bf16.msra.mxu0 %v3000
    %5170 = vmatprep.subr.bf16.mxu0 %v3005
    %5171 = vmatpush1.bf16.msra.mxu0 %v3004
    %5172 = vmatprep.subr.bf16.mxu0 %v3009
    %5173 = vmatpush1.bf16.msra.mxu0 %v3008
    %5174 = vmatprep.subr.bf16.mxu0 %v3013
    %5175 = vmatpush1.bf16.msra.mxu0 %v3012
    %5176 = vmatprep.subr.bf16.mxu0 %v3017
    %5177 = vmatpush1.bf16.msra.mxu0 %v3016
    %5178 = vmatprep.subr.bf16.mxu0 0
    %5179 = vmatpush1.bf16.msra.mxu0 0
    %5180 = vmatprep.subr.bf16.mxu0 0
    %5181 = vmatpush1.bf16.msra.mxu0 0
    %5182 = vmatprep.subr.bf16.mxu0 0
    %5183 = vmatpush1.bf16.msra.mxu0 0
    %5184 = vmatprep.subr.bf16.mxu0 0
    %5185 = vmatpush1.bf16.msra.mxu0 0
    %5186 = vmatprep.subr.bf16.mxu0 0
    %5187 = vmatpush1.bf16.msra.mxu0 0
    %5188 = vmatprep.subr.bf16.mxu0 0
    %5189 = vmatpush1.bf16.msra.mxu0 0
    %5190 = vmatprep.subr.bf16.mxu0 0
    %5191 = vmatpush1.bf16.msra.mxu0 0
    %5192 = vmatprep.subr.bf16.mxu0 0
    %5193 = vmatpush1.bf16.msra.mxu0 0
    %5194 = vmatprep.mubr.bf16.mxu0 0
    %5195 = vmatmul.mubr.bf16.gmra.mrb[0].mxu0 %v4459
    %v5196 = vpop.f32.mrb[0].mxu0
    %v5197 = vadd.f32 %v5115, %v5196
    %v5198 = vpop.f32.mrb[0].mxu0
    %v5199 = vadd.f32 %v5117, %v5198
    %v5200 = vpop.f32.mrb[0].mxu0
    %v5201 = vpop.f32.mrb[0].mxu0
    %5202 = vdwg.mxu0
    %v5203 = vadd.f32 %v5156, %v3219
    %v5204 = vadd.f32 %v5158, %v3223
    %v5205 = vadd.f32 %v5197, %v3227
    %v5206 = vadd.f32 %v5199, %v3231
    %v5207 = vxor.u32 %v5203, 2147483648
    %v5208 = vxor.u32 %v5204, 2147483648
    %v5209 = vxor.u32 %v5205, 2147483648
    %v5210 = vmul.f32 %v5207, 1.442695
    %v5211 = vpow.pop %v5210
    %v5212 = vmul.f32 %v5208, 1.442695
    %v5213 = vpow.pop %v5212
    %v5214 = vmul.f32 %v5209, 1.442695
    %v5215 = vpow.pop %v5214
    %v5216 = vadd.f32 %v5211, 1.0
    %v5217 = vadd.f32 %v5213, 1.0
    %v5218 = vadd.f32 %v5215, 1.0
    %v5219 = vrcp.pop %v5216
    %v5220 = vmul.f32 1.0, %v5219
    %v5221 = vrcp.pop %v5217
    %v5222 = vmul.f32 1.0, %v5221
    %v5223 = vrcp.pop %v5218
    %v5224 = vmul.f32 1.0, %v5223
    %v5225 = vtanh.pop %v5206
    %v5226 = vmul.f32 %v5222, %v4649
    %v5227 = vmul.f32 %v5220, %v5225
    %v5228 = vadd.f32 %v5226, %v5227
    %v5229 = vtanh.pop %v5228
    %v5230 = vmul.f32 %v5224, %v5229
    %v5231 = vpack.c.bf16 %v5230, %v5230
    %5232 = vmatprep.subr.bf16.mxu0 %v2313
    %5233 = vmatpush1.bf16.msra.mxu0 %v2312
    %5234 = vmatprep.subr.bf16.mxu0 %v2317
    %5235 = vmatpush1.bf16.msra.mxu0 %v2316
    %5236 = vmatprep.subr.bf16.mxu0 %v2321
    %5237 = vmatpush1.bf16.msra.mxu0 %v2320
    %5238 = vmatprep.subr.bf16.mxu0 %v2325
    %5239 = vmatpush1.bf16.msra.mxu0 %v2324
    %5240 = vmatprep.subr.bf16.mxu0 %v2329
    %5241 = vmatpush1.bf16.msra.mxu0 %v2328
    %5242 = vmatprep.subr.bf16.mxu0 %v2333
    %5243 = vmatpush1.bf16.msra.mxu0 %v2332
    %5244 = vmatprep.subr.bf16.mxu0 %v2337
    %5245 = vmatpush1.bf16.msra.mxu0 %v2336
    %5246 = vmatprep.subr.bf16.mxu0 %v2341
    %5247 = vmatpush1.bf16.msra.mxu0 %v2340
    %5248 = vmatprep.subr.bf16.mxu0 0
    %5249 = vmatpush1.bf16.msra.mxu0 0
    %5250 = vmatprep.subr.bf16.mxu0 0
    %5251 = vmatpush1.bf16.msra.mxu0 0
    %5252 = vmatprep.subr.bf16.mxu0 0
    %5253 = vmatpush1.bf16.msra.mxu0 0
    %5254 = vmatprep.subr.bf16.mxu0 0
    %5255 = vmatpush1.bf16.msra.mxu0 0
    %5256 = vmatprep.subr.bf16.mxu0 0
    %5257 = vmatpush1.bf16.msra.mxu0 0
    %5258 = vmatprep.subr.bf16.mxu0 0
    %5259 = vmatpush1.bf16.msra.mxu0 0
    %5260 = vmatprep.subr.bf16.mxu0 0
    %5261 = vmatpush1.bf16.msra.mxu0 0
    %5262 = vmatprep.subr.bf16.mxu0 0
    %5263 = vmatpush1.bf16.msra.mxu0 0
    %5264 = vmatprep.mubr.bf16.mxu0 0
    %5265 = vmatmul.mubr.bf16.gmra.mrb[0].mxu0 %v4845
    %v5266 = vpop.f32.mrb[0].mxu0
    %v5267 = vadd.f32 0.0, %v5266
    %v5268 = vpop.f32.mrb[0].mxu0
    %v5269 = vadd.f32 0.0, %v5268
    %v5270 = vpop.f32.mrb[0].mxu0
    %v5271 = vpop.f32.mrb[0].mxu0
    %5272 = vdwg.mxu0
    %5273 = vmatprep.subr.bf16.mxu0 %v2315
    %5274 = vmatpush1.bf16.msra.mxu0 %v2314
    %5275 = vmatprep.subr.bf16.mxu0 %v2319
    %5276 = vmatpush1.bf16.msra.mxu0 %v2318
    %5277 = vmatprep.subr.bf16.mxu0 %v2323
    %5278 = vmatpush1.bf16.msra.mxu0 %v2322
    %5279 = vmatprep.subr.bf16.mxu0 %v2327
    %5280 = vmatpush1.bf16.msra.mxu0 %v2326
    %5281 = vmatprep.subr.bf16.mxu0 %v2331
    %5282 = vmatpush1.bf16.msra.mxu0 %v2330
    %5283 = vmatprep.subr.bf16.mxu0 %v2335
    %5284 = vmatpush1.bf16.msra.mxu0 %v2334
    %5285 = vmatprep.subr.bf16.mxu0 %v2339
    %5286 = vmatpush1.bf16.msra.mxu0 %v2338
    %5287 = vmatprep.subr.bf16.mxu0 %v2343
    %5288 = vmatpush1.bf16.msra.mxu0 %v2342
    %5289 = vmatprep.subr.bf16.mxu0 0
    %5290 = vmatpush1.bf16.msra.mxu0 0
    %5291 = vmatprep.subr.bf16.mxu0 0
    %5292 = vmatpush1.bf16.msra.mxu0 0
    %5293 = vmatprep.subr.bf16.mxu0 0
    %5294 = vmatpush1.bf16.msra.mxu0 0
    %5295 = vmatprep.subr.bf16.mxu0 0
    %5296 = vmatpush1.bf16.msra.mxu0 0
    %5297 = vmatprep.subr.bf16.mxu0 0
    %5298 = vmatpush1.bf16.msra.mxu0 0
    %5299 = vmatprep.subr.bf16.mxu0 0
    %5300 = vmatpush1.bf16.msra.mxu0 0
    %5301 = vmatprep.subr.bf16.mxu0 0
    %5302 = vmatpush1.bf16.msra.mxu0 0
    %5303 = vmatprep.subr.bf16.mxu0 0
    %5304 = vmatpush1.bf16.msra.mxu0 0
    %5305 = vmatprep.mubr.bf16.mxu0 0
    %5306 = vmatmul.mubr.bf16.gmra.mrb[0].mxu0 %v4845
    %v5307 = vpop.f32.mrb[0].mxu0
    %v5308 = vadd.f32 0.0, %v5307
    %v5309 = vpop.f32.mrb[0].mxu0
    %v5310 = vadd.f32 0.0, %v5309
    %v5311 = vpop.f32.mrb[0].mxu0
    %v5312 = vpop.f32.mrb[0].mxu0
    %5313 = vdwg.mxu0
    %5314 = vmatprep.subr.bf16.mxu0 %v2281
    %5315 = vmatpush1.bf16.msra.mxu0 %v2280
    %5316 = vmatprep.subr.bf16.mxu0 %v2285
    %5317 = vmatpush1.bf16.msra.mxu0 %v2284
    %5318 = vmatprep.subr.bf16.mxu0 %v2289
    %5319 = vmatpush1.bf16.msra.mxu0 %v2288
    %5320 = vmatprep.subr.bf16.mxu0 %v2293
    %5321 = vmatpush1.bf16.msra.mxu0 %v2292
    %5322 = vmatprep.subr.bf16.mxu0 %v2297
    %5323 = vmatpush1.bf16.msra.mxu0 %v2296
    %5324 = vmatprep.subr.bf16.mxu0 %v2301
    %5325 = vmatpush1.bf16.msra.mxu0 %v2300
    %5326 = vmatprep.subr.bf16.mxu0 %v2305
    %5327 = vmatpush1.bf16.msra.mxu0 %v2304
    %5328 = vmatprep.subr.bf16.mxu0 %v2309
    %5329 = vmatpush1.bf16.msra.mxu0 %v2308
    %5330 = vmatprep.subr.bf16.mxu0 0
    %5331 = vmatpush1.bf16.msra.mxu0 0
    %5332 = vmatprep.subr.bf16.mxu0 0
    %5333 = vmatpush1.bf16.msra.mxu0 0
    %5334 = vmatprep.subr.bf16.mxu0 0
    %5335 = vmatpush1.bf16.msra.mxu0 0
    %5336 = vmatprep.subr.bf16.mxu0 0
    %5337 = vmatpush1.bf16.msra.mxu0 0
    %5338 = vmatprep.subr.bf16.mxu0 0
    %5339 = vmatpush1.bf16.msra.mxu0 0
    %5340 = vmatprep.subr.bf16.mxu0 0
    %5341 = vmatpush1.bf16.msra.mxu0 0
    %5342 = vmatprep.subr.bf16.mxu0 0
    %5343 = vmatpush1.bf16.msra.mxu0 0
    %5344 = vmatprep.subr.bf16.mxu0 0
    %5345 = vmatpush1.bf16.msra.mxu0 0
    %5346 = vmatprep.mubr.bf16.mxu0 0
    %5347 = vmatmul.mubr.bf16.gmra.mrb[0].mxu0 %v4652
    %v5348 = vpop.f32.mrb[0].mxu0
    %v5349 = vadd.f32 %v5267, %v5348
    %v5350 = vpop.f32.mrb[0].mxu0
    %v5351 = vadd.f32 %v5269, %v5350
    %v5352 = vpop.f32.mrb[0].mxu0
    %v5353 = vpop.f32.mrb[0].mxu0
    %5354 = vdwg.mxu0
    %5355 = vmatprep.subr.bf16.mxu0 %v2283
    %5356 = vmatpush1.bf16.msra.mxu0 %v2282
    %5357 = vmatprep.subr.bf16.mxu0 %v2287
    %5358 = vmatpush1.bf16.msra.mxu0 %v2286
    %5359 = vmatprep.subr.bf16.mxu0 %v2291
    %5360 = vmatpush1.bf16.msra.mxu0 %v2290
    %5361 = vmatprep.subr.bf16.mxu0 %v2295
    %5362 = vmatpush1.bf16.msra.mxu0 %v2294
    %5363 = vmatprep.subr.bf16.mxu0 %v2299
    %5364 = vmatpush1.bf16.msra.mxu0 %v2298
    %5365 = vmatprep.subr.bf16.mxu0 %v2303
    %5366 = vmatpush1.bf16.msra.mxu0 %v2302
    %5367 = vmatprep.subr.bf16.mxu0 %v2307
    %5368 = vmatpush1.bf16.msra.mxu0 %v2306
    %5369 = vmatprep.subr.bf16.mxu0 %v2311
    %5370 = vmatpush1.bf16.msra.mxu0 %v2310
    %5371 = vmatprep.subr.bf16.mxu0 0
    %5372 = vmatpush1.bf16.msra.mxu0 0
    %5373 = vmatprep.subr.bf16.mxu0 0
    %5374 = vmatpush1.bf16.msra.mxu0 0
    %5375 = vmatprep.subr.bf16.mxu0 0
    %5376 = vmatpush1.bf16.msra.mxu0 0
    %5377 = vmatprep.subr.bf16.mxu0 0
    %5378 = vmatpush1.bf16.msra.mxu0 0
    %5379 = vmatprep.subr.bf16.mxu0 0
    %5380 = vmatpush1.bf16.msra.mxu0 0
    %5381 = vmatprep.subr.bf16.mxu0 0
    %5382 = vmatpush1.bf16.msra.mxu0 0
    %5383 = vmatprep.subr.bf16.mxu0 0
    %5384 = vmatpush1.bf16.msra.mxu0 0
    %5385 = vmatprep.subr.bf16.mxu0 0
    %5386 = vmatpush1.bf16.msra.mxu0 0
    %5387 = vmatprep.mubr.bf16.mxu0 0
    %5388 = vmatmul.mubr.bf16.gmra.mrb[0].mxu0 %v4652
    %v5389 = vpop.f32.mrb[0].mxu0
    %v5390 = vadd.f32 %v5308, %v5389
    %v5391 = vpop.f32.mrb[0].mxu0
    %v5392 = vadd.f32 %v5310, %v5391
    %v5393 = vpop.f32.mrb[0].mxu0
    %v5394 = vpop.f32.mrb[0].mxu0
    %5395 = vdwg.mxu0
    %v5396 = vadd.f32 %v5349, %v2514
    %v5397 = vadd.f32 %v5351, %v2518
    %v5398 = vadd.f32 %v5390, %v2522
    %v5399 = vadd.f32 %v5392, %v2526
    %v5400 = vxor.u32 %v5396, 2147483648
    %v5401 = vxor.u32 %v5397, 2147483648
    %v5402 = vxor.u32 %v5398, 2147483648
    %v5403 = vmul.f32 %v5400, 1.442695
    %v5404 = vpow.pop %v5403
    %v5405 = vmul.f32 %v5401, 1.442695
    %v5406 = vpow.pop %v5405
    %v5407 = vmul.f32 %v5402, 1.442695
    %v5408 = vpow.pop %v5407
    %v5409 = vadd.f32 %v5404, 1.0
    %v5410 = vadd.f32 %v5406, 1.0
    %v5411 = vadd.f32 %v5408, 1.0
    %v5412 = vrcp.pop %v5409
    %v5413 = vmul.f32 1.0, %v5412
    %v5414 = vrcp.pop %v5410
    %v5415 = vmul.f32 1.0, %v5414
    %v5416 = vrcp.pop %v5411
    %v5417 = vmul.f32 1.0, %v5416
    %v5418 = vtanh.pop %v5399
    %v5419 = vmul.f32 %v5415, %v4842
    %v5420 = vmul.f32 %v5413, %v5418
    %v5421 = vadd.f32 %v5419, %v5420
    %v5422 = vtanh.pop %v5421
    %v5423 = vmul.f32 %v5417, %v5422
    %v5424 = vpack.c.bf16 %v5423, %v5423
    %5425 = vmatprep.subr.bf16.mxu0 %v3019
    %5426 = vmatpush1.bf16.msra.mxu0 %v3018
    %5427 = vmatprep.subr.bf16.mxu0 %v3023
    %5428 = vmatpush1.bf16.msra.mxu0 %v3022
    %5429 = vmatprep.subr.bf16.mxu0 %v3027
    %5430 = vmatpush1.bf16.msra.mxu0 %v3026
    %5431 = vmatprep.subr.bf16.mxu0 %v3031
    %5432 = vmatpush1.bf16.msra.mxu0 %v3030
    %5433 = vmatprep.subr.bf16.mxu0 %v3035
    %5434 = vmatpush1.bf16.msra.mxu0 %v3034
    %5435 = vmatprep.subr.bf16.mxu0 %v3039
    %5436 = vmatpush1.bf16.msra.mxu0 %v3038
    %5437 = vmatprep.subr.bf16.mxu0 %v3043
    %5438 = vmatpush1.bf16.msra.mxu0 %v3042
    %5439 = vmatprep.subr.bf16.mxu0 %v3047
    %5440 = vmatpush1.bf16.msra.mxu0 %v3046
    %5441 = vmatprep.subr.bf16.mxu0 0
    %5442 = vmatpush1.bf16.msra.mxu0 0
    %5443 = vmatprep.subr.bf16.mxu0 0
    %5444 = vmatpush1.bf16.msra.mxu0 0
    %5445 = vmatprep.subr.bf16.mxu0 0
    %5446 = vmatpush1.bf16.msra.mxu0 0
    %5447 = vmatprep.subr.bf16.mxu0 0
    %5448 = vmatpush1.bf16.msra.mxu0 0
    %5449 = vmatprep.subr.bf16.mxu0 0
    %5450 = vmatpush1.bf16.msra.mxu0 0
    %5451 = vmatprep.subr.bf16.mxu0 0
    %5452 = vmatpush1.bf16.msra.mxu0 0
    %5453 = vmatprep.subr.bf16.mxu0 0
    %5454 = vmatpush1.bf16.msra.mxu0 0
    %5455 = vmatprep.subr.bf16.mxu0 0
    %5456 = vmatpush1.bf16.msra.mxu0 0
    %5457 = vmatprep.mubr.bf16.mxu0 0
    %5458 = vmatmul.mubr.bf16.gmra.mrb[0].mxu0 %v5231
    %v5459 = vpop.f32.mrb[0].mxu0
    %v5460 = vadd.f32 0.0, %v5459
    %v5461 = vpop.f32.mrb[0].mxu0
    %v5462 = vadd.f32 0.0, %v5461
    %v5463 = vpop.f32.mrb[0].mxu0
    %v5464 = vpop.f32.mrb[0].mxu0
    %5465 = vdwg.mxu0
    %5466 = vmatprep.subr.bf16.mxu0 %v3021
    %5467 = vmatpush1.bf16.msra.mxu0 %v3020
    %5468 = vmatprep.subr.bf16.mxu0 %v3025
    %5469 = vmatpush1.bf16.msra.mxu0 %v3024
    %5470 = vmatprep.subr.bf16.mxu0 %v3029
    %5471 = vmatpush1.bf16.msra.mxu0 %v3028
    %5472 = vmatprep.subr.bf16.mxu0 %v3033
    %5473 = vmatpush1.bf16.msra.mxu0 %v3032
    %5474 = vmatprep.subr.bf16.mxu0 %v3037
    %5475 = vmatpush1.bf16.msra.mxu0 %v3036
    %5476 = vmatprep.subr.bf16.mxu0 %v3041
    %5477 = vmatpush1.bf16.msra.mxu0 %v3040
    %5478 = vmatprep.subr.bf16.mxu0 %v3045
    %5479 = vmatpush1.bf16.msra.mxu0 %v3044
    %5480 = vmatprep.subr.bf16.mxu0 %v3049
    %5481 = vmatpush1.bf16.msra.mxu0 %v3048
    %5482 = vmatprep.subr.bf16.mxu0 0
    %5483 = vmatpush1.bf16.msra.mxu0 0
    %5484 = vmatprep.subr.bf16.mxu0 0
    %5485 = vmatpush1.bf16.msra.mxu0 0
    %5486 = vmatprep.subr.bf16.mxu0 0
    %5487 = vmatpush1.bf16.msra.mxu0 0
    %5488 = vmatprep.subr.bf16.mxu0 0
    %5489 = vmatpush1.bf16.msra.mxu0 0
    %5490 = vmatprep.subr.bf16.mxu0 0
    %5491 = vmatpush1.bf16.msra.mxu0 0
    %5492 = vmatprep.subr.bf16.mxu0 0
    %5493 = vmatpush1.bf16.msra.mxu0 0
    %5494 = vmatprep.subr.bf16.mxu0 0
    %5495 = vmatpush1.bf16.msra.mxu0 0
    %5496 = vmatprep.subr.bf16.mxu0 0
    %5497 = vmatpush1.bf16.msra.mxu0 0
    %5498 = vmatprep.mubr.bf16.mxu0 0
    %5499 = vmatmul.mubr.bf16.gmra.mrb[0].mxu0 %v5231
    %v5500 = vpop.f32.mrb[0].mxu0
    %v5501 = vadd.f32 0.0, %v5500
    %v5502 = vpop.f32.mrb[0].mxu0
    %v5503 = vadd.f32 0.0, %v5502
    %v5504 = vpop.f32.mrb[0].mxu0
    %v5505 = vpop.f32.mrb[0].mxu0
    %5506 = vdwg.mxu0
    %5507 = vmatprep.subr.bf16.mxu0 %v2987
    %5508 = vmatpush1.bf16.msra.mxu0 %v2986
    %5509 = vmatprep.subr.bf16.mxu0 %v2991
    %5510 = vmatpush1.bf16.msra.mxu0 %v2990
    %5511 = vmatprep.subr.bf16.mxu0 %v2995
    %5512 = vmatpush1.bf16.msra.mxu0 %v2994
    %5513 = vmatprep.subr.bf16.mxu0 %v2999
    %5514 = vmatpush1.bf16.msra.mxu0 %v2998
    %5515 = vmatprep.subr.bf16.mxu0 %v3003
    %5516 = vmatpush1.bf16.msra.mxu0 %v3002
    %5517 = vmatprep.subr.bf16.mxu0 %v3007
    %5518 = vmatpush1.bf16.msra.mxu0 %v3006
    %5519 = vmatprep.subr.bf16.mxu0 %v3011
    %5520 = vmatpush1.bf16.msra.mxu0 %v3010
    %5521 = vmatprep.subr.bf16.mxu0 %v3015
    %5522 = vmatpush1.bf16.msra.mxu0 %v3014
    %5523 = vmatprep.subr.bf16.mxu0 0
    %5524 = vmatpush1.bf16.msra.mxu0 0
    %5525 = vmatprep.subr.bf16.mxu0 0
    %5526 = vmatpush1.bf16.msra.mxu0 0
    %5527 = vmatprep.subr.bf16.mxu0 0
    %5528 = vmatpush1.bf16.msra.mxu0 0
    %5529 = vmatprep.subr.bf16.mxu0 0
    %5530 = vmatpush1.bf16.msra.mxu0 0
    %5531 = vmatprep.subr.bf16.mxu0 0
    %5532 = vmatpush1.bf16.msra.mxu0 0
    %5533 = vmatprep.subr.bf16.mxu0 0
    %5534 = vmatpush1.bf16.msra.mxu0 0
    %5535 = vmatprep.subr.bf16.mxu0 0
    %5536 = vmatpush1.bf16.msra.mxu0 0
    %5537 = vmatprep.subr.bf16.mxu0 0
    %5538 = vmatpush1.bf16.msra.mxu0 0
    %5539 = vmatprep.mubr.bf16.mxu0 0
    %5540 = vmatmul.mubr.bf16.gmra.mrb[0].mxu0 %v5038
    %v5541 = vpop.f32.mrb[0].mxu0
    %v5542 = vadd.f32 %v5460, %v5541
    %v5543 = vpop.f32.mrb[0].mxu0
    %v5544 = vadd.f32 %v5462, %v5543
    %v5545 = vpop.f32.mrb[0].mxu0
    %v5546 = vpop.f32.mrb[0].mxu0
    %5547 = vdwg.mxu0
    %5548 = vmatprep.subr.bf16.mxu0 %v2989
    %5549 = vmatpush1.bf16.msra.mxu0 %v2988
    %5550 = vmatprep.subr.bf16.mxu0 %v2993
    %5551 = vmatpush1.bf16.msra.mxu0 %v2992
    %5552 = vmatprep.subr.bf16.mxu0 %v2997
    %5553 = vmatpush1.bf16.msra.mxu0 %v2996
    %5554 = vmatprep.subr.bf16.mxu0 %v3001
    %5555 = vmatpush1.bf16.msra.mxu0 %v3000
    %5556 = vmatprep.subr.bf16.mxu0 %v3005
    %5557 = vmatpush1.bf16.msra.mxu0 %v3004
    %5558 = vmatprep.subr.bf16.mxu0 %v3009
    %5559 = vmatpush1.bf16.msra.mxu0 %v3008
    %5560 = vmatprep.subr.bf16.mxu0 %v3013
    %5561 = vmatpush1.bf16.msra.mxu0 %v3012
    %5562 = vmatprep.subr.bf16.mxu0 %v3017
    %5563 = vmatpush1.bf16.msra.mxu0 %v3016
    %5564 = vmatprep.subr.bf16.mxu0 0
    %5565 = vmatpush1.bf16.msra.mxu0 0
    %5566 = vmatprep.subr.bf16.mxu0 0
    %5567 = vmatpush1.bf16.msra.mxu0 0
    %5568 = vmatprep.subr.bf16.mxu0 0
    %5569 = vmatpush1.bf16.msra.mxu0 0
    %5570 = vmatprep.subr.bf16.mxu0 0
    %5571 = vmatpush1.bf16.msra.mxu0 0
    %5572 = vmatprep.subr.bf16.mxu0 0
    %5573 = vmatpush1.bf16.msra.mxu0 0
    %5574 = vmatprep.subr.bf16.mxu0 0
    %5575 = vmatpush1.bf16.msra.mxu0 0
    %5576 = vmatprep.subr.bf16.mxu0 0
    %5577 = vmatpush1.bf16.msra.mxu0 0
    %5578 = vmatprep.subr.bf16.mxu0 0
    %5579 = vmatpush1.bf16.msra.mxu0 0
    %5580 = vmatprep.mubr.bf16.mxu0 0
    %5581 = vmatmul.mubr.bf16.gmra.mrb[0].mxu0 %v5038
    %v5582 = vpop.f32.mrb[0].mxu0
    %v5583 = vadd.f32 %v5501, %v5582
    %v5584 = vpop.f32.mrb[0].mxu0
    %v5585 = vadd.f32 %v5503, %v5584
    %v5586 = vpop.f32.mrb[0].mxu0
    %v5587 = vpop.f32.mrb[0].mxu0
    %5588 = vdwg.mxu0
    %v5589 = vadd.f32 %v5542, %v3219
    %v5590 = vadd.f32 %v5544, %v3223
    %v5591 = vadd.f32 %v5583, %v3227
    %v5592 = vadd.f32 %v5585, %v3231
    %v5593 = vxor.u32 %v5589, 2147483648
    %v5594 = vxor.u32 %v5590, 2147483648
    %v5595 = vxor.u32 %v5591, 2147483648
    %v5596 = vmul.f32 %v5593, 1.442695
    %v5597 = vpow.pop %v5596
    %v5598 = vmul.f32 %v5594, 1.442695
    %v5599 = vpow.pop %v5598
    %v5600 = vmul.f32 %v5595, 1.442695
    %v5601 = vpow.pop %v5600
    %v5602 = vadd.f32 %v5597, 1.0
    %v5603 = vadd.f32 %v5599, 1.0
    %v5604 = vadd.f32 %v5601, 1.0
    %v5605 = vrcp.pop %v5602
    %v5606 = vmul.f32 1.0, %v5605
    %v5607 = vrcp.pop %v5603
    %v5608 = vmul.f32 1.0, %v5607
    %v5609 = vrcp.pop %v5604
    %v5610 = vmul.f32 1.0, %v5609
    %v5611 = vtanh.pop %v5592
    %v5612 = vmul.f32 %v5608, %v5228
    %v5613 = vmul.f32 %v5606, %v5611
    %v5614 = vadd.f32 %v5612, %v5613
    %v5615 = vtanh.pop %v5614
    %v5616 = vmul.f32 %v5610, %v5615
    %v5617 = vpack.c.bf16 %v5616, %v5616
    %5618 = vmatprep.subr.bf16.mxu0 %v2313
    %5619 = vmatpush1.bf16.msra.mxu0 %v2312
    %5620 = vmatprep.subr.bf16.mxu0 %v2317
    %5621 = vmatpush1.bf16.msra.mxu0 %v2316
    %5622 = vmatprep.subr.bf16.mxu0 %v2321
    %5623 = vmatpush1.bf16.msra.mxu0 %v2320
    %5624 = vmatprep.subr.bf16.mxu0 %v2325
    %5625 = vmatpush1.bf16.msra.mxu0 %v2324
    %5626 = vmatprep.subr.bf16.mxu0 %v2329
    %5627 = vmatpush1.bf16.msra.mxu0 %v2328
    %5628 = vmatprep.subr.bf16.mxu0 %v2333
    %5629 = vmatpush1.bf16.msra.mxu0 %v2332
    %5630 = vmatprep.subr.bf16.mxu0 %v2337
    %5631 = vmatpush1.bf16.msra.mxu0 %v2336
    %5632 = vmatprep.subr.bf16.mxu0 %v2341
    %5633 = vmatpush1.bf16.msra.mxu0 %v2340
    %5634 = vmatprep.subr.bf16.mxu0 0
    %5635 = vmatpush1.bf16.msra.mxu0 0
    %5636 = vmatprep.subr.bf16.mxu0 0
    %5637 = vmatpush1.bf16.msra.mxu0 0
    %5638 = vmatprep.subr.bf16.mxu0 0
    %5639 = vmatpush1.bf16.msra.mxu0 0
    %5640 = vmatprep.subr.bf16.mxu0 0
    %5641 = vmatpush1.bf16.msra.mxu0 0
    %5642 = vmatprep.subr.bf16.mxu0 0
    %5643 = vmatpush1.bf16.msra.mxu0 0
    %5644 = vmatprep.subr.bf16.mxu0 0
    %5645 = vmatpush1.bf16.msra.mxu0 0
    %5646 = vmatprep.subr.bf16.mxu0 0
    %5647 = vmatpush1.bf16.msra.mxu0 0
    %5648 = vmatprep.subr.bf16.mxu0 0
    %5649 = vmatpush1.bf16.msra.mxu0 0
    %5650 = vmatprep.mubr.bf16.mxu0 0
    %5651 = vmatmul.mubr.bf16.gmra.mrb[0].mxu0 %v5424
    %v5652 = vpop.f32.mrb[0].mxu0
    %v5653 = vadd.f32 0.0, %v5652
    %v5654 = vpop.f32.mrb[0].mxu0
    %v5655 = vadd.f32 0.0, %v5654
    %v5656 = vpop.f32.mrb[0].mxu0
    %v5657 = vpop.f32.mrb[0].mxu0
    %5658 = vdwg.mxu0
    %5659 = vmatprep.subr.bf16.mxu0 %v2315
    %5660 = vmatpush1.bf16.msra.mxu0 %v2314
    %5661 = vmatprep.subr.bf16.mxu0 %v2319
    %5662 = vmatpush1.bf16.msra.mxu0 %v2318
    %5663 = vmatprep.subr.bf16.mxu0 %v2323
    %5664 = vmatpush1.bf16.msra.mxu0 %v2322
    %5665 = vmatprep.subr.bf16.mxu0 %v2327
    %5666 = vmatpush1.bf16.msra.mxu0 %v2326
    %5667 = vmatprep.subr.bf16.mxu0 %v2331
    %5668 = vmatpush1.bf16.msra.mxu0 %v2330
    %5669 = vmatprep.subr.bf16.mxu0 %v2335
    %5670 = vmatpush1.bf16.msra.mxu0 %v2334
    %5671 = vmatprep.subr.bf16.mxu0 %v2339
    %5672 = vmatpush1.bf16.msra.mxu0 %v2338
    %5673 = vmatprep.subr.bf16.mxu0 %v2343
    %5674 = vmatpush1.bf16.msra.mxu0 %v2342
    %5675 = vmatprep.subr.bf16.mxu0 0
    %5676 = vmatpush1.bf16.msra.mxu0 0
    %5677 = vmatprep.subr.bf16.mxu0 0
    %5678 = vmatpush1.bf16.msra.mxu0 0
    %5679 = vmatprep.subr.bf16.mxu0 0
    %5680 = vmatpush1.bf16.msra.mxu0 0
    %5681 = vmatprep.subr.bf16.mxu0 0
    %5682 = vmatpush1.bf16.msra.mxu0 0
    %5683 = vmatprep.subr.bf16.mxu0 0
    %5684 = vmatpush1.bf16.msra.mxu0 0
    %5685 = vmatprep.subr.bf16.mxu0 0
    %5686 = vmatpush1.bf16.msra.mxu0 0
    %5687 = vmatprep.subr.bf16.mxu0 0
    %5688 = vmatpush1.bf16.msra.mxu0 0
    %5689 = vmatprep.subr.bf16.mxu0 0
    %5690 = vmatpush1.bf16.msra.mxu0 0
    %5691 = vmatprep.mubr.bf16.mxu0 0
    %5692 = vmatmul.mubr.bf16.gmra.mrb[0].mxu0 %v5424
    %v5693 = vpop.f32.mrb[0].mxu0
    %v5694 = vadd.f32 0.0, %v5693
    %v5695 = vpop.f32.mrb[0].mxu0
    %v5696 = vadd.f32 0.0, %v5695
    %v5697 = vpop.f32.mrb[0].mxu0
    %v5698 = vpop.f32.mrb[0].mxu0
    %5699 = vdwg.mxu0
    %5700 = vmatprep.subr.bf16.mxu0 %v2281
    %5701 = vmatpush1.bf16.msra.mxu0 %v2280
    %5702 = vmatprep.subr.bf16.mxu0 %v2285
    %5703 = vmatpush1.bf16.msra.mxu0 %v2284
    %5704 = vmatprep.subr.bf16.mxu0 %v2289
    %5705 = vmatpush1.bf16.msra.mxu0 %v2288
    %5706 = vmatprep.subr.bf16.mxu0 %v2293
    %5707 = vmatpush1.bf16.msra.mxu0 %v2292
    %5708 = vmatprep.subr.bf16.mxu0 %v2297
    %5709 = vmatpush1.bf16.msra.mxu0 %v2296
    %5710 = vmatprep.subr.bf16.mxu0 %v2301
    %5711 = vmatpush1.bf16.msra.mxu0 %v2300
    %5712 = vmatprep.subr.bf16.mxu0 %v2305
    %5713 = vmatpush1.bf16.msra.mxu0 %v2304
    %5714 = vmatprep.subr.bf16.mxu0 %v2309
    %5715 = vmatpush1.bf16.msra.mxu0 %v2308
    %5716 = vmatprep.subr.bf16.mxu0 0
    %5717 = vmatpush1.bf16.msra.mxu0 0
    %5718 = vmatprep.subr.bf16.mxu0 0
    %5719 = vmatpush1.bf16.msra.mxu0 0
    %5720 = vmatprep.subr.bf16.mxu0 0
    %5721 = vmatpush1.bf16.msra.mxu0 0
    %5722 = vmatprep.subr.bf16.mxu0 0
    %5723 = vmatpush1.bf16.msra.mxu0 0
    %5724 = vmatprep.subr.bf16.mxu0 0
    %5725 = vmatpush1.bf16.msra.mxu0 0
    %5726 = vmatprep.subr.bf16.mxu0 0
    %5727 = vmatpush1.bf16.msra.mxu0 0
    %5728 = vmatprep.subr.bf16.mxu0 0
    %5729 = vmatpush1.bf16.msra.mxu0 0
    %5730 = vmatprep.subr.bf16.mxu0 0
    %5731 = vmatpush1.bf16.msra.mxu0 0
    %5732 = vmatprep.mubr.bf16.mxu0 0
    %5733 = vmatmul.mubr.bf16.gmra.mrb[0].mxu0 %v5231
    %v5734 = vpop.f32.mrb[0].mxu0
    %v5735 = vadd.f32 %v5653, %v5734
    %v5736 = vpop.f32.mrb[0].mxu0
    %v5737 = vadd.f32 %v5655, %v5736
    %v5738 = vpop.f32.mrb[0].mxu0
    %v5739 = vpop.f32.mrb[0].mxu0
    %5740 = vdwg.mxu0
    %5741 = vmatprep.subr.bf16.mxu0 %v2283
    %5742 = vmatpush1.bf16.msra.mxu0 %v2282
    %5743 = vmatprep.subr.bf16.mxu0 %v2287
    %5744 = vmatpush1.bf16.msra.mxu0 %v2286
    %5745 = vmatprep.subr.bf16.mxu0 %v2291
    %5746 = vmatpush1.bf16.msra.mxu0 %v2290
    %5747 = vmatprep.subr.bf16.mxu0 %v2295
    %5748 = vmatpush1.bf16.msra.mxu0 %v2294
    %5749 = vmatprep.subr.bf16.mxu0 %v2299
    %5750 = vmatpush1.bf16.msra.mxu0 %v2298
    %5751 = vmatprep.subr.bf16.mxu0 %v2303
    %5752 = vmatpush1.bf16.msra.mxu0 %v2302
    %5753 = vmatprep.subr.bf16.mxu0 %v2307
    %5754 = vmatpush1.bf16.msra.mxu0 %v2306
    %5755 = vmatprep.subr.bf16.mxu0 %v2311
    %5756 = vmatpush1.bf16.msra.mxu0 %v2310
    %5757 = vmatprep.subr.bf16.mxu0 0
    %5758 = vmatpush1.bf16.msra.mxu0 0
    %5759 = vmatprep.subr.bf16.mxu0 0
    %5760 = vmatpush1.bf16.msra.mxu0 0
    %5761 = vmatprep.subr.bf16.mxu0 0
    %5762 = vmatpush1.bf16.msra.mxu0 0
    %5763 = vmatprep.subr.bf16.mxu0 0
    %5764 = vmatpush1.bf16.msra.mxu0 0
    %5765 = vmatprep.subr.bf16.mxu0 0
    %5766 = vmatpush1.bf16.msra.mxu0 0
    %5767 = vmatprep.subr.bf16.mxu0 0
    %5768 = vmatpush1.bf16.msra.mxu0 0
    %5769 = vmatprep.subr.bf16.mxu0 0
    %5770 = vmatpush1.bf16.msra.mxu0 0
    %5771 = vmatprep.subr.bf16.mxu0 0
    %5772 = vmatpush1.bf16.msra.mxu0 0
    %5773 = vmatprep.mubr.bf16.mxu0 0
    %5774 = vmatmul.mubr.bf16.gmra.mrb[0].mxu0 %v5231
    %v5775 = vpop.f32.mrb[0].mxu0
    %v5776 = vadd.f32 %v5694, %v5775
    %v5777 = vpop.f32.mrb[0].mxu0
    %v5778 = vadd.f32 %v5696, %v5777
    %v5779 = vpop.f32.mrb[0].mxu0
    %v5780 = vpop.f32.mrb[0].mxu0
    %5781 = vdwg.mxu0
    %v5782 = vadd.f32 %v5735, %v2514
    %v5783 = vadd.f32 %v5737, %v2518
    %v5784 = vadd.f32 %v5776, %v2522
    %v5785 = vadd.f32 %v5778, %v2526
    %v5786 = vxor.u32 %v5782, 2147483648
    %v5787 = vxor.u32 %v5783, 2147483648
    %v5788 = vxor.u32 %v5784, 2147483648
    %v5789 = vmul.f32 %v5786, 1.442695
    %v5790 = vpow.pop %v5789
    %v5791 = vmul.f32 %v5787, 1.442695
    %v5792 = vpow.pop %v5791
    %v5793 = vmul.f32 %v5788, 1.442695
    %v5794 = vpow.pop %v5793
    %v5795 = vadd.f32 %v5790, 1.0
    %v5796 = vadd.f32 %v5792, 1.0
    %v5797 = vadd.f32 %v5794, 1.0
    %v5798 = vrcp.pop %v5795
    %v5799 = vmul.f32 1.0, %v5798
    %v5800 = vrcp.pop %v5796
    %v5801 = vmul.f32 1.0, %v5800
    %v5802 = vrcp.pop %v5797
    %v5803 = vmul.f32 1.0, %v5802
    %v5804 = vtanh.pop %v5785
    %v5805 = vmul.f32 %v5801, %v5421
    %v5806 = vmul.f32 %v5799, %v5804
    %v5807 = vadd.f32 %v5805, %v5806
    %v5808 = vtanh.pop %v5807
    %v5809 = vmul.f32 %v5803, %v5808
    %v5810 = vpack.c.bf16 %v5809, %v5809
    %5811 = vmatprep.subr.bf16.mxu0 %v2313
    %5812 = vmatpush1.bf16.msra.mxu0 %v2312
    %5813 = vmatprep.subr.bf16.mxu0 %v2317
    %5814 = vmatpush1.bf16.msra.mxu0 %v2316
    %5815 = vmatprep.subr.bf16.mxu0 %v2321
    %5816 = vmatpush1.bf16.msra.mxu0 %v2320
    %5817 = vmatprep.subr.bf16.mxu0 %v2325
    %5818 = vmatpush1.bf16.msra.mxu0 %v2324
    %5819 = vmatprep.subr.bf16.mxu0 %v2329
    %5820 = vmatpush1.bf16.msra.mxu0 %v2328
    %5821 = vmatprep.subr.bf16.mxu0 %v2333
    %5822 = vmatpush1.bf16.msra.mxu0 %v2332
    %5823 = vmatprep.subr.bf16.mxu0 %v2337
    %5824 = vmatpush1.bf16.msra.mxu0 %v2336
    %5825 = vmatprep.subr.bf16.mxu0 %v2341
    %5826 = vmatpush1.bf16.msra.mxu0 %v2340
    %5827 = vmatprep.subr.bf16.mxu0 0
    %5828 = vmatpush1.bf16.msra.mxu0 0
    %5829 = vmatprep.subr.bf16.mxu0 0
    %5830 = vmatpush1.bf16.msra.mxu0 0
    %5831 = vmatprep.subr.bf16.mxu0 0
    %5832 = vmatpush1.bf16.msra.mxu0 0
    %5833 = vmatprep.subr.bf16.mxu0 0
    %5834 = vmatpush1.bf16.msra.mxu0 0
    %5835 = vmatprep.subr.bf16.mxu0 0
    %5836 = vmatpush1.bf16.msra.mxu0 0
    %5837 = vmatprep.subr.bf16.mxu0 0
    %5838 = vmatpush1.bf16.msra.mxu0 0
    %5839 = vmatprep.subr.bf16.mxu0 0
    %5840 = vmatpush1.bf16.msra.mxu0 0
    %5841 = vmatprep.subr.bf16.mxu0 0
    %5842 = vmatpush1.bf16.msra.mxu0 0
    %5843 = vmatprep.mubr.bf16.mxu0 0
    %5844 = vmatmul.mubr.bf16.gmra.mrb[0].mxu0 %v5810
    %v5845 = vpop.f32.mrb[0].mxu0
    %v5846 = vadd.f32 0.0, %v5845
    %v5847 = vpop.f32.mrb[0].mxu0
    %v5848 = vadd.f32 0.0, %v5847
    %v5849 = vpop.f32.mrb[0].mxu0
    %v5850 = vpop.f32.mrb[0].mxu0
    %5851 = vdwg.mxu0
    %5852 = vmatprep.subr.bf16.mxu0 %v2315
    %5853 = vmatpush1.bf16.msra.mxu0 %v2314
    %5854 = vmatprep.subr.bf16.mxu0 %v2319
    %5855 = vmatpush1.bf16.msra.mxu0 %v2318
    %5856 = vmatprep.subr.bf16.mxu0 %v2323
    %5857 = vmatpush1.bf16.msra.mxu0 %v2322
    %5858 = vmatprep.subr.bf16.mxu0 %v2327
    %5859 = vmatpush1.bf16.msra.mxu0 %v2326
    %5860 = vmatprep.subr.bf16.mxu0 %v2331
    %5861 = vmatpush1.bf16.msra.mxu0 %v2330
    %5862 = vmatprep.subr.bf16.mxu0 %v2335
    %5863 = vmatpush1.bf16.msra.mxu0 %v2334
    %5864 = vmatprep.subr.bf16.mxu0 %v2339
    %5865 = vmatpush1.bf16.msra.mxu0 %v2338
    %5866 = vmatprep.subr.bf16.mxu0 %v2343
    %5867 = vmatpush1.bf16.msra.mxu0 %v2342
    %5868 = vmatprep.subr.bf16.mxu0 0
    %5869 = vmatpush1.bf16.msra.mxu0 0
    %5870 = vmatprep.subr.bf16.mxu0 0
    %5871 = vmatpush1.bf16.msra.mxu0 0
    %5872 = vmatprep.subr.bf16.mxu0 0
    %5873 = vmatpush1.bf16.msra.mxu0 0
    %5874 = vmatprep.subr.bf16.mxu0 0
    %5875 = vmatpush1.bf16.msra.mxu0 0
    %5876 = vmatprep.subr.bf16.mxu0 0
    %5877 = vmatpush1.bf16.msra.mxu0 0
    %5878 = vmatprep.subr.bf16.mxu0 0
    %5879 = vmatpush1.bf16.msra.mxu0 0
    %5880 = vmatprep.subr.bf16.mxu0 0
    %5881 = vmatpush1.bf16.msra.mxu0 0
    %5882 = vmatprep.subr.bf16.mxu0 0
    %5883 = vmatpush1.bf16.msra.mxu0 0
    %5884 = vmatprep.mubr.bf16.mxu0 0
    %5885 = vmatmul.mubr.bf16.gmra.mrb[0].mxu0 %v5810
    %v5886 = vpop.f32.mrb[0].mxu0
    %v5887 = vadd.f32 0.0, %v5886
    %v5888 = vpop.f32.mrb[0].mxu0
    %v5889 = vadd.f32 0.0, %v5888
    %v5890 = vpop.f32.mrb[0].mxu0
    %v5891 = vpop.f32.mrb[0].mxu0
    %5892 = vdwg.mxu0
    %5893 = vmatprep.subr.bf16.mxu0 %v2281
    %5894 = vmatpush1.bf16.msra.mxu0 %v2280
    %5895 = vmatprep.subr.bf16.mxu0 %v2285
    %5896 = vmatpush1.bf16.msra.mxu0 %v2284
    %5897 = vmatprep.subr.bf16.mxu0 %v2289
    %5898 = vmatpush1.bf16.msra.mxu0 %v2288
    %5899 = vmatprep.subr.bf16.mxu0 %v2293
    %5900 = vmatpush1.bf16.msra.mxu0 %v2292
    %5901 = vmatprep.subr.bf16.mxu0 %v2297
    %5902 = vmatpush1.bf16.msra.mxu0 %v2296
    %5903 = vmatprep.subr.bf16.mxu0 %v2301
    %5904 = vmatpush1.bf16.msra.mxu0 %v2300
    %5905 = vmatprep.subr.bf16.mxu0 %v2305
    %5906 = vmatpush1.bf16.msra.mxu0 %v2304
    %5907 = vmatprep.subr.bf16.mxu0 %v2309
    %5908 = vmatpush1.bf16.msra.mxu0 %v2308
    %5909 = vmatprep.subr.bf16.mxu0 0
    %5910 = vmatpush1.bf16.msra.mxu0 0
    %5911 = vmatprep.subr.bf16.mxu0 0
    %5912 = vmatpush1.bf16.msra.mxu0 0
    %5913 = vmatprep.subr.bf16.mxu0 0
    %5914 = vmatpush1.bf16.msra.mxu0 0
    %5915 = vmatprep.subr.bf16.mxu0 0
    %5916 = vmatpush1.bf16.msra.mxu0 0
    %5917 = vmatprep.subr.bf16.mxu0 0
    %5918 = vmatpush1.bf16.msra.mxu0 0
    %5919 = vmatprep.subr.bf16.mxu0 0
    %5920 = vmatpush1.bf16.msra.mxu0 0
    %5921 = vmatprep.subr.bf16.mxu0 0
    %5922 = vmatpush1.bf16.msra.mxu0 0
    %5923 = vmatprep.subr.bf16.mxu0 0
    %5924 = vmatpush1.bf16.msra.mxu0 0
    %5925 = vmatprep.mubr.bf16.mxu0 0
    %5926 = vmatmul.mubr.bf16.gmra.mrb[0].mxu0 %v5617
    %v5927 = vpop.f32.mrb[0].mxu0
    %v5928 = vadd.f32 %v5846, %v5927
    %v5929 = vpop.f32.mrb[0].mxu0
    %v5930 = vadd.f32 %v5848, %v5929
    %v5931 = vpop.f32.mrb[0].mxu0
    %v5932 = vpop.f32.mrb[0].mxu0
    %5933 = vdwg.mxu0
    %5934 = vmatprep.subr.bf16.mxu0 %v2283
    %5935 = vmatpush1.bf16.msra.mxu0 %v2282
    %5936 = vmatprep.subr.bf16.mxu0 %v2287
    %5937 = vmatpush1.bf16.msra.mxu0 %v2286
    %5938 = vmatprep.subr.bf16.mxu0 %v2291
    %5939 = vmatpush1.bf16.msra.mxu0 %v2290
    %5940 = vmatprep.subr.bf16.mxu0 %v2295
    %5941 = vmatpush1.bf16.msra.mxu0 %v2294
    %5942 = vmatprep.subr.bf16.mxu0 %v2299
    %5943 = vmatpush1.bf16.msra.mxu0 %v2298
    %5944 = vmatprep.subr.bf16.mxu0 %v2303
    %5945 = vmatpush1.bf16.msra.mxu0 %v2302
    %5946 = vmatprep.subr.bf16.mxu0 %v2307
    %5947 = vmatpush1.bf16.msra.mxu0 %v2306
    %5948 = vmatprep.subr.bf16.mxu0 %v2311
    %5949 = vmatpush1.bf16.msra.mxu0 %v2310
    %5950 = vmatprep.subr.bf16.mxu0 0
    %5951 = vmatpush1.bf16.msra.mxu0 0
    %5952 = vmatprep.subr.bf16.mxu0 0
    %5953 = vmatpush1.bf16.msra.mxu0 0
    %5954 = vmatprep.subr.bf16.mxu0 0
    %5955 = vmatpush1.bf16.msra.mxu0 0
    %5956 = vmatprep.subr.bf16.mxu0 0
    %5957 = vmatpush1.bf16.msra.mxu0 0
    %5958 = vmatprep.subr.bf16.mxu0 0
    %5959 = vmatpush1.bf16.msra.mxu0 0
    %5960 = vmatprep.subr.bf16.mxu0 0
    %5961 = vmatpush1.bf16.msra.mxu0 0
    %5962 = vmatprep.subr.bf16.mxu0 0
    %5963 = vmatpush1.bf16.msra.mxu0 0
    %5964 = vmatprep.subr.bf16.mxu0 0
    %5965 = vmatpush1.bf16.msra.mxu0 0
    %5966 = vmatprep.mubr.bf16.mxu0 0
    %5967 = vmatmul.mubr.bf16.gmra.mrb[0].mxu0 %v5617
    %v5968 = vpop.f32.mrb[0].mxu0
    %v5969 = vadd.f32 %v5887, %v5968
    %v5970 = vpop.f32.mrb[0].mxu0
    %v5971 = vadd.f32 %v5889, %v5970
    %v5972 = vpop.f32.mrb[0].mxu0
    %v5973 = vpop.f32.mrb[0].mxu0
    %5974 = vdwg.mxu0
    %v5975 = vadd.f32 %v5928, %v2514
    %v5976 = vadd.f32 %v5930, %v2518
    %v5977 = vadd.f32 %v5969, %v2522
    %v5978 = vadd.f32 %v5971, %v2526
    %v5979 = vxor.u32 %v5975, 2147483648
    %v5980 = vxor.u32 %v5976, 2147483648
    %v5981 = vxor.u32 %v5977, 2147483648
    %v5982 = vmul.f32 %v5979, 1.442695
    %v5983 = vpow.pop %v5982
    %v5984 = vmul.f32 %v5980, 1.442695
    %v5985 = vpow.pop %v5984
    %v5986 = vmul.f32 %v5981, 1.442695
    %v5987 = vpow.pop %v5986
    %v5988 = vadd.f32 %v5983, 1.0
    %v5989 = vadd.f32 %v5985, 1.0
    %v5990 = vadd.f32 %v5987, 1.0
    %v5991 = vrcp.pop %v5988
    %v5992 = vmul.f32 1.0, %v5991
    %v5993 = vrcp.pop %v5989
    %v5994 = vmul.f32 1.0, %v5993
    %v5995 = vrcp.pop %v5990
    %v5996 = vmul.f32 1.0, %v5995
    %v5997 = vtanh.pop %v5978
    %v5998 = vmul.f32 %v5994, %v5807
    %v5999 = vmul.f32 %v5992, %v5997
    %v6000 = vadd.f32 %v5998, %v5999
    %v6001 = vtanh.pop %v6000
    %v6002 = vmul.f32 %v5996, %v6001
    %v6003 = vpack.c.bf16 %v6002, %v6002
    %s6004 = smul.u32 4, 16
    %s6005 = smul.u32 %s6004, 1
    %s6006 = sshll.u32 %s6005, 4
    %6007 = dma.done %s179, %s6006
    %v6008 = vld [vmem:[#allocation3] sm:$0xff]
    %v6009 = vld [vmem:[#allocation3 + $0x8] sm:$0xff]
    %v6010 = vld [vmem:[#allocation3 + $0x10] sm:$0xff]
    %v6011 = vld [vmem:[#allocation3 + $0x18] sm:$0xff]
    %v6012 = vld [vmem:[#allocation3 + $0x20] sm:$0xff]
    %v6013 = vld [vmem:[#allocation3 + $0x28] sm:$0xff]
    %v6014 = vld [vmem:[#allocation3 + $0x30] sm:$0xff]
    %v6015 = vld [vmem:[#allocation3 + $0x38] sm:$0xff]
    %v6016 = vld [vmem:[%s2] sm:$0x1]
    %v6018 = vlaneseq
    %v6019 = vshrl.u32 %v6018, 7
    %v6020 = vsub.s32 0, %v6019
    %v6021 = vrot.slane %v6016, %v6020
    %6023 = vmatprep.subr.bf16.mxu0 0
    %6024 = vmatpush1.bf16.msra.mxu0 %v6008
    %6025 = vmatprep.subr.bf16.mxu0 0
    %6026 = vmatpush1.bf16.msra.mxu0 %v6009
    %6027 = vmatprep.subr.bf16.mxu0 0
    %6028 = vmatpush1.bf16.msra.mxu0 %v6010
    %6029 = vmatprep.subr.bf16.mxu0 0
    %6030 = vmatpush1.bf16.msra.mxu0 %v6011
    %6031 = vmatprep.subr.bf16.mxu0 0
    %6032 = vmatpush1.bf16.msra.mxu0 %v6012
    %6033 = vmatprep.subr.bf16.mxu0 0
    %6034 = vmatpush1.bf16.msra.mxu0 %v6013
    %6035 = vmatprep.subr.bf16.mxu0 0
    %6036 = vmatpush1.bf16.msra.mxu0 %v6014
    %6037 = vmatprep.subr.bf16.mxu0 0
    %6038 = vmatpush1.bf16.msra.mxu0 %v6015
    %6039 = vmatprep.subr.bf16.mxu0 0
    %6040 = vmatpush1.bf16.msra.mxu0 0
    %6041 = vmatprep.subr.bf16.mxu0 0
    %6042 = vmatpush1.bf16.msra.mxu0 0
    %6043 = vmatprep.subr.bf16.mxu0 0
    %6044 = vmatpush1.bf16.msra.mxu0 0
    %6045 = vmatprep.subr.bf16.mxu0 0
    %6046 = vmatpush1.bf16.msra.mxu0 0
    %6047 = vmatprep.subr.bf16.mxu0 0
    %6048 = vmatpush1.bf16.msra.mxu0 0
    %6049 = vmatprep.subr.bf16.mxu0 0
    %6050 = vmatpush1.bf16.msra.mxu0 0
    %6051 = vmatprep.subr.bf16.mxu0 0
    %6052 = vmatpush1.bf16.msra.mxu0 0
    %6053 = vmatprep.subr.bf16.mxu0 0
    %6054 = vmatpush1.bf16.msra.mxu0 0
    %6055 = vmatprep.mubr.bf16.mxu0 0
    %6056 = vmatmul.mubr.bf16.gmra.mrb[0].mxu0 %v6003
    %v6057 = vpop.f32.mrb[0].mxu0
    %v6058 = vadd.f32 %v6021, %v6057
    %v6059 = vpop.f32.mrb[0].mxu0
    %v6060 = vpop.f32.mrb[0].mxu0
    %v6061 = vpop.f32.mrb[0].mxu0
    %6062 = vdwg.mxu0
    %6063 = vst [vmem:[%s5] sm:$0xff] %v6058
    %6064 = vst [vmem:[%s6] sm:$0xff] %v6002
    // Predicated region
    $region52: #{lstm_forward.1} parent=1 // pred_check
      _
    $region53: #{lstm_forward.1} parent=1 // pred_check_branch
      %6066 = sbr.rel (0) target = $region55
    $region54: #{lstm_forward.1} parent=1 // pred_region
      _
    $region55: #{lstm_forward.1} parent=1 // pred_fallthru
      _
    // Predicated region
    $region56: #{lstm_forward.1} parent=1 // pred_check
      _
    $region57: #{lstm_forward.1} parent=1 // pred_check_branch
      %6068 = sbr.rel (0) target = $region59
    $region58: #{lstm_forward.1} parent=1 // pred_region
      _
    $region59: #{lstm_forward.1} parent=1 // pred_fallthru
      _
    // Predicated region
    $region60: #{lstm_forward.1} parent=1 // pred_check
      _
    $region61: #{lstm_forward.1} parent=1 // pred_check_branch
      %6070 = sbr.rel (0) target = $region63
    $region62: #{lstm_forward.1} parent=1 // pred_region
      _
    $region63: #{lstm_forward.1} parent=1 // pred_fallthru
      _
    // Predicated region
    $region64: #{lstm_forward.1} parent=1 // pred_check
      _
    $region65: #{lstm_forward.1} parent=1 // pred_check_branch
      %6072 = sbr.rel (0) target = $region67
    $region66: #{lstm_forward.1} parent=1 // pred_region
      _
    $region67: #{lstm_forward.1} parent=1 // pred_fallthru
      _
    %6073 = vsyncpa [#allocation7], 1
  %6074 = vsyncmov [#allocation5]
  %s6075 = vpop.sfrf %6074
  %p6076 = scmp.eq.s32.totalorder %s6075, 0
  %p6077 = pneg %p6076
  %6079 = shalt.err (%p6077)
  %s6080 = scalar_lea.sflag [#allocation5], 1
  %6081 = vsyncmov %s6080
  %s6082 = vpop.sfrf %6081
  %p6083 = scmp.eq.s32.totalorder %s6082, 0
  %p6084 = pneg %p6083
  %6086 = shalt.err (%p6084)
  %s6087 = scalar_lea.sflag [#allocation5], 2
  %6088 = vsyncmov %s6087
  %s6089 = vpop.sfrf %6088
  %p6090 = scmp.eq.s32.totalorder %s6089, 0
  %p6091 = pneg %p6090
  %6093 = shalt.err (%p6091)
  %s6094 = scalar_lea.sflag [#allocation5], 3
  %6095 = vsyncmov %s6094
  %s6096 = vpop.sfrf %6095
  %p6097 = scmp.eq.s32.totalorder %s6096, 0
  %p6098 = pneg %p6097
  %6100 = shalt.err (%p6098)
  %s6101 = scalar_lea.sflag [#allocation5], 4
  %6102 = vsyncmov %s6101
  %s6103 = vpop.sfrf %6102
  %p6104 = scmp.eq.s32.totalorder %s6103, 0
  %p6105 = pneg %p6104
  %6107 = shalt.err (%p6105)

</llo_original>
